<compile_context>
chip_gen: v6e
topology: v6e:2x2x1
jax: 0.10.0
libtpu: 0.0.40
codegen_flags: <defaults>
</compile_context>

<pallas_src>
import jax
import jax.numpy as jnp
from jax import lax
from jax.experimental import pallas as pl
from jax.experimental.pallas import tpu as pltpu


def _prod_second_minor(u):
    """Product over axis=1 of a (M, D, C) array via a pairwise multiply tree.

    Pads with 1s to a power of two (no-op for power-of-two D).  Returns
    (M, 1, C).  Avoids relying on a multiplicative reduce lowering."""
    d = u.shape[1]
    n = 1
    while n < d:
        n *= 2
    if n != d:
        pad = jnp.ones((u.shape[0], n - d, u.shape[2]), u.dtype)
        u = jnp.concatenate([u, pad], axis=1)
    while n > 1:
        half = n // 2
        u = lax.slice_in_dim(u, 0, half, axis=1) * lax.slice_in_dim(u, half, n, axis=1)
        n = half
    return u  # (M, 1, C)


def dnm_lstm_kernel(x_ref, wx_ref, qx_ref, wh_ref, qh_ref, kq_ref,
                    out_ref, c_ref, h_sc):
    t_block, batch, hidden = out_ref.shape
    m_branches = wx_ref.shape[0]

    @pl.when(pl.program_id(0) == 0)
    def _init():
        h_sc[...] = jnp.zeros_like(h_sc)
        c_ref[...] = jnp.zeros_like(c_ref)

    wx = wx_ref[...]            # (M, Din, 4H)   gate order along lanes: [f|i|g|o]
    qx = qx_ref[...]
    wh = wh_ref[...]            # (M, H,   4H)
    qh = qh_ref[...]
    kq = kq_ref[...]            # (2, 4H)
    k_vec = kq[0:1, :]          # (1, 4H)
    qs_vec = kq[1:2, :]         # (1, 4H)

    # (H, H) identity used to move hidden features onto sublanes with the
    # otherwise idle MXU:  h_t[j, b] = h_pre[b, j].
    rows = lax.broadcasted_iota(jnp.int32, (hidden, hidden), 0)
    cols = lax.broadcasted_iota(jnp.int32, (hidden, hidden), 1)
    eye = (rows == cols).astype(jnp.float32)

    # (B, 1) row ids for scattering per-batch rows back into (B, H) carries.
    row_ids = lax.broadcasted_iota(jnp.int32, (batch, 1), 0)

    for t in range(t_block):
        h_pre = h_sc[...]                      # (B, H)  hidden on lanes
        c_pre = c_ref[0]                       # (B, H)

        h_t = lax.dot_general(                 # (H, B)  hidden on sublanes
            eye, h_pre, (((1,), (1,)), ((), ())),
            preferred_element_type=jnp.float32)

        h_next = jnp.zeros((batch, hidden), jnp.float32)
        c_next = jnp.zeros((batch, hidden), jnp.float32)

        for b in range(batch):
            x_b = x_ref[t, b]                                   # (Din, 1)
            h_b = lax.slice_in_dim(h_t, b, b + 1, axis=1)       # (H, 1)

            # Dendrites for all four gates at once (lanes = 4H):
            #   prod_d sigmoid(z_d) = 1 / prod_d (1 + exp(-z_d)),
            #   product over D = Din + H factorizes across [x | h].
            zx = x_b[None, :, :] * wx - qx                      # (M, Din, 4H)
            zh = h_b[None, :, :] * wh - qh                      # (M, H,   4H)
            px = _prod_second_minor(1.0 + jnp.exp(-zx))         # (M, 1, 4H)
            ph = _prod_second_minor(1.0 + jnp.exp(-zh))         # (M, 1, 4H)
            branch = 1.0 / (px * ph)                            # (M, 1, 4H)

            soma = branch[0]                                    # (1, 4H)
            for mm in range(1, m_branches):
                soma = soma + branch[mm]
            gates = k_vec * (soma - qs_vec)                     # (1, 4H)

            f_b = jax.nn.sigmoid(gates[:, 0 * hidden:1 * hidden])
            i_b = jax.nn.sigmoid(gates[:, 1 * hidden:2 * hidden])
            g_b = jnp.tanh(gates[:, 2 * hidden:3 * hidden])
            o_b = jax.nn.sigmoid(gates[:, 3 * hidden:4 * hidden])

            c_pre_b = lax.slice_in_dim(c_pre, b, b + 1, axis=0)  # (1, H)
            c_b = f_b * c_pre_b + i_b * g_b                      # (1, H)
            hb_next = o_b * jnp.tanh(c_b)                        # (1, H)

            mask_b = (row_ids == b).astype(jnp.float32)          # (B, 1)
            h_next = h_next + mask_b * hb_next
            c_next = c_next + mask_b * c_b

        h_sc[...] = h_next
        c_ref[0] = c_next
        out_ref[t] = h_next


def _pack_gate_params(gate_params, input_size, hidden_dim):
    """Fuse the four gates: (H, M, D) weights -> lane-dense (M, D, 4H), split
    into the x part and the h part; per-gate k/qs -> a (2, 4H) vector."""
    ws, qs, ks, qss = [], [], [], []
    for name in ("f", "i", "g", "o"):
        w, q, k, qsc = gate_params[name]
        ws.append(jnp.transpose(w.astype(jnp.float32), (1, 2, 0)))   # (M, D, H)
        qs.append(jnp.transpose(q.astype(jnp.float32), (1, 2, 0)))
        k0 = jnp.reshape(jnp.asarray(k, jnp.float32), ())
        q0 = jnp.reshape(jnp.asarray(qsc, jnp.float32), ())
        ks.append(jnp.full((hidden_dim,), k0, jnp.float32))
        qss.append(jnp.full((hidden_dim,), q0, jnp.float32))
    w_stack = jnp.concatenate(ws, axis=-1)       # (M, D, 4H)
    q_stack = jnp.concatenate(qs, axis=-1)
    kq = jnp.stack([jnp.concatenate(ks), jnp.concatenate(qss)], axis=0)  # (2, 4H)
    wx, wh = w_stack[:, :input_size, :], w_stack[:, input_size:, :]
    qx, qh = q_stack[:, :input_size, :], q_stack[:, input_size:, :]
    return wx, qx, wh, qh, kq


def dnm_lstm_forward(x, gate_params, *, max_time_block=16):
    """x: (seq_len, batch, input_size).  gate_params: dict with per-gate
    (W, q, k, qs).  Returns (output, (h_n, c_n)) like the PyTorch module."""
    seq_len, batch, input_size = x.shape
    hidden_dim, m_branches, d_total = gate_params["f"][0].shape
    assert d_total == input_size + hidden_dim
    four_h = 4 * hidden_dim

    wx, qx, wh, qh, kq = _pack_gate_params(gate_params, input_size, hidden_dim)

    # Time blocking: amortize per-grid-step pipeline overhead.
    t_block = 1
    for cand in range(1, min(seq_len, max_time_block) + 1):
        if seq_len % cand == 0:
            t_block = cand
    n_blocks = seq_len // t_block

    # x pre-shaped to (seq, B, Din, 1) so per-(t, b) slices arrive with the
    # feature axis on sublanes (no in-kernel relayout).
    x4 = x.astype(jnp.float32)[..., None]

    grid_spec = pltpu.PrefetchScalarGridSpec(
        num_scalar_prefetch=0,
        grid=(n_blocks,),
        in_specs=[
            pl.BlockSpec((t_block, batch, input_size, 1), lambda i: (i, 0, 0, 0)),  # x
            pl.BlockSpec((m_branches, input_size, four_h), lambda i: (0, 0, 0)),    # Wx
            pl.BlockSpec((m_branches, input_size, four_h), lambda i: (0, 0, 0)),    # qx
            pl.BlockSpec((m_branches, hidden_dim, four_h), lambda i: (0, 0, 0)),    # Wh
            pl.BlockSpec((m_branches, hidden_dim, four_h), lambda i: (0, 0, 0)),    # qh
            pl.BlockSpec((2, four_h), lambda i: (0, 0)),                            # k/qs
        ],
        out_specs=[
            pl.BlockSpec((t_block, batch, hidden_dim), lambda i: (i, 0, 0)),        # output
            pl.BlockSpec((1, batch, hidden_dim), lambda i: (0, 0, 0)),              # c carry
        ],
        scratch_shapes=[pltpu.VMEM((batch, hidden_dim), jnp.float32)],              # h carry
    )

    output, c_n = pl.pallas_call(
        dnm_lstm_kernel,
        out_shape=(
            jax.ShapeDtypeStruct((seq_len, batch, hidden_dim), jnp.float32),
            jax.ShapeDtypeStruct((1, batch, hidden_dim), jnp.float32),
        ),
        grid_spec=grid_spec,
        compiler_params=pltpu.CompilerParams(
            dimension_semantics=("arbitrary",)),   # recurrent over time
    )(x4, wx, qx, wh, qh, kq)

    h_n = output[-1:, :, :]
    return output, (h_n, c_n)


# ---------------- pure-JAX reference (mirrors the PyTorch code) ----------------
def _dnm_linear_ref(xh, w, q, k, qs):
    z = xh[:, None, None, :] * w[None] - q[None]
    s = jax.nn.sigmoid(z)
    p = jnp.prod(s, axis=-1)
    return k * (jnp.sum(p, axis=-1) - qs)


def dnm_lstm_ref(x, gate_params):
    seq_len, batch, _ = x.shape
    hidden_dim = gate_params["f"][0].shape[0]
    h = jnp.zeros((batch, hidden_dim), jnp.float32)
    c = jnp.zeros((batch, hidden_dim), jnp.float32)
    outs = []
    for t in range(seq_len):
        xh = jnp.concatenate([x[t], h], axis=1)
        f_t = jax.nn.sigmoid(_dnm_linear_ref(xh, *gate_params["f"]))
        i_t = jax.nn.sigmoid(_dnm_linear_ref(xh, *gate_params["i"]))
        g_t = jnp.tanh(_dnm_linear_ref(xh, *gate_params["g"]))
        o_t = jax.nn.sigmoid(_dnm_linear_ref(xh, *gate_params["o"]))
        c = f_t * c + i_t * g_t
        h = o_t * jnp.tanh(c)
        outs.append(h)
    output = jnp.stack(outs, axis=0)
    return output, (output[-1:], c[None])


if __name__ == "__main__":
    # Small shapes consistent with the module's forward:
    seq_len, batch, input_size, hidden_dim, M = 8, 2, 8, 32, 5
    D = input_size + hidden_dim

    key = jax.random.PRNGKey(0)
    keys = jax.random.split(key, 13)

    def make_gate(kw, kk, kq_):
        W = jax.random.uniform(kw, (hidden_dim, M, D), jnp.float32)     # torch.rand
        q = jnp.full((hidden_dim, M, D), 0.1, jnp.float32)              # init.constant_(0.1)
        k_ = jax.random.uniform(kk, (), jnp.float32)                    # torch.rand(1)
        qs = jax.random.uniform(kq_, (), jnp.float32)                   # torch.rand(1)
        return (W, q, k_, qs)

    gate_params = {
        "f": make_gate(keys[0], keys[1], keys[2]),
        "i": make_gate(keys[3], keys[4], keys[5]),
        "g": make_gate(keys[6], keys[7], keys[8]),
        "o": make_gate(keys[9], keys[10], keys[11]),
    }

    x = jax.random.normal(keys[12], (seq_len, batch, input_size), jnp.float32)

    output, (h_n, c_n) = dnm_lstm_forward(x, gate_params)
    jax.block_until_ready((output, h_n, c_n))

    out_ref, (h_ref, c_ref) = dnm_lstm_ref(x, gate_params)
    assert output.shape == (seq_len, batch, hidden_dim)
    assert h_n.shape == (1, batch, hidden_dim) and c_n.shape == (1, batch, hidden_dim)
    assert jnp.allclose(output, out_ref, atol=1e-4, rtol=1e-4)
    assert jnp.allclose(c_n, c_ref, atol=1e-4, rtol=1e-4)
    assert jnp.allclose(h_n, h_ref, atol=1e-4, rtol=1e-4)

    print("KERNEL_OK")
</pallas_src>

<mosaic_0001>
module attributes {stable_mosaic.version = 11 : i64} {
  func.func @dnm_lstm_kernel(%arg0: i32, %arg1: memref<8x2x8x1xf32, #tpu.memory_space<vmem>>, %arg2: memref<5x8x128xf32, #tpu.memory_space<vmem>>, %arg3: memref<5x8x128xf32, #tpu.memory_space<vmem>>, %arg4: memref<5x32x128xf32, #tpu.memory_space<vmem>>, %arg5: memref<5x32x128xf32, #tpu.memory_space<vmem>>, %arg6: memref<2x128xf32, #tpu.memory_space<vmem>>, %arg7: memref<8x2x32xf32, #tpu.memory_space<vmem>>, %arg8: memref<1x2x32xf32, #tpu.memory_space<vmem>>, %arg9: memref<2x32xf32, #tpu.memory_space<vmem>>) attributes {dimension_semantics = [#tpu.dimension_semantics<arbitrary>], iteration_bounds = array<i64: 1>, scalar_prefetch = 0 : i64, scratch_operands = 1 : i64, tpu.core_type = #tpu.core_type<tc>, window_params = [{transform_indices = @transform_0, window_bounds = array<i64: 8, 2, 8, 1>}, {pipeline_mode = #tpu.pipeline_mode<synchronous>, transform_indices = @transform_1, window_bounds = array<i64: 5, 8, 128>}, {pipeline_mode = #tpu.pipeline_mode<synchronous>, transform_indices = @transform_2, window_bounds = array<i64: 5, 8, 128>}, {pipeline_mode = #tpu.pipeline_mode<synchronous>, transform_indices = @transform_3, window_bounds = array<i64: 5, 32, 128>}, {pipeline_mode = #tpu.pipeline_mode<synchronous>, transform_indices = @transform_4, window_bounds = array<i64: 5, 32, 128>}, {pipeline_mode = #tpu.pipeline_mode<synchronous>, transform_indices = @transform_5, window_bounds = array<i64: 2, 128>}, {transform_indices = @transform_6, window_bounds = array<i64: 8, 2, 32>}, {pipeline_mode = #tpu.pipeline_mode<synchronous>, transform_indices = @transform_7, window_bounds = array<i64: 1, 2, 32>}]} {
    %c0_i32 = arith.constant 0 : i32
    %0 = arith.cmpi eq, %arg0, %c0_i32 : i32
    %1 = arith.extui %0 : i1 to i32
    %c0_i32_0 = arith.constant 0 : i32
    %2 = arith.cmpi ne, %1, %c0_i32_0 : i32
    scf.if %2 {
      %cst_341 = arith.constant 0.000000e+00 : f32
      %1752 = vector.broadcast %cst_341 : f32 to vector<2x32xf32>
      %c0_342 = arith.constant 0 : index
      %c0_343 = arith.constant 0 : index
      %1753 = vector.load %arg9[%c0_342, %c0_343] : memref<2x32xf32, #tpu.memory_space<vmem>>, vector<2x32xf32>
      tpu.vector_store %arg9[%c0_342, %c0_343], %1752 {strides = array<i32>} : memref<2x32xf32, #tpu.memory_space<vmem>>, vector<2x32xf32>,
      %cst_344 = arith.constant 0.000000e+00 : f32
      %1754 = vector.broadcast %cst_344 : f32 to vector<1x2x32xf32>
      %c0_345 = arith.constant 0 : index
      %c0_346 = arith.constant 0 : index
      %c0_347 = arith.constant 0 : index
      %1755 = vector.load %arg8[%c0_345, %c0_346, %c0_347] : memref<1x2x32xf32, #tpu.memory_space<vmem>>, vector<1x2x32xf32>
      tpu.vector_store %arg8[%c0_345, %c0_346, %c0_347], %1754 {strides = array<i32>} : memref<1x2x32xf32, #tpu.memory_space<vmem>>, vector<1x2x32xf32>,
    } else {
    }
    %c0 = arith.constant 0 : index
    %c0_1 = arith.constant 0 : index
    %c0_2 = arith.constant 0 : index
    %3 = vector.load %arg2[%c0, %c0_1, %c0_2] : memref<5x8x128xf32, #tpu.memory_space<vmem>>, vector<5x8x128xf32>
    %c0_3 = arith.constant 0 : index
    %c0_4 = arith.constant 0 : index
    %c0_5 = arith.constant 0 : index
    %4 = vector.load %arg3[%c0_3, %c0_4, %c0_5] : memref<5x8x128xf32, #tpu.memory_space<vmem>>, vector<5x8x128xf32>
    %c0_6 = arith.constant 0 : index
    %c0_7 = arith.constant 0 : index
    %c0_8 = arith.constant 0 : index
    %5 = vector.load %arg4[%c0_6, %c0_7, %c0_8] : memref<5x32x128xf32, #tpu.memory_space<vmem>>, vector<5x32x128xf32>
    %c0_9 = arith.constant 0 : index
    %c0_10 = arith.constant 0 : index
    %c0_11 = arith.constant 0 : index
    %6 = vector.load %arg5[%c0_9, %c0_10, %c0_11] : memref<5x32x128xf32, #tpu.memory_space<vmem>>, vector<5x32x128xf32>
    %c0_12 = arith.constant 0 : index
    %c0_13 = arith.constant 0 : index
    %7 = vector.load %arg6[%c0_12, %c0_13] : memref<2x128xf32, #tpu.memory_space<vmem>>, vector<2x128xf32>
    %8 = vector.extract_strided_slice %7 {offsets = [0, 0], sizes = [1, 128], strides = [1, 1]} : vector<2x128xf32> to vector<1x128xf32>
    %9 = vector.extract_strided_slice %7 {offsets = [1, 0], sizes = [1, 128], strides = [1, 1]} : vector<2x128xf32> to vector<1x128xf32>
    %10 = tpu.iota {dimensions = array<i32: 0>} : vector<32x32xi32>
    %11 = tpu.iota {dimensions = array<i32: 1>} : vector<32x32xi32>
    %12 = arith.cmpi eq, %10, %11 : vector<32x32xi32>
    %13 = arith.extui %12 : vector<32x32xi1> to vector<32x32xi32>
    %14 = arith.sitofp %13 : vector<32x32xi32> to vector<32x32xf32>
    %15 = tpu.iota {dimensions = array<i32: 0>} : vector<2x1xi32>
    %c0_14 = arith.constant 0 : index
    %c0_15 = arith.constant 0 : index
    %16 = vector.load %arg9[%c0_14, %c0_15] : memref<2x32xf32, #tpu.memory_space<vmem>>, vector<2x32xf32>
    %c0_16 = arith.constant 0 : index
    %c0_17 = arith.constant 0 : index
    %c0_18 = arith.constant 0 : index
    %17 = vector.load %arg8[%c0_16, %c0_17, %c0_18] : memref<1x2x32xf32, #tpu.memory_space<vmem>>, vector<1x2x32xf32>
    %18 = vector.shape_cast %17 : vector<1x2x32xf32> to vector<2x32xf32>
    %cst = arith.constant dense<0.000000e+00> : vector<32x2xf32>
    %19 = tpu.matmul %14, %16, %cst {dimension_numbers = #tpu.dot_dimension_numbers<[1], [1], [0], [0], [0, 0, 1, 0], [], []>} : vector<32x32xf32>, vector<2x32xf32>, vector<32x2xf32> -> vector<32x2xf32>
    %cst_19 = arith.constant 0.000000e+00 : f32
    %20 = vector.broadcast %cst_19 : f32 to vector<2x32xf32>
    %cst_20 = arith.constant 0.000000e+00 : f32
    %21 = vector.broadcast %cst_20 : f32 to vector<2x32xf32>
    %c0_21 = arith.constant 0 : index
    %c0_22 = arith.constant 0 : index
    %c0_23 = arith.constant 0 : index
    %c0_24 = arith.constant 0 : index
    %22 = vector.load %arg1[%c0_21, %c0_22, %c0_23, %c0_24] : memref<8x2x8x1xf32, #tpu.memory_space<vmem>>, vector<1x1x8x1xf32>
    %23 = vector.shape_cast %22 : vector<1x1x8x1xf32> to vector<8x1xf32>
    %24 = vector.extract_strided_slice %19 {offsets = [0, 0], sizes = [32, 1], strides = [1, 1]} : vector<32x2xf32> to vector<32x1xf32>
    %25 = vector.shape_cast %23 : vector<8x1xf32> to vector<1x8x1xf32>
    %26 = vector.broadcast %25 : vector<1x8x1xf32> to vector<5x8x128xf32>
    %27 = arith.mulf %26, %3 : vector<5x8x128xf32>
    %28 = arith.subf %27, %4 : vector<5x8x128xf32>
    %29 = vector.shape_cast %24 : vector<32x1xf32> to vector<1x32x1xf32>
    %30 = vector.broadcast %29 : vector<1x32x1xf32> to vector<5x32x128xf32>
    %31 = arith.mulf %30, %5 : vector<5x32x128xf32>
    %32 = arith.subf %31, %6 : vector<5x32x128xf32>
    %cst_25 = arith.constant 0.000000e+00 : f32
    %33 = vector.broadcast %cst_25 : f32 to vector<5x8x128xf32>
    %34 = arith.subf %33, %28 : vector<5x8x128xf32>
    %35 = math.exp %34 : vector<5x8x128xf32>
    %cst_26 = arith.constant 1.000000e+00 : f32
    %36 = vector.broadcast %cst_26 : f32 to vector<5x8x128xf32>
    %37 = arith.addf %36, %35 : vector<5x8x128xf32>
    %38 = vector.extract_strided_slice %37 {offsets = [0, 0, 0], sizes = [5, 4, 128], strides = [1, 1, 1]} : vector<5x8x128xf32> to vector<5x4x128xf32>
    %39 = vector.extract_strided_slice %37 {offsets = [0, 4, 0], sizes = [5, 4, 128], strides = [1, 1, 1]} : vector<5x8x128xf32> to vector<5x4x128xf32>
    %40 = arith.mulf %38, %39 : vector<5x4x128xf32>
    %41 = vector.extract_strided_slice %40 {offsets = [0, 0, 0], sizes = [5, 2, 128], strides = [1, 1, 1]} : vector<5x4x128xf32> to vector<5x2x128xf32>
    %42 = vector.extract_strided_slice %40 {offsets = [0, 2, 0], sizes = [5, 2, 128], strides = [1, 1, 1]} : vector<5x4x128xf32> to vector<5x2x128xf32>
    %43 = arith.mulf %41, %42 : vector<5x2x128xf32>
    %44 = vector.extract_strided_slice %43 {offsets = [0, 0, 0], sizes = [5, 1, 128], strides = [1, 1, 1]} : vector<5x2x128xf32> to vector<5x1x128xf32>
    %45 = vector.extract_strided_slice %43 {offsets = [0, 1, 0], sizes = [5, 1, 128], strides = [1, 1, 1]} : vector<5x2x128xf32> to vector<5x1x128xf32>
    %46 = arith.mulf %44, %45 : vector<5x1x128xf32>
    %cst_27 = arith.constant 0.000000e+00 : f32
    %47 = vector.broadcast %cst_27 : f32 to vector<5x32x128xf32>
    %48 = arith.subf %47, %32 : vector<5x32x128xf32>
    %49 = math.exp %48 : vector<5x32x128xf32>
    %cst_28 = arith.constant 1.000000e+00 : f32
    %50 = vector.broadcast %cst_28 : f32 to vector<5x32x128xf32>
    %51 = arith.addf %50, %49 : vector<5x32x128xf32>
    %52 = vector.extract_strided_slice %51 {offsets = [0, 0, 0], sizes = [5, 16, 128], strides = [1, 1, 1]} : vector<5x32x128xf32> to vector<5x16x128xf32>
    %53 = vector.extract_strided_slice %51 {offsets = [0, 16, 0], sizes = [5, 16, 128], strides = [1, 1, 1]} : vector<5x32x128xf32> to vector<5x16x128xf32>
    %54 = arith.mulf %52, %53 : vector<5x16x128xf32>
    %55 = vector.extract_strided_slice %54 {offsets = [0, 0, 0], sizes = [5, 8, 128], strides = [1, 1, 1]} : vector<5x16x128xf32> to vector<5x8x128xf32>
    %56 = vector.extract_strided_slice %54 {offsets = [0, 8, 0], sizes = [5, 8, 128], strides = [1, 1, 1]} : vector<5x16x128xf32> to vector<5x8x128xf32>
    %57 = arith.mulf %55, %56 : vector<5x8x128xf32>
    %58 = vector.extract_strided_slice %57 {offsets = [0, 0, 0], sizes = [5, 4, 128], strides = [1, 1, 1]} : vector<5x8x128xf32> to vector<5x4x128xf32>
    %59 = vector.extract_strided_slice %57 {offsets = [0, 4, 0], sizes = [5, 4, 128], strides = [1, 1, 1]} : vector<5x8x128xf32> to vector<5x4x128xf32>
    %60 = arith.mulf %58, %59 : vector<5x4x128xf32>
    %61 = vector.extract_strided_slice %60 {offsets = [0, 0, 0], sizes = [5, 2, 128], strides = [1, 1, 1]} : vector<5x4x128xf32> to vector<5x2x128xf32>
    %62 = vector.extract_strided_slice %60 {offsets = [0, 2, 0], sizes = [5, 2, 128], strides = [1, 1, 1]} : vector<5x4x128xf32> to vector<5x2x128xf32>
    %63 = arith.mulf %61, %62 : vector<5x2x128xf32>
    %64 = vector.extract_strided_slice %63 {offsets = [0, 0, 0], sizes = [5, 1, 128], strides = [1, 1, 1]} : vector<5x2x128xf32> to vector<5x1x128xf32>
    %65 = vector.extract_strided_slice %63 {offsets = [0, 1, 0], sizes = [5, 1, 128], strides = [1, 1, 1]} : vector<5x2x128xf32> to vector<5x1x128xf32>
    %66 = arith.mulf %64, %65 : vector<5x1x128xf32>
    %67 = arith.mulf %46, %66 : vector<5x1x128xf32>
    %cst_29 = arith.constant 1.000000e+00 : f32
    %68 = vector.broadcast %cst_29 : f32 to vector<5x1x128xf32>
    %69 = arith.divf %68, %67 : vector<5x1x128xf32>
    %70 = vector.extract_strided_slice %69 {offsets = [0, 0, 0], sizes = [1, 1, 128], strides = [1, 1, 1]} : vector<5x1x128xf32> to vector<1x1x128xf32>
    %71 = vector.shape_cast %70 : vector<1x1x128xf32> to vector<1x128xf32>
    %72 = vector.extract_strided_slice %69 {offsets = [1, 0, 0], sizes = [1, 1, 128], strides = [1, 1, 1]} : vector<5x1x128xf32> to vector<1x1x128xf32>
    %73 = vector.shape_cast %72 : vector<1x1x128xf32> to vector<1x128xf32>
    %74 = arith.addf %71, %73 : vector<1x128xf32>
    %75 = vector.extract_strided_slice %69 {offsets = [2, 0, 0], sizes = [1, 1, 128], strides = [1, 1, 1]} : vector<5x1x128xf32> to vector<1x1x128xf32>
    %76 = vector.shape_cast %75 : vector<1x1x128xf32> to vector<1x128xf32>
    %77 = arith.addf %74, %76 : vector<1x128xf32>
    %78 = vector.extract_strided_slice %69 {offsets = [3, 0, 0], sizes = [1, 1, 128], strides = [1, 1, 1]} : vector<5x1x128xf32> to vector<1x1x128xf32>
    %79 = vector.shape_cast %78 : vector<1x1x128xf32> to vector<1x128xf32>
    %80 = arith.addf %77, %79 : vector<1x128xf32>
    %81 = vector.extract_strided_slice %69 {offsets = [4, 0, 0], sizes = [1, 1, 128], strides = [1, 1, 1]} : vector<5x1x128xf32> to vector<1x1x128xf32>
    %82 = vector.shape_cast %81 : vector<1x1x128xf32> to vector<1x128xf32>
    %83 = arith.addf %80, %82 : vector<1x128xf32>
    %84 = arith.subf %83, %9 : vector<1x128xf32>
    %85 = arith.mulf %8, %84 : vector<1x128xf32>
    %86 = vector.extract_strided_slice %85 {offsets = [0, 0], sizes = [1, 32], strides = [1, 1]} : vector<1x128xf32> to vector<1x32xf32>
    %87 = arith.negf %86 : vector<1x32xf32>
    %88 = math.exp %87 : vector<1x32xf32>
    %cst_30 = arith.constant 1.000000e+00 : f32
    %89 = vector.broadcast %cst_30 : f32 to vector<1x32xf32>
    %90 = arith.addf %89, %88 : vector<1x32xf32>
    %91 = arith.divf %89, %90 : vector<1x32xf32>
    %92 = vector.extract_strided_slice %85 {offsets = [0, 32], sizes = [1, 32], strides = [1, 1]} : vector<1x128xf32> to vector<1x32xf32>
    %93 = arith.negf %92 : vector<1x32xf32>
    %94 = math.exp %93 : vector<1x32xf32>
    %cst_31 = arith.constant 1.000000e+00 : f32
    %95 = vector.broadcast %cst_31 : f32 to vector<1x32xf32>
    %96 = arith.addf %95, %94 : vector<1x32xf32>
    %97 = arith.divf %95, %96 : vector<1x32xf32>
    %98 = vector.extract_strided_slice %85 {offsets = [0, 64], sizes = [1, 32], strides = [1, 1]} : vector<1x128xf32> to vector<1x32xf32>
    %99 = math.tanh %98 : vector<1x32xf32>
    %100 = vector.extract_strided_slice %85 {offsets = [0, 96], sizes = [1, 32], strides = [1, 1]} : vector<1x128xf32> to vector<1x32xf32>
    %101 = arith.negf %100 : vector<1x32xf32>
    %102 = math.exp %101 : vector<1x32xf32>
    %cst_32 = arith.constant 1.000000e+00 : f32
    %103 = vector.broadcast %cst_32 : f32 to vector<1x32xf32>
    %104 = arith.addf %103, %102 : vector<1x32xf32>
    %105 = arith.divf %103, %104 : vector<1x32xf32>
    %106 = vector.extract_strided_slice %18 {offsets = [0, 0], sizes = [1, 32], strides = [1, 1]} : vector<2x32xf32> to vector<1x32xf32>
    %107 = arith.mulf %91, %106 : vector<1x32xf32>
    %108 = arith.mulf %97, %99 : vector<1x32xf32>
    %109 = arith.addf %107, %108 : vector<1x32xf32>
    %110 = math.tanh %109 : vector<1x32xf32>
    %111 = arith.mulf %105, %110 : vector<1x32xf32>
    %c0_i32_33 = arith.constant 0 : i32
    %112 = vector.broadcast %c0_i32_33 : i32 to vector<2x1xi32>
    %113 = arith.cmpi eq, %15, %112 : vector<2x1xi32>
    %114 = arith.extui %113 : vector<2x1xi1> to vector<2x1xi32>
    %115 = arith.sitofp %114 : vector<2x1xi32> to vector<2x1xf32>
    %116 = vector.broadcast %115 : vector<2x1xf32> to vector<2x32xf32>
    %117 = vector.broadcast %111 : vector<1x32xf32> to vector<2x32xf32>
    %118 = arith.mulf %116, %117 : vector<2x32xf32>
    %119 = arith.addf %20, %118 : vector<2x32xf32>
    %120 = vector.broadcast %115 : vector<2x1xf32> to vector<2x32xf32>
    %121 = vector.broadcast %109 : vector<1x32xf32> to vector<2x32xf32>
    %122 = arith.mulf %120, %121 : vector<2x32xf32>
    %123 = arith.addf %21, %122 : vector<2x32xf32>
    %c0_34 = arith.constant 0 : index
    %c1 = arith.constant 1 : index
    %c0_35 = arith.constant 0 : index
    %c0_36 = arith.constant 0 : index
    %124 = vector.load %arg1[%c0_34, %c1, %c0_35, %c0_36] : memref<8x2x8x1xf32, #tpu.memory_space<vmem>>, vector<1x1x8x1xf32>
    %125 = vector.shape_cast %124 : vector<1x1x8x1xf32> to vector<8x1xf32>
    %126 = vector.extract_strided_slice %19 {offsets = [0, 1], sizes = [32, 1], strides = [1, 1]} : vector<32x2xf32> to vector<32x1xf32>
    %127 = vector.shape_cast %125 : vector<8x1xf32> to vector<1x8x1xf32>
    %128 = vector.broadcast %127 : vector<1x8x1xf32> to vector<5x8x128xf32>
    %129 = arith.mulf %128, %3 : vector<5x8x128xf32>
    %130 = arith.subf %129, %4 : vector<5x8x128xf32>
    %131 = vector.shape_cast %126 : vector<32x1xf32> to vector<1x32x1xf32>
    %132 = vector.broadcast %131 : vector<1x32x1xf32> to vector<5x32x128xf32>
    %133 = arith.mulf %132, %5 : vector<5x32x128xf32>
    %134 = arith.subf %133, %6 : vector<5x32x128xf32>
    %cst_37 = arith.constant 0.000000e+00 : f32
    %135 = vector.broadcast %cst_37 : f32 to vector<5x8x128xf32>
    %136 = arith.subf %135, %130 : vector<5x8x128xf32>
    %137 = math.exp %136 : vector<5x8x128xf32>
    %cst_38 = arith.constant 1.000000e+00 : f32
    %138 = vector.broadcast %cst_38 : f32 to vector<5x8x128xf32>
    %139 = arith.addf %138, %137 : vector<5x8x128xf32>
    %140 = vector.extract_strided_slice %139 {offsets = [0, 0, 0], sizes = [5, 4, 128], strides = [1, 1, 1]} : vector<5x8x128xf32> to vector<5x4x128xf32>
    %141 = vector.extract_strided_slice %139 {offsets = [0, 4, 0], sizes = [5, 4, 128], strides = [1, 1, 1]} : vector<5x8x128xf32> to vector<5x4x128xf32>
    %142 = arith.mulf %140, %141 : vector<5x4x128xf32>
    %143 = vector.extract_strided_slice %142 {offsets = [0, 0, 0], sizes = [5, 2, 128], strides = [1, 1, 1]} : vector<5x4x128xf32> to vector<5x2x128xf32>
    %144 = vector.extract_strided_slice %142 {offsets = [0, 2, 0], sizes = [5, 2, 128], strides = [1, 1, 1]} : vector<5x4x128xf32> to vector<5x2x128xf32>
    %145 = arith.mulf %143, %144 : vector<5x2x128xf32>
    %146 = vector.extract_strided_slice %145 {offsets = [0, 0, 0], sizes = [5, 1, 128], strides = [1, 1, 1]} : vector<5x2x128xf32> to vector<5x1x128xf32>
    %147 = vector.extract_strided_slice %145 {offsets = [0, 1, 0], sizes = [5, 1, 128], strides = [1, 1, 1]} : vector<5x2x128xf32> to vector<5x1x128xf32>
    %148 = arith.mulf %146, %147 : vector<5x1x128xf32>
    %cst_39 = arith.constant 0.000000e+00 : f32
    %149 = vector.broadcast %cst_39 : f32 to vector<5x32x128xf32>
    %150 = arith.subf %149, %134 : vector<5x32x128xf32>
    %151 = math.exp %150 : vector<5x32x128xf32>
    %cst_40 = arith.constant 1.000000e+00 : f32
    %152 = vector.broadcast %cst_40 : f32 to vector<5x32x128xf32>
    %153 = arith.addf %152, %151 : vector<5x32x128xf32>
    %154 = vector.extract_strided_slice %153 {offsets = [0, 0, 0], sizes = [5, 16, 128], strides = [1, 1, 1]} : vector<5x32x128xf32> to vector<5x16x128xf32>
    %155 = vector.extract_strided_slice %153 {offsets = [0, 16, 0], sizes = [5, 16, 128], strides = [1, 1, 1]} : vector<5x32x128xf32> to vector<5x16x128xf32>
    %156 = arith.mulf %154, %155 : vector<5x16x128xf32>
    %157 = vector.extract_strided_slice %156 {offsets = [0, 0, 0], sizes = [5, 8, 128], strides = [1, 1, 1]} : vector<5x16x128xf32> to vector<5x8x128xf32>
    %158 = vector.extract_strided_slice %156 {offsets = [0, 8, 0], sizes = [5, 8, 128], strides = [1, 1, 1]} : vector<5x16x128xf32> to vector<5x8x128xf32>
    %159 = arith.mulf %157, %158 : vector<5x8x128xf32>
    %160 = vector.extract_strided_slice %159 {offsets = [0, 0, 0], sizes = [5, 4, 128], strides = [1, 1, 1]} : vector<5x8x128xf32> to vector<5x4x128xf32>
    %161 = vector.extract_strided_slice %159 {offsets = [0, 4, 0], sizes = [5, 4, 128], strides = [1, 1, 1]} : vector<5x8x128xf32> to vector<5x4x128xf32>
    %162 = arith.mulf %160, %161 : vector<5x4x128xf32>
    %163 = vector.extract_strided_slice %162 {offsets = [0, 0, 0], sizes = [5, 2, 128], strides = [1, 1, 1]} : vector<5x4x128xf32> to vector<5x2x128xf32>
    %164 = vector.extract_strided_slice %162 {offsets = [0, 2, 0], sizes = [5, 2, 128], strides = [1, 1, 1]} : vector<5x4x128xf32> to vector<5x2x128xf32>
    %165 = arith.mulf %163, %164 : vector<5x2x128xf32>
    %166 = vector.extract_strided_slice %165 {offsets = [0, 0, 0], sizes = [5, 1, 128], strides = [1, 1, 1]} : vector<5x2x128xf32> to vector<5x1x128xf32>
    %167 = vector.extract_strided_slice %165 {offsets = [0, 1, 0], sizes = [5, 1, 128], strides = [1, 1, 1]} : vector<5x2x128xf32> to vector<5x1x128xf32>
    %168 = arith.mulf %166, %167 : vector<5x1x128xf32>
    %169 = arith.mulf %148, %168 : vector<5x1x128xf32>
    %cst_41 = arith.constant 1.000000e+00 : f32
    %170 = vector.broadcast %cst_41 : f32 to vector<5x1x128xf32>
    %171 = arith.divf %170, %169 : vector<5x1x128xf32>
    %172 = vector.extract_strided_slice %171 {offsets = [0, 0, 0], sizes = [1, 1, 128], strides = [1, 1, 1]} : vector<5x1x128xf32> to vector<1x1x128xf32>
    %173 = vector.shape_cast %172 : vector<1x1x128xf32> to vector<1x128xf32>
    %174 = vector.extract_strided_slice %171 {offsets = [1, 0, 0], sizes = [1, 1, 128], strides = [1, 1, 1]} : vector<5x1x128xf32> to vector<1x1x128xf32>
    %175 = vector.shape_cast %174 : vector<1x1x128xf32> to vector<1x128xf32>
    %176 = arith.addf %173, %175 : vector<1x128xf32>
    %177 = vector.extract_strided_slice %171 {offsets = [2, 0, 0], sizes = [1, 1, 128], strides = [1, 1, 1]} : vector<5x1x128xf32> to vector<1x1x128xf32>
    %178 = vector.shape_cast %177 : vector<1x1x128xf32> to vector<1x128xf32>
    %179 = arith.addf %176, %178 : vector<1x128xf32>
    %180 = vector.extract_strided_slice %171 {offsets = [3, 0, 0], sizes = [1, 1, 128], strides = [1, 1, 1]} : vector<5x1x128xf32> to vector<1x1x128xf32>
    %181 = vector.shape_cast %180 : vector<1x1x128xf32> to vector<1x128xf32>
    %182 = arith.addf %179, %181 : vector<1x128xf32>
    %183 = vector.extract_strided_slice %171 {offsets = [4, 0, 0], sizes = [1, 1, 128], strides = [1, 1, 1]} : vector<5x1x128xf32> to vector<1x1x128xf32>
    %184 = vector.shape_cast %183 : vector<1x1x128xf32> to vector<1x128xf32>
    %185 = arith.addf %182, %184 : vector<1x128xf32>
    %186 = arith.subf %185, %9 : vector<1x128xf32>
    %187 = arith.mulf %8, %186 : vector<1x128xf32>
    %188 = vector.extract_strided_slice %187 {offsets = [0, 0], sizes = [1, 32], strides = [1, 1]} : vector<1x128xf32> to vector<1x32xf32>
    %189 = arith.negf %188 : vector<1x32xf32>
    %190 = math.exp %189 : vector<1x32xf32>
    %cst_42 = arith.constant 1.000000e+00 : f32
    %191 = vector.broadcast %cst_42 : f32 to vector<1x32xf32>
    %192 = arith.addf %191, %190 : vector<1x32xf32>
    %193 = arith.divf %191, %192 : vector<1x32xf32>
    %194 = vector.extract_strided_slice %187 {offsets = [0, 32], sizes = [1, 32], strides = [1, 1]} : vector<1x128xf32> to vector<1x32xf32>
    %195 = arith.negf %194 : vector<1x32xf32>
    %196 = math.exp %195 : vector<1x32xf32>
    %cst_43 = arith.constant 1.000000e+00 : f32
    %197 = vector.broadcast %cst_43 : f32 to vector<1x32xf32>
    %198 = arith.addf %197, %196 : vector<1x32xf32>
    %199 = arith.divf %197, %198 : vector<1x32xf32>
    %200 = vector.extract_strided_slice %187 {offsets = [0, 64], sizes = [1, 32], strides = [1, 1]} : vector<1x128xf32> to vector<1x32xf32>
    %201 = math.tanh %200 : vector<1x32xf32>
    %202 = vector.extract_strided_slice %187 {offsets = [0, 96], sizes = [1, 32], strides = [1, 1]} : vector<1x128xf32> to vector<1x32xf32>
    %203 = arith.negf %202 : vector<1x32xf32>
    %204 = math.exp %203 : vector<1x32xf32>
    %cst_44 = arith.constant 1.000000e+00 : f32
    %205 = vector.broadcast %cst_44 : f32 to vector<1x32xf32>
    %206 = arith.addf %205, %204 : vector<1x32xf32>
    %207 = arith.divf %205, %206 : vector<1x32xf32>
    %208 = vector.extract_strided_slice %18 {offsets = [1, 0], sizes = [1, 32], strides = [1, 1]} : vector<2x32xf32> to vector<1x32xf32>
    %209 = arith.mulf %193, %208 : vector<1x32xf32>
    %210 = arith.mulf %199, %201 : vector<1x32xf32>
    %211 = arith.addf %209, %210 : vector<1x32xf32>
    %212 = math.tanh %211 : vector<1x32xf32>
    %213 = arith.mulf %207, %212 : vector<1x32xf32>
    %c1_i32 = arith.constant 1 : i32
    %214 = vector.broadcast %c1_i32 : i32 to vector<2x1xi32>
    %215 = arith.cmpi eq, %15, %214 : vector<2x1xi32>
    %216 = arith.extui %215 : vector<2x1xi1> to vector<2x1xi32>
    %217 = arith.sitofp %216 : vector<2x1xi32> to vector<2x1xf32>
    %218 = vector.broadcast %217 : vector<2x1xf32> to vector<2x32xf32>
    %219 = vector.broadcast %213 : vector<1x32xf32> to vector<2x32xf32>
    %220 = arith.mulf %218, %219 : vector<2x32xf32>
    %221 = arith.addf %119, %220 : vector<2x32xf32>
    %222 = vector.broadcast %217 : vector<2x1xf32> to vector<2x32xf32>
    %223 = vector.broadcast %211 : vector<1x32xf32> to vector<2x32xf32>
    %224 = arith.mulf %222, %223 : vector<2x32xf32>
    %225 = arith.addf %123, %224 : vector<2x32xf32>
    %c0_45 = arith.constant 0 : index
    %c0_46 = arith.constant 0 : index
    %226 = vector.load %arg9[%c0_45, %c0_46] : memref<2x32xf32, #tpu.memory_space<vmem>>, vector<2x32xf32>
    tpu.vector_store %arg9[%c0_45, %c0_46], %221 {strides = array<i32>} : memref<2x32xf32, #tpu.memory_space<vmem>>, vector<2x32xf32>,
    %c0_47 = arith.constant 0 : index
    %c0_48 = arith.constant 0 : index
    %c0_49 = arith.constant 0 : index
    %227 = vector.load %arg8[%c0_47, %c0_48, %c0_49] : memref<1x2x32xf32, #tpu.memory_space<vmem>>, vector<1x2x32xf32>
    %228 = vector.shape_cast %227 : vector<1x2x32xf32> to vector<2x32xf32>
    %229 = vector.shape_cast %225 : vector<2x32xf32> to vector<1x2x32xf32>
    tpu.vector_store %arg8[%c0_47, %c0_48, %c0_49], %229 {strides = array<i32>} : memref<1x2x32xf32, #tpu.memory_space<vmem>>, vector<1x2x32xf32>,
    %c0_50 = arith.constant 0 : index
    %c0_51 = arith.constant 0 : index
    %c0_52 = arith.constant 0 : index
    %230 = vector.load %arg7[%c0_50, %c0_51, %c0_52] : memref<8x2x32xf32, #tpu.memory_space<vmem>>, vector<1x2x32xf32>
    %231 = vector.shape_cast %230 : vector<1x2x32xf32> to vector<2x32xf32>
    %232 = vector.shape_cast %221 : vector<2x32xf32> to vector<1x2x32xf32>
    tpu.vector_store %arg7[%c0_50, %c0_51, %c0_52], %232 {strides = array<i32>} : memref<8x2x32xf32, #tpu.memory_space<vmem>>, vector<1x2x32xf32>,
    %c0_53 = arith.constant 0 : index
    %c0_54 = arith.constant 0 : index
    %233 = vector.load %arg9[%c0_53, %c0_54] : memref<2x32xf32, #tpu.memory_space<vmem>>, vector<2x32xf32>
    %c0_55 = arith.constant 0 : index
    %c0_56 = arith.constant 0 : index
    %c0_57 = arith.constant 0 : index
    %234 = vector.load %arg8[%c0_55, %c0_56, %c0_57] : memref<1x2x32xf32, #tpu.memory_space<vmem>>, vector<1x2x32xf32>
    %235 = vector.shape_cast %234 : vector<1x2x32xf32> to vector<2x32xf32>
    %cst_58 = arith.constant dense<0.000000e+00> : vector<32x2xf32>
    %236 = tpu.matmul %14, %233, %cst_58 {dimension_numbers = #tpu.dot_dimension_numbers<[1], [1], [0], [0], [0, 0, 1, 0], [], []>} : vector<32x32xf32>, vector<2x32xf32>, vector<32x2xf32> -> vector<32x2xf32>
    %cst_59 = arith.constant 0.000000e+00 : f32
    %237 = vector.broadcast %cst_59 : f32 to vector<2x32xf32>
    %cst_60 = arith.constant 0.000000e+00 : f32
    %238 = vector.broadcast %cst_60 : f32 to vector<2x32xf32>
    %c1_61 = arith.constant 1 : index
    %c0_62 = arith.constant 0 : index
    %c0_63 = arith.constant 0 : index
    %c0_64 = arith.constant 0 : index
    %239 = vector.load %arg1[%c1_61, %c0_62, %c0_63, %c0_64] : memref<8x2x8x1xf32, #tpu.memory_space<vmem>>, vector<1x1x8x1xf32>
    %240 = vector.shape_cast %239 : vector<1x1x8x1xf32> to vector<8x1xf32>
    %241 = vector.extract_strided_slice %236 {offsets = [0, 0], sizes = [32, 1], strides = [1, 1]} : vector<32x2xf32> to vector<32x1xf32>
    %242 = vector.shape_cast %240 : vector<8x1xf32> to vector<1x8x1xf32>
    %243 = vector.broadcast %242 : vector<1x8x1xf32> to vector<5x8x128xf32>
    %244 = arith.mulf %243, %3 : vector<5x8x128xf32>
    %245 = arith.subf %244, %4 : vector<5x8x128xf32>
    %246 = vector.shape_cast %241 : vector<32x1xf32> to vector<1x32x1xf32>
    %247 = vector.broadcast %246 : vector<1x32x1xf32> to vector<5x32x128xf32>
    %248 = arith.mulf %247, %5 : vector<5x32x128xf32>
    %249 = arith.subf %248, %6 : vector<5x32x128xf32>
    %cst_65 = arith.constant 0.000000e+00 : f32
    %250 = vector.broadcast %cst_65 : f32 to vector<5x8x128xf32>
    %251 = arith.subf %250, %245 : vector<5x8x128xf32>
    %252 = math.exp %251 : vector<5x8x128xf32>
    %cst_66 = arith.constant 1.000000e+00 : f32
    %253 = vector.broadcast %cst_66 : f32 to vector<5x8x128xf32>
    %254 = arith.addf %253, %252 : vector<5x8x128xf32>
    %255 = vector.extract_strided_slice %254 {offsets = [0, 0, 0], sizes = [5, 4, 128], strides = [1, 1, 1]} : vector<5x8x128xf32> to vector<5x4x128xf32>
    %256 = vector.extract_strided_slice %254 {offsets = [0, 4, 0], sizes = [5, 4, 128], strides = [1, 1, 1]} : vector<5x8x128xf32> to vector<5x4x128xf32>
    %257 = arith.mulf %255, %256 : vector<5x4x128xf32>
    %258 = vector.extract_strided_slice %257 {offsets = [0, 0, 0], sizes = [5, 2, 128], strides = [1, 1, 1]} : vector<5x4x128xf32> to vector<5x2x128xf32>
    %259 = vector.extract_strided_slice %257 {offsets = [0, 2, 0], sizes = [5, 2, 128], strides = [1, 1, 1]} : vector<5x4x128xf32> to vector<5x2x128xf32>
    %260 = arith.mulf %258, %259 : vector<5x2x128xf32>
    %261 = vector.extract_strided_slice %260 {offsets = [0, 0, 0], sizes = [5, 1, 128], strides = [1, 1, 1]} : vector<5x2x128xf32> to vector<5x1x128xf32>
    %262 = vector.extract_strided_slice %260 {offsets = [0, 1, 0], sizes = [5, 1, 128], strides = [1, 1, 1]} : vector<5x2x128xf32> to vector<5x1x128xf32>
    %263 = arith.mulf %261, %262 : vector<5x1x128xf32>
    %cst_67 = arith.constant 0.000000e+00 : f32
    %264 = vector.broadcast %cst_67 : f32 to vector<5x32x128xf32>
    %265 = arith.subf %264, %249 : vector<5x32x128xf32>
    %266 = math.exp %265 : vector<5x32x128xf32>
    %cst_68 = arith.constant 1.000000e+00 : f32
    %267 = vector.broadcast %cst_68 : f32 to vector<5x32x128xf32>
    %268 = arith.addf %267, %266 : vector<5x32x128xf32>
    %269 = vector.extract_strided_slice %268 {offsets = [0, 0, 0], sizes = [5, 16, 128], strides = [1, 1, 1]} : vector<5x32x128xf32> to vector<5x16x128xf32>
    %270 = vector.extract_strided_slice %268 {offsets = [0, 16, 0], sizes = [5, 16, 128], strides = [1, 1, 1]} : vector<5x32x128xf32> to vector<5x16x128xf32>
    %271 = arith.mulf %269, %270 : vector<5x16x128xf32>
    %272 = vector.extract_strided_slice %271 {offsets = [0, 0, 0], sizes = [5, 8, 128], strides = [1, 1, 1]} : vector<5x16x128xf32> to vector<5x8x128xf32>
    %273 = vector.extract_strided_slice %271 {offsets = [0, 8, 0], sizes = [5, 8, 128], strides = [1, 1, 1]} : vector<5x16x128xf32> to vector<5x8x128xf32>
    %274 = arith.mulf %272, %273 : vector<5x8x128xf32>
    %275 = vector.extract_strided_slice %274 {offsets = [0, 0, 0], sizes = [5, 4, 128], strides = [1, 1, 1]} : vector<5x8x128xf32> to vector<5x4x128xf32>
    %276 = vector.extract_strided_slice %274 {offsets = [0, 4, 0], sizes = [5, 4, 128], strides = [1, 1, 1]} : vector<5x8x128xf32> to vector<5x4x128xf32>
    %277 = arith.mulf %275, %276 : vector<5x4x128xf32>
    %278 = vector.extract_strided_slice %277 {offsets = [0, 0, 0], sizes = [5, 2, 128], strides = [1, 1, 1]} : vector<5x4x128xf32> to vector<5x2x128xf32>
    %279 = vector.extract_strided_slice %277 {offsets = [0, 2, 0], sizes = [5, 2, 128], strides = [1, 1, 1]} : vector<5x4x128xf32> to vector<5x2x128xf32>
    %280 = arith.mulf %278, %279 : vector<5x2x128xf32>
    %281 = vector.extract_strided_slice %280 {offsets = [0, 0, 0], sizes = [5, 1, 128], strides = [1, 1, 1]} : vector<5x2x128xf32> to vector<5x1x128xf32>
    %282 = vector.extract_strided_slice %280 {offsets = [0, 1, 0], sizes = [5, 1, 128], strides = [1, 1, 1]} : vector<5x2x128xf32> to vector<5x1x128xf32>
    %283 = arith.mulf %281, %282 : vector<5x1x128xf32>
    %284 = arith.mulf %263, %283 : vector<5x1x128xf32>
    %cst_69 = arith.constant 1.000000e+00 : f32
    %285 = vector.broadcast %cst_69 : f32 to vector<5x1x128xf32>
    %286 = arith.divf %285, %284 : vector<5x1x128xf32>
    %287 = vector.extract_strided_slice %286 {offsets = [0, 0, 0], sizes = [1, 1, 128], strides = [1, 1, 1]} : vector<5x1x128xf32> to vector<1x1x128xf32>
    %288 = vector.shape_cast %287 : vector<1x1x128xf32> to vector<1x128xf32>
    %289 = vector.extract_strided_slice %286 {offsets = [1, 0, 0], sizes = [1, 1, 128], strides = [1, 1, 1]} : vector<5x1x128xf32> to vector<1x1x128xf32>
    %290 = vector.shape_cast %289 : vector<1x1x128xf32> to vector<1x128xf32>
    %291 = arith.addf %288, %290 : vector<1x128xf32>
    %292 = vector.extract_strided_slice %286 {offsets = [2, 0, 0], sizes = [1, 1, 128], strides = [1, 1, 1]} : vector<5x1x128xf32> to vector<1x1x128xf32>
    %293 = vector.shape_cast %292 : vector<1x1x128xf32> to vector<1x128xf32>
    %294 = arith.addf %291, %293 : vector<1x128xf32>
    %295 = vector.extract_strided_slice %286 {offsets = [3, 0, 0], sizes = [1, 1, 128], strides = [1, 1, 1]} : vector<5x1x128xf32> to vector<1x1x128xf32>
    %296 = vector.shape_cast %295 : vector<1x1x128xf32> to vector<1x128xf32>
    %297 = arith.addf %294, %296 : vector<1x128xf32>
    %298 = vector.extract_strided_slice %286 {offsets = [4, 0, 0], sizes = [1, 1, 128], strides = [1, 1, 1]} : vector<5x1x128xf32> to vector<1x1x128xf32>
    %299 = vector.shape_cast %298 : vector<1x1x128xf32> to vector<1x128xf32>
    %300 = arith.addf %297, %299 : vector<1x128xf32>
    %301 = arith.subf %300, %9 : vector<1x128xf32>
    %302 = arith.mulf %8, %301 : vector<1x128xf32>
    %303 = vector.extract_strided_slice %302 {offsets = [0, 0], sizes = [1, 32], strides = [1, 1]} : vector<1x128xf32> to vector<1x32xf32>
    %304 = arith.negf %303 : vector<1x32xf32>
    %305 = math.exp %304 : vector<1x32xf32>
    %cst_70 = arith.constant 1.000000e+00 : f32
    %306 = vector.broadcast %cst_70 : f32 to vector<1x32xf32>
    %307 = arith.addf %306, %305 : vector<1x32xf32>
    %308 = arith.divf %306, %307 : vector<1x32xf32>
    %309 = vector.extract_strided_slice %302 {offsets = [0, 32], sizes = [1, 32], strides = [1, 1]} : vector<1x128xf32> to vector<1x32xf32>
    %310 = arith.negf %309 : vector<1x32xf32>
    %311 = math.exp %310 : vector<1x32xf32>
    %cst_71 = arith.constant 1.000000e+00 : f32
    %312 = vector.broadcast %cst_71 : f32 to vector<1x32xf32>
    %313 = arith.addf %312, %311 : vector<1x32xf32>
    %314 = arith.divf %312, %313 : vector<1x32xf32>
    %315 = vector.extract_strided_slice %302 {offsets = [0, 64], sizes = [1, 32], strides = [1, 1]} : vector<1x128xf32> to vector<1x32xf32>
    %316 = math.tanh %315 : vector<1x32xf32>
    %317 = vector.extract_strided_slice %302 {offsets = [0, 96], sizes = [1, 32], strides = [1, 1]} : vector<1x128xf32> to vector<1x32xf32>
    %318 = arith.negf %317 : vector<1x32xf32>
    %319 = math.exp %318 : vector<1x32xf32>
    %cst_72 = arith.constant 1.000000e+00 : f32
    %320 = vector.broadcast %cst_72 : f32 to vector<1x32xf32>
    %321 = arith.addf %320, %319 : vector<1x32xf32>
    %322 = arith.divf %320, %321 : vector<1x32xf32>
    %323 = vector.extract_strided_slice %235 {offsets = [0, 0], sizes = [1, 32], strides = [1, 1]} : vector<2x32xf32> to vector<1x32xf32>
    %324 = arith.mulf %308, %323 : vector<1x32xf32>
    %325 = arith.mulf %314, %316 : vector<1x32xf32>
    %326 = arith.addf %324, %325 : vector<1x32xf32>
    %327 = math.tanh %326 : vector<1x32xf32>
    %328 = arith.mulf %322, %327 : vector<1x32xf32>
    %c0_i32_73 = arith.constant 0 : i32
    %329 = vector.broadcast %c0_i32_73 : i32 to vector<2x1xi32>
    %330 = arith.cmpi eq, %15, %329 : vector<2x1xi32>
    %331 = arith.extui %330 : vector<2x1xi1> to vector<2x1xi32>
    %332 = arith.sitofp %331 : vector<2x1xi32> to vector<2x1xf32>
    %333 = vector.broadcast %332 : vector<2x1xf32> to vector<2x32xf32>
    %334 = vector.broadcast %328 : vector<1x32xf32> to vector<2x32xf32>
    %335 = arith.mulf %333, %334 : vector<2x32xf32>
    %336 = arith.addf %237, %335 : vector<2x32xf32>
    %337 = vector.broadcast %332 : vector<2x1xf32> to vector<2x32xf32>
    %338 = vector.broadcast %326 : vector<1x32xf32> to vector<2x32xf32>
    %339 = arith.mulf %337, %338 : vector<2x32xf32>
    %340 = arith.addf %238, %339 : vector<2x32xf32>
    %c1_74 = arith.constant 1 : index
    %c1_75 = arith.constant 1 : index
    %c0_76 = arith.constant 0 : index
    %c0_77 = arith.constant 0 : index
    %341 = vector.load %arg1[%c1_74, %c1_75, %c0_76, %c0_77] : memref<8x2x8x1xf32, #tpu.memory_space<vmem>>, vector<1x1x8x1xf32>
    %342 = vector.shape_cast %341 : vector<1x1x8x1xf32> to vector<8x1xf32>
    %343 = vector.extract_strided_slice %236 {offsets = [0, 1], sizes = [32, 1], strides = [1, 1]} : vector<32x2xf32> to vector<32x1xf32>
    %344 = vector.shape_cast %342 : vector<8x1xf32> to vector<1x8x1xf32>
    %345 = vector.broadcast %344 : vector<1x8x1xf32> to vector<5x8x128xf32>
    %346 = arith.mulf %345, %3 : vector<5x8x128xf32>
    %347 = arith.subf %346, %4 : vector<5x8x128xf32>
    %348 = vector.shape_cast %343 : vector<32x1xf32> to vector<1x32x1xf32>
    %349 = vector.broadcast %348 : vector<1x32x1xf32> to vector<5x32x128xf32>
    %350 = arith.mulf %349, %5 : vector<5x32x128xf32>
    %351 = arith.subf %350, %6 : vector<5x32x128xf32>
    %cst_78 = arith.constant 0.000000e+00 : f32
    %352 = vector.broadcast %cst_78 : f32 to vector<5x8x128xf32>
    %353 = arith.subf %352, %347 : vector<5x8x128xf32>
    %354 = math.exp %353 : vector<5x8x128xf32>
    %cst_79 = arith.constant 1.000000e+00 : f32
    %355 = vector.broadcast %cst_79 : f32 to vector<5x8x128xf32>
    %356 = arith.addf %355, %354 : vector<5x8x128xf32>
    %357 = vector.extract_strided_slice %356 {offsets = [0, 0, 0], sizes = [5, 4, 128], strides = [1, 1, 1]} : vector<5x8x128xf32> to vector<5x4x128xf32>
    %358 = vector.extract_strided_slice %356 {offsets = [0, 4, 0], sizes = [5, 4, 128], strides = [1, 1, 1]} : vector<5x8x128xf32> to vector<5x4x128xf32>
    %359 = arith.mulf %357, %358 : vector<5x4x128xf32>
    %360 = vector.extract_strided_slice %359 {offsets = [0, 0, 0], sizes = [5, 2, 128], strides = [1, 1, 1]} : vector<5x4x128xf32> to vector<5x2x128xf32>
    %361 = vector.extract_strided_slice %359 {offsets = [0, 2, 0], sizes = [5, 2, 128], strides = [1, 1, 1]} : vector<5x4x128xf32> to vector<5x2x128xf32>
    %362 = arith.mulf %360, %361 : vector<5x2x128xf32>
    %363 = vector.extract_strided_slice %362 {offsets = [0, 0, 0], sizes = [5, 1, 128], strides = [1, 1, 1]} : vector<5x2x128xf32> to vector<5x1x128xf32>
    %364 = vector.extract_strided_slice %362 {offsets = [0, 1, 0], sizes = [5, 1, 128], strides = [1, 1, 1]} : vector<5x2x128xf32> to vector<5x1x128xf32>
    %365 = arith.mulf %363, %364 : vector<5x1x128xf32>
    %cst_80 = arith.constant 0.000000e+00 : f32
    %366 = vector.broadcast %cst_80 : f32 to vector<5x32x128xf32>
    %367 = arith.subf %366, %351 : vector<5x32x128xf32>
    %368 = math.exp %367 : vector<5x32x128xf32>
    %cst_81 = arith.constant 1.000000e+00 : f32
    %369 = vector.broadcast %cst_81 : f32 to vector<5x32x128xf32>
    %370 = arith.addf %369, %368 : vector<5x32x128xf32>
    %371 = vector.extract_strided_slice %370 {offsets = [0, 0, 0], sizes = [5, 16, 128], strides = [1, 1, 1]} : vector<5x32x128xf32> to vector<5x16x128xf32>
    %372 = vector.extract_strided_slice %370 {offsets = [0, 16, 0], sizes = [5, 16, 128], strides = [1, 1, 1]} : vector<5x32x128xf32> to vector<5x16x128xf32>
    %373 = arith.mulf %371, %372 : vector<5x16x128xf32>
    %374 = vector.extract_strided_slice %373 {offsets = [0, 0, 0], sizes = [5, 8, 128], strides = [1, 1, 1]} : vector<5x16x128xf32> to vector<5x8x128xf32>
    %375 = vector.extract_strided_slice %373 {offsets = [0, 8, 0], sizes = [5, 8, 128], strides = [1, 1, 1]} : vector<5x16x128xf32> to vector<5x8x128xf32>
    %376 = arith.mulf %374, %375 : vector<5x8x128xf32>
    %377 = vector.extract_strided_slice %376 {offsets = [0, 0, 0], sizes = [5, 4, 128], strides = [1, 1, 1]} : vector<5x8x128xf32> to vector<5x4x128xf32>
    %378 = vector.extract_strided_slice %376 {offsets = [0, 4, 0], sizes = [5, 4, 128], strides = [1, 1, 1]} : vector<5x8x128xf32> to vector<5x4x128xf32>
    %379 = arith.mulf %377, %378 : vector<5x4x128xf32>
    %380 = vector.extract_strided_slice %379 {offsets = [0, 0, 0], sizes = [5, 2, 128], strides = [1, 1, 1]} : vector<5x4x128xf32> to vector<5x2x128xf32>
    %381 = vector.extract_strided_slice %379 {offsets = [0, 2, 0], sizes = [5, 2, 128], strides = [1, 1, 1]} : vector<5x4x128xf32> to vector<5x2x128xf32>
    %382 = arith.mulf %380, %381 : vector<5x2x128xf32>
    %383 = vector.extract_strided_slice %382 {offsets = [0, 0, 0], sizes = [5, 1, 128], strides = [1, 1, 1]} : vector<5x2x128xf32> to vector<5x1x128xf32>
    %384 = vector.extract_strided_slice %382 {offsets = [0, 1, 0], sizes = [5, 1, 128], strides = [1, 1, 1]} : vector<5x2x128xf32> to vector<5x1x128xf32>
    %385 = arith.mulf %383, %384 : vector<5x1x128xf32>
    %386 = arith.mulf %365, %385 : vector<5x1x128xf32>
    %cst_82 = arith.constant 1.000000e+00 : f32
    %387 = vector.broadcast %cst_82 : f32 to vector<5x1x128xf32>
    %388 = arith.divf %387, %386 : vector<5x1x128xf32>
    %389 = vector.extract_strided_slice %388 {offsets = [0, 0, 0], sizes = [1, 1, 128], strides = [1, 1, 1]} : vector<5x1x128xf32> to vector<1x1x128xf32>
    %390 = vector.shape_cast %389 : vector<1x1x128xf32> to vector<1x128xf32>
    %391 = vector.extract_strided_slice %388 {offsets = [1, 0, 0], sizes = [1, 1, 128], strides = [1, 1, 1]} : vector<5x1x128xf32> to vector<1x1x128xf32>
    %392 = vector.shape_cast %391 : vector<1x1x128xf32> to vector<1x128xf32>
    %393 = arith.addf %390, %392 : vector<1x128xf32>
    %394 = vector.extract_strided_slice %388 {offsets = [2, 0, 0], sizes = [1, 1, 128], strides = [1, 1, 1]} : vector<5x1x128xf32> to vector<1x1x128xf32>
    %395 = vector.shape_cast %394 : vector<1x1x128xf32> to vector<1x128xf32>
    %396 = arith.addf %393, %395 : vector<1x128xf32>
    %397 = vector.extract_strided_slice %388 {offsets = [3, 0, 0], sizes = [1, 1, 128], strides = [1, 1, 1]} : vector<5x1x128xf32> to vector<1x1x128xf32>
    %398 = vector.shape_cast %397 : vector<1x1x128xf32> to vector<1x128xf32>
    %399 = arith.addf %396, %398 : vector<1x128xf32>
    %400 = vector.extract_strided_slice %388 {offsets = [4, 0, 0], sizes = [1, 1, 128], strides = [1, 1, 1]} : vector<5x1x128xf32> to vector<1x1x128xf32>
    %401 = vector.shape_cast %400 : vector<1x1x128xf32> to vector<1x128xf32>
    %402 = arith.addf %399, %401 : vector<1x128xf32>
    %403 = arith.subf %402, %9 : vector<1x128xf32>
    %404 = arith.mulf %8, %403 : vector<1x128xf32>
    %405 = vector.extract_strided_slice %404 {offsets = [0, 0], sizes = [1, 32], strides = [1, 1]} : vector<1x128xf32> to vector<1x32xf32>
    %406 = arith.negf %405 : vector<1x32xf32>
    %407 = math.exp %406 : vector<1x32xf32>
    %cst_83 = arith.constant 1.000000e+00 : f32
    %408 = vector.broadcast %cst_83 : f32 to vector<1x32xf32>
    %409 = arith.addf %408, %407 : vector<1x32xf32>
    %410 = arith.divf %408, %409 : vector<1x32xf32>
    %411 = vector.extract_strided_slice %404 {offsets = [0, 32], sizes = [1, 32], strides = [1, 1]} : vector<1x128xf32> to vector<1x32xf32>
    %412 = arith.negf %411 : vector<1x32xf32>
    %413 = math.exp %412 : vector<1x32xf32>
    %cst_84 = arith.constant 1.000000e+00 : f32
    %414 = vector.broadcast %cst_84 : f32 to vector<1x32xf32>
    %415 = arith.addf %414, %413 : vector<1x32xf32>
    %416 = arith.divf %414, %415 : vector<1x32xf32>
    %417 = vector.extract_strided_slice %404 {offsets = [0, 64], sizes = [1, 32], strides = [1, 1]} : vector<1x128xf32> to vector<1x32xf32>
    %418 = math.tanh %417 : vector<1x32xf32>
    %419 = vector.extract_strided_slice %404 {offsets = [0, 96], sizes = [1, 32], strides = [1, 1]} : vector<1x128xf32> to vector<1x32xf32>
    %420 = arith.negf %419 : vector<1x32xf32>
    %421 = math.exp %420 : vector<1x32xf32>
    %cst_85 = arith.constant 1.000000e+00 : f32
    %422 = vector.broadcast %cst_85 : f32 to vector<1x32xf32>
    %423 = arith.addf %422, %421 : vector<1x32xf32>
    %424 = arith.divf %422, %423 : vector<1x32xf32>
    %425 = vector.extract_strided_slice %235 {offsets = [1, 0], sizes = [1, 32], strides = [1, 1]} : vector<2x32xf32> to vector<1x32xf32>
    %426 = arith.mulf %410, %425 : vector<1x32xf32>
    %427 = arith.mulf %416, %418 : vector<1x32xf32>
    %428 = arith.addf %426, %427 : vector<1x32xf32>
    %429 = math.tanh %428 : vector<1x32xf32>
    %430 = arith.mulf %424, %429 : vector<1x32xf32>
    %c1_i32_86 = arith.constant 1 : i32
    %431 = vector.broadcast %c1_i32_86 : i32 to vector<2x1xi32>
    %432 = arith.cmpi eq, %15, %431 : vector<2x1xi32>
    %433 = arith.extui %432 : vector<2x1xi1> to vector<2x1xi32>
    %434 = arith.sitofp %433 : vector<2x1xi32> to vector<2x1xf32>
    %435 = vector.broadcast %434 : vector<2x1xf32> to vector<2x32xf32>
    %436 = vector.broadcast %430 : vector<1x32xf32> to vector<2x32xf32>
    %437 = arith.mulf %435, %436 : vector<2x32xf32>
    %438 = arith.addf %336, %437 : vector<2x32xf32>
    %439 = vector.broadcast %434 : vector<2x1xf32> to vector<2x32xf32>
    %440 = vector.broadcast %428 : vector<1x32xf32> to vector<2x32xf32>
    %441 = arith.mulf %439, %440 : vector<2x32xf32>
    %442 = arith.addf %340, %441 : vector<2x32xf32>
    %c0_87 = arith.constant 0 : index
    %c0_88 = arith.constant 0 : index
    %443 = vector.load %arg9[%c0_87, %c0_88] : memref<2x32xf32, #tpu.memory_space<vmem>>, vector<2x32xf32>
    tpu.vector_store %arg9[%c0_87, %c0_88], %438 {strides = array<i32>} : memref<2x32xf32, #tpu.memory_space<vmem>>, vector<2x32xf32>,
    %c0_89 = arith.constant 0 : index
    %c0_90 = arith.constant 0 : index
    %c0_91 = arith.constant 0 : index
    %444 = vector.load %arg8[%c0_89, %c0_90, %c0_91] : memref<1x2x32xf32, #tpu.memory_space<vmem>>, vector<1x2x32xf32>
    %445 = vector.shape_cast %444 : vector<1x2x32xf32> to vector<2x32xf32>
    %446 = vector.shape_cast %442 : vector<2x32xf32> to vector<1x2x32xf32>
    tpu.vector_store %arg8[%c0_89, %c0_90, %c0_91], %446 {strides = array<i32>} : memref<1x2x32xf32, #tpu.memory_space<vmem>>, vector<1x2x32xf32>,
    %c1_92 = arith.constant 1 : index
    %c0_93 = arith.constant 0 : index
    %c0_94 = arith.constant 0 : index
    %447 = vector.load %arg7[%c1_92, %c0_93, %c0_94] : memref<8x2x32xf32, #tpu.memory_space<vmem>>, vector<1x2x32xf32>
    %448 = vector.shape_cast %447 : vector<1x2x32xf32> to vector<2x32xf32>
    %449 = vector.shape_cast %438 : vector<2x32xf32> to vector<1x2x32xf32>
    tpu.vector_store %arg7[%c1_92, %c0_93, %c0_94], %449 {strides = array<i32>} : memref<8x2x32xf32, #tpu.memory_space<vmem>>, vector<1x2x32xf32>,
    %c0_95 = arith.constant 0 : index
    %c0_96 = arith.constant 0 : index
    %450 = vector.load %arg9[%c0_95, %c0_96] : memref<2x32xf32, #tpu.memory_space<vmem>>, vector<2x32xf32>
    %c0_97 = arith.constant 0 : index
    %c0_98 = arith.constant 0 : index
    %c0_99 = arith.constant 0 : index
    %451 = vector.load %arg8[%c0_97, %c0_98, %c0_99] : memref<1x2x32xf32, #tpu.memory_space<vmem>>, vector<1x2x32xf32>
    %452 = vector.shape_cast %451 : vector<1x2x32xf32> to vector<2x32xf32>
    %cst_100 = arith.constant dense<0.000000e+00> : vector<32x2xf32>
    %453 = tpu.matmul %14, %450, %cst_100 {dimension_numbers = #tpu.dot_dimension_numbers<[1], [1], [0], [0], [0, 0, 1, 0], [], []>} : vector<32x32xf32>, vector<2x32xf32>, vector<32x2xf32> -> vector<32x2xf32>
    %cst_101 = arith.constant 0.000000e+00 : f32
    %454 = vector.broadcast %cst_101 : f32 to vector<2x32xf32>
    %cst_102 = arith.constant 0.000000e+00 : f32
    %455 = vector.broadcast %cst_102 : f32 to vector<2x32xf32>
    %c2 = arith.constant 2 : index
    %c0_103 = arith.constant 0 : index
    %c0_104 = arith.constant 0 : index
    %c0_105 = arith.constant 0 : index
    %456 = vector.load %arg1[%c2, %c0_103, %c0_104, %c0_105] : memref<8x2x8x1xf32, #tpu.memory_space<vmem>>, vector<1x1x8x1xf32>
    %457 = vector.shape_cast %456 : vector<1x1x8x1xf32> to vector<8x1xf32>
    %458 = vector.extract_strided_slice %453 {offsets = [0, 0], sizes = [32, 1], strides = [1, 1]} : vector<32x2xf32> to vector<32x1xf32>
    %459 = vector.shape_cast %457 : vector<8x1xf32> to vector<1x8x1xf32>
    %460 = vector.broadcast %459 : vector<1x8x1xf32> to vector<5x8x128xf32>
    %461 = arith.mulf %460, %3 : vector<5x8x128xf32>
    %462 = arith.subf %461, %4 : vector<5x8x128xf32>
    %463 = vector.shape_cast %458 : vector<32x1xf32> to vector<1x32x1xf32>
    %464 = vector.broadcast %463 : vector<1x32x1xf32> to vector<5x32x128xf32>
    %465 = arith.mulf %464, %5 : vector<5x32x128xf32>
    %466 = arith.subf %465, %6 : vector<5x32x128xf32>
    %cst_106 = arith.constant 0.000000e+00 : f32
    %467 = vector.broadcast %cst_106 : f32 to vector<5x8x128xf32>
    %468 = arith.subf %467, %462 : vector<5x8x128xf32>
    %469 = math.exp %468 : vector<5x8x128xf32>
    %cst_107 = arith.constant 1.000000e+00 : f32
    %470 = vector.broadcast %cst_107 : f32 to vector<5x8x128xf32>
    %471 = arith.addf %470, %469 : vector<5x8x128xf32>
    %472 = vector.extract_strided_slice %471 {offsets = [0, 0, 0], sizes = [5, 4, 128], strides = [1, 1, 1]} : vector<5x8x128xf32> to vector<5x4x128xf32>
    %473 = vector.extract_strided_slice %471 {offsets = [0, 4, 0], sizes = [5, 4, 128], strides = [1, 1, 1]} : vector<5x8x128xf32> to vector<5x4x128xf32>
    %474 = arith.mulf %472, %473 : vector<5x4x128xf32>
    %475 = vector.extract_strided_slice %474 {offsets = [0, 0, 0], sizes = [5, 2, 128], strides = [1, 1, 1]} : vector<5x4x128xf32> to vector<5x2x128xf32>
    %476 = vector.extract_strided_slice %474 {offsets = [0, 2, 0], sizes = [5, 2, 128], strides = [1, 1, 1]} : vector<5x4x128xf32> to vector<5x2x128xf32>
    %477 = arith.mulf %475, %476 : vector<5x2x128xf32>
    %478 = vector.extract_strided_slice %477 {offsets = [0, 0, 0], sizes = [5, 1, 128], strides = [1, 1, 1]} : vector<5x2x128xf32> to vector<5x1x128xf32>
    %479 = vector.extract_strided_slice %477 {offsets = [0, 1, 0], sizes = [5, 1, 128], strides = [1, 1, 1]} : vector<5x2x128xf32> to vector<5x1x128xf32>
    %480 = arith.mulf %478, %479 : vector<5x1x128xf32>
    %cst_108 = arith.constant 0.000000e+00 : f32
    %481 = vector.broadcast %cst_108 : f32 to vector<5x32x128xf32>
    %482 = arith.subf %481, %466 : vector<5x32x128xf32>
    %483 = math.exp %482 : vector<5x32x128xf32>
    %cst_109 = arith.constant 1.000000e+00 : f32
    %484 = vector.broadcast %cst_109 : f32 to vector<5x32x128xf32>
    %485 = arith.addf %484, %483 : vector<5x32x128xf32>
    %486 = vector.extract_strided_slice %485 {offsets = [0, 0, 0], sizes = [5, 16, 128], strides = [1, 1, 1]} : vector<5x32x128xf32> to vector<5x16x128xf32>
    %487 = vector.extract_strided_slice %485 {offsets = [0, 16, 0], sizes = [5, 16, 128], strides = [1, 1, 1]} : vector<5x32x128xf32> to vector<5x16x128xf32>
    %488 = arith.mulf %486, %487 : vector<5x16x128xf32>
    %489 = vector.extract_strided_slice %488 {offsets = [0, 0, 0], sizes = [5, 8, 128], strides = [1, 1, 1]} : vector<5x16x128xf32> to vector<5x8x128xf32>
    %490 = vector.extract_strided_slice %488 {offsets = [0, 8, 0], sizes = [5, 8, 128], strides = [1, 1, 1]} : vector<5x16x128xf32> to vector<5x8x128xf32>
    %491 = arith.mulf %489, %490 : vector<5x8x128xf32>
    %492 = vector.extract_strided_slice %491 {offsets = [0, 0, 0], sizes = [5, 4, 128], strides = [1, 1, 1]} : vector<5x8x128xf32> to vector<5x4x128xf32>
    %493 = vector.extract_strided_slice %491 {offsets = [0, 4, 0], sizes = [5, 4, 128], strides = [1, 1, 1]} : vector<5x8x128xf32> to vector<5x4x128xf32>
    %494 = arith.mulf %492, %493 : vector<5x4x128xf32>
    %495 = vector.extract_strided_slice %494 {offsets = [0, 0, 0], sizes = [5, 2, 128], strides = [1, 1, 1]} : vector<5x4x128xf32> to vector<5x2x128xf32>
    %496 = vector.extract_strided_slice %494 {offsets = [0, 2, 0], sizes = [5, 2, 128], strides = [1, 1, 1]} : vector<5x4x128xf32> to vector<5x2x128xf32>
    %497 = arith.mulf %495, %496 : vector<5x2x128xf32>
    %498 = vector.extract_strided_slice %497 {offsets = [0, 0, 0], sizes = [5, 1, 128], strides = [1, 1, 1]} : vector<5x2x128xf32> to vector<5x1x128xf32>
    %499 = vector.extract_strided_slice %497 {offsets = [0, 1, 0], sizes = [5, 1, 128], strides = [1, 1, 1]} : vector<5x2x128xf32> to vector<5x1x128xf32>
    %500 = arith.mulf %498, %499 : vector<5x1x128xf32>
    %501 = arith.mulf %480, %500 : vector<5x1x128xf32>
    %cst_110 = arith.constant 1.000000e+00 : f32
    %502 = vector.broadcast %cst_110 : f32 to vector<5x1x128xf32>
    %503 = arith.divf %502, %501 : vector<5x1x128xf32>
    %504 = vector.extract_strided_slice %503 {offsets = [0, 0, 0], sizes = [1, 1, 128], strides = [1, 1, 1]} : vector<5x1x128xf32> to vector<1x1x128xf32>
    %505 = vector.shape_cast %504 : vector<1x1x128xf32> to vector<1x128xf32>
    %506 = vector.extract_strided_slice %503 {offsets = [1, 0, 0], sizes = [1, 1, 128], strides = [1, 1, 1]} : vector<5x1x128xf32> to vector<1x1x128xf32>
    %507 = vector.shape_cast %506 : vector<1x1x128xf32> to vector<1x128xf32>
    %508 = arith.addf %505, %507 : vector<1x128xf32>
    %509 = vector.extract_strided_slice %503 {offsets = [2, 0, 0], sizes = [1, 1, 128], strides = [1, 1, 1]} : vector<5x1x128xf32> to vector<1x1x128xf32>
    %510 = vector.shape_cast %509 : vector<1x1x128xf32> to vector<1x128xf32>
    %511 = arith.addf %508, %510 : vector<1x128xf32>
    %512 = vector.extract_strided_slice %503 {offsets = [3, 0, 0], sizes = [1, 1, 128], strides = [1, 1, 1]} : vector<5x1x128xf32> to vector<1x1x128xf32>
    %513 = vector.shape_cast %512 : vector<1x1x128xf32> to vector<1x128xf32>
    %514 = arith.addf %511, %513 : vector<1x128xf32>
    %515 = vector.extract_strided_slice %503 {offsets = [4, 0, 0], sizes = [1, 1, 128], strides = [1, 1, 1]} : vector<5x1x128xf32> to vector<1x1x128xf32>
    %516 = vector.shape_cast %515 : vector<1x1x128xf32> to vector<1x128xf32>
    %517 = arith.addf %514, %516 : vector<1x128xf32>
    %518 = arith.subf %517, %9 : vector<1x128xf32>
    %519 = arith.mulf %8, %518 : vector<1x128xf32>
    %520 = vector.extract_strided_slice %519 {offsets = [0, 0], sizes = [1, 32], strides = [1, 1]} : vector<1x128xf32> to vector<1x32xf32>
    %521 = arith.negf %520 : vector<1x32xf32>
    %522 = math.exp %521 : vector<1x32xf32>
    %cst_111 = arith.constant 1.000000e+00 : f32
    %523 = vector.broadcast %cst_111 : f32 to vector<1x32xf32>
    %524 = arith.addf %523, %522 : vector<1x32xf32>
    %525 = arith.divf %523, %524 : vector<1x32xf32>
    %526 = vector.extract_strided_slice %519 {offsets = [0, 32], sizes = [1, 32], strides = [1, 1]} : vector<1x128xf32> to vector<1x32xf32>
    %527 = arith.negf %526 : vector<1x32xf32>
    %528 = math.exp %527 : vector<1x32xf32>
    %cst_112 = arith.constant 1.000000e+00 : f32
    %529 = vector.broadcast %cst_112 : f32 to vector<1x32xf32>
    %530 = arith.addf %529, %528 : vector<1x32xf32>
    %531 = arith.divf %529, %530 : vector<1x32xf32>
    %532 = vector.extract_strided_slice %519 {offsets = [0, 64], sizes = [1, 32], strides = [1, 1]} : vector<1x128xf32> to vector<1x32xf32>
    %533 = math.tanh %532 : vector<1x32xf32>
    %534 = vector.extract_strided_slice %519 {offsets = [0, 96], sizes = [1, 32], strides = [1, 1]} : vector<1x128xf32> to vector<1x32xf32>
    %535 = arith.negf %534 : vector<1x32xf32>
    %536 = math.exp %535 : vector<1x32xf32>
    %cst_113 = arith.constant 1.000000e+00 : f32
    %537 = vector.broadcast %cst_113 : f32 to vector<1x32xf32>
    %538 = arith.addf %537, %536 : vector<1x32xf32>
    %539 = arith.divf %537, %538 : vector<1x32xf32>
    %540 = vector.extract_strided_slice %452 {offsets = [0, 0], sizes = [1, 32], strides = [1, 1]} : vector<2x32xf32> to vector<1x32xf32>
    %541 = arith.mulf %525, %540 : vector<1x32xf32>
    %542 = arith.mulf %531, %533 : vector<1x32xf32>
    %543 = arith.addf %541, %542 : vector<1x32xf32>
    %544 = math.tanh %543 : vector<1x32xf32>
    %545 = arith.mulf %539, %544 : vector<1x32xf32>
    %c0_i32_114 = arith.constant 0 : i32
    %546 = vector.broadcast %c0_i32_114 : i32 to vector<2x1xi32>
    %547 = arith.cmpi eq, %15, %546 : vector<2x1xi32>
    %548 = arith.extui %547 : vector<2x1xi1> to vector<2x1xi32>
    %549 = arith.sitofp %548 : vector<2x1xi32> to vector<2x1xf32>
    %550 = vector.broadcast %549 : vector<2x1xf32> to vector<2x32xf32>
    %551 = vector.broadcast %545 : vector<1x32xf32> to vector<2x32xf32>
    %552 = arith.mulf %550, %551 : vector<2x32xf32>
    %553 = arith.addf %454, %552 : vector<2x32xf32>
    %554 = vector.broadcast %549 : vector<2x1xf32> to vector<2x32xf32>
    %555 = vector.broadcast %543 : vector<1x32xf32> to vector<2x32xf32>
    %556 = arith.mulf %554, %555 : vector<2x32xf32>
    %557 = arith.addf %455, %556 : vector<2x32xf32>
    %c2_115 = arith.constant 2 : index
    %c1_116 = arith.constant 1 : index
    %c0_117 = arith.constant 0 : index
    %c0_118 = arith.constant 0 : index
    %558 = vector.load %arg1[%c2_115, %c1_116, %c0_117, %c0_118] : memref<8x2x8x1xf32, #tpu.memory_space<vmem>>, vector<1x1x8x1xf32>
    %559 = vector.shape_cast %558 : vector<1x1x8x1xf32> to vector<8x1xf32>
    %560 = vector.extract_strided_slice %453 {offsets = [0, 1], sizes = [32, 1], strides = [1, 1]} : vector<32x2xf32> to vector<32x1xf32>
    %561 = vector.shape_cast %559 : vector<8x1xf32> to vector<1x8x1xf32>
    %562 = vector.broadcast %561 : vector<1x8x1xf32> to vector<5x8x128xf32>
    %563 = arith.mulf %562, %3 : vector<5x8x128xf32>
    %564 = arith.subf %563, %4 : vector<5x8x128xf32>
    %565 = vector.shape_cast %560 : vector<32x1xf32> to vector<1x32x1xf32>
    %566 = vector.broadcast %565 : vector<1x32x1xf32> to vector<5x32x128xf32>
    %567 = arith.mulf %566, %5 : vector<5x32x128xf32>
    %568 = arith.subf %567, %6 : vector<5x32x128xf32>
    %cst_119 = arith.constant 0.000000e+00 : f32
    %569 = vector.broadcast %cst_119 : f32 to vector<5x8x128xf32>
    %570 = arith.subf %569, %564 : vector<5x8x128xf32>
    %571 = math.exp %570 : vector<5x8x128xf32>
    %cst_120 = arith.constant 1.000000e+00 : f32
    %572 = vector.broadcast %cst_120 : f32 to vector<5x8x128xf32>
    %573 = arith.addf %572, %571 : vector<5x8x128xf32>
    %574 = vector.extract_strided_slice %573 {offsets = [0, 0, 0], sizes = [5, 4, 128], strides = [1, 1, 1]} : vector<5x8x128xf32> to vector<5x4x128xf32>
    %575 = vector.extract_strided_slice %573 {offsets = [0, 4, 0], sizes = [5, 4, 128], strides = [1, 1, 1]} : vector<5x8x128xf32> to vector<5x4x128xf32>
    %576 = arith.mulf %574, %575 : vector<5x4x128xf32>
    %577 = vector.extract_strided_slice %576 {offsets = [0, 0, 0], sizes = [5, 2, 128], strides = [1, 1, 1]} : vector<5x4x128xf32> to vector<5x2x128xf32>
    %578 = vector.extract_strided_slice %576 {offsets = [0, 2, 0], sizes = [5, 2, 128], strides = [1, 1, 1]} : vector<5x4x128xf32> to vector<5x2x128xf32>
    %579 = arith.mulf %577, %578 : vector<5x2x128xf32>
    %580 = vector.extract_strided_slice %579 {offsets = [0, 0, 0], sizes = [5, 1, 128], strides = [1, 1, 1]} : vector<5x2x128xf32> to vector<5x1x128xf32>
    %581 = vector.extract_strided_slice %579 {offsets = [0, 1, 0], sizes = [5, 1, 128], strides = [1, 1, 1]} : vector<5x2x128xf32> to vector<5x1x128xf32>
    %582 = arith.mulf %580, %581 : vector<5x1x128xf32>
    %cst_121 = arith.constant 0.000000e+00 : f32
    %583 = vector.broadcast %cst_121 : f32 to vector<5x32x128xf32>
    %584 = arith.subf %583, %568 : vector<5x32x128xf32>
    %585 = math.exp %584 : vector<5x32x128xf32>
    %cst_122 = arith.constant 1.000000e+00 : f32
    %586 = vector.broadcast %cst_122 : f32 to vector<5x32x128xf32>
    %587 = arith.addf %586, %585 : vector<5x32x128xf32>
    %588 = vector.extract_strided_slice %587 {offsets = [0, 0, 0], sizes = [5, 16, 128], strides = [1, 1, 1]} : vector<5x32x128xf32> to vector<5x16x128xf32>
    %589 = vector.extract_strided_slice %587 {offsets = [0, 16, 0], sizes = [5, 16, 128], strides = [1, 1, 1]} : vector<5x32x128xf32> to vector<5x16x128xf32>
    %590 = arith.mulf %588, %589 : vector<5x16x128xf32>
    %591 = vector.extract_strided_slice %590 {offsets = [0, 0, 0], sizes = [5, 8, 128], strides = [1, 1, 1]} : vector<5x16x128xf32> to vector<5x8x128xf32>
    %592 = vector.extract_strided_slice %590 {offsets = [0, 8, 0], sizes = [5, 8, 128], strides = [1, 1, 1]} : vector<5x16x128xf32> to vector<5x8x128xf32>
    %593 = arith.mulf %591, %592 : vector<5x8x128xf32>
    %594 = vector.extract_strided_slice %593 {offsets = [0, 0, 0], sizes = [5, 4, 128], strides = [1, 1, 1]} : vector<5x8x128xf32> to vector<5x4x128xf32>
    %595 = vector.extract_strided_slice %593 {offsets = [0, 4, 0], sizes = [5, 4, 128], strides = [1, 1, 1]} : vector<5x8x128xf32> to vector<5x4x128xf32>
    %596 = arith.mulf %594, %595 : vector<5x4x128xf32>
    %597 = vector.extract_strided_slice %596 {offsets = [0, 0, 0], sizes = [5, 2, 128], strides = [1, 1, 1]} : vector<5x4x128xf32> to vector<5x2x128xf32>
    %598 = vector.extract_strided_slice %596 {offsets = [0, 2, 0], sizes = [5, 2, 128], strides = [1, 1, 1]} : vector<5x4x128xf32> to vector<5x2x128xf32>
    %599 = arith.mulf %597, %598 : vector<5x2x128xf32>
    %600 = vector.extract_strided_slice %599 {offsets = [0, 0, 0], sizes = [5, 1, 128], strides = [1, 1, 1]} : vector<5x2x128xf32> to vector<5x1x128xf32>
    %601 = vector.extract_strided_slice %599 {offsets = [0, 1, 0], sizes = [5, 1, 128], strides = [1, 1, 1]} : vector<5x2x128xf32> to vector<5x1x128xf32>
    %602 = arith.mulf %600, %601 : vector<5x1x128xf32>
    %603 = arith.mulf %582, %602 : vector<5x1x128xf32>
    %cst_123 = arith.constant 1.000000e+00 : f32
    %604 = vector.broadcast %cst_123 : f32 to vector<5x1x128xf32>
    %605 = arith.divf %604, %603 : vector<5x1x128xf32>
    %606 = vector.extract_strided_slice %605 {offsets = [0, 0, 0], sizes = [1, 1, 128], strides = [1, 1, 1]} : vector<5x1x128xf32> to vector<1x1x128xf32>
    %607 = vector.shape_cast %606 : vector<1x1x128xf32> to vector<1x128xf32>
    %608 = vector.extract_strided_slice %605 {offsets = [1, 0, 0], sizes = [1, 1, 128], strides = [1, 1, 1]} : vector<5x1x128xf32> to vector<1x1x128xf32>
    %609 = vector.shape_cast %608 : vector<1x1x128xf32> to vector<1x128xf32>
    %610 = arith.addf %607, %609 : vector<1x128xf32>
    %611 = vector.extract_strided_slice %605 {offsets = [2, 0, 0], sizes = [1, 1, 128], strides = [1, 1, 1]} : vector<5x1x128xf32> to vector<1x1x128xf32>
    %612 = vector.shape_cast %611 : vector<1x1x128xf32> to vector<1x128xf32>
    %613 = arith.addf %610, %612 : vector<1x128xf32>
    %614 = vector.extract_strided_slice %605 {offsets = [3, 0, 0], sizes = [1, 1, 128], strides = [1, 1, 1]} : vector<5x1x128xf32> to vector<1x1x128xf32>
    %615 = vector.shape_cast %614 : vector<1x1x128xf32> to vector<1x128xf32>
    %616 = arith.addf %613, %615 : vector<1x128xf32>
    %617 = vector.extract_strided_slice %605 {offsets = [4, 0, 0], sizes = [1, 1, 128], strides = [1, 1, 1]} : vector<5x1x128xf32> to vector<1x1x128xf32>
    %618 = vector.shape_cast %617 : vector<1x1x128xf32> to vector<1x128xf32>
    %619 = arith.addf %616, %618 : vector<1x128xf32>
    %620 = arith.subf %619, %9 : vector<1x128xf32>
    %621 = arith.mulf %8, %620 : vector<1x128xf32>
    %622 = vector.extract_strided_slice %621 {offsets = [0, 0], sizes = [1, 32], strides = [1, 1]} : vector<1x128xf32> to vector<1x32xf32>
    %623 = arith.negf %622 : vector<1x32xf32>
    %624 = math.exp %623 : vector<1x32xf32>
    %cst_124 = arith.constant 1.000000e+00 : f32
    %625 = vector.broadcast %cst_124 : f32 to vector<1x32xf32>
    %626 = arith.addf %625, %624 : vector<1x32xf32>
    %627 = arith.divf %625, %626 : vector<1x32xf32>
    %628 = vector.extract_strided_slice %621 {offsets = [0, 32], sizes = [1, 32], strides = [1, 1]} : vector<1x128xf32> to vector<1x32xf32>
    %629 = arith.negf %628 : vector<1x32xf32>
    %630 = math.exp %629 : vector<1x32xf32>
    %cst_125 = arith.constant 1.000000e+00 : f32
    %631 = vector.broadcast %cst_125 : f32 to vector<1x32xf32>
    %632 = arith.addf %631, %630 : vector<1x32xf32>
    %633 = arith.divf %631, %632 : vector<1x32xf32>
    %634 = vector.extract_strided_slice %621 {offsets = [0, 64], sizes = [1, 32], strides = [1, 1]} : vector<1x128xf32> to vector<1x32xf32>
    %635 = math.tanh %634 : vector<1x32xf32>
    %636 = vector.extract_strided_slice %621 {offsets = [0, 96], sizes = [1, 32], strides = [1, 1]} : vector<1x128xf32> to vector<1x32xf32>
    %637 = arith.negf %636 : vector<1x32xf32>
    %638 = math.exp %637 : vector<1x32xf32>
    %cst_126 = arith.constant 1.000000e+00 : f32
    %639 = vector.broadcast %cst_126 : f32 to vector<1x32xf32>
    %640 = arith.addf %639, %638 : vector<1x32xf32>
    %641 = arith.divf %639, %640 : vector<1x32xf32>
    %642 = vector.extract_strided_slice %452 {offsets = [1, 0], sizes = [1, 32], strides = [1, 1]} : vector<2x32xf32> to vector<1x32xf32>
    %643 = arith.mulf %627, %642 : vector<1x32xf32>
    %644 = arith.mulf %633, %635 : vector<1x32xf32>
    %645 = arith.addf %643, %644 : vector<1x32xf32>
    %646 = math.tanh %645 : vector<1x32xf32>
    %647 = arith.mulf %641, %646 : vector<1x32xf32>
    %c1_i32_127 = arith.constant 1 : i32
    %648 = vector.broadcast %c1_i32_127 : i32 to vector<2x1xi32>
    %649 = arith.cmpi eq, %15, %648 : vector<2x1xi32>
    %650 = arith.extui %649 : vector<2x1xi1> to vector<2x1xi32>
    %651 = arith.sitofp %650 : vector<2x1xi32> to vector<2x1xf32>
    %652 = vector.broadcast %651 : vector<2x1xf32> to vector<2x32xf32>
    %653 = vector.broadcast %647 : vector<1x32xf32> to vector<2x32xf32>
    %654 = arith.mulf %652, %653 : vector<2x32xf32>
    %655 = arith.addf %553, %654 : vector<2x32xf32>
    %656 = vector.broadcast %651 : vector<2x1xf32> to vector<2x32xf32>
    %657 = vector.broadcast %645 : vector<1x32xf32> to vector<2x32xf32>
    %658 = arith.mulf %656, %657 : vector<2x32xf32>
    %659 = arith.addf %557, %658 : vector<2x32xf32>
    %c0_128 = arith.constant 0 : index
    %c0_129 = arith.constant 0 : index
    %660 = vector.load %arg9[%c0_128, %c0_129] : memref<2x32xf32, #tpu.memory_space<vmem>>, vector<2x32xf32>
    tpu.vector_store %arg9[%c0_128, %c0_129], %655 {strides = array<i32>} : memref<2x32xf32, #tpu.memory_space<vmem>>, vector<2x32xf32>,
    %c0_130 = arith.constant 0 : index
    %c0_131 = arith.constant 0 : index
    %c0_132 = arith.constant 0 : index
    %661 = vector.load %arg8[%c0_130, %c0_131, %c0_132] : memref<1x2x32xf32, #tpu.memory_space<vmem>>, vector<1x2x32xf32>
    %662 = vector.shape_cast %661 : vector<1x2x32xf32> to vector<2x32xf32>
    %663 = vector.shape_cast %659 : vector<2x32xf32> to vector<1x2x32xf32>
    tpu.vector_store %arg8[%c0_130, %c0_131, %c0_132], %663 {strides = array<i32>} : memref<1x2x32xf32, #tpu.memory_space<vmem>>, vector<1x2x32xf32>,
    %c2_133 = arith.constant 2 : index
    %c0_134 = arith.constant 0 : index
    %c0_135 = arith.constant 0 : index
    %664 = vector.load %arg7[%c2_133, %c0_134, %c0_135] : memref<8x2x32xf32, #tpu.memory_space<vmem>>, vector<1x2x32xf32>
    %665 = vector.shape_cast %664 : vector<1x2x32xf32> to vector<2x32xf32>
    %666 = vector.shape_cast %655 : vector<2x32xf32> to vector<1x2x32xf32>
    tpu.vector_store %arg7[%c2_133, %c0_134, %c0_135], %666 {strides = array<i32>} : memref<8x2x32xf32, #tpu.memory_space<vmem>>, vector<1x2x32xf32>,
    %c0_136 = arith.constant 0 : index
    %c0_137 = arith.constant 0 : index
    %667 = vector.load %arg9[%c0_136, %c0_137] : memref<2x32xf32, #tpu.memory_space<vmem>>, vector<2x32xf32>
    %c0_138 = arith.constant 0 : index
    %c0_139 = arith.constant 0 : index
    %c0_140 = arith.constant 0 : index
    %668 = vector.load %arg8[%c0_138, %c0_139, %c0_140] : memref<1x2x32xf32, #tpu.memory_space<vmem>>, vector<1x2x32xf32>
    %669 = vector.shape_cast %668 : vector<1x2x32xf32> to vector<2x32xf32>
    %cst_141 = arith.constant dense<0.000000e+00> : vector<32x2xf32>
    %670 = tpu.matmul %14, %667, %cst_141 {dimension_numbers = #tpu.dot_dimension_numbers<[1], [1], [0], [0], [0, 0, 1, 0], [], []>} : vector<32x32xf32>, vector<2x32xf32>, vector<32x2xf32> -> vector<32x2xf32>
    %cst_142 = arith.constant 0.000000e+00 : f32
    %671 = vector.broadcast %cst_142 : f32 to vector<2x32xf32>
    %cst_143 = arith.constant 0.000000e+00 : f32
    %672 = vector.broadcast %cst_143 : f32 to vector<2x32xf32>
    %c3 = arith.constant 3 : index
    %c0_144 = arith.constant 0 : index
    %c0_145 = arith.constant 0 : index
    %c0_146 = arith.constant 0 : index
    %673 = vector.load %arg1[%c3, %c0_144, %c0_145, %c0_146] : memref<8x2x8x1xf32, #tpu.memory_space<vmem>>, vector<1x1x8x1xf32>
    %674 = vector.shape_cast %673 : vector<1x1x8x1xf32> to vector<8x1xf32>
    %675 = vector.extract_strided_slice %670 {offsets = [0, 0], sizes = [32, 1], strides = [1, 1]} : vector<32x2xf32> to vector<32x1xf32>
    %676 = vector.shape_cast %674 : vector<8x1xf32> to vector<1x8x1xf32>
    %677 = vector.broadcast %676 : vector<1x8x1xf32> to vector<5x8x128xf32>
    %678 = arith.mulf %677, %3 : vector<5x8x128xf32>
    %679 = arith.subf %678, %4 : vector<5x8x128xf32>
    %680 = vector.shape_cast %675 : vector<32x1xf32> to vector<1x32x1xf32>
    %681 = vector.broadcast %680 : vector<1x32x1xf32> to vector<5x32x128xf32>
    %682 = arith.mulf %681, %5 : vector<5x32x128xf32>
    %683 = arith.subf %682, %6 : vector<5x32x128xf32>
    %cst_147 = arith.constant 0.000000e+00 : f32
    %684 = vector.broadcast %cst_147 : f32 to vector<5x8x128xf32>
    %685 = arith.subf %684, %679 : vector<5x8x128xf32>
    %686 = math.exp %685 : vector<5x8x128xf32>
    %cst_148 = arith.constant 1.000000e+00 : f32
    %687 = vector.broadcast %cst_148 : f32 to vector<5x8x128xf32>
    %688 = arith.addf %687, %686 : vector<5x8x128xf32>
    %689 = vector.extract_strided_slice %688 {offsets = [0, 0, 0], sizes = [5, 4, 128], strides = [1, 1, 1]} : vector<5x8x128xf32> to vector<5x4x128xf32>
    %690 = vector.extract_strided_slice %688 {offsets = [0, 4, 0], sizes = [5, 4, 128], strides = [1, 1, 1]} : vector<5x8x128xf32> to vector<5x4x128xf32>
    %691 = arith.mulf %689, %690 : vector<5x4x128xf32>
    %692 = vector.extract_strided_slice %691 {offsets = [0, 0, 0], sizes = [5, 2, 128], strides = [1, 1, 1]} : vector<5x4x128xf32> to vector<5x2x128xf32>
    %693 = vector.extract_strided_slice %691 {offsets = [0, 2, 0], sizes = [5, 2, 128], strides = [1, 1, 1]} : vector<5x4x128xf32> to vector<5x2x128xf32>
    %694 = arith.mulf %692, %693 : vector<5x2x128xf32>
    %695 = vector.extract_strided_slice %694 {offsets = [0, 0, 0], sizes = [5, 1, 128], strides = [1, 1, 1]} : vector<5x2x128xf32> to vector<5x1x128xf32>
    %696 = vector.extract_strided_slice %694 {offsets = [0, 1, 0], sizes = [5, 1, 128], strides = [1, 1, 1]} : vector<5x2x128xf32> to vector<5x1x128xf32>
    %697 = arith.mulf %695, %696 : vector<5x1x128xf32>
    %cst_149 = arith.constant 0.000000e+00 : f32
    %698 = vector.broadcast %cst_149 : f32 to vector<5x32x128xf32>
    %699 = arith.subf %698, %683 : vector<5x32x128xf32>
    %700 = math.exp %699 : vector<5x32x128xf32>
    %cst_150 = arith.constant 1.000000e+00 : f32
    %701 = vector.broadcast %cst_150 : f32 to vector<5x32x128xf32>
    %702 = arith.addf %701, %700 : vector<5x32x128xf32>
    %703 = vector.extract_strided_slice %702 {offsets = [0, 0, 0], sizes = [5, 16, 128], strides = [1, 1, 1]} : vector<5x32x128xf32> to vector<5x16x128xf32>
    %704 = vector.extract_strided_slice %702 {offsets = [0, 16, 0], sizes = [5, 16, 128], strides = [1, 1, 1]} : vector<5x32x128xf32> to vector<5x16x128xf32>
    %705 = arith.mulf %703, %704 : vector<5x16x128xf32>
    %706 = vector.extract_strided_slice %705 {offsets = [0, 0, 0], sizes = [5, 8, 128], strides = [1, 1, 1]} : vector<5x16x128xf32> to vector<5x8x128xf32>
    %707 = vector.extract_strided_slice %705 {offsets = [0, 8, 0], sizes = [5, 8, 128], strides = [1, 1, 1]} : vector<5x16x128xf32> to vector<5x8x128xf32>
    %708 = arith.mulf %706, %707 : vector<5x8x128xf32>
    %709 = vector.extract_strided_slice %708 {offsets = [0, 0, 0], sizes = [5, 4, 128], strides = [1, 1, 1]} : vector<5x8x128xf32> to vector<5x4x128xf32>
    %710 = vector.extract_strided_slice %708 {offsets = [0, 4, 0], sizes = [5, 4, 128], strides = [1, 1, 1]} : vector<5x8x128xf32> to vector<5x4x128xf32>
    %711 = arith.mulf %709, %710 : vector<5x4x128xf32>
    %712 = vector.extract_strided_slice %711 {offsets = [0, 0, 0], sizes = [5, 2, 128], strides = [1, 1, 1]} : vector<5x4x128xf32> to vector<5x2x128xf32>
    %713 = vector.extract_strided_slice %711 {offsets = [0, 2, 0], sizes = [5, 2, 128], strides = [1, 1, 1]} : vector<5x4x128xf32> to vector<5x2x128xf32>
    %714 = arith.mulf %712, %713 : vector<5x2x128xf32>
    %715 = vector.extract_strided_slice %714 {offsets = [0, 0, 0], sizes = [5, 1, 128], strides = [1, 1, 1]} : vector<5x2x128xf32> to vector<5x1x128xf32>
    %716 = vector.extract_strided_slice %714 {offsets = [0, 1, 0], sizes = [5, 1, 128], strides = [1, 1, 1]} : vector<5x2x128xf32> to vector<5x1x128xf32>
    %717 = arith.mulf %715, %716 : vector<5x1x128xf32>
    %718 = arith.mulf %697, %717 : vector<5x1x128xf32>
    %cst_151 = arith.constant 1.000000e+00 : f32
    %719 = vector.broadcast %cst_151 : f32 to vector<5x1x128xf32>
    %720 = arith.divf %719, %718 : vector<5x1x128xf32>
    %721 = vector.extract_strided_slice %720 {offsets = [0, 0, 0], sizes = [1, 1, 128], strides = [1, 1, 1]} : vector<5x1x128xf32> to vector<1x1x128xf32>
    %722 = vector.shape_cast %721 : vector<1x1x128xf32> to vector<1x128xf32>
    %723 = vector.extract_strided_slice %720 {offsets = [1, 0, 0], sizes = [1, 1, 128], strides = [1, 1, 1]} : vector<5x1x128xf32> to vector<1x1x128xf32>
    %724 = vector.shape_cast %723 : vector<1x1x128xf32> to vector<1x128xf32>
    %725 = arith.addf %722, %724 : vector<1x128xf32>
    %726 = vector.extract_strided_slice %720 {offsets = [2, 0, 0], sizes = [1, 1, 128], strides = [1, 1, 1]} : vector<5x1x128xf32> to vector<1x1x128xf32>
    %727 = vector.shape_cast %726 : vector<1x1x128xf32> to vector<1x128xf32>
    %728 = arith.addf %725, %727 : vector<1x128xf32>
    %729 = vector.extract_strided_slice %720 {offsets = [3, 0, 0], sizes = [1, 1, 128], strides = [1, 1, 1]} : vector<5x1x128xf32> to vector<1x1x128xf32>
    %730 = vector.shape_cast %729 : vector<1x1x128xf32> to vector<1x128xf32>
    %731 = arith.addf %728, %730 : vector<1x128xf32>
    %732 = vector.extract_strided_slice %720 {offsets = [4, 0, 0], sizes = [1, 1, 128], strides = [1, 1, 1]} : vector<5x1x128xf32> to vector<1x1x128xf32>
    %733 = vector.shape_cast %732 : vector<1x1x128xf32> to vector<1x128xf32>
    %734 = arith.addf %731, %733 : vector<1x128xf32>
    %735 = arith.subf %734, %9 : vector<1x128xf32>
    %736 = arith.mulf %8, %735 : vector<1x128xf32>
    %737 = vector.extract_strided_slice %736 {offsets = [0, 0], sizes = [1, 32], strides = [1, 1]} : vector<1x128xf32> to vector<1x32xf32>
    %738 = arith.negf %737 : vector<1x32xf32>
    %739 = math.exp %738 : vector<1x32xf32>
    %cst_152 = arith.constant 1.000000e+00 : f32
    %740 = vector.broadcast %cst_152 : f32 to vector<1x32xf32>
    %741 = arith.addf %740, %739 : vector<1x32xf32>
    %742 = arith.divf %740, %741 : vector<1x32xf32>
    %743 = vector.extract_strided_slice %736 {offsets = [0, 32], sizes = [1, 32], strides = [1, 1]} : vector<1x128xf32> to vector<1x32xf32>
    %744 = arith.negf %743 : vector<1x32xf32>
    %745 = math.exp %744 : vector<1x32xf32>
    %cst_153 = arith.constant 1.000000e+00 : f32
    %746 = vector.broadcast %cst_153 : f32 to vector<1x32xf32>
    %747 = arith.addf %746, %745 : vector<1x32xf32>
    %748 = arith.divf %746, %747 : vector<1x32xf32>
    %749 = vector.extract_strided_slice %736 {offsets = [0, 64], sizes = [1, 32], strides = [1, 1]} : vector<1x128xf32> to vector<1x32xf32>
    %750 = math.tanh %749 : vector<1x32xf32>
    %751 = vector.extract_strided_slice %736 {offsets = [0, 96], sizes = [1, 32], strides = [1, 1]} : vector<1x128xf32> to vector<1x32xf32>
    %752 = arith.negf %751 : vector<1x32xf32>
    %753 = math.exp %752 : vector<1x32xf32>
    %cst_154 = arith.constant 1.000000e+00 : f32
    %754 = vector.broadcast %cst_154 : f32 to vector<1x32xf32>
    %755 = arith.addf %754, %753 : vector<1x32xf32>
    %756 = arith.divf %754, %755 : vector<1x32xf32>
    %757 = vector.extract_strided_slice %669 {offsets = [0, 0], sizes = [1, 32], strides = [1, 1]} : vector<2x32xf32> to vector<1x32xf32>
    %758 = arith.mulf %742, %757 : vector<1x32xf32>
    %759 = arith.mulf %748, %750 : vector<1x32xf32>
    %760 = arith.addf %758, %759 : vector<1x32xf32>
    %761 = math.tanh %760 : vector<1x32xf32>
    %762 = arith.mulf %756, %761 : vector<1x32xf32>
    %c0_i32_155 = arith.constant 0 : i32
    %763 = vector.broadcast %c0_i32_155 : i32 to vector<2x1xi32>
    %764 = arith.cmpi eq, %15, %763 : vector<2x1xi32>
    %765 = arith.extui %764 : vector<2x1xi1> to vector<2x1xi32>
    %766 = arith.sitofp %765 : vector<2x1xi32> to vector<2x1xf32>
    %767 = vector.broadcast %766 : vector<2x1xf32> to vector<2x32xf32>
    %768 = vector.broadcast %762 : vector<1x32xf32> to vector<2x32xf32>
    %769 = arith.mulf %767, %768 : vector<2x32xf32>
    %770 = arith.addf %671, %769 : vector<2x32xf32>
    %771 = vector.broadcast %766 : vector<2x1xf32> to vector<2x32xf32>
    %772 = vector.broadcast %760 : vector<1x32xf32> to vector<2x32xf32>
    %773 = arith.mulf %771, %772 : vector<2x32xf32>
    %774 = arith.addf %672, %773 : vector<2x32xf32>
    %c3_156 = arith.constant 3 : index
    %c1_157 = arith.constant 1 : index
    %c0_158 = arith.constant 0 : index
    %c0_159 = arith.constant 0 : index
    %775 = vector.load %arg1[%c3_156, %c1_157, %c0_158, %c0_159] : memref<8x2x8x1xf32, #tpu.memory_space<vmem>>, vector<1x1x8x1xf32>
    %776 = vector.shape_cast %775 : vector<1x1x8x1xf32> to vector<8x1xf32>
    %777 = vector.extract_strided_slice %670 {offsets = [0, 1], sizes = [32, 1], strides = [1, 1]} : vector<32x2xf32> to vector<32x1xf32>
    %778 = vector.shape_cast %776 : vector<8x1xf32> to vector<1x8x1xf32>
    %779 = vector.broadcast %778 : vector<1x8x1xf32> to vector<5x8x128xf32>
    %780 = arith.mulf %779, %3 : vector<5x8x128xf32>
    %781 = arith.subf %780, %4 : vector<5x8x128xf32>
    %782 = vector.shape_cast %777 : vector<32x1xf32> to vector<1x32x1xf32>
    %783 = vector.broadcast %782 : vector<1x32x1xf32> to vector<5x32x128xf32>
    %784 = arith.mulf %783, %5 : vector<5x32x128xf32>
    %785 = arith.subf %784, %6 : vector<5x32x128xf32>
    %cst_160 = arith.constant 0.000000e+00 : f32
    %786 = vector.broadcast %cst_160 : f32 to vector<5x8x128xf32>
    %787 = arith.subf %786, %781 : vector<5x8x128xf32>
    %788 = math.exp %787 : vector<5x8x128xf32>
    %cst_161 = arith.constant 1.000000e+00 : f32
    %789 = vector.broadcast %cst_161 : f32 to vector<5x8x128xf32>
    %790 = arith.addf %789, %788 : vector<5x8x128xf32>
    %791 = vector.extract_strided_slice %790 {offsets = [0, 0, 0], sizes = [5, 4, 128], strides = [1, 1, 1]} : vector<5x8x128xf32> to vector<5x4x128xf32>
    %792 = vector.extract_strided_slice %790 {offsets = [0, 4, 0], sizes = [5, 4, 128], strides = [1, 1, 1]} : vector<5x8x128xf32> to vector<5x4x128xf32>
    %793 = arith.mulf %791, %792 : vector<5x4x128xf32>
    %794 = vector.extract_strided_slice %793 {offsets = [0, 0, 0], sizes = [5, 2, 128], strides = [1, 1, 1]} : vector<5x4x128xf32> to vector<5x2x128xf32>
    %795 = vector.extract_strided_slice %793 {offsets = [0, 2, 0], sizes = [5, 2, 128], strides = [1, 1, 1]} : vector<5x4x128xf32> to vector<5x2x128xf32>
    %796 = arith.mulf %794, %795 : vector<5x2x128xf32>
    %797 = vector.extract_strided_slice %796 {offsets = [0, 0, 0], sizes = [5, 1, 128], strides = [1, 1, 1]} : vector<5x2x128xf32> to vector<5x1x128xf32>
    %798 = vector.extract_strided_slice %796 {offsets = [0, 1, 0], sizes = [5, 1, 128], strides = [1, 1, 1]} : vector<5x2x128xf32> to vector<5x1x128xf32>
    %799 = arith.mulf %797, %798 : vector<5x1x128xf32>
    %cst_162 = arith.constant 0.000000e+00 : f32
    %800 = vector.broadcast %cst_162 : f32 to vector<5x32x128xf32>
    %801 = arith.subf %800, %785 : vector<5x32x128xf32>
    %802 = math.exp %801 : vector<5x32x128xf32>
    %cst_163 = arith.constant 1.000000e+00 : f32
    %803 = vector.broadcast %cst_163 : f32 to vector<5x32x128xf32>
    %804 = arith.addf %803, %802 : vector<5x32x128xf32>
    %805 = vector.extract_strided_slice %804 {offsets = [0, 0, 0], sizes = [5, 16, 128], strides = [1, 1, 1]} : vector<5x32x128xf32> to vector<5x16x128xf32>
    %806 = vector.extract_strided_slice %804 {offsets = [0, 16, 0], sizes = [5, 16, 128], strides = [1, 1, 1]} : vector<5x32x128xf32> to vector<5x16x128xf32>
    %807 = arith.mulf %805, %806 : vector<5x16x128xf32>
    %808 = vector.extract_strided_slice %807 {offsets = [0, 0, 0], sizes = [5, 8, 128], strides = [1, 1, 1]} : vector<5x16x128xf32> to vector<5x8x128xf32>
    %809 = vector.extract_strided_slice %807 {offsets = [0, 8, 0], sizes = [5, 8, 128], strides = [1, 1, 1]} : vector<5x16x128xf32> to vector<5x8x128xf32>
    %810 = arith.mulf %808, %809 : vector<5x8x128xf32>
    %811 = vector.extract_strided_slice %810 {offsets = [0, 0, 0], sizes = [5, 4, 128], strides = [1, 1, 1]} : vector<5x8x128xf32> to vector<5x4x128xf32>
    %812 = vector.extract_strided_slice %810 {offsets = [0, 4, 0], sizes = [5, 4, 128], strides = [1, 1, 1]} : vector<5x8x128xf32> to vector<5x4x128xf32>
    %813 = arith.mulf %811, %812 : vector<5x4x128xf32>
    %814 = vector.extract_strided_slice %813 {offsets = [0, 0, 0], sizes = [5, 2, 128], strides = [1, 1, 1]} : vector<5x4x128xf32> to vector<5x2x128xf32>
    %815 = vector.extract_strided_slice %813 {offsets = [0, 2, 0], sizes = [5, 2, 128], strides = [1, 1, 1]} : vector<5x4x128xf32> to vector<5x2x128xf32>
    %816 = arith.mulf %814, %815 : vector<5x2x128xf32>
    %817 = vector.extract_strided_slice %816 {offsets = [0, 0, 0], sizes = [5, 1, 128], strides = [1, 1, 1]} : vector<5x2x128xf32> to vector<5x1x128xf32>
    %818 = vector.extract_strided_slice %816 {offsets = [0, 1, 0], sizes = [5, 1, 128], strides = [1, 1, 1]} : vector<5x2x128xf32> to vector<5x1x128xf32>
    %819 = arith.mulf %817, %818 : vector<5x1x128xf32>
    %820 = arith.mulf %799, %819 : vector<5x1x128xf32>
    %cst_164 = arith.constant 1.000000e+00 : f32
    %821 = vector.broadcast %cst_164 : f32 to vector<5x1x128xf32>
    %822 = arith.divf %821, %820 : vector<5x1x128xf32>
    %823 = vector.extract_strided_slice %822 {offsets = [0, 0, 0], sizes = [1, 1, 128], strides = [1, 1, 1]} : vector<5x1x128xf32> to vector<1x1x128xf32>
    %824 = vector.shape_cast %823 : vector<1x1x128xf32> to vector<1x128xf32>
    %825 = vector.extract_strided_slice %822 {offsets = [1, 0, 0], sizes = [1, 1, 128], strides = [1, 1, 1]} : vector<5x1x128xf32> to vector<1x1x128xf32>
    %826 = vector.shape_cast %825 : vector<1x1x128xf32> to vector<1x128xf32>
    %827 = arith.addf %824, %826 : vector<1x128xf32>
    %828 = vector.extract_strided_slice %822 {offsets = [2, 0, 0], sizes = [1, 1, 128], strides = [1, 1, 1]} : vector<5x1x128xf32> to vector<1x1x128xf32>
    %829 = vector.shape_cast %828 : vector<1x1x128xf32> to vector<1x128xf32>
    %830 = arith.addf %827, %829 : vector<1x128xf32>
    %831 = vector.extract_strided_slice %822 {offsets = [3, 0, 0], sizes = [1, 1, 128], strides = [1, 1, 1]} : vector<5x1x128xf32> to vector<1x1x128xf32>
    %832 = vector.shape_cast %831 : vector<1x1x128xf32> to vector<1x128xf32>
    %833 = arith.addf %830, %832 : vector<1x128xf32>
    %834 = vector.extract_strided_slice %822 {offsets = [4, 0, 0], sizes = [1, 1, 128], strides = [1, 1, 1]} : vector<5x1x128xf32> to vector<1x1x128xf32>
    %835 = vector.shape_cast %834 : vector<1x1x128xf32> to vector<1x128xf32>
    %836 = arith.addf %833, %835 : vector<1x128xf32>
    %837 = arith.subf %836, %9 : vector<1x128xf32>
    %838 = arith.mulf %8, %837 : vector<1x128xf32>
    %839 = vector.extract_strided_slice %838 {offsets = [0, 0], sizes = [1, 32], strides = [1, 1]} : vector<1x128xf32> to vector<1x32xf32>
    %840 = arith.negf %839 : vector<1x32xf32>
    %841 = math.exp %840 : vector<1x32xf32>
    %cst_165 = arith.constant 1.000000e+00 : f32
    %842 = vector.broadcast %cst_165 : f32 to vector<1x32xf32>
    %843 = arith.addf %842, %841 : vector<1x32xf32>
    %844 = arith.divf %842, %843 : vector<1x32xf32>
    %845 = vector.extract_strided_slice %838 {offsets = [0, 32], sizes = [1, 32], strides = [1, 1]} : vector<1x128xf32> to vector<1x32xf32>
    %846 = arith.negf %845 : vector<1x32xf32>
    %847 = math.exp %846 : vector<1x32xf32>
    %cst_166 = arith.constant 1.000000e+00 : f32
    %848 = vector.broadcast %cst_166 : f32 to vector<1x32xf32>
    %849 = arith.addf %848, %847 : vector<1x32xf32>
    %850 = arith.divf %848, %849 : vector<1x32xf32>
    %851 = vector.extract_strided_slice %838 {offsets = [0, 64], sizes = [1, 32], strides = [1, 1]} : vector<1x128xf32> to vector<1x32xf32>
    %852 = math.tanh %851 : vector<1x32xf32>
    %853 = vector.extract_strided_slice %838 {offsets = [0, 96], sizes = [1, 32], strides = [1, 1]} : vector<1x128xf32> to vector<1x32xf32>
    %854 = arith.negf %853 : vector<1x32xf32>
    %855 = math.exp %854 : vector<1x32xf32>
    %cst_167 = arith.constant 1.000000e+00 : f32
    %856 = vector.broadcast %cst_167 : f32 to vector<1x32xf32>
    %857 = arith.addf %856, %855 : vector<1x32xf32>
    %858 = arith.divf %856, %857 : vector<1x32xf32>
    %859 = vector.extract_strided_slice %669 {offsets = [1, 0], sizes = [1, 32], strides = [1, 1]} : vector<2x32xf32> to vector<1x32xf32>
    %860 = arith.mulf %844, %859 : vector<1x32xf32>
    %861 = arith.mulf %850, %852 : vector<1x32xf32>
    %862 = arith.addf %860, %861 : vector<1x32xf32>
    %863 = math.tanh %862 : vector<1x32xf32>
    %864 = arith.mulf %858, %863 : vector<1x32xf32>
    %c1_i32_168 = arith.constant 1 : i32
    %865 = vector.broadcast %c1_i32_168 : i32 to vector<2x1xi32>
    %866 = arith.cmpi eq, %15, %865 : vector<2x1xi32>
    %867 = arith.extui %866 : vector<2x1xi1> to vector<2x1xi32>
    %868 = arith.sitofp %867 : vector<2x1xi32> to vector<2x1xf32>
    %869 = vector.broadcast %868 : vector<2x1xf32> to vector<2x32xf32>
    %870 = vector.broadcast %864 : vector<1x32xf32> to vector<2x32xf32>
    %871 = arith.mulf %869, %870 : vector<2x32xf32>
    %872 = arith.addf %770, %871 : vector<2x32xf32>
    %873 = vector.broadcast %868 : vector<2x1xf32> to vector<2x32xf32>
    %874 = vector.broadcast %862 : vector<1x32xf32> to vector<2x32xf32>
    %875 = arith.mulf %873, %874 : vector<2x32xf32>
    %876 = arith.addf %774, %875 : vector<2x32xf32>
    %c0_169 = arith.constant 0 : index
    %c0_170 = arith.constant 0 : index
    %877 = vector.load %arg9[%c0_169, %c0_170] : memref<2x32xf32, #tpu.memory_space<vmem>>, vector<2x32xf32>
    tpu.vector_store %arg9[%c0_169, %c0_170], %872 {strides = array<i32>} : memref<2x32xf32, #tpu.memory_space<vmem>>, vector<2x32xf32>,
    %c0_171 = arith.constant 0 : index
    %c0_172 = arith.constant 0 : index
    %c0_173 = arith.constant 0 : index
    %878 = vector.load %arg8[%c0_171, %c0_172, %c0_173] : memref<1x2x32xf32, #tpu.memory_space<vmem>>, vector<1x2x32xf32>
    %879 = vector.shape_cast %878 : vector<1x2x32xf32> to vector<2x32xf32>
    %880 = vector.shape_cast %876 : vector<2x32xf32> to vector<1x2x32xf32>
    tpu.vector_store %arg8[%c0_171, %c0_172, %c0_173], %880 {strides = array<i32>} : memref<1x2x32xf32, #tpu.memory_space<vmem>>, vector<1x2x32xf32>,
    %c3_174 = arith.constant 3 : index
    %c0_175 = arith.constant 0 : index
    %c0_176 = arith.constant 0 : index
    %881 = vector.load %arg7[%c3_174, %c0_175, %c0_176] : memref<8x2x32xf32, #tpu.memory_space<vmem>>, vector<1x2x32xf32>
    %882 = vector.shape_cast %881 : vector<1x2x32xf32> to vector<2x32xf32>
    %883 = vector.shape_cast %872 : vector<2x32xf32> to vector<1x2x32xf32>
    tpu.vector_store %arg7[%c3_174, %c0_175, %c0_176], %883 {strides = array<i32>} : memref<8x2x32xf32, #tpu.memory_space<vmem>>, vector<1x2x32xf32>,
    %c0_177 = arith.constant 0 : index
    %c0_178 = arith.constant 0 : index
    %884 = vector.load %arg9[%c0_177, %c0_178] : memref<2x32xf32, #tpu.memory_space<vmem>>, vector<2x32xf32>
    %c0_179 = arith.constant 0 : index
    %c0_180 = arith.constant 0 : index
    %c0_181 = arith.constant 0 : index
    %885 = vector.load %arg8[%c0_179, %c0_180, %c0_181] : memref<1x2x32xf32, #tpu.memory_space<vmem>>, vector<1x2x32xf32>
    %886 = vector.shape_cast %885 : vector<1x2x32xf32> to vector<2x32xf32>
    %cst_182 = arith.constant dense<0.000000e+00> : vector<32x2xf32>
    %887 = tpu.matmul %14, %884, %cst_182 {dimension_numbers = #tpu.dot_dimension_numbers<[1], [1], [0], [0], [0, 0, 1, 0], [], []>} : vector<32x32xf32>, vector<2x32xf32>, vector<32x2xf32> -> vector<32x2xf32>
    %cst_183 = arith.constant 0.000000e+00 : f32
    %888 = vector.broadcast %cst_183 : f32 to vector<2x32xf32>
    %cst_184 = arith.constant 0.000000e+00 : f32
    %889 = vector.broadcast %cst_184 : f32 to vector<2x32xf32>
    %c4 = arith.constant 4 : index
    %c0_185 = arith.constant 0 : index
    %c0_186 = arith.constant 0 : index
    %c0_187 = arith.constant 0 : index
    %890 = vector.load %arg1[%c4, %c0_185, %c0_186, %c0_187] : memref<8x2x8x1xf32, #tpu.memory_space<vmem>>, vector<1x1x8x1xf32>
    %891 = vector.shape_cast %890 : vector<1x1x8x1xf32> to vector<8x1xf32>
    %892 = vector.extract_strided_slice %887 {offsets = [0, 0], sizes = [32, 1], strides = [1, 1]} : vector<32x2xf32> to vector<32x1xf32>
    %893 = vector.shape_cast %891 : vector<8x1xf32> to vector<1x8x1xf32>
    %894 = vector.broadcast %893 : vector<1x8x1xf32> to vector<5x8x128xf32>
    %895 = arith.mulf %894, %3 : vector<5x8x128xf32>
    %896 = arith.subf %895, %4 : vector<5x8x128xf32>
    %897 = vector.shape_cast %892 : vector<32x1xf32> to vector<1x32x1xf32>
    %898 = vector.broadcast %897 : vector<1x32x1xf32> to vector<5x32x128xf32>
    %899 = arith.mulf %898, %5 : vector<5x32x128xf32>
    %900 = arith.subf %899, %6 : vector<5x32x128xf32>
    %cst_188 = arith.constant 0.000000e+00 : f32
    %901 = vector.broadcast %cst_188 : f32 to vector<5x8x128xf32>
    %902 = arith.subf %901, %896 : vector<5x8x128xf32>
    %903 = math.exp %902 : vector<5x8x128xf32>
    %cst_189 = arith.constant 1.000000e+00 : f32
    %904 = vector.broadcast %cst_189 : f32 to vector<5x8x128xf32>
    %905 = arith.addf %904, %903 : vector<5x8x128xf32>
    %906 = vector.extract_strided_slice %905 {offsets = [0, 0, 0], sizes = [5, 4, 128], strides = [1, 1, 1]} : vector<5x8x128xf32> to vector<5x4x128xf32>
    %907 = vector.extract_strided_slice %905 {offsets = [0, 4, 0], sizes = [5, 4, 128], strides = [1, 1, 1]} : vector<5x8x128xf32> to vector<5x4x128xf32>
    %908 = arith.mulf %906, %907 : vector<5x4x128xf32>
    %909 = vector.extract_strided_slice %908 {offsets = [0, 0, 0], sizes = [5, 2, 128], strides = [1, 1, 1]} : vector<5x4x128xf32> to vector<5x2x128xf32>
    %910 = vector.extract_strided_slice %908 {offsets = [0, 2, 0], sizes = [5, 2, 128], strides = [1, 1, 1]} : vector<5x4x128xf32> to vector<5x2x128xf32>
    %911 = arith.mulf %909, %910 : vector<5x2x128xf32>
    %912 = vector.extract_strided_slice %911 {offsets = [0, 0, 0], sizes = [5, 1, 128], strides = [1, 1, 1]} : vector<5x2x128xf32> to vector<5x1x128xf32>
    %913 = vector.extract_strided_slice %911 {offsets = [0, 1, 0], sizes = [5, 1, 128], strides = [1, 1, 1]} : vector<5x2x128xf32> to vector<5x1x128xf32>
    %914 = arith.mulf %912, %913 : vector<5x1x128xf32>
    %cst_190 = arith.constant 0.000000e+00 : f32
    %915 = vector.broadcast %cst_190 : f32 to vector<5x32x128xf32>
    %916 = arith.subf %915, %900 : vector<5x32x128xf32>
    %917 = math.exp %916 : vector<5x32x128xf32>
    %cst_191 = arith.constant 1.000000e+00 : f32
    %918 = vector.broadcast %cst_191 : f32 to vector<5x32x128xf32>
    %919 = arith.addf %918, %917 : vector<5x32x128xf32>
    %920 = vector.extract_strided_slice %919 {offsets = [0, 0, 0], sizes = [5, 16, 128], strides = [1, 1, 1]} : vector<5x32x128xf32> to vector<5x16x128xf32>
    %921 = vector.extract_strided_slice %919 {offsets = [0, 16, 0], sizes = [5, 16, 128], strides = [1, 1, 1]} : vector<5x32x128xf32> to vector<5x16x128xf32>
    %922 = arith.mulf %920, %921 : vector<5x16x128xf32>
    %923 = vector.extract_strided_slice %922 {offsets = [0, 0, 0], sizes = [5, 8, 128], strides = [1, 1, 1]} : vector<5x16x128xf32> to vector<5x8x128xf32>
    %924 = vector.extract_strided_slice %922 {offsets = [0, 8, 0], sizes = [5, 8, 128], strides = [1, 1, 1]} : vector<5x16x128xf32> to vector<5x8x128xf32>
    %925 = arith.mulf %923, %924 : vector<5x8x128xf32>
    %926 = vector.extract_strided_slice %925 {offsets = [0, 0, 0], sizes = [5, 4, 128], strides = [1, 1, 1]} : vector<5x8x128xf32> to vector<5x4x128xf32>
    %927 = vector.extract_strided_slice %925 {offsets = [0, 4, 0], sizes = [5, 4, 128], strides = [1, 1, 1]} : vector<5x8x128xf32> to vector<5x4x128xf32>
    %928 = arith.mulf %926, %927 : vector<5x4x128xf32>
    %929 = vector.extract_strided_slice %928 {offsets = [0, 0, 0], sizes = [5, 2, 128], strides = [1, 1, 1]} : vector<5x4x128xf32> to vector<5x2x128xf32>
    %930 = vector.extract_strided_slice %928 {offsets = [0, 2, 0], sizes = [5, 2, 128], strides = [1, 1, 1]} : vector<5x4x128xf32> to vector<5x2x128xf32>
    %931 = arith.mulf %929, %930 : vector<5x2x128xf32>
    %932 = vector.extract_strided_slice %931 {offsets = [0, 0, 0], sizes = [5, 1, 128], strides = [1, 1, 1]} : vector<5x2x128xf32> to vector<5x1x128xf32>
    %933 = vector.extract_strided_slice %931 {offsets = [0, 1, 0], sizes = [5, 1, 128], strides = [1, 1, 1]} : vector<5x2x128xf32> to vector<5x1x128xf32>
    %934 = arith.mulf %932, %933 : vector<5x1x128xf32>
    %935 = arith.mulf %914, %934 : vector<5x1x128xf32>
    %cst_192 = arith.constant 1.000000e+00 : f32
    %936 = vector.broadcast %cst_192 : f32 to vector<5x1x128xf32>
    %937 = arith.divf %936, %935 : vector<5x1x128xf32>
    %938 = vector.extract_strided_slice %937 {offsets = [0, 0, 0], sizes = [1, 1, 128], strides = [1, 1, 1]} : vector<5x1x128xf32> to vector<1x1x128xf32>
    %939 = vector.shape_cast %938 : vector<1x1x128xf32> to vector<1x128xf32>
    %940 = vector.extract_strided_slice %937 {offsets = [1, 0, 0], sizes = [1, 1, 128], strides = [1, 1, 1]} : vector<5x1x128xf32> to vector<1x1x128xf32>
    %941 = vector.shape_cast %940 : vector<1x1x128xf32> to vector<1x128xf32>
    %942 = arith.addf %939, %941 : vector<1x128xf32>
    %943 = vector.extract_strided_slice %937 {offsets = [2, 0, 0], sizes = [1, 1, 128], strides = [1, 1, 1]} : vector<5x1x128xf32> to vector<1x1x128xf32>
    %944 = vector.shape_cast %943 : vector<1x1x128xf32> to vector<1x128xf32>
    %945 = arith.addf %942, %944 : vector<1x128xf32>
    %946 = vector.extract_strided_slice %937 {offsets = [3, 0, 0], sizes = [1, 1, 128], strides = [1, 1, 1]} : vector<5x1x128xf32> to vector<1x1x128xf32>
    %947 = vector.shape_cast %946 : vector<1x1x128xf32> to vector<1x128xf32>
    %948 = arith.addf %945, %947 : vector<1x128xf32>
    %949 = vector.extract_strided_slice %937 {offsets = [4, 0, 0], sizes = [1, 1, 128], strides = [1, 1, 1]} : vector<5x1x128xf32> to vector<1x1x128xf32>
    %950 = vector.shape_cast %949 : vector<1x1x128xf32> to vector<1x128xf32>
    %951 = arith.addf %948, %950 : vector<1x128xf32>
    %952 = arith.subf %951, %9 : vector<1x128xf32>
    %953 = arith.mulf %8, %952 : vector<1x128xf32>
    %954 = vector.extract_strided_slice %953 {offsets = [0, 0], sizes = [1, 32], strides = [1, 1]} : vector<1x128xf32> to vector<1x32xf32>
    %955 = arith.negf %954 : vector<1x32xf32>
    %956 = math.exp %955 : vector<1x32xf32>
    %cst_193 = arith.constant 1.000000e+00 : f32
    %957 = vector.broadcast %cst_193 : f32 to vector<1x32xf32>
    %958 = arith.addf %957, %956 : vector<1x32xf32>
    %959 = arith.divf %957, %958 : vector<1x32xf32>
    %960 = vector.extract_strided_slice %953 {offsets = [0, 32], sizes = [1, 32], strides = [1, 1]} : vector<1x128xf32> to vector<1x32xf32>
    %961 = arith.negf %960 : vector<1x32xf32>
    %962 = math.exp %961 : vector<1x32xf32>
    %cst_194 = arith.constant 1.000000e+00 : f32
    %963 = vector.broadcast %cst_194 : f32 to vector<1x32xf32>
    %964 = arith.addf %963, %962 : vector<1x32xf32>
    %965 = arith.divf %963, %964 : vector<1x32xf32>
    %966 = vector.extract_strided_slice %953 {offsets = [0, 64], sizes = [1, 32], strides = [1, 1]} : vector<1x128xf32> to vector<1x32xf32>
    %967 = math.tanh %966 : vector<1x32xf32>
    %968 = vector.extract_strided_slice %953 {offsets = [0, 96], sizes = [1, 32], strides = [1, 1]} : vector<1x128xf32> to vector<1x32xf32>
    %969 = arith.negf %968 : vector<1x32xf32>
    %970 = math.exp %969 : vector<1x32xf32>
    %cst_195 = arith.constant 1.000000e+00 : f32
    %971 = vector.broadcast %cst_195 : f32 to vector<1x32xf32>
    %972 = arith.addf %971, %970 : vector<1x32xf32>
    %973 = arith.divf %971, %972 : vector<1x32xf32>
    %974 = vector.extract_strided_slice %886 {offsets = [0, 0], sizes = [1, 32], strides = [1, 1]} : vector<2x32xf32> to vector<1x32xf32>
    %975 = arith.mulf %959, %974 : vector<1x32xf32>
    %976 = arith.mulf %965, %967 : vector<1x32xf32>
    %977 = arith.addf %975, %976 : vector<1x32xf32>
    %978 = math.tanh %977 : vector<1x32xf32>
    %979 = arith.mulf %973, %978 : vector<1x32xf32>
    %c0_i32_196 = arith.constant 0 : i32
    %980 = vector.broadcast %c0_i32_196 : i32 to vector<2x1xi32>
    %981 = arith.cmpi eq, %15, %980 : vector<2x1xi32>
    %982 = arith.extui %981 : vector<2x1xi1> to vector<2x1xi32>
    %983 = arith.sitofp %982 : vector<2x1xi32> to vector<2x1xf32>
    %984 = vector.broadcast %983 : vector<2x1xf32> to vector<2x32xf32>
    %985 = vector.broadcast %979 : vector<1x32xf32> to vector<2x32xf32>
    %986 = arith.mulf %984, %985 : vector<2x32xf32>
    %987 = arith.addf %888, %986 : vector<2x32xf32>
    %988 = vector.broadcast %983 : vector<2x1xf32> to vector<2x32xf32>
    %989 = vector.broadcast %977 : vector<1x32xf32> to vector<2x32xf32>
    %990 = arith.mulf %988, %989 : vector<2x32xf32>
    %991 = arith.addf %889, %990 : vector<2x32xf32>
    %c4_197 = arith.constant 4 : index
    %c1_198 = arith.constant 1 : index
    %c0_199 = arith.constant 0 : index
    %c0_200 = arith.constant 0 : index
    %992 = vector.load %arg1[%c4_197, %c1_198, %c0_199, %c0_200] : memref<8x2x8x1xf32, #tpu.memory_space<vmem>>, vector<1x1x8x1xf32>
    %993 = vector.shape_cast %992 : vector<1x1x8x1xf32> to vector<8x1xf32>
    %994 = vector.extract_strided_slice %887 {offsets = [0, 1], sizes = [32, 1], strides = [1, 1]} : vector<32x2xf32> to vector<32x1xf32>
    %995 = vector.shape_cast %993 : vector<8x1xf32> to vector<1x8x1xf32>
    %996 = vector.broadcast %995 : vector<1x8x1xf32> to vector<5x8x128xf32>
    %997 = arith.mulf %996, %3 : vector<5x8x128xf32>
    %998 = arith.subf %997, %4 : vector<5x8x128xf32>
    %999 = vector.shape_cast %994 : vector<32x1xf32> to vector<1x32x1xf32>
    %1000 = vector.broadcast %999 : vector<1x32x1xf32> to vector<5x32x128xf32>
    %1001 = arith.mulf %1000, %5 : vector<5x32x128xf32>
    %1002 = arith.subf %1001, %6 : vector<5x32x128xf32>
    %cst_201 = arith.constant 0.000000e+00 : f32
    %1003 = vector.broadcast %cst_201 : f32 to vector<5x8x128xf32>
    %1004 = arith.subf %1003, %998 : vector<5x8x128xf32>
    %1005 = math.exp %1004 : vector<5x8x128xf32>
    %cst_202 = arith.constant 1.000000e+00 : f32
    %1006 = vector.broadcast %cst_202 : f32 to vector<5x8x128xf32>
    %1007 = arith.addf %1006, %1005 : vector<5x8x128xf32>
    %1008 = vector.extract_strided_slice %1007 {offsets = [0, 0, 0], sizes = [5, 4, 128], strides = [1, 1, 1]} : vector<5x8x128xf32> to vector<5x4x128xf32>
    %1009 = vector.extract_strided_slice %1007 {offsets = [0, 4, 0], sizes = [5, 4, 128], strides = [1, 1, 1]} : vector<5x8x128xf32> to vector<5x4x128xf32>
    %1010 = arith.mulf %1008, %1009 : vector<5x4x128xf32>
    %1011 = vector.extract_strided_slice %1010 {offsets = [0, 0, 0], sizes = [5, 2, 128], strides = [1, 1, 1]} : vector<5x4x128xf32> to vector<5x2x128xf32>
    %1012 = vector.extract_strided_slice %1010 {offsets = [0, 2, 0], sizes = [5, 2, 128], strides = [1, 1, 1]} : vector<5x4x128xf32> to vector<5x2x128xf32>
    %1013 = arith.mulf %1011, %1012 : vector<5x2x128xf32>
    %1014 = vector.extract_strided_slice %1013 {offsets = [0, 0, 0], sizes = [5, 1, 128], strides = [1, 1, 1]} : vector<5x2x128xf32> to vector<5x1x128xf32>
    %1015 = vector.extract_strided_slice %1013 {offsets = [0, 1, 0], sizes = [5, 1, 128], strides = [1, 1, 1]} : vector<5x2x128xf32> to vector<5x1x128xf32>
    %1016 = arith.mulf %1014, %1015 : vector<5x1x128xf32>
    %cst_203 = arith.constant 0.000000e+00 : f32
    %1017 = vector.broadcast %cst_203 : f32 to vector<5x32x128xf32>
    %1018 = arith.subf %1017, %1002 : vector<5x32x128xf32>
    %1019 = math.exp %1018 : vector<5x32x128xf32>
    %cst_204 = arith.constant 1.000000e+00 : f32
    %1020 = vector.broadcast %cst_204 : f32 to vector<5x32x128xf32>
    %1021 = arith.addf %1020, %1019 : vector<5x32x128xf32>
    %1022 = vector.extract_strided_slice %1021 {offsets = [0, 0, 0], sizes = [5, 16, 128], strides = [1, 1, 1]} : vector<5x32x128xf32> to vector<5x16x128xf32>
    %1023 = vector.extract_strided_slice %1021 {offsets = [0, 16, 0], sizes = [5, 16, 128], strides = [1, 1, 1]} : vector<5x32x128xf32> to vector<5x16x128xf32>
    %1024 = arith.mulf %1022, %1023 : vector<5x16x128xf32>
    %1025 = vector.extract_strided_slice %1024 {offsets = [0, 0, 0], sizes = [5, 8, 128], strides = [1, 1, 1]} : vector<5x16x128xf32> to vector<5x8x128xf32>
    %1026 = vector.extract_strided_slice %1024 {offsets = [0, 8, 0], sizes = [5, 8, 128], strides = [1, 1, 1]} : vector<5x16x128xf32> to vector<5x8x128xf32>
    %1027 = arith.mulf %1025, %1026 : vector<5x8x128xf32>
    %1028 = vector.extract_strided_slice %1027 {offsets = [0, 0, 0], sizes = [5, 4, 128], strides = [1, 1, 1]} : vector<5x8x128xf32> to vector<5x4x128xf32>
    %1029 = vector.extract_strided_slice %1027 {offsets = [0, 4, 0], sizes = [5, 4, 128], strides = [1, 1, 1]} : vector<5x8x128xf32> to vector<5x4x128xf32>
    %1030 = arith.mulf %1028, %1029 : vector<5x4x128xf32>
    %1031 = vector.extract_strided_slice %1030 {offsets = [0, 0, 0], sizes = [5, 2, 128], strides = [1, 1, 1]} : vector<5x4x128xf32> to vector<5x2x128xf32>
    %1032 = vector.extract_strided_slice %1030 {offsets = [0, 2, 0], sizes = [5, 2, 128], strides = [1, 1, 1]} : vector<5x4x128xf32> to vector<5x2x128xf32>
    %1033 = arith.mulf %1031, %1032 : vector<5x2x128xf32>
    %1034 = vector.extract_strided_slice %1033 {offsets = [0, 0, 0], sizes = [5, 1, 128], strides = [1, 1, 1]} : vector<5x2x128xf32> to vector<5x1x128xf32>
    %1035 = vector.extract_strided_slice %1033 {offsets = [0, 1, 0], sizes = [5, 1, 128], strides = [1, 1, 1]} : vector<5x2x128xf32> to vector<5x1x128xf32>
    %1036 = arith.mulf %1034, %1035 : vector<5x1x128xf32>
    %1037 = arith.mulf %1016, %1036 : vector<5x1x128xf32>
    %cst_205 = arith.constant 1.000000e+00 : f32
    %1038 = vector.broadcast %cst_205 : f32 to vector<5x1x128xf32>
    %1039 = arith.divf %1038, %1037 : vector<5x1x128xf32>
    %1040 = vector.extract_strided_slice %1039 {offsets = [0, 0, 0], sizes = [1, 1, 128], strides = [1, 1, 1]} : vector<5x1x128xf32> to vector<1x1x128xf32>
    %1041 = vector.shape_cast %1040 : vector<1x1x128xf32> to vector<1x128xf32>
    %1042 = vector.extract_strided_slice %1039 {offsets = [1, 0, 0], sizes = [1, 1, 128], strides = [1, 1, 1]} : vector<5x1x128xf32> to vector<1x1x128xf32>
    %1043 = vector.shape_cast %1042 : vector<1x1x128xf32> to vector<1x128xf32>
    %1044 = arith.addf %1041, %1043 : vector<1x128xf32>
    %1045 = vector.extract_strided_slice %1039 {offsets = [2, 0, 0], sizes = [1, 1, 128], strides = [1, 1, 1]} : vector<5x1x128xf32> to vector<1x1x128xf32>
    %1046 = vector.shape_cast %1045 : vector<1x1x128xf32> to vector<1x128xf32>
    %1047 = arith.addf %1044, %1046 : vector<1x128xf32>
    %1048 = vector.extract_strided_slice %1039 {offsets = [3, 0, 0], sizes = [1, 1, 128], strides = [1, 1, 1]} : vector<5x1x128xf32> to vector<1x1x128xf32>
    %1049 = vector.shape_cast %1048 : vector<1x1x128xf32> to vector<1x128xf32>
    %1050 = arith.addf %1047, %1049 : vector<1x128xf32>
    %1051 = vector.extract_strided_slice %1039 {offsets = [4, 0, 0], sizes = [1, 1, 128], strides = [1, 1, 1]} : vector<5x1x128xf32> to vector<1x1x128xf32>
    %1052 = vector.shape_cast %1051 : vector<1x1x128xf32> to vector<1x128xf32>
    %1053 = arith.addf %1050, %1052 : vector<1x128xf32>
    %1054 = arith.subf %1053, %9 : vector<1x128xf32>
    %1055 = arith.mulf %8, %1054 : vector<1x128xf32>
    %1056 = vector.extract_strided_slice %1055 {offsets = [0, 0], sizes = [1, 32], strides = [1, 1]} : vector<1x128xf32> to vector<1x32xf32>
    %1057 = arith.negf %1056 : vector<1x32xf32>
    %1058 = math.exp %1057 : vector<1x32xf32>
    %cst_206 = arith.constant 1.000000e+00 : f32
    %1059 = vector.broadcast %cst_206 : f32 to vector<1x32xf32>
    %1060 = arith.addf %1059, %1058 : vector<1x32xf32>
    %1061 = arith.divf %1059, %1060 : vector<1x32xf32>
    %1062 = vector.extract_strided_slice %1055 {offsets = [0, 32], sizes = [1, 32], strides = [1, 1]} : vector<1x128xf32> to vector<1x32xf32>
    %1063 = arith.negf %1062 : vector<1x32xf32>
    %1064 = math.exp %1063 : vector<1x32xf32>
    %cst_207 = arith.constant 1.000000e+00 : f32
    %1065 = vector.broadcast %cst_207 : f32 to vector<1x32xf32>
    %1066 = arith.addf %1065, %1064 : vector<1x32xf32>
    %1067 = arith.divf %1065, %1066 : vector<1x32xf32>
    %1068 = vector.extract_strided_slice %1055 {offsets = [0, 64], sizes = [1, 32], strides = [1, 1]} : vector<1x128xf32> to vector<1x32xf32>
    %1069 = math.tanh %1068 : vector<1x32xf32>
    %1070 = vector.extract_strided_slice %1055 {offsets = [0, 96], sizes = [1, 32], strides = [1, 1]} : vector<1x128xf32> to vector<1x32xf32>
    %1071 = arith.negf %1070 : vector<1x32xf32>
    %1072 = math.exp %1071 : vector<1x32xf32>
    %cst_208 = arith.constant 1.000000e+00 : f32
    %1073 = vector.broadcast %cst_208 : f32 to vector<1x32xf32>
    %1074 = arith.addf %1073, %1072 : vector<1x32xf32>
    %1075 = arith.divf %1073, %1074 : vector<1x32xf32>
    %1076 = vector.extract_strided_slice %886 {offsets = [1, 0], sizes = [1, 32], strides = [1, 1]} : vector<2x32xf32> to vector<1x32xf32>
    %1077 = arith.mulf %1061, %1076 : vector<1x32xf32>
    %1078 = arith.mulf %1067, %1069 : vector<1x32xf32>
    %1079 = arith.addf %1077, %1078 : vector<1x32xf32>
    %1080 = math.tanh %1079 : vector<1x32xf32>
    %1081 = arith.mulf %1075, %1080 : vector<1x32xf32>
    %c1_i32_209 = arith.constant 1 : i32
    %1082 = vector.broadcast %c1_i32_209 : i32 to vector<2x1xi32>
    %1083 = arith.cmpi eq, %15, %1082 : vector<2x1xi32>
    %1084 = arith.extui %1083 : vector<2x1xi1> to vector<2x1xi32>
    %1085 = arith.sitofp %1084 : vector<2x1xi32> to vector<2x1xf32>
    %1086 = vector.broadcast %1085 : vector<2x1xf32> to vector<2x32xf32>
    %1087 = vector.broadcast %1081 : vector<1x32xf32> to vector<2x32xf32>
    %1088 = arith.mulf %1086, %1087 : vector<2x32xf32>
    %1089 = arith.addf %987, %1088 : vector<2x32xf32>
    %1090 = vector.broadcast %1085 : vector<2x1xf32> to vector<2x32xf32>
    %1091 = vector.broadcast %1079 : vector<1x32xf32> to vector<2x32xf32>
    %1092 = arith.mulf %1090, %1091 : vector<2x32xf32>
    %1093 = arith.addf %991, %1092 : vector<2x32xf32>
    %c0_210 = arith.constant 0 : index
    %c0_211 = arith.constant 0 : index
    %1094 = vector.load %arg9[%c0_210, %c0_211] : memref<2x32xf32, #tpu.memory_space<vmem>>, vector<2x32xf32>
    tpu.vector_store %arg9[%c0_210, %c0_211], %1089 {strides = array<i32>} : memref<2x32xf32, #tpu.memory_space<vmem>>, vector<2x32xf32>,
    %c0_212 = arith.constant 0 : index
    %c0_213 = arith.constant 0 : index
    %c0_214 = arith.constant 0 : index
    %1095 = vector.load %arg8[%c0_212, %c0_213, %c0_214] : memref<1x2x32xf32, #tpu.memory_space<vmem>>, vector<1x2x32xf32>
    %1096 = vector.shape_cast %1095 : vector<1x2x32xf32> to vector<2x32xf32>
    %1097 = vector.shape_cast %1093 : vector<2x32xf32> to vector<1x2x32xf32>
    tpu.vector_store %arg8[%c0_212, %c0_213, %c0_214], %1097 {strides = array<i32>} : memref<1x2x32xf32, #tpu.memory_space<vmem>>, vector<1x2x32xf32>,
    %c4_215 = arith.constant 4 : index
    %c0_216 = arith.constant 0 : index
    %c0_217 = arith.constant 0 : index
    %1098 = vector.load %arg7[%c4_215, %c0_216, %c0_217] : memref<8x2x32xf32, #tpu.memory_space<vmem>>, vector<1x2x32xf32>
    %1099 = vector.shape_cast %1098 : vector<1x2x32xf32> to vector<2x32xf32>
    %1100 = vector.shape_cast %1089 : vector<2x32xf32> to vector<1x2x32xf32>
    tpu.vector_store %arg7[%c4_215, %c0_216, %c0_217], %1100 {strides = array<i32>} : memref<8x2x32xf32, #tpu.memory_space<vmem>>, vector<1x2x32xf32>,
    %c0_218 = arith.constant 0 : index
    %c0_219 = arith.constant 0 : index
    %1101 = vector.load %arg9[%c0_218, %c0_219] : memref<2x32xf32, #tpu.memory_space<vmem>>, vector<2x32xf32>
    %c0_220 = arith.constant 0 : index
    %c0_221 = arith.constant 0 : index
    %c0_222 = arith.constant 0 : index
    %1102 = vector.load %arg8[%c0_220, %c0_221, %c0_222] : memref<1x2x32xf32, #tpu.memory_space<vmem>>, vector<1x2x32xf32>
    %1103 = vector.shape_cast %1102 : vector<1x2x32xf32> to vector<2x32xf32>
    %cst_223 = arith.constant dense<0.000000e+00> : vector<32x2xf32>
    %1104 = tpu.matmul %14, %1101, %cst_223 {dimension_numbers = #tpu.dot_dimension_numbers<[1], [1], [0], [0], [0, 0, 1, 0], [], []>} : vector<32x32xf32>, vector<2x32xf32>, vector<32x2xf32> -> vector<32x2xf32>
    %cst_224 = arith.constant 0.000000e+00 : f32
    %1105 = vector.broadcast %cst_224 : f32 to vector<2x32xf32>
    %cst_225 = arith.constant 0.000000e+00 : f32
    %1106 = vector.broadcast %cst_225 : f32 to vector<2x32xf32>
    %c5 = arith.constant 5 : index
    %c0_226 = arith.constant 0 : index
    %c0_227 = arith.constant 0 : index
    %c0_228 = arith.constant 0 : index
    %1107 = vector.load %arg1[%c5, %c0_226, %c0_227, %c0_228] : memref<8x2x8x1xf32, #tpu.memory_space<vmem>>, vector<1x1x8x1xf32>
    %1108 = vector.shape_cast %1107 : vector<1x1x8x1xf32> to vector<8x1xf32>
    %1109 = vector.extract_strided_slice %1104 {offsets = [0, 0], sizes = [32, 1], strides = [1, 1]} : vector<32x2xf32> to vector<32x1xf32>
    %1110 = vector.shape_cast %1108 : vector<8x1xf32> to vector<1x8x1xf32>
    %1111 = vector.broadcast %1110 : vector<1x8x1xf32> to vector<5x8x128xf32>
    %1112 = arith.mulf %1111, %3 : vector<5x8x128xf32>
    %1113 = arith.subf %1112, %4 : vector<5x8x128xf32>
    %1114 = vector.shape_cast %1109 : vector<32x1xf32> to vector<1x32x1xf32>
    %1115 = vector.broadcast %1114 : vector<1x32x1xf32> to vector<5x32x128xf32>
    %1116 = arith.mulf %1115, %5 : vector<5x32x128xf32>
    %1117 = arith.subf %1116, %6 : vector<5x32x128xf32>
    %cst_229 = arith.constant 0.000000e+00 : f32
    %1118 = vector.broadcast %cst_229 : f32 to vector<5x8x128xf32>
    %1119 = arith.subf %1118, %1113 : vector<5x8x128xf32>
    %1120 = math.exp %1119 : vector<5x8x128xf32>
    %cst_230 = arith.constant 1.000000e+00 : f32
    %1121 = vector.broadcast %cst_230 : f32 to vector<5x8x128xf32>
    %1122 = arith.addf %1121, %1120 : vector<5x8x128xf32>
    %1123 = vector.extract_strided_slice %1122 {offsets = [0, 0, 0], sizes = [5, 4, 128], strides = [1, 1, 1]} : vector<5x8x128xf32> to vector<5x4x128xf32>
    %1124 = vector.extract_strided_slice %1122 {offsets = [0, 4, 0], sizes = [5, 4, 128], strides = [1, 1, 1]} : vector<5x8x128xf32> to vector<5x4x128xf32>
    %1125 = arith.mulf %1123, %1124 : vector<5x4x128xf32>
    %1126 = vector.extract_strided_slice %1125 {offsets = [0, 0, 0], sizes = [5, 2, 128], strides = [1, 1, 1]} : vector<5x4x128xf32> to vector<5x2x128xf32>
    %1127 = vector.extract_strided_slice %1125 {offsets = [0, 2, 0], sizes = [5, 2, 128], strides = [1, 1, 1]} : vector<5x4x128xf32> to vector<5x2x128xf32>
    %1128 = arith.mulf %1126, %1127 : vector<5x2x128xf32>
    %1129 = vector.extract_strided_slice %1128 {offsets = [0, 0, 0], sizes = [5, 1, 128], strides = [1, 1, 1]} : vector<5x2x128xf32> to vector<5x1x128xf32>
    %1130 = vector.extract_strided_slice %1128 {offsets = [0, 1, 0], sizes = [5, 1, 128], strides = [1, 1, 1]} : vector<5x2x128xf32> to vector<5x1x128xf32>
    %1131 = arith.mulf %1129, %1130 : vector<5x1x128xf32>
    %cst_231 = arith.constant 0.000000e+00 : f32
    %1132 = vector.broadcast %cst_231 : f32 to vector<5x32x128xf32>
    %1133 = arith.subf %1132, %1117 : vector<5x32x128xf32>
    %1134 = math.exp %1133 : vector<5x32x128xf32>
    %cst_232 = arith.constant 1.000000e+00 : f32
    %1135 = vector.broadcast %cst_232 : f32 to vector<5x32x128xf32>
    %1136 = arith.addf %1135, %1134 : vector<5x32x128xf32>
    %1137 = vector.extract_strided_slice %1136 {offsets = [0, 0, 0], sizes = [5, 16, 128], strides = [1, 1, 1]} : vector<5x32x128xf32> to vector<5x16x128xf32>
    %1138 = vector.extract_strided_slice %1136 {offsets = [0, 16, 0], sizes = [5, 16, 128], strides = [1, 1, 1]} : vector<5x32x128xf32> to vector<5x16x128xf32>
    %1139 = arith.mulf %1137, %1138 : vector<5x16x128xf32>
    %1140 = vector.extract_strided_slice %1139 {offsets = [0, 0, 0], sizes = [5, 8, 128], strides = [1, 1, 1]} : vector<5x16x128xf32> to vector<5x8x128xf32>
    %1141 = vector.extract_strided_slice %1139 {offsets = [0, 8, 0], sizes = [5, 8, 128], strides = [1, 1, 1]} : vector<5x16x128xf32> to vector<5x8x128xf32>
    %1142 = arith.mulf %1140, %1141 : vector<5x8x128xf32>
    %1143 = vector.extract_strided_slice %1142 {offsets = [0, 0, 0], sizes = [5, 4, 128], strides = [1, 1, 1]} : vector<5x8x128xf32> to vector<5x4x128xf32>
    %1144 = vector.extract_strided_slice %1142 {offsets = [0, 4, 0], sizes = [5, 4, 128], strides = [1, 1, 1]} : vector<5x8x128xf32> to vector<5x4x128xf32>
    %1145 = arith.mulf %1143, %1144 : vector<5x4x128xf32>
    %1146 = vector.extract_strided_slice %1145 {offsets = [0, 0, 0], sizes = [5, 2, 128], strides = [1, 1, 1]} : vector<5x4x128xf32> to vector<5x2x128xf32>
    %1147 = vector.extract_strided_slice %1145 {offsets = [0, 2, 0], sizes = [5, 2, 128], strides = [1, 1, 1]} : vector<5x4x128xf32> to vector<5x2x128xf32>
    %1148 = arith.mulf %1146, %1147 : vector<5x2x128xf32>
    %1149 = vector.extract_strided_slice %1148 {offsets = [0, 0, 0], sizes = [5, 1, 128], strides = [1, 1, 1]} : vector<5x2x128xf32> to vector<5x1x128xf32>
    %1150 = vector.extract_strided_slice %1148 {offsets = [0, 1, 0], sizes = [5, 1, 128], strides = [1, 1, 1]} : vector<5x2x128xf32> to vector<5x1x128xf32>
    %1151 = arith.mulf %1149, %1150 : vector<5x1x128xf32>
    %1152 = arith.mulf %1131, %1151 : vector<5x1x128xf32>
    %cst_233 = arith.constant 1.000000e+00 : f32
    %1153 = vector.broadcast %cst_233 : f32 to vector<5x1x128xf32>
    %1154 = arith.divf %1153, %1152 : vector<5x1x128xf32>
    %1155 = vector.extract_strided_slice %1154 {offsets = [0, 0, 0], sizes = [1, 1, 128], strides = [1, 1, 1]} : vector<5x1x128xf32> to vector<1x1x128xf32>
    %1156 = vector.shape_cast %1155 : vector<1x1x128xf32> to vector<1x128xf32>
    %1157 = vector.extract_strided_slice %1154 {offsets = [1, 0, 0], sizes = [1, 1, 128], strides = [1, 1, 1]} : vector<5x1x128xf32> to vector<1x1x128xf32>
    %1158 = vector.shape_cast %1157 : vector<1x1x128xf32> to vector<1x128xf32>
    %1159 = arith.addf %1156, %1158 : vector<1x128xf32>
    %1160 = vector.extract_strided_slice %1154 {offsets = [2, 0, 0], sizes = [1, 1, 128], strides = [1, 1, 1]} : vector<5x1x128xf32> to vector<1x1x128xf32>
    %1161 = vector.shape_cast %1160 : vector<1x1x128xf32> to vector<1x128xf32>
    %1162 = arith.addf %1159, %1161 : vector<1x128xf32>
    %1163 = vector.extract_strided_slice %1154 {offsets = [3, 0, 0], sizes = [1, 1, 128], strides = [1, 1, 1]} : vector<5x1x128xf32> to vector<1x1x128xf32>
    %1164 = vector.shape_cast %1163 : vector<1x1x128xf32> to vector<1x128xf32>
    %1165 = arith.addf %1162, %1164 : vector<1x128xf32>
    %1166 = vector.extract_strided_slice %1154 {offsets = [4, 0, 0], sizes = [1, 1, 128], strides = [1, 1, 1]} : vector<5x1x128xf32> to vector<1x1x128xf32>
    %1167 = vector.shape_cast %1166 : vector<1x1x128xf32> to vector<1x128xf32>
    %1168 = arith.addf %1165, %1167 : vector<1x128xf32>
    %1169 = arith.subf %1168, %9 : vector<1x128xf32>
    %1170 = arith.mulf %8, %1169 : vector<1x128xf32>
    %1171 = vector.extract_strided_slice %1170 {offsets = [0, 0], sizes = [1, 32], strides = [1, 1]} : vector<1x128xf32> to vector<1x32xf32>
    %1172 = arith.negf %1171 : vector<1x32xf32>
    %1173 = math.exp %1172 : vector<1x32xf32>
    %cst_234 = arith.constant 1.000000e+00 : f32
    %1174 = vector.broadcast %cst_234 : f32 to vector<1x32xf32>
    %1175 = arith.addf %1174, %1173 : vector<1x32xf32>
    %1176 = arith.divf %1174, %1175 : vector<1x32xf32>
    %1177 = vector.extract_strided_slice %1170 {offsets = [0, 32], sizes = [1, 32], strides = [1, 1]} : vector<1x128xf32> to vector<1x32xf32>
    %1178 = arith.negf %1177 : vector<1x32xf32>
    %1179 = math.exp %1178 : vector<1x32xf32>
    %cst_235 = arith.constant 1.000000e+00 : f32
    %1180 = vector.broadcast %cst_235 : f32 to vector<1x32xf32>
    %1181 = arith.addf %1180, %1179 : vector<1x32xf32>
    %1182 = arith.divf %1180, %1181 : vector<1x32xf32>
    %1183 = vector.extract_strided_slice %1170 {offsets = [0, 64], sizes = [1, 32], strides = [1, 1]} : vector<1x128xf32> to vector<1x32xf32>
    %1184 = math.tanh %1183 : vector<1x32xf32>
    %1185 = vector.extract_strided_slice %1170 {offsets = [0, 96], sizes = [1, 32], strides = [1, 1]} : vector<1x128xf32> to vector<1x32xf32>
    %1186 = arith.negf %1185 : vector<1x32xf32>
    %1187 = math.exp %1186 : vector<1x32xf32>
    %cst_236 = arith.constant 1.000000e+00 : f32
    %1188 = vector.broadcast %cst_236 : f32 to vector<1x32xf32>
    %1189 = arith.addf %1188, %1187 : vector<1x32xf32>
    %1190 = arith.divf %1188, %1189 : vector<1x32xf32>
    %1191 = vector.extract_strided_slice %1103 {offsets = [0, 0], sizes = [1, 32], strides = [1, 1]} : vector<2x32xf32> to vector<1x32xf32>
    %1192 = arith.mulf %1176, %1191 : vector<1x32xf32>
    %1193 = arith.mulf %1182, %1184 : vector<1x32xf32>
    %1194 = arith.addf %1192, %1193 : vector<1x32xf32>
    %1195 = math.tanh %1194 : vector<1x32xf32>
    %1196 = arith.mulf %1190, %1195 : vector<1x32xf32>
    %c0_i32_237 = arith.constant 0 : i32
    %1197 = vector.broadcast %c0_i32_237 : i32 to vector<2x1xi32>
    %1198 = arith.cmpi eq, %15, %1197 : vector<2x1xi32>
    %1199 = arith.extui %1198 : vector<2x1xi1> to vector<2x1xi32>
    %1200 = arith.sitofp %1199 : vector<2x1xi32> to vector<2x1xf32>
    %1201 = vector.broadcast %1200 : vector<2x1xf32> to vector<2x32xf32>
    %1202 = vector.broadcast %1196 : vector<1x32xf32> to vector<2x32xf32>
    %1203 = arith.mulf %1201, %1202 : vector<2x32xf32>
    %1204 = arith.addf %1105, %1203 : vector<2x32xf32>
    %1205 = vector.broadcast %1200 : vector<2x1xf32> to vector<2x32xf32>
    %1206 = vector.broadcast %1194 : vector<1x32xf32> to vector<2x32xf32>
    %1207 = arith.mulf %1205, %1206 : vector<2x32xf32>
    %1208 = arith.addf %1106, %1207 : vector<2x32xf32>
    %c5_238 = arith.constant 5 : index
    %c1_239 = arith.constant 1 : index
    %c0_240 = arith.constant 0 : index
    %c0_241 = arith.constant 0 : index
    %1209 = vector.load %arg1[%c5_238, %c1_239, %c0_240, %c0_241] : memref<8x2x8x1xf32, #tpu.memory_space<vmem>>, vector<1x1x8x1xf32>
    %1210 = vector.shape_cast %1209 : vector<1x1x8x1xf32> to vector<8x1xf32>
    %1211 = vector.extract_strided_slice %1104 {offsets = [0, 1], sizes = [32, 1], strides = [1, 1]} : vector<32x2xf32> to vector<32x1xf32>
    %1212 = vector.shape_cast %1210 : vector<8x1xf32> to vector<1x8x1xf32>
    %1213 = vector.broadcast %1212 : vector<1x8x1xf32> to vector<5x8x128xf32>
    %1214 = arith.mulf %1213, %3 : vector<5x8x128xf32>
    %1215 = arith.subf %1214, %4 : vector<5x8x128xf32>
    %1216 = vector.shape_cast %1211 : vector<32x1xf32> to vector<1x32x1xf32>
    %1217 = vector.broadcast %1216 : vector<1x32x1xf32> to vector<5x32x128xf32>
    %1218 = arith.mulf %1217, %5 : vector<5x32x128xf32>
    %1219 = arith.subf %1218, %6 : vector<5x32x128xf32>
    %cst_242 = arith.constant 0.000000e+00 : f32
    %1220 = vector.broadcast %cst_242 : f32 to vector<5x8x128xf32>
    %1221 = arith.subf %1220, %1215 : vector<5x8x128xf32>
    %1222 = math.exp %1221 : vector<5x8x128xf32>
    %cst_243 = arith.constant 1.000000e+00 : f32
    %1223 = vector.broadcast %cst_243 : f32 to vector<5x8x128xf32>
    %1224 = arith.addf %1223, %1222 : vector<5x8x128xf32>
    %1225 = vector.extract_strided_slice %1224 {offsets = [0, 0, 0], sizes = [5, 4, 128], strides = [1, 1, 1]} : vector<5x8x128xf32> to vector<5x4x128xf32>
    %1226 = vector.extract_strided_slice %1224 {offsets = [0, 4, 0], sizes = [5, 4, 128], strides = [1, 1, 1]} : vector<5x8x128xf32> to vector<5x4x128xf32>
    %1227 = arith.mulf %1225, %1226 : vector<5x4x128xf32>
    %1228 = vector.extract_strided_slice %1227 {offsets = [0, 0, 0], sizes = [5, 2, 128], strides = [1, 1, 1]} : vector<5x4x128xf32> to vector<5x2x128xf32>
    %1229 = vector.extract_strided_slice %1227 {offsets = [0, 2, 0], sizes = [5, 2, 128], strides = [1, 1, 1]} : vector<5x4x128xf32> to vector<5x2x128xf32>
    %1230 = arith.mulf %1228, %1229 : vector<5x2x128xf32>
    %1231 = vector.extract_strided_slice %1230 {offsets = [0, 0, 0], sizes = [5, 1, 128], strides = [1, 1, 1]} : vector<5x2x128xf32> to vector<5x1x128xf32>
    %1232 = vector.extract_strided_slice %1230 {offsets = [0, 1, 0], sizes = [5, 1, 128], strides = [1, 1, 1]} : vector<5x2x128xf32> to vector<5x1x128xf32>
    %1233 = arith.mulf %1231, %1232 : vector<5x1x128xf32>
    %cst_244 = arith.constant 0.000000e+00 : f32
    %1234 = vector.broadcast %cst_244 : f32 to vector<5x32x128xf32>
    %1235 = arith.subf %1234, %1219 : vector<5x32x128xf32>
    %1236 = math.exp %1235 : vector<5x32x128xf32>
    %cst_245 = arith.constant 1.000000e+00 : f32
    %1237 = vector.broadcast %cst_245 : f32 to vector<5x32x128xf32>
    %1238 = arith.addf %1237, %1236 : vector<5x32x128xf32>
    %1239 = vector.extract_strided_slice %1238 {offsets = [0, 0, 0], sizes = [5, 16, 128], strides = [1, 1, 1]} : vector<5x32x128xf32> to vector<5x16x128xf32>
    %1240 = vector.extract_strided_slice %1238 {offsets = [0, 16, 0], sizes = [5, 16, 128], strides = [1, 1, 1]} : vector<5x32x128xf32> to vector<5x16x128xf32>
    %1241 = arith.mulf %1239, %1240 : vector<5x16x128xf32>
    %1242 = vector.extract_strided_slice %1241 {offsets = [0, 0, 0], sizes = [5, 8, 128], strides = [1, 1, 1]} : vector<5x16x128xf32> to vector<5x8x128xf32>
    %1243 = vector.extract_strided_slice %1241 {offsets = [0, 8, 0], sizes = [5, 8, 128], strides = [1, 1, 1]} : vector<5x16x128xf32> to vector<5x8x128xf32>
    %1244 = arith.mulf %1242, %1243 : vector<5x8x128xf32>
    %1245 = vector.extract_strided_slice %1244 {offsets = [0, 0, 0], sizes = [5, 4, 128], strides = [1, 1, 1]} : vector<5x8x128xf32> to vector<5x4x128xf32>
    %1246 = vector.extract_strided_slice %1244 {offsets = [0, 4, 0], sizes = [5, 4, 128], strides = [1, 1, 1]} : vector<5x8x128xf32> to vector<5x4x128xf32>
    %1247 = arith.mulf %1245, %1246 : vector<5x4x128xf32>
    %1248 = vector.extract_strided_slice %1247 {offsets = [0, 0, 0], sizes = [5, 2, 128], strides = [1, 1, 1]} : vector<5x4x128xf32> to vector<5x2x128xf32>
    %1249 = vector.extract_strided_slice %1247 {offsets = [0, 2, 0], sizes = [5, 2, 128], strides = [1, 1, 1]} : vector<5x4x128xf32> to vector<5x2x128xf32>
    %1250 = arith.mulf %1248, %1249 : vector<5x2x128xf32>
    %1251 = vector.extract_strided_slice %1250 {offsets = [0, 0, 0], sizes = [5, 1, 128], strides = [1, 1, 1]} : vector<5x2x128xf32> to vector<5x1x128xf32>
    %1252 = vector.extract_strided_slice %1250 {offsets = [0, 1, 0], sizes = [5, 1, 128], strides = [1, 1, 1]} : vector<5x2x128xf32> to vector<5x1x128xf32>
    %1253 = arith.mulf %1251, %1252 : vector<5x1x128xf32>
    %1254 = arith.mulf %1233, %1253 : vector<5x1x128xf32>
    %cst_246 = arith.constant 1.000000e+00 : f32
    %1255 = vector.broadcast %cst_246 : f32 to vector<5x1x128xf32>
    %1256 = arith.divf %1255, %1254 : vector<5x1x128xf32>
    %1257 = vector.extract_strided_slice %1256 {offsets = [0, 0, 0], sizes = [1, 1, 128], strides = [1, 1, 1]} : vector<5x1x128xf32> to vector<1x1x128xf32>
    %1258 = vector.shape_cast %1257 : vector<1x1x128xf32> to vector<1x128xf32>
    %1259 = vector.extract_strided_slice %1256 {offsets = [1, 0, 0], sizes = [1, 1, 128], strides = [1, 1, 1]} : vector<5x1x128xf32> to vector<1x1x128xf32>
    %1260 = vector.shape_cast %1259 : vector<1x1x128xf32> to vector<1x128xf32>
    %1261 = arith.addf %1258, %1260 : vector<1x128xf32>
    %1262 = vector.extract_strided_slice %1256 {offsets = [2, 0, 0], sizes = [1, 1, 128], strides = [1, 1, 1]} : vector<5x1x128xf32> to vector<1x1x128xf32>
    %1263 = vector.shape_cast %1262 : vector<1x1x128xf32> to vector<1x128xf32>
    %1264 = arith.addf %1261, %1263 : vector<1x128xf32>
    %1265 = vector.extract_strided_slice %1256 {offsets = [3, 0, 0], sizes = [1, 1, 128], strides = [1, 1, 1]} : vector<5x1x128xf32> to vector<1x1x128xf32>
    %1266 = vector.shape_cast %1265 : vector<1x1x128xf32> to vector<1x128xf32>
    %1267 = arith.addf %1264, %1266 : vector<1x128xf32>
    %1268 = vector.extract_strided_slice %1256 {offsets = [4, 0, 0], sizes = [1, 1, 128], strides = [1, 1, 1]} : vector<5x1x128xf32> to vector<1x1x128xf32>
    %1269 = vector.shape_cast %1268 : vector<1x1x128xf32> to vector<1x128xf32>
    %1270 = arith.addf %1267, %1269 : vector<1x128xf32>
    %1271 = arith.subf %1270, %9 : vector<1x128xf32>
    %1272 = arith.mulf %8, %1271 : vector<1x128xf32>
    %1273 = vector.extract_strided_slice %1272 {offsets = [0, 0], sizes = [1, 32], strides = [1, 1]} : vector<1x128xf32> to vector<1x32xf32>
    %1274 = arith.negf %1273 : vector<1x32xf32>
    %1275 = math.exp %1274 : vector<1x32xf32>
    %cst_247 = arith.constant 1.000000e+00 : f32
    %1276 = vector.broadcast %cst_247 : f32 to vector<1x32xf32>
    %1277 = arith.addf %1276, %1275 : vector<1x32xf32>
    %1278 = arith.divf %1276, %1277 : vector<1x32xf32>
    %1279 = vector.extract_strided_slice %1272 {offsets = [0, 32], sizes = [1, 32], strides = [1, 1]} : vector<1x128xf32> to vector<1x32xf32>
    %1280 = arith.negf %1279 : vector<1x32xf32>
    %1281 = math.exp %1280 : vector<1x32xf32>
    %cst_248 = arith.constant 1.000000e+00 : f32
    %1282 = vector.broadcast %cst_248 : f32 to vector<1x32xf32>
    %1283 = arith.addf %1282, %1281 : vector<1x32xf32>
    %1284 = arith.divf %1282, %1283 : vector<1x32xf32>
    %1285 = vector.extract_strided_slice %1272 {offsets = [0, 64], sizes = [1, 32], strides = [1, 1]} : vector<1x128xf32> to vector<1x32xf32>
    %1286 = math.tanh %1285 : vector<1x32xf32>
    %1287 = vector.extract_strided_slice %1272 {offsets = [0, 96], sizes = [1, 32], strides = [1, 1]} : vector<1x128xf32> to vector<1x32xf32>
    %1288 = arith.negf %1287 : vector<1x32xf32>
    %1289 = math.exp %1288 : vector<1x32xf32>
    %cst_249 = arith.constant 1.000000e+00 : f32
    %1290 = vector.broadcast %cst_249 : f32 to vector<1x32xf32>
    %1291 = arith.addf %1290, %1289 : vector<1x32xf32>
    %1292 = arith.divf %1290, %1291 : vector<1x32xf32>
    %1293 = vector.extract_strided_slice %1103 {offsets = [1, 0], sizes = [1, 32], strides = [1, 1]} : vector<2x32xf32> to vector<1x32xf32>
    %1294 = arith.mulf %1278, %1293 : vector<1x32xf32>
    %1295 = arith.mulf %1284, %1286 : vector<1x32xf32>
    %1296 = arith.addf %1294, %1295 : vector<1x32xf32>
    %1297 = math.tanh %1296 : vector<1x32xf32>
    %1298 = arith.mulf %1292, %1297 : vector<1x32xf32>
    %c1_i32_250 = arith.constant 1 : i32
    %1299 = vector.broadcast %c1_i32_250 : i32 to vector<2x1xi32>
    %1300 = arith.cmpi eq, %15, %1299 : vector<2x1xi32>
    %1301 = arith.extui %1300 : vector<2x1xi1> to vector<2x1xi32>
    %1302 = arith.sitofp %1301 : vector<2x1xi32> to vector<2x1xf32>
    %1303 = vector.broadcast %1302 : vector<2x1xf32> to vector<2x32xf32>
    %1304 = vector.broadcast %1298 : vector<1x32xf32> to vector<2x32xf32>
    %1305 = arith.mulf %1303, %1304 : vector<2x32xf32>
    %1306 = arith.addf %1204, %1305 : vector<2x32xf32>
    %1307 = vector.broadcast %1302 : vector<2x1xf32> to vector<2x32xf32>
    %1308 = vector.broadcast %1296 : vector<1x32xf32> to vector<2x32xf32>
    %1309 = arith.mulf %1307, %1308 : vector<2x32xf32>
    %1310 = arith.addf %1208, %1309 : vector<2x32xf32>
    %c0_251 = arith.constant 0 : index
    %c0_252 = arith.constant 0 : index
    %1311 = vector.load %arg9[%c0_251, %c0_252] : memref<2x32xf32, #tpu.memory_space<vmem>>, vector<2x32xf32>
    tpu.vector_store %arg9[%c0_251, %c0_252], %1306 {strides = array<i32>} : memref<2x32xf32, #tpu.memory_space<vmem>>, vector<2x32xf32>,
    %c0_253 = arith.constant 0 : index
    %c0_254 = arith.constant 0 : index
    %c0_255 = arith.constant 0 : index
    %1312 = vector.load %arg8[%c0_253, %c0_254, %c0_255] : memref<1x2x32xf32, #tpu.memory_space<vmem>>, vector<1x2x32xf32>
    %1313 = vector.shape_cast %1312 : vector<1x2x32xf32> to vector<2x32xf32>
    %1314 = vector.shape_cast %1310 : vector<2x32xf32> to vector<1x2x32xf32>
    tpu.vector_store %arg8[%c0_253, %c0_254, %c0_255], %1314 {strides = array<i32>} : memref<1x2x32xf32, #tpu.memory_space<vmem>>, vector<1x2x32xf32>,
    %c5_256 = arith.constant 5 : index
    %c0_257 = arith.constant 0 : index
    %c0_258 = arith.constant 0 : index
    %1315 = vector.load %arg7[%c5_256, %c0_257, %c0_258] : memref<8x2x32xf32, #tpu.memory_space<vmem>>, vector<1x2x32xf32>
    %1316 = vector.shape_cast %1315 : vector<1x2x32xf32> to vector<2x32xf32>
    %1317 = vector.shape_cast %1306 : vector<2x32xf32> to vector<1x2x32xf32>
    tpu.vector_store %arg7[%c5_256, %c0_257, %c0_258], %1317 {strides = array<i32>} : memref<8x2x32xf32, #tpu.memory_space<vmem>>, vector<1x2x32xf32>,
    %c0_259 = arith.constant 0 : index
    %c0_260 = arith.constant 0 : index
    %1318 = vector.load %arg9[%c0_259, %c0_260] : memref<2x32xf32, #tpu.memory_space<vmem>>, vector<2x32xf32>
    %c0_261 = arith.constant 0 : index
    %c0_262 = arith.constant 0 : index
    %c0_263 = arith.constant 0 : index
    %1319 = vector.load %arg8[%c0_261, %c0_262, %c0_263] : memref<1x2x32xf32, #tpu.memory_space<vmem>>, vector<1x2x32xf32>
    %1320 = vector.shape_cast %1319 : vector<1x2x32xf32> to vector<2x32xf32>
    %cst_264 = arith.constant dense<0.000000e+00> : vector<32x2xf32>
    %1321 = tpu.matmul %14, %1318, %cst_264 {dimension_numbers = #tpu.dot_dimension_numbers<[1], [1], [0], [0], [0, 0, 1, 0], [], []>} : vector<32x32xf32>, vector<2x32xf32>, vector<32x2xf32> -> vector<32x2xf32>
    %cst_265 = arith.constant 0.000000e+00 : f32
    %1322 = vector.broadcast %cst_265 : f32 to vector<2x32xf32>
    %cst_266 = arith.constant 0.000000e+00 : f32
    %1323 = vector.broadcast %cst_266 : f32 to vector<2x32xf32>
    %c6 = arith.constant 6 : index
    %c0_267 = arith.constant 0 : index
    %c0_268 = arith.constant 0 : index
    %c0_269 = arith.constant 0 : index
    %1324 = vector.load %arg1[%c6, %c0_267, %c0_268, %c0_269] : memref<8x2x8x1xf32, #tpu.memory_space<vmem>>, vector<1x1x8x1xf32>
    %1325 = vector.shape_cast %1324 : vector<1x1x8x1xf32> to vector<8x1xf32>
    %1326 = vector.extract_strided_slice %1321 {offsets = [0, 0], sizes = [32, 1], strides = [1, 1]} : vector<32x2xf32> to vector<32x1xf32>
    %1327 = vector.shape_cast %1325 : vector<8x1xf32> to vector<1x8x1xf32>
    %1328 = vector.broadcast %1327 : vector<1x8x1xf32> to vector<5x8x128xf32>
    %1329 = arith.mulf %1328, %3 : vector<5x8x128xf32>
    %1330 = arith.subf %1329, %4 : vector<5x8x128xf32>
    %1331 = vector.shape_cast %1326 : vector<32x1xf32> to vector<1x32x1xf32>
    %1332 = vector.broadcast %1331 : vector<1x32x1xf32> to vector<5x32x128xf32>
    %1333 = arith.mulf %1332, %5 : vector<5x32x128xf32>
    %1334 = arith.subf %1333, %6 : vector<5x32x128xf32>
    %cst_270 = arith.constant 0.000000e+00 : f32
    %1335 = vector.broadcast %cst_270 : f32 to vector<5x8x128xf32>
    %1336 = arith.subf %1335, %1330 : vector<5x8x128xf32>
    %1337 = math.exp %1336 : vector<5x8x128xf32>
    %cst_271 = arith.constant 1.000000e+00 : f32
    %1338 = vector.broadcast %cst_271 : f32 to vector<5x8x128xf32>
    %1339 = arith.addf %1338, %1337 : vector<5x8x128xf32>
    %1340 = vector.extract_strided_slice %1339 {offsets = [0, 0, 0], sizes = [5, 4, 128], strides = [1, 1, 1]} : vector<5x8x128xf32> to vector<5x4x128xf32>
    %1341 = vector.extract_strided_slice %1339 {offsets = [0, 4, 0], sizes = [5, 4, 128], strides = [1, 1, 1]} : vector<5x8x128xf32> to vector<5x4x128xf32>
    %1342 = arith.mulf %1340, %1341 : vector<5x4x128xf32>
    %1343 = vector.extract_strided_slice %1342 {offsets = [0, 0, 0], sizes = [5, 2, 128], strides = [1, 1, 1]} : vector<5x4x128xf32> to vector<5x2x128xf32>
    %1344 = vector.extract_strided_slice %1342 {offsets = [0, 2, 0], sizes = [5, 2, 128], strides = [1, 1, 1]} : vector<5x4x128xf32> to vector<5x2x128xf32>
    %1345 = arith.mulf %1343, %1344 : vector<5x2x128xf32>
    %1346 = vector.extract_strided_slice %1345 {offsets = [0, 0, 0], sizes = [5, 1, 128], strides = [1, 1, 1]} : vector<5x2x128xf32> to vector<5x1x128xf32>
    %1347 = vector.extract_strided_slice %1345 {offsets = [0, 1, 0], sizes = [5, 1, 128], strides = [1, 1, 1]} : vector<5x2x128xf32> to vector<5x1x128xf32>
    %1348 = arith.mulf %1346, %1347 : vector<5x1x128xf32>
    %cst_272 = arith.constant 0.000000e+00 : f32
    %1349 = vector.broadcast %cst_272 : f32 to vector<5x32x128xf32>
    %1350 = arith.subf %1349, %1334 : vector<5x32x128xf32>
    %1351 = math.exp %1350 : vector<5x32x128xf32>
    %cst_273 = arith.constant 1.000000e+00 : f32
    %1352 = vector.broadcast %cst_273 : f32 to vector<5x32x128xf32>
    %1353 = arith.addf %1352, %1351 : vector<5x32x128xf32>
    %1354 = vector.extract_strided_slice %1353 {offsets = [0, 0, 0], sizes = [5, 16, 128], strides = [1, 1, 1]} : vector<5x32x128xf32> to vector<5x16x128xf32>
    %1355 = vector.extract_strided_slice %1353 {offsets = [0, 16, 0], sizes = [5, 16, 128], strides = [1, 1, 1]} : vector<5x32x128xf32> to vector<5x16x128xf32>
    %1356 = arith.mulf %1354, %1355 : vector<5x16x128xf32>
    %1357 = vector.extract_strided_slice %1356 {offsets = [0, 0, 0], sizes = [5, 8, 128], strides = [1, 1, 1]} : vector<5x16x128xf32> to vector<5x8x128xf32>
    %1358 = vector.extract_strided_slice %1356 {offsets = [0, 8, 0], sizes = [5, 8, 128], strides = [1, 1, 1]} : vector<5x16x128xf32> to vector<5x8x128xf32>
    %1359 = arith.mulf %1357, %1358 : vector<5x8x128xf32>
    %1360 = vector.extract_strided_slice %1359 {offsets = [0, 0, 0], sizes = [5, 4, 128], strides = [1, 1, 1]} : vector<5x8x128xf32> to vector<5x4x128xf32>
    %1361 = vector.extract_strided_slice %1359 {offsets = [0, 4, 0], sizes = [5, 4, 128], strides = [1, 1, 1]} : vector<5x8x128xf32> to vector<5x4x128xf32>
    %1362 = arith.mulf %1360, %1361 : vector<5x4x128xf32>
    %1363 = vector.extract_strided_slice %1362 {offsets = [0, 0, 0], sizes = [5, 2, 128], strides = [1, 1, 1]} : vector<5x4x128xf32> to vector<5x2x128xf32>
    %1364 = vector.extract_strided_slice %1362 {offsets = [0, 2, 0], sizes = [5, 2, 128], strides = [1, 1, 1]} : vector<5x4x128xf32> to vector<5x2x128xf32>
    %1365 = arith.mulf %1363, %1364 : vector<5x2x128xf32>
    %1366 = vector.extract_strided_slice %1365 {offsets = [0, 0, 0], sizes = [5, 1, 128], strides = [1, 1, 1]} : vector<5x2x128xf32> to vector<5x1x128xf32>
    %1367 = vector.extract_strided_slice %1365 {offsets = [0, 1, 0], sizes = [5, 1, 128], strides = [1, 1, 1]} : vector<5x2x128xf32> to vector<5x1x128xf32>
    %1368 = arith.mulf %1366, %1367 : vector<5x1x128xf32>
    %1369 = arith.mulf %1348, %1368 : vector<5x1x128xf32>
    %cst_274 = arith.constant 1.000000e+00 : f32
    %1370 = vector.broadcast %cst_274 : f32 to vector<5x1x128xf32>
    %1371 = arith.divf %1370, %1369 : vector<5x1x128xf32>
    %1372 = vector.extract_strided_slice %1371 {offsets = [0, 0, 0], sizes = [1, 1, 128], strides = [1, 1, 1]} : vector<5x1x128xf32> to vector<1x1x128xf32>
    %1373 = vector.shape_cast %1372 : vector<1x1x128xf32> to vector<1x128xf32>
    %1374 = vector.extract_strided_slice %1371 {offsets = [1, 0, 0], sizes = [1, 1, 128], strides = [1, 1, 1]} : vector<5x1x128xf32> to vector<1x1x128xf32>
    %1375 = vector.shape_cast %1374 : vector<1x1x128xf32> to vector<1x128xf32>
    %1376 = arith.addf %1373, %1375 : vector<1x128xf32>
    %1377 = vector.extract_strided_slice %1371 {offsets = [2, 0, 0], sizes = [1, 1, 128], strides = [1, 1, 1]} : vector<5x1x128xf32> to vector<1x1x128xf32>
    %1378 = vector.shape_cast %1377 : vector<1x1x128xf32> to vector<1x128xf32>
    %1379 = arith.addf %1376, %1378 : vector<1x128xf32>
    %1380 = vector.extract_strided_slice %1371 {offsets = [3, 0, 0], sizes = [1, 1, 128], strides = [1, 1, 1]} : vector<5x1x128xf32> to vector<1x1x128xf32>
    %1381 = vector.shape_cast %1380 : vector<1x1x128xf32> to vector<1x128xf32>
    %1382 = arith.addf %1379, %1381 : vector<1x128xf32>
    %1383 = vector.extract_strided_slice %1371 {offsets = [4, 0, 0], sizes = [1, 1, 128], strides = [1, 1, 1]} : vector<5x1x128xf32> to vector<1x1x128xf32>
    %1384 = vector.shape_cast %1383 : vector<1x1x128xf32> to vector<1x128xf32>
    %1385 = arith.addf %1382, %1384 : vector<1x128xf32>
    %1386 = arith.subf %1385, %9 : vector<1x128xf32>
    %1387 = arith.mulf %8, %1386 : vector<1x128xf32>
    %1388 = vector.extract_strided_slice %1387 {offsets = [0, 0], sizes = [1, 32], strides = [1, 1]} : vector<1x128xf32> to vector<1x32xf32>
    %1389 = arith.negf %1388 : vector<1x32xf32>
    %1390 = math.exp %1389 : vector<1x32xf32>
    %cst_275 = arith.constant 1.000000e+00 : f32
    %1391 = vector.broadcast %cst_275 : f32 to vector<1x32xf32>
    %1392 = arith.addf %1391, %1390 : vector<1x32xf32>
    %1393 = arith.divf %1391, %1392 : vector<1x32xf32>
    %1394 = vector.extract_strided_slice %1387 {offsets = [0, 32], sizes = [1, 32], strides = [1, 1]} : vector<1x128xf32> to vector<1x32xf32>
    %1395 = arith.negf %1394 : vector<1x32xf32>
    %1396 = math.exp %1395 : vector<1x32xf32>
    %cst_276 = arith.constant 1.000000e+00 : f32
    %1397 = vector.broadcast %cst_276 : f32 to vector<1x32xf32>
    %1398 = arith.addf %1397, %1396 : vector<1x32xf32>
    %1399 = arith.divf %1397, %1398 : vector<1x32xf32>
    %1400 = vector.extract_strided_slice %1387 {offsets = [0, 64], sizes = [1, 32], strides = [1, 1]} : vector<1x128xf32> to vector<1x32xf32>
    %1401 = math.tanh %1400 : vector<1x32xf32>
    %1402 = vector.extract_strided_slice %1387 {offsets = [0, 96], sizes = [1, 32], strides = [1, 1]} : vector<1x128xf32> to vector<1x32xf32>
    %1403 = arith.negf %1402 : vector<1x32xf32>
    %1404 = math.exp %1403 : vector<1x32xf32>
    %cst_277 = arith.constant 1.000000e+00 : f32
    %1405 = vector.broadcast %cst_277 : f32 to vector<1x32xf32>
    %1406 = arith.addf %1405, %1404 : vector<1x32xf32>
    %1407 = arith.divf %1405, %1406 : vector<1x32xf32>
    %1408 = vector.extract_strided_slice %1320 {offsets = [0, 0], sizes = [1, 32], strides = [1, 1]} : vector<2x32xf32> to vector<1x32xf32>
    %1409 = arith.mulf %1393, %1408 : vector<1x32xf32>
    %1410 = arith.mulf %1399, %1401 : vector<1x32xf32>
    %1411 = arith.addf %1409, %1410 : vector<1x32xf32>
    %1412 = math.tanh %1411 : vector<1x32xf32>
    %1413 = arith.mulf %1407, %1412 : vector<1x32xf32>
    %c0_i32_278 = arith.constant 0 : i32
    %1414 = vector.broadcast %c0_i32_278 : i32 to vector<2x1xi32>
    %1415 = arith.cmpi eq, %15, %1414 : vector<2x1xi32>
    %1416 = arith.extui %1415 : vector<2x1xi1> to vector<2x1xi32>
    %1417 = arith.sitofp %1416 : vector<2x1xi32> to vector<2x1xf32>
    %1418 = vector.broadcast %1417 : vector<2x1xf32> to vector<2x32xf32>
    %1419 = vector.broadcast %1413 : vector<1x32xf32> to vector<2x32xf32>
    %1420 = arith.mulf %1418, %1419 : vector<2x32xf32>
    %1421 = arith.addf %1322, %1420 : vector<2x32xf32>
    %1422 = vector.broadcast %1417 : vector<2x1xf32> to vector<2x32xf32>
    %1423 = vector.broadcast %1411 : vector<1x32xf32> to vector<2x32xf32>
    %1424 = arith.mulf %1422, %1423 : vector<2x32xf32>
    %1425 = arith.addf %1323, %1424 : vector<2x32xf32>
    %c6_279 = arith.constant 6 : index
    %c1_280 = arith.constant 1 : index
    %c0_281 = arith.constant 0 : index
    %c0_282 = arith.constant 0 : index
    %1426 = vector.load %arg1[%c6_279, %c1_280, %c0_281, %c0_282] : memref<8x2x8x1xf32, #tpu.memory_space<vmem>>, vector<1x1x8x1xf32>
    %1427 = vector.shape_cast %1426 : vector<1x1x8x1xf32> to vector<8x1xf32>
    %1428 = vector.extract_strided_slice %1321 {offsets = [0, 1], sizes = [32, 1], strides = [1, 1]} : vector<32x2xf32> to vector<32x1xf32>
    %1429 = vector.shape_cast %1427 : vector<8x1xf32> to vector<1x8x1xf32>
    %1430 = vector.broadcast %1429 : vector<1x8x1xf32> to vector<5x8x128xf32>
    %1431 = arith.mulf %1430, %3 : vector<5x8x128xf32>
    %1432 = arith.subf %1431, %4 : vector<5x8x128xf32>
    %1433 = vector.shape_cast %1428 : vector<32x1xf32> to vector<1x32x1xf32>
    %1434 = vector.broadcast %1433 : vector<1x32x1xf32> to vector<5x32x128xf32>
    %1435 = arith.mulf %1434, %5 : vector<5x32x128xf32>
    %1436 = arith.subf %1435, %6 : vector<5x32x128xf32>
    %cst_283 = arith.constant 0.000000e+00 : f32
    %1437 = vector.broadcast %cst_283 : f32 to vector<5x8x128xf32>
    %1438 = arith.subf %1437, %1432 : vector<5x8x128xf32>
    %1439 = math.exp %1438 : vector<5x8x128xf32>
    %cst_284 = arith.constant 1.000000e+00 : f32
    %1440 = vector.broadcast %cst_284 : f32 to vector<5x8x128xf32>
    %1441 = arith.addf %1440, %1439 : vector<5x8x128xf32>
    %1442 = vector.extract_strided_slice %1441 {offsets = [0, 0, 0], sizes = [5, 4, 128], strides = [1, 1, 1]} : vector<5x8x128xf32> to vector<5x4x128xf32>
    %1443 = vector.extract_strided_slice %1441 {offsets = [0, 4, 0], sizes = [5, 4, 128], strides = [1, 1, 1]} : vector<5x8x128xf32> to vector<5x4x128xf32>
    %1444 = arith.mulf %1442, %1443 : vector<5x4x128xf32>
    %1445 = vector.extract_strided_slice %1444 {offsets = [0, 0, 0], sizes = [5, 2, 128], strides = [1, 1, 1]} : vector<5x4x128xf32> to vector<5x2x128xf32>
    %1446 = vector.extract_strided_slice %1444 {offsets = [0, 2, 0], sizes = [5, 2, 128], strides = [1, 1, 1]} : vector<5x4x128xf32> to vector<5x2x128xf32>
    %1447 = arith.mulf %1445, %1446 : vector<5x2x128xf32>
    %1448 = vector.extract_strided_slice %1447 {offsets = [0, 0, 0], sizes = [5, 1, 128], strides = [1, 1, 1]} : vector<5x2x128xf32> to vector<5x1x128xf32>
    %1449 = vector.extract_strided_slice %1447 {offsets = [0, 1, 0], sizes = [5, 1, 128], strides = [1, 1, 1]} : vector<5x2x128xf32> to vector<5x1x128xf32>
    %1450 = arith.mulf %1448, %1449 : vector<5x1x128xf32>
    %cst_285 = arith.constant 0.000000e+00 : f32
    %1451 = vector.broadcast %cst_285 : f32 to vector<5x32x128xf32>
    %1452 = arith.subf %1451, %1436 : vector<5x32x128xf32>
    %1453 = math.exp %1452 : vector<5x32x128xf32>
    %cst_286 = arith.constant 1.000000e+00 : f32
    %1454 = vector.broadcast %cst_286 : f32 to vector<5x32x128xf32>
    %1455 = arith.addf %1454, %1453 : vector<5x32x128xf32>
    %1456 = vector.extract_strided_slice %1455 {offsets = [0, 0, 0], sizes = [5, 16, 128], strides = [1, 1, 1]} : vector<5x32x128xf32> to vector<5x16x128xf32>
    %1457 = vector.extract_strided_slice %1455 {offsets = [0, 16, 0], sizes = [5, 16, 128], strides = [1, 1, 1]} : vector<5x32x128xf32> to vector<5x16x128xf32>
    %1458 = arith.mulf %1456, %1457 : vector<5x16x128xf32>
    %1459 = vector.extract_strided_slice %1458 {offsets = [0, 0, 0], sizes = [5, 8, 128], strides = [1, 1, 1]} : vector<5x16x128xf32> to vector<5x8x128xf32>
    %1460 = vector.extract_strided_slice %1458 {offsets = [0, 8, 0], sizes = [5, 8, 128], strides = [1, 1, 1]} : vector<5x16x128xf32> to vector<5x8x128xf32>
    %1461 = arith.mulf %1459, %1460 : vector<5x8x128xf32>
    %1462 = vector.extract_strided_slice %1461 {offsets = [0, 0, 0], sizes = [5, 4, 128], strides = [1, 1, 1]} : vector<5x8x128xf32> to vector<5x4x128xf32>
    %1463 = vector.extract_strided_slice %1461 {offsets = [0, 4, 0], sizes = [5, 4, 128], strides = [1, 1, 1]} : vector<5x8x128xf32> to vector<5x4x128xf32>
    %1464 = arith.mulf %1462, %1463 : vector<5x4x128xf32>
    %1465 = vector.extract_strided_slice %1464 {offsets = [0, 0, 0], sizes = [5, 2, 128], strides = [1, 1, 1]} : vector<5x4x128xf32> to vector<5x2x128xf32>
    %1466 = vector.extract_strided_slice %1464 {offsets = [0, 2, 0], sizes = [5, 2, 128], strides = [1, 1, 1]} : vector<5x4x128xf32> to vector<5x2x128xf32>
    %1467 = arith.mulf %1465, %1466 : vector<5x2x128xf32>
    %1468 = vector.extract_strided_slice %1467 {offsets = [0, 0, 0], sizes = [5, 1, 128], strides = [1, 1, 1]} : vector<5x2x128xf32> to vector<5x1x128xf32>
    %1469 = vector.extract_strided_slice %1467 {offsets = [0, 1, 0], sizes = [5, 1, 128], strides = [1, 1, 1]} : vector<5x2x128xf32> to vector<5x1x128xf32>
    %1470 = arith.mulf %1468, %1469 : vector<5x1x128xf32>
    %1471 = arith.mulf %1450, %1470 : vector<5x1x128xf32>
    %cst_287 = arith.constant 1.000000e+00 : f32
    %1472 = vector.broadcast %cst_287 : f32 to vector<5x1x128xf32>
    %1473 = arith.divf %1472, %1471 : vector<5x1x128xf32>
    %1474 = vector.extract_strided_slice %1473 {offsets = [0, 0, 0], sizes = [1, 1, 128], strides = [1, 1, 1]} : vector<5x1x128xf32> to vector<1x1x128xf32>
    %1475 = vector.shape_cast %1474 : vector<1x1x128xf32> to vector<1x128xf32>
    %1476 = vector.extract_strided_slice %1473 {offsets = [1, 0, 0], sizes = [1, 1, 128], strides = [1, 1, 1]} : vector<5x1x128xf32> to vector<1x1x128xf32>
    %1477 = vector.shape_cast %1476 : vector<1x1x128xf32> to vector<1x128xf32>
    %1478 = arith.addf %1475, %1477 : vector<1x128xf32>
    %1479 = vector.extract_strided_slice %1473 {offsets = [2, 0, 0], sizes = [1, 1, 128], strides = [1, 1, 1]} : vector<5x1x128xf32> to vector<1x1x128xf32>
    %1480 = vector.shape_cast %1479 : vector<1x1x128xf32> to vector<1x128xf32>
    %1481 = arith.addf %1478, %1480 : vector<1x128xf32>
    %1482 = vector.extract_strided_slice %1473 {offsets = [3, 0, 0], sizes = [1, 1, 128], strides = [1, 1, 1]} : vector<5x1x128xf32> to vector<1x1x128xf32>
    %1483 = vector.shape_cast %1482 : vector<1x1x128xf32> to vector<1x128xf32>
    %1484 = arith.addf %1481, %1483 : vector<1x128xf32>
    %1485 = vector.extract_strided_slice %1473 {offsets = [4, 0, 0], sizes = [1, 1, 128], strides = [1, 1, 1]} : vector<5x1x128xf32> to vector<1x1x128xf32>
    %1486 = vector.shape_cast %1485 : vector<1x1x128xf32> to vector<1x128xf32>
    %1487 = arith.addf %1484, %1486 : vector<1x128xf32>
    %1488 = arith.subf %1487, %9 : vector<1x128xf32>
    %1489 = arith.mulf %8, %1488 : vector<1x128xf32>
    %1490 = vector.extract_strided_slice %1489 {offsets = [0, 0], sizes = [1, 32], strides = [1, 1]} : vector<1x128xf32> to vector<1x32xf32>
    %1491 = arith.negf %1490 : vector<1x32xf32>
    %1492 = math.exp %1491 : vector<1x32xf32>
    %cst_288 = arith.constant 1.000000e+00 : f32
    %1493 = vector.broadcast %cst_288 : f32 to vector<1x32xf32>
    %1494 = arith.addf %1493, %1492 : vector<1x32xf32>
    %1495 = arith.divf %1493, %1494 : vector<1x32xf32>
    %1496 = vector.extract_strided_slice %1489 {offsets = [0, 32], sizes = [1, 32], strides = [1, 1]} : vector<1x128xf32> to vector<1x32xf32>
    %1497 = arith.negf %1496 : vector<1x32xf32>
    %1498 = math.exp %1497 : vector<1x32xf32>
    %cst_289 = arith.constant 1.000000e+00 : f32
    %1499 = vector.broadcast %cst_289 : f32 to vector<1x32xf32>
    %1500 = arith.addf %1499, %1498 : vector<1x32xf32>
    %1501 = arith.divf %1499, %1500 : vector<1x32xf32>
    %1502 = vector.extract_strided_slice %1489 {offsets = [0, 64], sizes = [1, 32], strides = [1, 1]} : vector<1x128xf32> to vector<1x32xf32>
    %1503 = math.tanh %1502 : vector<1x32xf32>
    %1504 = vector.extract_strided_slice %1489 {offsets = [0, 96], sizes = [1, 32], strides = [1, 1]} : vector<1x128xf32> to vector<1x32xf32>
    %1505 = arith.negf %1504 : vector<1x32xf32>
    %1506 = math.exp %1505 : vector<1x32xf32>
    %cst_290 = arith.constant 1.000000e+00 : f32
    %1507 = vector.broadcast %cst_290 : f32 to vector<1x32xf32>
    %1508 = arith.addf %1507, %1506 : vector<1x32xf32>
    %1509 = arith.divf %1507, %1508 : vector<1x32xf32>
    %1510 = vector.extract_strided_slice %1320 {offsets = [1, 0], sizes = [1, 32], strides = [1, 1]} : vector<2x32xf32> to vector<1x32xf32>
    %1511 = arith.mulf %1495, %1510 : vector<1x32xf32>
    %1512 = arith.mulf %1501, %1503 : vector<1x32xf32>
    %1513 = arith.addf %1511, %1512 : vector<1x32xf32>
    %1514 = math.tanh %1513 : vector<1x32xf32>
    %1515 = arith.mulf %1509, %1514 : vector<1x32xf32>
    %c1_i32_291 = arith.constant 1 : i32
    %1516 = vector.broadcast %c1_i32_291 : i32 to vector<2x1xi32>
    %1517 = arith.cmpi eq, %15, %1516 : vector<2x1xi32>
    %1518 = arith.extui %1517 : vector<2x1xi1> to vector<2x1xi32>
    %1519 = arith.sitofp %1518 : vector<2x1xi32> to vector<2x1xf32>
    %1520 = vector.broadcast %1519 : vector<2x1xf32> to vector<2x32xf32>
    %1521 = vector.broadcast %1515 : vector<1x32xf32> to vector<2x32xf32>
    %1522 = arith.mulf %1520, %1521 : vector<2x32xf32>
    %1523 = arith.addf %1421, %1522 : vector<2x32xf32>
    %1524 = vector.broadcast %1519 : vector<2x1xf32> to vector<2x32xf32>
    %1525 = vector.broadcast %1513 : vector<1x32xf32> to vector<2x32xf32>
    %1526 = arith.mulf %1524, %1525 : vector<2x32xf32>
    %1527 = arith.addf %1425, %1526 : vector<2x32xf32>
    %c0_292 = arith.constant 0 : index
    %c0_293 = arith.constant 0 : index
    %1528 = vector.load %arg9[%c0_292, %c0_293] : memref<2x32xf32, #tpu.memory_space<vmem>>, vector<2x32xf32>
    tpu.vector_store %arg9[%c0_292, %c0_293], %1523 {strides = array<i32>} : memref<2x32xf32, #tpu.memory_space<vmem>>, vector<2x32xf32>,
    %c0_294 = arith.constant 0 : index
    %c0_295 = arith.constant 0 : index
    %c0_296 = arith.constant 0 : index
    %1529 = vector.load %arg8[%c0_294, %c0_295, %c0_296] : memref<1x2x32xf32, #tpu.memory_space<vmem>>, vector<1x2x32xf32>
    %1530 = vector.shape_cast %1529 : vector<1x2x32xf32> to vector<2x32xf32>
    %1531 = vector.shape_cast %1527 : vector<2x32xf32> to vector<1x2x32xf32>
    tpu.vector_store %arg8[%c0_294, %c0_295, %c0_296], %1531 {strides = array<i32>} : memref<1x2x32xf32, #tpu.memory_space<vmem>>, vector<1x2x32xf32>,
    %c6_297 = arith.constant 6 : index
    %c0_298 = arith.constant 0 : index
    %c0_299 = arith.constant 0 : index
    %1532 = vector.load %arg7[%c6_297, %c0_298, %c0_299] : memref<8x2x32xf32, #tpu.memory_space<vmem>>, vector<1x2x32xf32>
    %1533 = vector.shape_cast %1532 : vector<1x2x32xf32> to vector<2x32xf32>
    %1534 = vector.shape_cast %1523 : vector<2x32xf32> to vector<1x2x32xf32>
    tpu.vector_store %arg7[%c6_297, %c0_298, %c0_299], %1534 {strides = array<i32>} : memref<8x2x32xf32, #tpu.memory_space<vmem>>, vector<1x2x32xf32>,
    %c0_300 = arith.constant 0 : index
    %c0_301 = arith.constant 0 : index
    %1535 = vector.load %arg9[%c0_300, %c0_301] : memref<2x32xf32, #tpu.memory_space<vmem>>, vector<2x32xf32>
    %c0_302 = arith.constant 0 : index
    %c0_303 = arith.constant 0 : index
    %c0_304 = arith.constant 0 : index
    %1536 = vector.load %arg8[%c0_302, %c0_303, %c0_304] : memref<1x2x32xf32, #tpu.memory_space<vmem>>, vector<1x2x32xf32>
    %1537 = vector.shape_cast %1536 : vector<1x2x32xf32> to vector<2x32xf32>
    %cst_305 = arith.constant dense<0.000000e+00> : vector<32x2xf32>
    %1538 = tpu.matmul %14, %1535, %cst_305 {dimension_numbers = #tpu.dot_dimension_numbers<[1], [1], [0], [0], [0, 0, 1, 0], [], []>} : vector<32x32xf32>, vector<2x32xf32>, vector<32x2xf32> -> vector<32x2xf32>
    %cst_306 = arith.constant 0.000000e+00 : f32
    %1539 = vector.broadcast %cst_306 : f32 to vector<2x32xf32>
    %cst_307 = arith.constant 0.000000e+00 : f32
    %1540 = vector.broadcast %cst_307 : f32 to vector<2x32xf32>
    %c7 = arith.constant 7 : index
    %c0_308 = arith.constant 0 : index
    %c0_309 = arith.constant 0 : index
    %c0_310 = arith.constant 0 : index
    %1541 = vector.load %arg1[%c7, %c0_308, %c0_309, %c0_310] : memref<8x2x8x1xf32, #tpu.memory_space<vmem>>, vector<1x1x8x1xf32>
    %1542 = vector.shape_cast %1541 : vector<1x1x8x1xf32> to vector<8x1xf32>
    %1543 = vector.extract_strided_slice %1538 {offsets = [0, 0], sizes = [32, 1], strides = [1, 1]} : vector<32x2xf32> to vector<32x1xf32>
    %1544 = vector.shape_cast %1542 : vector<8x1xf32> to vector<1x8x1xf32>
    %1545 = vector.broadcast %1544 : vector<1x8x1xf32> to vector<5x8x128xf32>
    %1546 = arith.mulf %1545, %3 : vector<5x8x128xf32>
    %1547 = arith.subf %1546, %4 : vector<5x8x128xf32>
    %1548 = vector.shape_cast %1543 : vector<32x1xf32> to vector<1x32x1xf32>
    %1549 = vector.broadcast %1548 : vector<1x32x1xf32> to vector<5x32x128xf32>
    %1550 = arith.mulf %1549, %5 : vector<5x32x128xf32>
    %1551 = arith.subf %1550, %6 : vector<5x32x128xf32>
    %cst_311 = arith.constant 0.000000e+00 : f32
    %1552 = vector.broadcast %cst_311 : f32 to vector<5x8x128xf32>
    %1553 = arith.subf %1552, %1547 : vector<5x8x128xf32>
    %1554 = math.exp %1553 : vector<5x8x128xf32>
    %cst_312 = arith.constant 1.000000e+00 : f32
    %1555 = vector.broadcast %cst_312 : f32 to vector<5x8x128xf32>
    %1556 = arith.addf %1555, %1554 : vector<5x8x128xf32>
    %1557 = vector.extract_strided_slice %1556 {offsets = [0, 0, 0], sizes = [5, 4, 128], strides = [1, 1, 1]} : vector<5x8x128xf32> to vector<5x4x128xf32>
    %1558 = vector.extract_strided_slice %1556 {offsets = [0, 4, 0], sizes = [5, 4, 128], strides = [1, 1, 1]} : vector<5x8x128xf32> to vector<5x4x128xf32>
    %1559 = arith.mulf %1557, %1558 : vector<5x4x128xf32>
    %1560 = vector.extract_strided_slice %1559 {offsets = [0, 0, 0], sizes = [5, 2, 128], strides = [1, 1, 1]} : vector<5x4x128xf32> to vector<5x2x128xf32>
    %1561 = vector.extract_strided_slice %1559 {offsets = [0, 2, 0], sizes = [5, 2, 128], strides = [1, 1, 1]} : vector<5x4x128xf32> to vector<5x2x128xf32>
    %1562 = arith.mulf %1560, %1561 : vector<5x2x128xf32>
    %1563 = vector.extract_strided_slice %1562 {offsets = [0, 0, 0], sizes = [5, 1, 128], strides = [1, 1, 1]} : vector<5x2x128xf32> to vector<5x1x128xf32>
    %1564 = vector.extract_strided_slice %1562 {offsets = [0, 1, 0], sizes = [5, 1, 128], strides = [1, 1, 1]} : vector<5x2x128xf32> to vector<5x1x128xf32>
    %1565 = arith.mulf %1563, %1564 : vector<5x1x128xf32>
    %cst_313 = arith.constant 0.000000e+00 : f32
    %1566 = vector.broadcast %cst_313 : f32 to vector<5x32x128xf32>
    %1567 = arith.subf %1566, %1551 : vector<5x32x128xf32>
    %1568 = math.exp %1567 : vector<5x32x128xf32>
    %cst_314 = arith.constant 1.000000e+00 : f32
    %1569 = vector.broadcast %cst_314 : f32 to vector<5x32x128xf32>
    %1570 = arith.addf %1569, %1568 : vector<5x32x128xf32>
    %1571 = vector.extract_strided_slice %1570 {offsets = [0, 0, 0], sizes = [5, 16, 128], strides = [1, 1, 1]} : vector<5x32x128xf32> to vector<5x16x128xf32>
    %1572 = vector.extract_strided_slice %1570 {offsets = [0, 16, 0], sizes = [5, 16, 128], strides = [1, 1, 1]} : vector<5x32x128xf32> to vector<5x16x128xf32>
    %1573 = arith.mulf %1571, %1572 : vector<5x16x128xf32>
    %1574 = vector.extract_strided_slice %1573 {offsets = [0, 0, 0], sizes = [5, 8, 128], strides = [1, 1, 1]} : vector<5x16x128xf32> to vector<5x8x128xf32>
    %1575 = vector.extract_strided_slice %1573 {offsets = [0, 8, 0], sizes = [5, 8, 128], strides = [1, 1, 1]} : vector<5x16x128xf32> to vector<5x8x128xf32>
    %1576 = arith.mulf %1574, %1575 : vector<5x8x128xf32>
    %1577 = vector.extract_strided_slice %1576 {offsets = [0, 0, 0], sizes = [5, 4, 128], strides = [1, 1, 1]} : vector<5x8x128xf32> to vector<5x4x128xf32>
    %1578 = vector.extract_strided_slice %1576 {offsets = [0, 4, 0], sizes = [5, 4, 128], strides = [1, 1, 1]} : vector<5x8x128xf32> to vector<5x4x128xf32>
    %1579 = arith.mulf %1577, %1578 : vector<5x4x128xf32>
    %1580 = vector.extract_strided_slice %1579 {offsets = [0, 0, 0], sizes = [5, 2, 128], strides = [1, 1, 1]} : vector<5x4x128xf32> to vector<5x2x128xf32>
    %1581 = vector.extract_strided_slice %1579 {offsets = [0, 2, 0], sizes = [5, 2, 128], strides = [1, 1, 1]} : vector<5x4x128xf32> to vector<5x2x128xf32>
    %1582 = arith.mulf %1580, %1581 : vector<5x2x128xf32>
    %1583 = vector.extract_strided_slice %1582 {offsets = [0, 0, 0], sizes = [5, 1, 128], strides = [1, 1, 1]} : vector<5x2x128xf32> to vector<5x1x128xf32>
    %1584 = vector.extract_strided_slice %1582 {offsets = [0, 1, 0], sizes = [5, 1, 128], strides = [1, 1, 1]} : vector<5x2x128xf32> to vector<5x1x128xf32>
    %1585 = arith.mulf %1583, %1584 : vector<5x1x128xf32>
    %1586 = arith.mulf %1565, %1585 : vector<5x1x128xf32>
    %cst_315 = arith.constant 1.000000e+00 : f32
    %1587 = vector.broadcast %cst_315 : f32 to vector<5x1x128xf32>
    %1588 = arith.divf %1587, %1586 : vector<5x1x128xf32>
    %1589 = vector.extract_strided_slice %1588 {offsets = [0, 0, 0], sizes = [1, 1, 128], strides = [1, 1, 1]} : vector<5x1x128xf32> to vector<1x1x128xf32>
    %1590 = vector.shape_cast %1589 : vector<1x1x128xf32> to vector<1x128xf32>
    %1591 = vector.extract_strided_slice %1588 {offsets = [1, 0, 0], sizes = [1, 1, 128], strides = [1, 1, 1]} : vector<5x1x128xf32> to vector<1x1x128xf32>
    %1592 = vector.shape_cast %1591 : vector<1x1x128xf32> to vector<1x128xf32>
    %1593 = arith.addf %1590, %1592 : vector<1x128xf32>
    %1594 = vector.extract_strided_slice %1588 {offsets = [2, 0, 0], sizes = [1, 1, 128], strides = [1, 1, 1]} : vector<5x1x128xf32> to vector<1x1x128xf32>
    %1595 = vector.shape_cast %1594 : vector<1x1x128xf32> to vector<1x128xf32>
    %1596 = arith.addf %1593, %1595 : vector<1x128xf32>
    %1597 = vector.extract_strided_slice %1588 {offsets = [3, 0, 0], sizes = [1, 1, 128], strides = [1, 1, 1]} : vector<5x1x128xf32> to vector<1x1x128xf32>
    %1598 = vector.shape_cast %1597 : vector<1x1x128xf32> to vector<1x128xf32>
    %1599 = arith.addf %1596, %1598 : vector<1x128xf32>
    %1600 = vector.extract_strided_slice %1588 {offsets = [4, 0, 0], sizes = [1, 1, 128], strides = [1, 1, 1]} : vector<5x1x128xf32> to vector<1x1x128xf32>
    %1601 = vector.shape_cast %1600 : vector<1x1x128xf32> to vector<1x128xf32>
    %1602 = arith.addf %1599, %1601 : vector<1x128xf32>
    %1603 = arith.subf %1602, %9 : vector<1x128xf32>
    %1604 = arith.mulf %8, %1603 : vector<1x128xf32>
    %1605 = vector.extract_strided_slice %1604 {offsets = [0, 0], sizes = [1, 32], strides = [1, 1]} : vector<1x128xf32> to vector<1x32xf32>
    %1606 = arith.negf %1605 : vector<1x32xf32>
    %1607 = math.exp %1606 : vector<1x32xf32>
    %cst_316 = arith.constant 1.000000e+00 : f32
    %1608 = vector.broadcast %cst_316 : f32 to vector<1x32xf32>
    %1609 = arith.addf %1608, %1607 : vector<1x32xf32>
    %1610 = arith.divf %1608, %1609 : vector<1x32xf32>
    %1611 = vector.extract_strided_slice %1604 {offsets = [0, 32], sizes = [1, 32], strides = [1, 1]} : vector<1x128xf32> to vector<1x32xf32>
    %1612 = arith.negf %1611 : vector<1x32xf32>
    %1613 = math.exp %1612 : vector<1x32xf32>
    %cst_317 = arith.constant 1.000000e+00 : f32
    %1614 = vector.broadcast %cst_317 : f32 to vector<1x32xf32>
    %1615 = arith.addf %1614, %1613 : vector<1x32xf32>
    %1616 = arith.divf %1614, %1615 : vector<1x32xf32>
    %1617 = vector.extract_strided_slice %1604 {offsets = [0, 64], sizes = [1, 32], strides = [1, 1]} : vector<1x128xf32> to vector<1x32xf32>
    %1618 = math.tanh %1617 : vector<1x32xf32>
    %1619 = vector.extract_strided_slice %1604 {offsets = [0, 96], sizes = [1, 32], strides = [1, 1]} : vector<1x128xf32> to vector<1x32xf32>
    %1620 = arith.negf %1619 : vector<1x32xf32>
    %1621 = math.exp %1620 : vector<1x32xf32>
    %cst_318 = arith.constant 1.000000e+00 : f32
    %1622 = vector.broadcast %cst_318 : f32 to vector<1x32xf32>
    %1623 = arith.addf %1622, %1621 : vector<1x32xf32>
    %1624 = arith.divf %1622, %1623 : vector<1x32xf32>
    %1625 = vector.extract_strided_slice %1537 {offsets = [0, 0], sizes = [1, 32], strides = [1, 1]} : vector<2x32xf32> to vector<1x32xf32>
    %1626 = arith.mulf %1610, %1625 : vector<1x32xf32>
    %1627 = arith.mulf %1616, %1618 : vector<1x32xf32>
    %1628 = arith.addf %1626, %1627 : vector<1x32xf32>
    %1629 = math.tanh %1628 : vector<1x32xf32>
    %1630 = arith.mulf %1624, %1629 : vector<1x32xf32>
    %c0_i32_319 = arith.constant 0 : i32
    %1631 = vector.broadcast %c0_i32_319 : i32 to vector<2x1xi32>
    %1632 = arith.cmpi eq, %15, %1631 : vector<2x1xi32>
    %1633 = arith.extui %1632 : vector<2x1xi1> to vector<2x1xi32>
    %1634 = arith.sitofp %1633 : vector<2x1xi32> to vector<2x1xf32>
    %1635 = vector.broadcast %1634 : vector<2x1xf32> to vector<2x32xf32>
    %1636 = vector.broadcast %1630 : vector<1x32xf32> to vector<2x32xf32>
    %1637 = arith.mulf %1635, %1636 : vector<2x32xf32>
    %1638 = arith.addf %1539, %1637 : vector<2x32xf32>
    %1639 = vector.broadcast %1634 : vector<2x1xf32> to vector<2x32xf32>
    %1640 = vector.broadcast %1628 : vector<1x32xf32> to vector<2x32xf32>
    %1641 = arith.mulf %1639, %1640 : vector<2x32xf32>
    %1642 = arith.addf %1540, %1641 : vector<2x32xf32>
    %c7_320 = arith.constant 7 : index
    %c1_321 = arith.constant 1 : index
    %c0_322 = arith.constant 0 : index
    %c0_323 = arith.constant 0 : index
    %1643 = vector.load %arg1[%c7_320, %c1_321, %c0_322, %c0_323] : memref<8x2x8x1xf32, #tpu.memory_space<vmem>>, vector<1x1x8x1xf32>
    %1644 = vector.shape_cast %1643 : vector<1x1x8x1xf32> to vector<8x1xf32>
    %1645 = vector.extract_strided_slice %1538 {offsets = [0, 1], sizes = [32, 1], strides = [1, 1]} : vector<32x2xf32> to vector<32x1xf32>
    %1646 = vector.shape_cast %1644 : vector<8x1xf32> to vector<1x8x1xf32>
    %1647 = vector.broadcast %1646 : vector<1x8x1xf32> to vector<5x8x128xf32>
    %1648 = arith.mulf %1647, %3 : vector<5x8x128xf32>
    %1649 = arith.subf %1648, %4 : vector<5x8x128xf32>
    %1650 = vector.shape_cast %1645 : vector<32x1xf32> to vector<1x32x1xf32>
    %1651 = vector.broadcast %1650 : vector<1x32x1xf32> to vector<5x32x128xf32>
    %1652 = arith.mulf %1651, %5 : vector<5x32x128xf32>
    %1653 = arith.subf %1652, %6 : vector<5x32x128xf32>
    %cst_324 = arith.constant 0.000000e+00 : f32
    %1654 = vector.broadcast %cst_324 : f32 to vector<5x8x128xf32>
    %1655 = arith.subf %1654, %1649 : vector<5x8x128xf32>
    %1656 = math.exp %1655 : vector<5x8x128xf32>
    %cst_325 = arith.constant 1.000000e+00 : f32
    %1657 = vector.broadcast %cst_325 : f32 to vector<5x8x128xf32>
    %1658 = arith.addf %1657, %1656 : vector<5x8x128xf32>
    %1659 = vector.extract_strided_slice %1658 {offsets = [0, 0, 0], sizes = [5, 4, 128], strides = [1, 1, 1]} : vector<5x8x128xf32> to vector<5x4x128xf32>
    %1660 = vector.extract_strided_slice %1658 {offsets = [0, 4, 0], sizes = [5, 4, 128], strides = [1, 1, 1]} : vector<5x8x128xf32> to vector<5x4x128xf32>
    %1661 = arith.mulf %1659, %1660 : vector<5x4x128xf32>
    %1662 = vector.extract_strided_slice %1661 {offsets = [0, 0, 0], sizes = [5, 2, 128], strides = [1, 1, 1]} : vector<5x4x128xf32> to vector<5x2x128xf32>
    %1663 = vector.extract_strided_slice %1661 {offsets = [0, 2, 0], sizes = [5, 2, 128], strides = [1, 1, 1]} : vector<5x4x128xf32> to vector<5x2x128xf32>
    %1664 = arith.mulf %1662, %1663 : vector<5x2x128xf32>
    %1665 = vector.extract_strided_slice %1664 {offsets = [0, 0, 0], sizes = [5, 1, 128], strides = [1, 1, 1]} : vector<5x2x128xf32> to vector<5x1x128xf32>
    %1666 = vector.extract_strided_slice %1664 {offsets = [0, 1, 0], sizes = [5, 1, 128], strides = [1, 1, 1]} : vector<5x2x128xf32> to vector<5x1x128xf32>
    %1667 = arith.mulf %1665, %1666 : vector<5x1x128xf32>
    %cst_326 = arith.constant 0.000000e+00 : f32
    %1668 = vector.broadcast %cst_326 : f32 to vector<5x32x128xf32>
    %1669 = arith.subf %1668, %1653 : vector<5x32x128xf32>
    %1670 = math.exp %1669 : vector<5x32x128xf32>
    %cst_327 = arith.constant 1.000000e+00 : f32
    %1671 = vector.broadcast %cst_327 : f32 to vector<5x32x128xf32>
    %1672 = arith.addf %1671, %1670 : vector<5x32x128xf32>
    %1673 = vector.extract_strided_slice %1672 {offsets = [0, 0, 0], sizes = [5, 16, 128], strides = [1, 1, 1]} : vector<5x32x128xf32> to vector<5x16x128xf32>
    %1674 = vector.extract_strided_slice %1672 {offsets = [0, 16, 0], sizes = [5, 16, 128], strides = [1, 1, 1]} : vector<5x32x128xf32> to vector<5x16x128xf32>
    %1675 = arith.mulf %1673, %1674 : vector<5x16x128xf32>
    %1676 = vector.extract_strided_slice %1675 {offsets = [0, 0, 0], sizes = [5, 8, 128], strides = [1, 1, 1]} : vector<5x16x128xf32> to vector<5x8x128xf32>
    %1677 = vector.extract_strided_slice %1675 {offsets = [0, 8, 0], sizes = [5, 8, 128], strides = [1, 1, 1]} : vector<5x16x128xf32> to vector<5x8x128xf32>
    %1678 = arith.mulf %1676, %1677 : vector<5x8x128xf32>
    %1679 = vector.extract_strided_slice %1678 {offsets = [0, 0, 0], sizes = [5, 4, 128], strides = [1, 1, 1]} : vector<5x8x128xf32> to vector<5x4x128xf32>
    %1680 = vector.extract_strided_slice %1678 {offsets = [0, 4, 0], sizes = [5, 4, 128], strides = [1, 1, 1]} : vector<5x8x128xf32> to vector<5x4x128xf32>
    %1681 = arith.mulf %1679, %1680 : vector<5x4x128xf32>
    %1682 = vector.extract_strided_slice %1681 {offsets = [0, 0, 0], sizes = [5, 2, 128], strides = [1, 1, 1]} : vector<5x4x128xf32> to vector<5x2x128xf32>
    %1683 = vector.extract_strided_slice %1681 {offsets = [0, 2, 0], sizes = [5, 2, 128], strides = [1, 1, 1]} : vector<5x4x128xf32> to vector<5x2x128xf32>
    %1684 = arith.mulf %1682, %1683 : vector<5x2x128xf32>
    %1685 = vector.extract_strided_slice %1684 {offsets = [0, 0, 0], sizes = [5, 1, 128], strides = [1, 1, 1]} : vector<5x2x128xf32> to vector<5x1x128xf32>
    %1686 = vector.extract_strided_slice %1684 {offsets = [0, 1, 0], sizes = [5, 1, 128], strides = [1, 1, 1]} : vector<5x2x128xf32> to vector<5x1x128xf32>
    %1687 = arith.mulf %1685, %1686 : vector<5x1x128xf32>
    %1688 = arith.mulf %1667, %1687 : vector<5x1x128xf32>
    %cst_328 = arith.constant 1.000000e+00 : f32
    %1689 = vector.broadcast %cst_328 : f32 to vector<5x1x128xf32>
    %1690 = arith.divf %1689, %1688 : vector<5x1x128xf32>
    %1691 = vector.extract_strided_slice %1690 {offsets = [0, 0, 0], sizes = [1, 1, 128], strides = [1, 1, 1]} : vector<5x1x128xf32> to vector<1x1x128xf32>
    %1692 = vector.shape_cast %1691 : vector<1x1x128xf32> to vector<1x128xf32>
    %1693 = vector.extract_strided_slice %1690 {offsets = [1, 0, 0], sizes = [1, 1, 128], strides = [1, 1, 1]} : vector<5x1x128xf32> to vector<1x1x128xf32>
    %1694 = vector.shape_cast %1693 : vector<1x1x128xf32> to vector<1x128xf32>
    %1695 = arith.addf %1692, %1694 : vector<1x128xf32>
    %1696 = vector.extract_strided_slice %1690 {offsets = [2, 0, 0], sizes = [1, 1, 128], strides = [1, 1, 1]} : vector<5x1x128xf32> to vector<1x1x128xf32>
    %1697 = vector.shape_cast %1696 : vector<1x1x128xf32> to vector<1x128xf32>
    %1698 = arith.addf %1695, %1697 : vector<1x128xf32>
    %1699 = vector.extract_strided_slice %1690 {offsets = [3, 0, 0], sizes = [1, 1, 128], strides = [1, 1, 1]} : vector<5x1x128xf32> to vector<1x1x128xf32>
    %1700 = vector.shape_cast %1699 : vector<1x1x128xf32> to vector<1x128xf32>
    %1701 = arith.addf %1698, %1700 : vector<1x128xf32>
    %1702 = vector.extract_strided_slice %1690 {offsets = [4, 0, 0], sizes = [1, 1, 128], strides = [1, 1, 1]} : vector<5x1x128xf32> to vector<1x1x128xf32>
    %1703 = vector.shape_cast %1702 : vector<1x1x128xf32> to vector<1x128xf32>
    %1704 = arith.addf %1701, %1703 : vector<1x128xf32>
    %1705 = arith.subf %1704, %9 : vector<1x128xf32>
    %1706 = arith.mulf %8, %1705 : vector<1x128xf32>
    %1707 = vector.extract_strided_slice %1706 {offsets = [0, 0], sizes = [1, 32], strides = [1, 1]} : vector<1x128xf32> to vector<1x32xf32>
    %1708 = arith.negf %1707 : vector<1x32xf32>
    %1709 = math.exp %1708 : vector<1x32xf32>
    %cst_329 = arith.constant 1.000000e+00 : f32
    %1710 = vector.broadcast %cst_329 : f32 to vector<1x32xf32>
    %1711 = arith.addf %1710, %1709 : vector<1x32xf32>
    %1712 = arith.divf %1710, %1711 : vector<1x32xf32>
    %1713 = vector.extract_strided_slice %1706 {offsets = [0, 32], sizes = [1, 32], strides = [1, 1]} : vector<1x128xf32> to vector<1x32xf32>
    %1714 = arith.negf %1713 : vector<1x32xf32>
    %1715 = math.exp %1714 : vector<1x32xf32>
    %cst_330 = arith.constant 1.000000e+00 : f32
    %1716 = vector.broadcast %cst_330 : f32 to vector<1x32xf32>
    %1717 = arith.addf %1716, %1715 : vector<1x32xf32>
    %1718 = arith.divf %1716, %1717 : vector<1x32xf32>
    %1719 = vector.extract_strided_slice %1706 {offsets = [0, 64], sizes = [1, 32], strides = [1, 1]} : vector<1x128xf32> to vector<1x32xf32>
    %1720 = math.tanh %1719 : vector<1x32xf32>
    %1721 = vector.extract_strided_slice %1706 {offsets = [0, 96], sizes = [1, 32], strides = [1, 1]} : vector<1x128xf32> to vector<1x32xf32>
    %1722 = arith.negf %1721 : vector<1x32xf32>
    %1723 = math.exp %1722 : vector<1x32xf32>
    %cst_331 = arith.constant 1.000000e+00 : f32
    %1724 = vector.broadcast %cst_331 : f32 to vector<1x32xf32>
    %1725 = arith.addf %1724, %1723 : vector<1x32xf32>
    %1726 = arith.divf %1724, %1725 : vector<1x32xf32>
    %1727 = vector.extract_strided_slice %1537 {offsets = [1, 0], sizes = [1, 32], strides = [1, 1]} : vector<2x32xf32> to vector<1x32xf32>
    %1728 = arith.mulf %1712, %1727 : vector<1x32xf32>
    %1729 = arith.mulf %1718, %1720 : vector<1x32xf32>
    %1730 = arith.addf %1728, %1729 : vector<1x32xf32>
    %1731 = math.tanh %1730 : vector<1x32xf32>
    %1732 = arith.mulf %1726, %1731 : vector<1x32xf32>
    %c1_i32_332 = arith.constant 1 : i32
    %1733 = vector.broadcast %c1_i32_332 : i32 to vector<2x1xi32>
    %1734 = arith.cmpi eq, %15, %1733 : vector<2x1xi32>
    %1735 = arith.extui %1734 : vector<2x1xi1> to vector<2x1xi32>
    %1736 = arith.sitofp %1735 : vector<2x1xi32> to vector<2x1xf32>
    %1737 = vector.broadcast %1736 : vector<2x1xf32> to vector<2x32xf32>
    %1738 = vector.broadcast %1732 : vector<1x32xf32> to vector<2x32xf32>
    %1739 = arith.mulf %1737, %1738 : vector<2x32xf32>
    %1740 = arith.addf %1638, %1739 : vector<2x32xf32>
    %1741 = vector.broadcast %1736 : vector<2x1xf32> to vector<2x32xf32>
    %1742 = vector.broadcast %1730 : vector<1x32xf32> to vector<2x32xf32>
    %1743 = arith.mulf %1741, %1742 : vector<2x32xf32>
    %1744 = arith.addf %1642, %1743 : vector<2x32xf32>
    %c0_333 = arith.constant 0 : index
    %c0_334 = arith.constant 0 : index
    %1745 = vector.load %arg9[%c0_333, %c0_334] : memref<2x32xf32, #tpu.memory_space<vmem>>, vector<2x32xf32>
    tpu.vector_store %arg9[%c0_333, %c0_334], %1740 {strides = array<i32>} : memref<2x32xf32, #tpu.memory_space<vmem>>, vector<2x32xf32>,
    %c0_335 = arith.constant 0 : index
    %c0_336 = arith.constant 0 : index
    %c0_337 = arith.constant 0 : index
    %1746 = vector.load %arg8[%c0_335, %c0_336, %c0_337] : memref<1x2x32xf32, #tpu.memory_space<vmem>>, vector<1x2x32xf32>
    %1747 = vector.shape_cast %1746 : vector<1x2x32xf32> to vector<2x32xf32>
    %1748 = vector.shape_cast %1744 : vector<2x32xf32> to vector<1x2x32xf32>
    tpu.vector_store %arg8[%c0_335, %c0_336, %c0_337], %1748 {strides = array<i32>} : memref<1x2x32xf32, #tpu.memory_space<vmem>>, vector<1x2x32xf32>,
    %c7_338 = arith.constant 7 : index
    %c0_339 = arith.constant 0 : index
    %c0_340 = arith.constant 0 : index
    %1749 = vector.load %arg7[%c7_338, %c0_339, %c0_340] : memref<8x2x32xf32, #tpu.memory_space<vmem>>, vector<1x2x32xf32>
    %1750 = vector.shape_cast %1749 : vector<1x2x32xf32> to vector<2x32xf32>
    %1751 = vector.shape_cast %1740 : vector<2x32xf32> to vector<1x2x32xf32>
    tpu.vector_store %arg7[%c7_338, %c0_339, %c0_340], %1751 {strides = array<i32>} : memref<8x2x32xf32, #tpu.memory_space<vmem>>, vector<1x2x32xf32>,
    return
  }
  func.func @transform_0(%arg0: i32) -> (i32, i32, i32, i32) {
    %c0_i32 = arith.constant 0 : i32
    %c0_i32_0 = arith.constant 0 : i32
    %c0_i32_1 = arith.constant 0 : i32
    %c0_i32_2 = arith.constant 0 : i32
    return %arg0, %c0_i32, %c0_i32_0, %c0_i32_1 : i32, i32, i32, i32
  }
  func.func @transform_1(%arg0: i32) -> (i32, i32, i32) {
    %c0_i32 = arith.constant 0 : i32
    %c0_i32_0 = arith.constant 0 : i32
    %c0_i32_1 = arith.constant 0 : i32
    %c0_i32_2 = arith.constant 0 : i32
    return %c0_i32, %c0_i32_0, %c0_i32_1 : i32, i32, i32
  }
  func.func @transform_2(%arg0: i32) -> (i32, i32, i32) {
    %c0_i32 = arith.constant 0 : i32
    %c0_i32_0 = arith.constant 0 : i32
    %c0_i32_1 = arith.constant 0 : i32
    %c0_i32_2 = arith.constant 0 : i32
    return %c0_i32, %c0_i32_0, %c0_i32_1 : i32, i32, i32
  }
  func.func @transform_3(%arg0: i32) -> (i32, i32, i32) {
    %c0_i32 = arith.constant 0 : i32
    %c0_i32_0 = arith.constant 0 : i32
    %c0_i32_1 = arith.constant 0 : i32
    %c0_i32_2 = arith.constant 0 : i32
    return %c0_i32, %c0_i32_0, %c0_i32_1 : i32, i32, i32
  }
  func.func @transform_4(%arg0: i32) -> (i32, i32, i32) {
    %c0_i32 = arith.constant 0 : i32
    %c0_i32_0 = arith.constant 0 : i32
    %c0_i32_1 = arith.constant 0 : i32
    %c0_i32_2 = arith.constant 0 : i32
    return %c0_i32, %c0_i32_0, %c0_i32_1 : i32, i32, i32
  }
  func.func @transform_5(%arg0: i32) -> (i32, i32) {
    %c0_i32 = arith.constant 0 : i32
    %c0_i32_0 = arith.constant 0 : i32
    %c0_i32_1 = arith.constant 0 : i32
    return %c0_i32, %c0_i32_0 : i32, i32
  }
  func.func @transform_6(%arg0: i32) -> (i32, i32, i32) {
    %c0_i32 = arith.constant 0 : i32
    %c0_i32_0 = arith.constant 0 : i32
    %c0_i32_1 = arith.constant 0 : i32
    return %arg0, %c0_i32, %c0_i32_0 : i32, i32, i32
  }
  func.func @transform_7(%arg0: i32) -> (i32, i32, i32) {
    %c0_i32 = arith.constant 0 : i32
    %c0_i32_0 = arith.constant 0 : i32
    %c0_i32_1 = arith.constant 0 : i32
    %c0_i32_2 = arith.constant 0 : i32
    return %c0_i32, %c0_i32_0, %c0_i32_1 : i32, i32, i32
  }
}

</mosaic_0001>

<llo_original>
// kernel: tpu_custom_call.1
$region0: #{tpu_custom_call.1}
  #allocation0 [shape = 'u32[]', space=smem, size = 0x4, offset = 0x4, fixed_abs, tag = 'smem constant byte address 0x4 - core index']
  #allocation1 [shape = 'u32[144,128]{1,0:T(1,128)}', space=vmem, size = 0x12000, scoped, tag = 'internal scratch']
  #allocation2 [shape = 'f32[2,32]{1,0:T(2,128)}', space=vmem, size = 0x400, scoped, tag = 'scratch operand']
  %s0 = inlined_call_operand.vmem [shape: f32[8,2,8,1], index: 0, kind: input, shape index: {}]
  %s1 = inlined_call_operand.vmem [shape: f32[5,8,128], index: 1, kind: input, shape index: {}]
  %s2 = inlined_call_operand.vmem [shape: f32[5,8,128], index: 2, kind: input, shape index: {}]
  %s3 = inlined_call_operand.hbm [shape: f32[5,32,128], index: 3, kind: input, shape index: {}]
  %s4 = inlined_call_operand.hbm [shape: f32[5,32,128], index: 4, kind: input, shape index: {}]
  %s5 = inlined_call_operand.vmem [shape: f32[2,128], index: 5, kind: input, shape index: {}]
  %s6 = inlined_call_operand.hbm [shape: f32[8,2,32], index: 6, kind: output, shape index: {0}]
  %s7 = inlined_call_operand.hbm [shape: f32[1,2,32], index: 7, kind: output, shape index: {1}]
  %8 = xla_tuple %s6, %s7
  %s9 = sld [smem:[#allocation0]]
  $region54: #{tpu_custom_call.1} parent=0
    _
  %s11 = ssub.s32 1, %s9
  %s12 = scalar_select 0, %s11, %s9
  $region1: #{tpu_custom_call.1} parent=0
    #allocation3 [shape = 'u8[81920]{0}', space=vmem, size = 0x14000, scoped, tag = 'input window, operand 3, single buffered']
    #allocation4 [shape = 's32[1]{0}', space=sflag, size = 0x4, scoped, tag = 'scoped memory for tpu_custom_call.1']
    #allocation5 [shape = 's32[1]{0}', space=sflag, size = 0x4, scoped, tag = 'scoped memory for tpu_custom_call.1']
    #allocation6 [shape = 'u8[81920]{0}', space=vmem, size = 0x14000, scoped, tag = 'input window, operand 4, single buffered']
    #allocation7 [shape = 's32[1]{0}', space=sflag, size = 0x4, scoped, tag = 'scoped memory for tpu_custom_call.1']
    #allocation8 [shape = 'u8[8192]{0}', space=vmem, size = 0x2000, scoped, tag = 'output window, operand 0, single buffered']
    #allocation9 [shape = 'u8[1024]{0}', space=vmem, size = 0x400, scoped, tag = 'output window, operand 1, single buffered']
    #allocation10 [shape = 's32[1]{0}', space=sflag, size = 0x4, scoped, tag = 'scoped memory for tpu_custom_call.1']
    %13 = vsyncpa [#allocation4], 0
    %14 = vsyncpa [#allocation7], 0
    %15 = vsyncpa [#allocation5], 0
    %16 = vsyncpa [#allocation10], 0
    // Predicated region
    $region2: #{tpu_custom_call.1} parent=1 // pred_check
      _
    $region3: #{tpu_custom_call.1} parent=1 // pred_check_branch
      %18 = sbr.rel (0) target = $region5
    $region4: #{tpu_custom_call.1} parent=1 // pred_region
      _
    $region5: #{tpu_custom_call.1} parent=1 // pred_fallthru
      _
    // Predicated region
    $region6: #{tpu_custom_call.1} parent=1 // pred_check
      _
    $region7: #{tpu_custom_call.1} parent=1 // pred_check_branch
      %20 = sbr.rel (0) target = $region9
    $region8: #{tpu_custom_call.1} parent=1 // pred_region
      _
    $region9: #{tpu_custom_call.1} parent=1 // pred_fallthru
      _
    // Predicated region
    $region10: #{tpu_custom_call.1} parent=1 // pred_check
      _
    $region11: #{tpu_custom_call.1} parent=1 // pred_check_branch
      %22 = sbr.rel (0) target = $region13
    $region12: #{tpu_custom_call.1} parent=1 // pred_region
      _
    $region13: #{tpu_custom_call.1} parent=1 // pred_fallthru
      _
    // Predicated region
    $region14: #{tpu_custom_call.1} parent=1 // pred_check
      _
    $region15: #{tpu_custom_call.1} parent=1 // pred_check_branch
      %24 = sbr.rel (0) target = $region17
    $region16: #{tpu_custom_call.1} parent=1 // pred_region
      %s26 = ssub.s32 2560, 2560
      %27 = vsyncadd [#allocation4], %s26
      %s28 = sshll.u32 [#allocation3], 4
      %s29 = int_to_ptr.vmem [resolvable:$true] %s28
      %34 = dma.hbm_to_vmem [thread:$0]  %s3, 2560, %s29, [#allocation4], 128, 128, 8
    $region17: #{tpu_custom_call.1} parent=1 // pred_fallthru
      _
    // Predicated region
    $region18: #{tpu_custom_call.1} parent=1 // pred_check
      _
    $region19: #{tpu_custom_call.1} parent=1 // pred_check_branch
      %36 = sbr.rel (0) target = $region21
    $region20: #{tpu_custom_call.1} parent=1 // pred_region
      %s38 = ssub.s32 2560, 2560
      %39 = vsyncadd [#allocation7], %s38
      %s40 = sshll.u32 [#allocation6], 4
      %s41 = int_to_ptr.vmem [resolvable:$true] %s40
      %46 = dma.hbm_to_vmem [thread:$0]  %s4, 2560, %s41, [#allocation7], 128, 128, 8
    $region21: #{tpu_custom_call.1} parent=1 // pred_fallthru
      _
    // Predicated region
    $region22: #{tpu_custom_call.1} parent=1 // pred_check
      _
    $region23: #{tpu_custom_call.1} parent=1 // pred_check_branch
      %48 = sbr.rel (0) target = $region25
    $region24: #{tpu_custom_call.1} parent=1 // pred_region
      _
    $region25: #{tpu_custom_call.1} parent=1 // pred_fallthru
      _
    // Predicated region
    $region26: #{tpu_custom_call.1} parent=1 // pred_check
      _
    $region27: #{tpu_custom_call.1} parent=1 // pred_check_branch
      %50 = sbr.rel (0) target = $region29
    $region28: #{tpu_custom_call.1} parent=1 // pred_region
      %51 = dma.done [#allocation4], 2560
    $region29: #{tpu_custom_call.1} parent=1 // pred_fallthru
      _
    // Predicated region
    $region30: #{tpu_custom_call.1} parent=1 // pred_check
      _
    $region31: #{tpu_custom_call.1} parent=1 // pred_check_branch
      %53 = sbr.rel (0) target = $region33
    $region32: #{tpu_custom_call.1} parent=1 // pred_region
      %54 = dma.done [#allocation7], 2560
    $region33: #{tpu_custom_call.1} parent=1 // pred_fallthru
      _
    %p55 = scmp.eq.s32.totalorder 0, 0
    // Predicated region
    $region34: #{tpu_custom_call.1} parent=1 // pred_check
      %p56 = pneg %p55
    $region35: #{tpu_custom_call.1} parent=1 // pred_check_branch
      %58 = sbr.rel (%p56) target = $region37
    $region36: #{tpu_custom_call.1} parent=1 // pred_region
      %vm59 = vcmask 254976
      %60 = vst.msk [vmem:[#allocation2] sm:$0x3] %vm59, 0.0
      %61 = vst.msk [vmem:[#allocation9] sm:$0x3] %vm59, 0.0
    $region37: #{tpu_custom_call.1} parent=1 // pred_fallthru
      _
    %v62 = vld [vmem:[%s1] sm:$0xff]
    %v63 = vld [vmem:[%s1 + $0x8] sm:$0xff]
    %v64 = vld [vmem:[%s1 + $0x10] sm:$0xff]
    %v65 = vld [vmem:[%s1 + $0x18] sm:$0xff]
    %v66 = vld [vmem:[%s1 + $0x20] sm:$0xff]
    %v67 = vld [vmem:[%s2] sm:$0xff]
    %v68 = vld [vmem:[%s2 + $0x8] sm:$0xff]
    %v69 = vld [vmem:[%s2 + $0x10] sm:$0xff]
    %v70 = vld [vmem:[%s2 + $0x18] sm:$0xff]
    %v71 = vld [vmem:[%s2 + $0x20] sm:$0xff]
    %v72 = vld [vmem:[#allocation3] sm:$0xff]
    %v73 = vld [vmem:[#allocation3 + $0x8] sm:$0xff]
    %v74 = vld [vmem:[#allocation3 + $0x10] sm:$0xff]
    %v75 = vld [vmem:[#allocation3 + $0x18] sm:$0xff]
    %v76 = vld [vmem:[#allocation3 + $0x20] sm:$0xff]
    %v77 = vld [vmem:[#allocation3 + $0x28] sm:$0xff]
    %v78 = vld [vmem:[#allocation3 + $0x30] sm:$0xff]
    %v79 = vld [vmem:[#allocation3 + $0x38] sm:$0xff]
    %v80 = vld [vmem:[#allocation3 + $0x40] sm:$0xff]
    %v81 = vld [vmem:[#allocation3 + $0x48] sm:$0xff]
    %v82 = vld [vmem:[#allocation3 + $0x50] sm:$0xff]
    %v83 = vld [vmem:[#allocation3 + $0x58] sm:$0xff]
    %v84 = vld [vmem:[#allocation3 + $0x60] sm:$0xff]
    %v85 = vld [vmem:[#allocation3 + $0x68] sm:$0xff]
    %v86 = vld [vmem:[#allocation3 + $0x70] sm:$0xff]
    %v87 = vld [vmem:[#allocation3 + $0x78] sm:$0xff]
    %v88 = vld [vmem:[#allocation3 + $0x80] sm:$0xff]
    %v89 = vld [vmem:[#allocation3 + $0x88] sm:$0xff]
    %v90 = vld [vmem:[#allocation3 + $0x90] sm:$0xff]
    %v91 = vld [vmem:[#allocation3 + $0x98] sm:$0xff]
    %v92 = vld [vmem:[#allocation6] sm:$0xff]
    %v93 = vld [vmem:[#allocation6 + $0x8] sm:$0xff]
    %v94 = vld [vmem:[#allocation6 + $0x10] sm:$0xff]
    %v95 = vld [vmem:[#allocation6 + $0x18] sm:$0xff]
    %v96 = vld [vmem:[#allocation6 + $0x20] sm:$0xff]
    %v97 = vld [vmem:[#allocation6 + $0x28] sm:$0xff]
    %v98 = vld [vmem:[#allocation6 + $0x30] sm:$0xff]
    %v99 = vld [vmem:[#allocation6 + $0x38] sm:$0xff]
    %v100 = vld [vmem:[#allocation6 + $0x40] sm:$0xff]
    %v101 = vld [vmem:[#allocation6 + $0x48] sm:$0xff]
    %v102 = vld [vmem:[#allocation6 + $0x50] sm:$0xff]
    %v103 = vld [vmem:[#allocation6 + $0x58] sm:$0xff]
    %v104 = vld [vmem:[#allocation6 + $0x60] sm:$0xff]
    %v105 = vld [vmem:[#allocation6 + $0x68] sm:$0xff]
    %v106 = vld [vmem:[#allocation6 + $0x70] sm:$0xff]
    %v107 = vld [vmem:[#allocation6 + $0x78] sm:$0xff]
    %v108 = vld [vmem:[#allocation6 + $0x80] sm:$0xff]
    %v109 = vld [vmem:[#allocation6 + $0x88] sm:$0xff]
    %v110 = vld [vmem:[#allocation6 + $0x90] sm:$0xff]
    %v111 = vld [vmem:[#allocation6 + $0x98] sm:$0xff]
    %v112 = vld [vmem:[%s5] sm:$0x3]
    %v113 = vlaneseq
    %v114 = vshrl.u32 %v113, 7
    %v115 = vadd.s32 %v114, 8
    %v116 = vadd.s32 %v114, 16
    %v117 = vadd.s32 %v114, 24
    %v118 = vlaneseq
    %v119 = vand.u32 %v118, 127
    %vm120 = vcmp.eq.s32.totalorder %v114, %v119
    %vm121 = vcmp.eq.s32.totalorder %v115, %v119
    %vm122 = vcmp.eq.s32.totalorder %v116, %v119
    %vm123 = vcmp.eq.s32.totalorder %v117, %v119
    %v124 = vsel %vm120, 1, 0
    %v125 = vsel %vm121, 1, 0
    %v126 = vsel %vm122, 1, 0
    %v127 = vsel %vm123, 1, 0
    %v128 = vcvt.s32.f32 %v124
    %v129 = vcvt.s32.f32 %v125
    %v130 = vcvt.s32.f32 %v126
    %v131 = vcvt.s32.f32 %v127
    %v132 = vld [vmem:[#allocation2] sm:$0x3]
    %v133 = vld [vmem:[#allocation9] sm:$0x3]
    %vm134 = vcmask 261120
    %v136 = vsel %vm134, %v128, 0
    %v139 = vsel %vm134, %v129, 0
    %v142 = vsel %vm134, %v130, 0
    %v145 = vsel %vm134, %v131, 0
    %v148 = vsel %vm134, %v132, 0
    %150 = vmatprep.subr.mxu0 0.0
    %151 = vmatpush1.xpose.msra.mxu0 0.0
    %152 = vmatprep.subr.mxu0 0.0
    %153 = vmatpush1.xpose.msra.mxu0 0.0
    %154 = vmatprep.subr.mxu0 0.0
    %155 = vmatpush1.xpose.msra.mxu0 0.0
    %156 = vmatprep.subr.mxu0 0.0
    %157 = vmatpush1.xpose.msra.mxu0 0.0
    %158 = vmatprep.subr.mxu0 0.0
    %159 = vmatpush1.xpose.msra.mxu0 0.0
    %160 = vmatprep.subr.mxu0 0.0
    %161 = vmatpush1.xpose.msra.mxu0 0.0
    %162 = vmatprep.subr.mxu0 0.0
    %163 = vmatpush1.xpose.msra.mxu0 0.0
    %164 = vmatprep.subr.mxu0 0.0
    %165 = vmatpush1.xpose.msra.mxu0 0.0
    %166 = vmatprep.subr.mxu0 0.0
    %167 = vmatpush1.xpose.msra.mxu0 0.0
    %168 = vmatprep.subr.mxu0 0.0
    %169 = vmatpush1.xpose.msra.mxu0 0.0
    %170 = vmatprep.subr.mxu0 0.0
    %171 = vmatpush1.xpose.msra.mxu0 0.0
    %172 = vmatprep.subr.mxu0 0.0
    %173 = vmatpush1.xpose.msra.mxu0 0.0
    %174 = vmatprep.subr.mxu0 0.0
    %175 = vmatpush1.xpose.msra.mxu0 0.0
    %176 = vmatprep.subr.mxu0 0.0
    %177 = vmatpush1.xpose.msra.mxu0 0.0
    %178 = vmatprep.subr.mxu0 0.0
    %179 = vmatpush1.xpose.msra.mxu0 0.0
    %180 = vmatprep.subr.mxu0 0.0
    %181 = vmatpush1.xpose.msra.mxu0 %v148
    %182 = vmatprep.subr.mxu0 0.0
    %183 = vmatpush2.xpose.msra.mxu0 0.0
    %184 = vmatprep.subr.mxu0 0.0
    %185 = vmatpush2.xpose.msra.mxu0 0.0
    %186 = vmatprep.subr.mxu0 0.0
    %187 = vmatpush2.xpose.msra.mxu0 0.0
    %188 = vmatprep.subr.mxu0 0.0
    %189 = vmatpush2.xpose.msra.mxu0 0.0
    %190 = vmatprep.subr.mxu0 0.0
    %191 = vmatpush2.xpose.msra.mxu0 0.0
    %192 = vmatprep.subr.mxu0 0.0
    %193 = vmatpush2.xpose.msra.mxu0 0.0
    %194 = vmatprep.subr.mxu0 0.0
    %195 = vmatpush2.xpose.msra.mxu0 0.0
    %196 = vmatprep.subr.mxu0 0.0
    %197 = vmatpush2.xpose.msra.mxu0 0.0
    %198 = vmatprep.subr.mxu0 0.0
    %199 = vmatpush2.xpose.msra.mxu0 0.0
    %200 = vmatprep.subr.mxu0 0.0
    %201 = vmatpush2.xpose.msra.mxu0 0.0
    %202 = vmatprep.subr.mxu0 0.0
    %203 = vmatpush2.xpose.msra.mxu0 0.0
    %204 = vmatprep.subr.mxu0 0.0
    %205 = vmatpush2.xpose.msra.mxu0 0.0
    %206 = vmatprep.subr.mxu0 0.0
    %207 = vmatpush2.xpose.msra.mxu0 0.0
    %208 = vmatprep.subr.mxu0 0.0
    %209 = vmatpush2.xpose.msra.mxu0 0.0
    %210 = vmatprep.subr.mxu0 0.0
    %211 = vmatpush2.xpose.msra.mxu0 0.0
    %212 = vmatprep.subr.mxu0 0.0
    %213 = vmatpush2.xpose.msra.mxu0 0.0
    %214 = vmatprep.mubr.f32.mxu0 0.0
    %215 = vmatmul.mubr.f32.gmra.mxu0 %v136
    %v216 = vpop.f32.mrf.mxu0
    %v217 = vadd.f32 0.0, %v216
    %v218 = vpop.f32.mrf.mxu0
    %219 = vmatprep.mubr.f32.mxu0 0.0
    %220 = vmatmul.mubr.f32.gmra.mxu0 %v139
    %v221 = vpop.f32.mrf.mxu0
    %v222 = vadd.f32 0.0, %v221
    %v223 = vpop.f32.mrf.mxu0
    %224 = vmatprep.mubr.f32.mxu0 0.0
    %225 = vmatmul.mubr.f32.gmra.mxu0 %v142
    %v226 = vpop.f32.mrf.mxu0
    %v227 = vadd.f32 0.0, %v226
    %v228 = vpop.f32.mrf.mxu0
    %229 = vmatprep.mubr.f32.mxu0 0.0
    %230 = vmatmul.mubr.f32.gmra.mxu0 %v145
    %v231 = vpop.f32.mrf.mxu0
    %v232 = vadd.f32 0.0, %v231
    %v233 = vpop.f32.mrf.mxu0
    %234 = vdwg.mxu0
    %v235 = vld [vmem:[%s0] sm:$0xff]
    %237 = vset.pattern.permute.xlu0 0
    %238 = vperm.xlu0 %237, %v235
    %v239 = vpop.permute.xlu0 %238
    %v241 = vmul.f32 %v239, %v62
    %v242 = vmul.f32 %v239, %v63
    %v243 = vmul.f32 %v239, %v64
    %v244 = vmul.f32 %v239, %v65
    %v245 = vmul.f32 %v239, %v66
    %v246 = vsub.f32 %v241, %v67
    %v247 = vsub.f32 %v242, %v68
    %v248 = vsub.f32 %v243, %v69
    %v249 = vsub.f32 %v244, %v70
    %v250 = vsub.f32 %v245, %v71
    %252 = vset.pattern.permute.xlu0 0
    %253 = vperm.xlu0 %252, %v217
    %v254 = vpop.permute.xlu0 %253
    %257 = vset.pattern.permute.xlu0 0
    %258 = vperm.xlu0 %257, %v222
    %v259 = vpop.permute.xlu0 %258
    %262 = vset.pattern.permute.xlu0 0
    %263 = vperm.xlu0 %262, %v227
    %v264 = vpop.permute.xlu0 %263
    %267 = vset.pattern.permute.xlu0 0
    %268 = vperm.xlu0 %267, %v232
    %v269 = vpop.permute.xlu0 %268
    %v271 = vmul.f32 %v254, %v72
    %v272 = vmul.f32 %v259, %v73
    %v273 = vmul.f32 %v264, %v74
    %v274 = vmul.f32 %v269, %v75
    %v275 = vmul.f32 %v254, %v76
    %v276 = vmul.f32 %v259, %v77
    %v277 = vmul.f32 %v264, %v78
    %v278 = vmul.f32 %v269, %v79
    %v279 = vmul.f32 %v254, %v80
    %v280 = vmul.f32 %v259, %v81
    %v281 = vmul.f32 %v264, %v82
    %v282 = vmul.f32 %v269, %v83
    %v283 = vmul.f32 %v254, %v84
    %v284 = vmul.f32 %v259, %v85
    %v285 = vmul.f32 %v264, %v86
    %v286 = vmul.f32 %v269, %v87
    %v287 = vmul.f32 %v254, %v88
    %v288 = vmul.f32 %v259, %v89
    %v289 = vmul.f32 %v264, %v90
    %v290 = vmul.f32 %v269, %v91
    %v291 = vsub.f32 %v271, %v92
    %v292 = vsub.f32 %v272, %v93
    %v293 = vsub.f32 %v273, %v94
    %v294 = vsub.f32 %v274, %v95
    %v295 = vsub.f32 %v275, %v96
    %v296 = vsub.f32 %v276, %v97
    %v297 = vsub.f32 %v277, %v98
    %v298 = vsub.f32 %v278, %v99
    %v299 = vsub.f32 %v279, %v100
    %v300 = vsub.f32 %v280, %v101
    %v301 = vsub.f32 %v281, %v102
    %v302 = vsub.f32 %v282, %v103
    %v303 = vsub.f32 %v283, %v104
    %v304 = vsub.f32 %v284, %v105
    %v305 = vsub.f32 %v285, %v106
    %v306 = vsub.f32 %v286, %v107
    %v307 = vsub.f32 %v287, %v108
    %v308 = vsub.f32 %v288, %v109
    %v309 = vsub.f32 %v289, %v110
    %v310 = vsub.f32 %v290, %v111
    %v311 = vsub.f32 0.0, %v246
    %v312 = vsub.f32 0.0, %v247
    %v313 = vsub.f32 0.0, %v248
    %v314 = vsub.f32 0.0, %v249
    %v315 = vsub.f32 0.0, %v250
    %v316 = vmul.f32 %v311, 1.442695
    %v317 = vpow.pop %v316
    %v318 = vmul.f32 %v312, 1.442695
    %v319 = vpow.pop %v318
    %v320 = vmul.f32 %v313, 1.442695
    %v321 = vpow.pop %v320
    %v322 = vmul.f32 %v314, 1.442695
    %v323 = vpow.pop %v322
    %v324 = vmul.f32 %v315, 1.442695
    %v325 = vpow.pop %v324
    %v326 = vadd.f32 %v317, 1.0
    %v327 = vadd.f32 %v319, 1.0
    %v328 = vadd.f32 %v321, 1.0
    %v329 = vadd.f32 %v323, 1.0
    %v330 = vadd.f32 %v325, 1.0
    %v336 = vrot.slane %v326, 4
    %v337 = vrot.slane %v327, 4
    %v338 = vrot.slane %v328, 4
    %v339 = vrot.slane %v329, 4
    %v340 = vrot.slane %v330, 4
    %v346 = vmul.f32 %v326, %v336
    %v347 = vmul.f32 %v327, %v337
    %v348 = vmul.f32 %v328, %v338
    %v349 = vmul.f32 %v329, %v339
    %v350 = vmul.f32 %v330, %v340
    %v356 = vrot.slane %v346, 2
    %v357 = vrot.slane %v347, 2
    %v358 = vrot.slane %v348, 2
    %v359 = vrot.slane %v349, 2
    %v360 = vrot.slane %v350, 2
    %v366 = vmul.f32 %v346, %v356
    %v367 = vmul.f32 %v347, %v357
    %v368 = vmul.f32 %v348, %v358
    %v369 = vmul.f32 %v349, %v359
    %v370 = vmul.f32 %v350, %v360
    %v376 = vrot.slane %v366, 1
    %v377 = vrot.slane %v367, 1
    %v378 = vrot.slane %v368, 1
    %v379 = vrot.slane %v369, 1
    %v380 = vrot.slane %v370, 1
    %v386 = vmul.f32 %v366, %v376
    %v387 = vmul.f32 %v367, %v377
    %v388 = vmul.f32 %v368, %v378
    %v389 = vmul.f32 %v369, %v379
    %v390 = vmul.f32 %v370, %v380
    %v391 = vsub.f32 0.0, %v291
    %v392 = vsub.f32 0.0, %v292
    %v393 = vsub.f32 0.0, %v293
    %v394 = vsub.f32 0.0, %v294
    %v395 = vsub.f32 0.0, %v295
    %v396 = vsub.f32 0.0, %v296
    %v397 = vsub.f32 0.0, %v297
    %v398 = vsub.f32 0.0, %v298
    %v399 = vsub.f32 0.0, %v299
    %v400 = vsub.f32 0.0, %v300
    %v401 = vsub.f32 0.0, %v301
    %v402 = vsub.f32 0.0, %v302
    %v403 = vsub.f32 0.0, %v303
    %v404 = vsub.f32 0.0, %v304
    %v405 = vsub.f32 0.0, %v305
    %v406 = vsub.f32 0.0, %v306
    %v407 = vsub.f32 0.0, %v307
    %v408 = vsub.f32 0.0, %v308
    %v409 = vsub.f32 0.0, %v309
    %v410 = vsub.f32 0.0, %v310
    %v411 = vmul.f32 %v391, 1.442695
    %v412 = vpow.pop %v411
    %v413 = vmul.f32 %v392, 1.442695
    %v414 = vpow.pop %v413
    %v415 = vmul.f32 %v393, 1.442695
    %v416 = vpow.pop %v415
    %v417 = vmul.f32 %v394, 1.442695
    %v418 = vpow.pop %v417
    %v419 = vmul.f32 %v395, 1.442695
    %v420 = vpow.pop %v419
    %v421 = vmul.f32 %v396, 1.442695
    %v422 = vpow.pop %v421
    %v423 = vmul.f32 %v397, 1.442695
    %v424 = vpow.pop %v423
    %v425 = vmul.f32 %v398, 1.442695
    %v426 = vpow.pop %v425
    %v427 = vmul.f32 %v399, 1.442695
    %v428 = vpow.pop %v427
    %v429 = vmul.f32 %v400, 1.442695
    %v430 = vpow.pop %v429
    %v431 = vmul.f32 %v401, 1.442695
    %v432 = vpow.pop %v431
    %v433 = vmul.f32 %v402, 1.442695
    %v434 = vpow.pop %v433
    %v435 = vmul.f32 %v403, 1.442695
    %v436 = vpow.pop %v435
    %v437 = vmul.f32 %v404, 1.442695
    %v438 = vpow.pop %v437
    %v439 = vmul.f32 %v405, 1.442695
    %v440 = vpow.pop %v439
    %v441 = vmul.f32 %v406, 1.442695
    %v442 = vpow.pop %v441
    %v443 = vmul.f32 %v407, 1.442695
    %v444 = vpow.pop %v443
    %v445 = vmul.f32 %v408, 1.442695
    %v446 = vpow.pop %v445
    %v447 = vmul.f32 %v409, 1.442695
    %v448 = vpow.pop %v447
    %v449 = vmul.f32 %v410, 1.442695
    %v450 = vpow.pop %v449
    %v451 = vadd.f32 %v412, 1.0
    %v452 = vadd.f32 %v414, 1.0
    %v453 = vadd.f32 %v416, 1.0
    %v454 = vadd.f32 %v418, 1.0
    %v455 = vadd.f32 %v420, 1.0
    %v456 = vadd.f32 %v422, 1.0
    %v457 = vadd.f32 %v424, 1.0
    %v458 = vadd.f32 %v426, 1.0
    %v459 = vadd.f32 %v428, 1.0
    %v460 = vadd.f32 %v430, 1.0
    %v461 = vadd.f32 %v432, 1.0
    %v462 = vadd.f32 %v434, 1.0
    %v463 = vadd.f32 %v436, 1.0
    %v464 = vadd.f32 %v438, 1.0
    %v465 = vadd.f32 %v440, 1.0
    %v466 = vadd.f32 %v442, 1.0
    %v467 = vadd.f32 %v444, 1.0
    %v468 = vadd.f32 %v446, 1.0
    %v469 = vadd.f32 %v448, 1.0
    %v470 = vadd.f32 %v450, 1.0
    %v471 = vmul.f32 %v451, %v453
    %v472 = vmul.f32 %v452, %v454
    %v473 = vmul.f32 %v455, %v457
    %v474 = vmul.f32 %v456, %v458
    %v475 = vmul.f32 %v459, %v461
    %v476 = vmul.f32 %v460, %v462
    %v477 = vmul.f32 %v463, %v465
    %v478 = vmul.f32 %v464, %v466
    %v479 = vmul.f32 %v467, %v469
    %v480 = vmul.f32 %v468, %v470
    %v481 = vmul.f32 %v471, %v472
    %v482 = vmul.f32 %v473, %v474
    %v483 = vmul.f32 %v475, %v476
    %v484 = vmul.f32 %v477, %v478
    %v485 = vmul.f32 %v479, %v480
    %v491 = vrot.slane %v481, 4
    %v492 = vrot.slane %v482, 4
    %v493 = vrot.slane %v483, 4
    %v494 = vrot.slane %v484, 4
    %v495 = vrot.slane %v485, 4
    %v501 = vmul.f32 %v481, %v491
    %v502 = vmul.f32 %v482, %v492
    %v503 = vmul.f32 %v483, %v493
    %v504 = vmul.f32 %v484, %v494
    %v505 = vmul.f32 %v485, %v495
    %v511 = vrot.slane %v501, 2
    %v512 = vrot.slane %v502, 2
    %v513 = vrot.slane %v503, 2
    %v514 = vrot.slane %v504, 2
    %v515 = vrot.slane %v505, 2
    %v521 = vmul.f32 %v501, %v511
    %v522 = vmul.f32 %v502, %v512
    %v523 = vmul.f32 %v503, %v513
    %v524 = vmul.f32 %v504, %v514
    %v525 = vmul.f32 %v505, %v515
    %v531 = vrot.slane %v521, 1
    %v532 = vrot.slane %v522, 1
    %v533 = vrot.slane %v523, 1
    %v534 = vrot.slane %v524, 1
    %v535 = vrot.slane %v525, 1
    %v541 = vmul.f32 %v521, %v531
    %v542 = vmul.f32 %v522, %v532
    %v543 = vmul.f32 %v523, %v533
    %v544 = vmul.f32 %v524, %v534
    %v545 = vmul.f32 %v525, %v535
    %v546 = vmul.f32 %v386, %v541
    %v547 = vmul.f32 %v387, %v542
    %v548 = vmul.f32 %v388, %v543
    %v549 = vmul.f32 %v389, %v544
    %v550 = vmul.f32 %v390, %v545
    %v551 = vrcp.pop %v546
    %v552 = vmul.f32 1.0, %v551
    %v553 = vrcp.pop %v547
    %v554 = vmul.f32 1.0, %v553
    %v555 = vrcp.pop %v548
    %v556 = vmul.f32 1.0, %v555
    %v557 = vrcp.pop %v549
    %v558 = vmul.f32 1.0, %v557
    %v559 = vrcp.pop %v550
    %v560 = vmul.f32 1.0, %v559
    %v561 = vadd.f32 %v552, %v554
    %v562 = vadd.f32 %v561, %v556
    %v563 = vadd.f32 %v562, %v558
    %v564 = vadd.f32 %v563, %v560
    %v566 = vrot.slane %v112, 1
    %v568 = vsub.f32 %v564, %v566
    %v569 = vmul.f32 %v112, %v568
    %v570 = vxor.u32 %v569, 2147483648
    %v571 = vmul.f32 %v570, 1.442695
    %v572 = vpow.pop %v571
    %v573 = vadd.f32 %v572, 1.0
    %v574 = vrcp.pop %v573
    %v575 = vmul.f32 1.0, %v574
    %v576 = vtanh.pop %v569
    %v577 = vmul.f32 %v575, %v133
    %579 = vrot.lane.b32.xlu0 %v576, 96
    %v580 = vpop.permute.xlu0 %579
    %v582 = vmul.f32 %v575, %v580
    %584 = vrot.lane.b32.xlu0 %v582, 96
    %v585 = vpop.permute.xlu0 %584
    %v587 = vadd.f32 %v577, %v585
    %v588 = vtanh.pop %v587
    %590 = vrot.lane.b32.xlu0 %v588, 96
    %v591 = vpop.permute.xlu0 %590
    %v593 = vmul.f32 %v575, %v591
    %vm594 = vcmp.eq.s32.totalorder %v114, 0
    %v595 = vsel %vm594, 1, 0
    %v596 = vcvt.s32.f32 %v595
    %v597 = vlaneseq
    %v598 = vshrl.u32 %v597, 7
    %v599 = vsub.s32 0, %v598
    %v600 = vrot.slane %v593, %v599
    %v601 = vmul.f32 %v596, %v600
    %v602 = vadd.f32 %v601, 0.0
    %v603 = vlaneseq
    %v604 = vshrl.u32 %v603, 7
    %v605 = vsub.s32 0, %v604
    %v606 = vrot.slane %v587, %v605
    %v607 = vmul.f32 %v596, %v606
    %v608 = vadd.f32 %v607, 0.0
    %s609 = scalar_lea.vmem %s0, 8
    %v610 = vld [vmem:[%s609] sm:$0xff]
    %612 = vset.pattern.permute.xlu0 0
    %613 = vperm.xlu0 %612, %v610
    %v614 = vpop.permute.xlu0 %613
    %v616 = vmul.f32 %v614, %v62
    %v617 = vmul.f32 %v614, %v63
    %v618 = vmul.f32 %v614, %v64
    %v619 = vmul.f32 %v614, %v65
    %v620 = vmul.f32 %v614, %v66
    %v621 = vsub.f32 %v616, %v67
    %v622 = vsub.f32 %v617, %v68
    %v623 = vsub.f32 %v618, %v69
    %v624 = vsub.f32 %v619, %v70
    %v625 = vsub.f32 %v620, %v71
    %626 = vset.pattern.permute.xlu0 1
    %627 = vperm.xlu0 %626, %v217
    %v628 = vpop.permute.xlu0 %627
    %630 = vset.pattern.permute.xlu0 1
    %631 = vperm.xlu0 %630, %v222
    %v632 = vpop.permute.xlu0 %631
    %634 = vset.pattern.permute.xlu0 1
    %635 = vperm.xlu0 %634, %v227
    %v636 = vpop.permute.xlu0 %635
    %638 = vset.pattern.permute.xlu0 1
    %639 = vperm.xlu0 %638, %v232
    %v640 = vpop.permute.xlu0 %639
    %v642 = vmul.f32 %v628, %v72
    %v643 = vmul.f32 %v632, %v73
    %v644 = vmul.f32 %v636, %v74
    %v645 = vmul.f32 %v640, %v75
    %v646 = vmul.f32 %v628, %v76
    %v647 = vmul.f32 %v632, %v77
    %v648 = vmul.f32 %v636, %v78
    %v649 = vmul.f32 %v640, %v79
    %v650 = vmul.f32 %v628, %v80
    %v651 = vmul.f32 %v632, %v81
    %v652 = vmul.f32 %v636, %v82
    %v653 = vmul.f32 %v640, %v83
    %v654 = vmul.f32 %v628, %v84
    %v655 = vmul.f32 %v632, %v85
    %v656 = vmul.f32 %v636, %v86
    %v657 = vmul.f32 %v640, %v87
    %v658 = vmul.f32 %v628, %v88
    %v659 = vmul.f32 %v632, %v89
    %v660 = vmul.f32 %v636, %v90
    %v661 = vmul.f32 %v640, %v91
    %v662 = vsub.f32 %v642, %v92
    %v663 = vsub.f32 %v643, %v93
    %v664 = vsub.f32 %v644, %v94
    %v665 = vsub.f32 %v645, %v95
    %v666 = vsub.f32 %v646, %v96
    %v667 = vsub.f32 %v647, %v97
    %v668 = vsub.f32 %v648, %v98
    %v669 = vsub.f32 %v649, %v99
    %v670 = vsub.f32 %v650, %v100
    %v671 = vsub.f32 %v651, %v101
    %v672 = vsub.f32 %v652, %v102
    %v673 = vsub.f32 %v653, %v103
    %v674 = vsub.f32 %v654, %v104
    %v675 = vsub.f32 %v655, %v105
    %v676 = vsub.f32 %v656, %v106
    %v677 = vsub.f32 %v657, %v107
    %v678 = vsub.f32 %v658, %v108
    %v679 = vsub.f32 %v659, %v109
    %v680 = vsub.f32 %v660, %v110
    %v681 = vsub.f32 %v661, %v111
    %v682 = vsub.f32 0.0, %v621
    %v683 = vsub.f32 0.0, %v622
    %v684 = vsub.f32 0.0, %v623
    %v685 = vsub.f32 0.0, %v624
    %v686 = vsub.f32 0.0, %v625
    %v687 = vmul.f32 %v682, 1.442695
    %v688 = vpow.pop %v687
    %v689 = vmul.f32 %v683, 1.442695
    %v690 = vpow.pop %v689
    %v691 = vmul.f32 %v684, 1.442695
    %v692 = vpow.pop %v691
    %v693 = vmul.f32 %v685, 1.442695
    %v694 = vpow.pop %v693
    %v695 = vmul.f32 %v686, 1.442695
    %v696 = vpow.pop %v695
    %v697 = vadd.f32 %v688, 1.0
    %v698 = vadd.f32 %v690, 1.0
    %v699 = vadd.f32 %v692, 1.0
    %v700 = vadd.f32 %v694, 1.0
    %v701 = vadd.f32 %v696, 1.0
    %v707 = vrot.slane %v697, 4
    %v708 = vrot.slane %v698, 4
    %v709 = vrot.slane %v699, 4
    %v710 = vrot.slane %v700, 4
    %v711 = vrot.slane %v701, 4
    %v717 = vmul.f32 %v697, %v707
    %v718 = vmul.f32 %v698, %v708
    %v719 = vmul.f32 %v699, %v709
    %v720 = vmul.f32 %v700, %v710
    %v721 = vmul.f32 %v701, %v711
    %v727 = vrot.slane %v717, 2
    %v728 = vrot.slane %v718, 2
    %v729 = vrot.slane %v719, 2
    %v730 = vrot.slane %v720, 2
    %v731 = vrot.slane %v721, 2
    %v737 = vmul.f32 %v717, %v727
    %v738 = vmul.f32 %v718, %v728
    %v739 = vmul.f32 %v719, %v729
    %v740 = vmul.f32 %v720, %v730
    %v741 = vmul.f32 %v721, %v731
    %v747 = vrot.slane %v737, 1
    %v748 = vrot.slane %v738, 1
    %v749 = vrot.slane %v739, 1
    %v750 = vrot.slane %v740, 1
    %v751 = vrot.slane %v741, 1
    %v757 = vmul.f32 %v737, %v747
    %v758 = vmul.f32 %v738, %v748
    %v759 = vmul.f32 %v739, %v749
    %v760 = vmul.f32 %v740, %v750
    %v761 = vmul.f32 %v741, %v751
    %v762 = vsub.f32 0.0, %v662
    %v763 = vsub.f32 0.0, %v663
    %v764 = vsub.f32 0.0, %v664
    %v765 = vsub.f32 0.0, %v665
    %v766 = vsub.f32 0.0, %v666
    %v767 = vsub.f32 0.0, %v667
    %v768 = vsub.f32 0.0, %v668
    %v769 = vsub.f32 0.0, %v669
    %v770 = vsub.f32 0.0, %v670
    %v771 = vsub.f32 0.0, %v671
    %v772 = vsub.f32 0.0, %v672
    %v773 = vsub.f32 0.0, %v673
    %v774 = vsub.f32 0.0, %v674
    %v775 = vsub.f32 0.0, %v675
    %v776 = vsub.f32 0.0, %v676
    %v777 = vsub.f32 0.0, %v677
    %v778 = vsub.f32 0.0, %v678
    %v779 = vsub.f32 0.0, %v679
    %v780 = vsub.f32 0.0, %v680
    %v781 = vsub.f32 0.0, %v681
    %v782 = vmul.f32 %v762, 1.442695
    %v783 = vpow.pop %v782
    %v784 = vmul.f32 %v763, 1.442695
    %v785 = vpow.pop %v784
    %v786 = vmul.f32 %v764, 1.442695
    %v787 = vpow.pop %v786
    %v788 = vmul.f32 %v765, 1.442695
    %v789 = vpow.pop %v788
    %v790 = vmul.f32 %v766, 1.442695
    %v791 = vpow.pop %v790
    %v792 = vmul.f32 %v767, 1.442695
    %v793 = vpow.pop %v792
    %v794 = vmul.f32 %v768, 1.442695
    %v795 = vpow.pop %v794
    %v796 = vmul.f32 %v769, 1.442695
    %v797 = vpow.pop %v796
    %v798 = vmul.f32 %v770, 1.442695
    %v799 = vpow.pop %v798
    %v800 = vmul.f32 %v771, 1.442695
    %v801 = vpow.pop %v800
    %v802 = vmul.f32 %v772, 1.442695
    %v803 = vpow.pop %v802
    %v804 = vmul.f32 %v773, 1.442695
    %v805 = vpow.pop %v804
    %v806 = vmul.f32 %v774, 1.442695
    %v807 = vpow.pop %v806
    %v808 = vmul.f32 %v775, 1.442695
    %v809 = vpow.pop %v808
    %v810 = vmul.f32 %v776, 1.442695
    %v811 = vpow.pop %v810
    %v812 = vmul.f32 %v777, 1.442695
    %v813 = vpow.pop %v812
    %v814 = vmul.f32 %v778, 1.442695
    %v815 = vpow.pop %v814
    %v816 = vmul.f32 %v779, 1.442695
    %v817 = vpow.pop %v816
    %v818 = vmul.f32 %v780, 1.442695
    %v819 = vpow.pop %v818
    %v820 = vmul.f32 %v781, 1.442695
    %v821 = vpow.pop %v820
    %v822 = vadd.f32 %v783, 1.0
    %v823 = vadd.f32 %v785, 1.0
    %v824 = vadd.f32 %v787, 1.0
    %v825 = vadd.f32 %v789, 1.0
    %v826 = vadd.f32 %v791, 1.0
    %v827 = vadd.f32 %v793, 1.0
    %v828 = vadd.f32 %v795, 1.0
    %v829 = vadd.f32 %v797, 1.0
    %v830 = vadd.f32 %v799, 1.0
    %v831 = vadd.f32 %v801, 1.0
    %v832 = vadd.f32 %v803, 1.0
    %v833 = vadd.f32 %v805, 1.0
    %v834 = vadd.f32 %v807, 1.0
    %v835 = vadd.f32 %v809, 1.0
    %v836 = vadd.f32 %v811, 1.0
    %v837 = vadd.f32 %v813, 1.0
    %v838 = vadd.f32 %v815, 1.0
    %v839 = vadd.f32 %v817, 1.0
    %v840 = vadd.f32 %v819, 1.0
    %v841 = vadd.f32 %v821, 1.0
    %v842 = vmul.f32 %v822, %v824
    %v843 = vmul.f32 %v823, %v825
    %v844 = vmul.f32 %v826, %v828
    %v845 = vmul.f32 %v827, %v829
    %v846 = vmul.f32 %v830, %v832
    %v847 = vmul.f32 %v831, %v833
    %v848 = vmul.f32 %v834, %v836
    %v849 = vmul.f32 %v835, %v837
    %v850 = vmul.f32 %v838, %v840
    %v851 = vmul.f32 %v839, %v841
    %v852 = vmul.f32 %v842, %v843
    %v853 = vmul.f32 %v844, %v845
    %v854 = vmul.f32 %v846, %v847
    %v855 = vmul.f32 %v848, %v849
    %v856 = vmul.f32 %v850, %v851
    %v862 = vrot.slane %v852, 4
    %v863 = vrot.slane %v853, 4
    %v864 = vrot.slane %v854, 4
    %v865 = vrot.slane %v855, 4
    %v866 = vrot.slane %v856, 4
    %v872 = vmul.f32 %v852, %v862
    %v873 = vmul.f32 %v853, %v863
    %v874 = vmul.f32 %v854, %v864
    %v875 = vmul.f32 %v855, %v865
    %v876 = vmul.f32 %v856, %v866
    %v882 = vrot.slane %v872, 2
    %v883 = vrot.slane %v873, 2
    %v884 = vrot.slane %v874, 2
    %v885 = vrot.slane %v875, 2
    %v886 = vrot.slane %v876, 2
    %v892 = vmul.f32 %v872, %v882
    %v893 = vmul.f32 %v873, %v883
    %v894 = vmul.f32 %v874, %v884
    %v895 = vmul.f32 %v875, %v885
    %v896 = vmul.f32 %v876, %v886
    %v902 = vrot.slane %v892, 1
    %v903 = vrot.slane %v893, 1
    %v904 = vrot.slane %v894, 1
    %v905 = vrot.slane %v895, 1
    %v906 = vrot.slane %v896, 1
    %v912 = vmul.f32 %v892, %v902
    %v913 = vmul.f32 %v893, %v903
    %v914 = vmul.f32 %v894, %v904
    %v915 = vmul.f32 %v895, %v905
    %v916 = vmul.f32 %v896, %v906
    %v917 = vmul.f32 %v757, %v912
    %v918 = vmul.f32 %v758, %v913
    %v919 = vmul.f32 %v759, %v914
    %v920 = vmul.f32 %v760, %v915
    %v921 = vmul.f32 %v761, %v916
    %v922 = vrcp.pop %v917
    %v923 = vmul.f32 1.0, %v922
    %v924 = vrcp.pop %v918
    %v925 = vmul.f32 1.0, %v924
    %v926 = vrcp.pop %v919
    %v927 = vmul.f32 1.0, %v926
    %v928 = vrcp.pop %v920
    %v929 = vmul.f32 1.0, %v928
    %v930 = vrcp.pop %v921
    %v931 = vmul.f32 1.0, %v930
    %v932 = vadd.f32 %v923, %v925
    %v933 = vadd.f32 %v932, %v927
    %v934 = vadd.f32 %v933, %v929
    %v935 = vadd.f32 %v934, %v931
    %v936 = vsub.f32 %v935, %v566
    %v937 = vmul.f32 %v112, %v936
    %v938 = vxor.u32 %v937, 2147483648
    %v939 = vmul.f32 %v938, 1.442695
    %v940 = vpow.pop %v939
    %v941 = vadd.f32 %v940, 1.0
    %v942 = vrcp.pop %v941
    %v943 = vmul.f32 1.0, %v942
    %v944 = vtanh.pop %v937
    %v946 = vrot.slane %v133, 1
    %v948 = vmul.f32 %v943, %v946
    %950 = vrot.lane.b32.xlu0 %v944, 96
    %v951 = vpop.permute.xlu0 %950
    %v953 = vmul.f32 %v943, %v951
    %955 = vrot.lane.b32.xlu0 %v953, 96
    %v956 = vpop.permute.xlu0 %955
    %v958 = vadd.f32 %v948, %v956
    %v959 = vtanh.pop %v958
    %961 = vrot.lane.b32.xlu0 %v959, 96
    %v962 = vpop.permute.xlu0 %961
    %v964 = vmul.f32 %v943, %v962
    %vm965 = vcmp.eq.s32.totalorder %v114, 1
    %v966 = vsel %vm965, 1, 0
    %v967 = vcvt.s32.f32 %v966
    %v968 = vlaneseq
    %v969 = vshrl.u32 %v968, 7
    %v970 = vsub.s32 0, %v969
    %v971 = vrot.slane %v964, %v970
    %v972 = vmul.f32 %v967, %v971
    %v973 = vadd.f32 %v602, %v972
    %v974 = vlaneseq
    %v975 = vshrl.u32 %v974, 7
    %v976 = vsub.s32 0, %v975
    %v977 = vrot.slane %v958, %v976
    %v978 = vmul.f32 %v967, %v977
    %v979 = vadd.f32 %v608, %v978
    %981 = vrot.lane.b32.xlu0 %v973, 32
    %v982 = vpop.permute.xlu0 %981
    %vm984 = vcmask 254976
    %985 = vst.msk [vmem:[#allocation2] sm:$0x3] %vm984, %v982
    %986 = vst.msk [vmem:[#allocation9] sm:$0x3] %vm984, %v979
    %987 = vst.msk [vmem:[#allocation8] sm:$0x3] %vm984, %v982
    %v988 = vld [vmem:[#allocation2] sm:$0x3]
    %v989 = vld [vmem:[#allocation9] sm:$0x3]
    %v991 = vsel %vm134, %v988, 0
    %993 = vmatprep.subr.mxu0 0.0
    %994 = vmatpush1.xpose.msra.mxu0 0.0
    %995 = vmatprep.subr.mxu0 0.0
    %996 = vmatpush1.xpose.msra.mxu0 0.0
    %997 = vmatprep.subr.mxu0 0.0
    %998 = vmatpush1.xpose.msra.mxu0 0.0
    %999 = vmatprep.subr.mxu0 0.0
    %1000 = vmatpush1.xpose.msra.mxu0 0.0
    %1001 = vmatprep.subr.mxu0 0.0
    %1002 = vmatpush1.xpose.msra.mxu0 0.0
    %1003 = vmatprep.subr.mxu0 0.0
    %1004 = vmatpush1.xpose.msra.mxu0 0.0
    %1005 = vmatprep.subr.mxu0 0.0
    %1006 = vmatpush1.xpose.msra.mxu0 0.0
    %1007 = vmatprep.subr.mxu0 0.0
    %1008 = vmatpush1.xpose.msra.mxu0 0.0
    %1009 = vmatprep.subr.mxu0 0.0
    %1010 = vmatpush1.xpose.msra.mxu0 0.0
    %1011 = vmatprep.subr.mxu0 0.0
    %1012 = vmatpush1.xpose.msra.mxu0 0.0
    %1013 = vmatprep.subr.mxu0 0.0
    %1014 = vmatpush1.xpose.msra.mxu0 0.0
    %1015 = vmatprep.subr.mxu0 0.0
    %1016 = vmatpush1.xpose.msra.mxu0 0.0
    %1017 = vmatprep.subr.mxu0 0.0
    %1018 = vmatpush1.xpose.msra.mxu0 0.0
    %1019 = vmatprep.subr.mxu0 0.0
    %1020 = vmatpush1.xpose.msra.mxu0 0.0
    %1021 = vmatprep.subr.mxu0 0.0
    %1022 = vmatpush1.xpose.msra.mxu0 0.0
    %1023 = vmatprep.subr.mxu0 0.0
    %1024 = vmatpush1.xpose.msra.mxu0 %v991
    %1025 = vmatprep.subr.mxu0 0.0
    %1026 = vmatpush2.xpose.msra.mxu0 0.0
    %1027 = vmatprep.subr.mxu0 0.0
    %1028 = vmatpush2.xpose.msra.mxu0 0.0
    %1029 = vmatprep.subr.mxu0 0.0
    %1030 = vmatpush2.xpose.msra.mxu0 0.0
    %1031 = vmatprep.subr.mxu0 0.0
    %1032 = vmatpush2.xpose.msra.mxu0 0.0
    %1033 = vmatprep.subr.mxu0 0.0
    %1034 = vmatpush2.xpose.msra.mxu0 0.0
    %1035 = vmatprep.subr.mxu0 0.0
    %1036 = vmatpush2.xpose.msra.mxu0 0.0
    %1037 = vmatprep.subr.mxu0 0.0
    %1038 = vmatpush2.xpose.msra.mxu0 0.0
    %1039 = vmatprep.subr.mxu0 0.0
    %1040 = vmatpush2.xpose.msra.mxu0 0.0
    %1041 = vmatprep.subr.mxu0 0.0
    %1042 = vmatpush2.xpose.msra.mxu0 0.0
    %1043 = vmatprep.subr.mxu0 0.0
    %1044 = vmatpush2.xpose.msra.mxu0 0.0
    %1045 = vmatprep.subr.mxu0 0.0
    %1046 = vmatpush2.xpose.msra.mxu0 0.0
    %1047 = vmatprep.subr.mxu0 0.0
    %1048 = vmatpush2.xpose.msra.mxu0 0.0
    %1049 = vmatprep.subr.mxu0 0.0
    %1050 = vmatpush2.xpose.msra.mxu0 0.0
    %1051 = vmatprep.subr.mxu0 0.0
    %1052 = vmatpush2.xpose.msra.mxu0 0.0
    %1053 = vmatprep.subr.mxu0 0.0
    %1054 = vmatpush2.xpose.msra.mxu0 0.0
    %1055 = vmatprep.subr.mxu0 0.0
    %1056 = vmatpush2.xpose.msra.mxu0 0.0
    %1057 = vmatprep.mubr.f32.mxu0 0.0
    %1058 = vmatmul.mubr.f32.gmra.mxu0 %v136
    %v1059 = vpop.f32.mrf.mxu0
    %v1060 = vadd.f32 0.0, %v1059
    %v1061 = vpop.f32.mrf.mxu0
    %1062 = vmatprep.mubr.f32.mxu0 0.0
    %1063 = vmatmul.mubr.f32.gmra.mxu0 %v139
    %v1064 = vpop.f32.mrf.mxu0
    %v1065 = vadd.f32 0.0, %v1064
    %v1066 = vpop.f32.mrf.mxu0
    %1067 = vmatprep.mubr.f32.mxu0 0.0
    %1068 = vmatmul.mubr.f32.gmra.mxu0 %v142
    %v1069 = vpop.f32.mrf.mxu0
    %v1070 = vadd.f32 0.0, %v1069
    %v1071 = vpop.f32.mrf.mxu0
    %1072 = vmatprep.mubr.f32.mxu0 0.0
    %1073 = vmatmul.mubr.f32.gmra.mxu0 %v145
    %v1074 = vpop.f32.mrf.mxu0
    %v1075 = vadd.f32 0.0, %v1074
    %v1076 = vpop.f32.mrf.mxu0
    %1077 = vdwg.mxu0
    %s1078 = scalar_lea.vmem %s0, 16
    %v1079 = vld [vmem:[%s1078] sm:$0xff]
    %1081 = vset.pattern.permute.xlu0 0
    %1082 = vperm.xlu0 %1081, %v1079
    %v1083 = vpop.permute.xlu0 %1082
    %v1085 = vmul.f32 %v1083, %v62
    %v1086 = vmul.f32 %v1083, %v63
    %v1087 = vmul.f32 %v1083, %v64
    %v1088 = vmul.f32 %v1083, %v65
    %v1089 = vmul.f32 %v1083, %v66
    %v1090 = vsub.f32 %v1085, %v67
    %v1091 = vsub.f32 %v1086, %v68
    %v1092 = vsub.f32 %v1087, %v69
    %v1093 = vsub.f32 %v1088, %v70
    %v1094 = vsub.f32 %v1089, %v71
    %1096 = vset.pattern.permute.xlu0 0
    %1097 = vperm.xlu0 %1096, %v1060
    %v1098 = vpop.permute.xlu0 %1097
    %1101 = vset.pattern.permute.xlu0 0
    %1102 = vperm.xlu0 %1101, %v1065
    %v1103 = vpop.permute.xlu0 %1102
    %1106 = vset.pattern.permute.xlu0 0
    %1107 = vperm.xlu0 %1106, %v1070
    %v1108 = vpop.permute.xlu0 %1107
    %1111 = vset.pattern.permute.xlu0 0
    %1112 = vperm.xlu0 %1111, %v1075
    %v1113 = vpop.permute.xlu0 %1112
    %v1115 = vmul.f32 %v1098, %v72
    %v1116 = vmul.f32 %v1103, %v73
    %v1117 = vmul.f32 %v1108, %v74
    %v1118 = vmul.f32 %v1113, %v75
    %v1119 = vmul.f32 %v1098, %v76
    %v1120 = vmul.f32 %v1103, %v77
    %v1121 = vmul.f32 %v1108, %v78
    %v1122 = vmul.f32 %v1113, %v79
    %v1123 = vmul.f32 %v1098, %v80
    %v1124 = vmul.f32 %v1103, %v81
    %v1125 = vmul.f32 %v1108, %v82
    %v1126 = vmul.f32 %v1113, %v83
    %v1127 = vmul.f32 %v1098, %v84
    %v1128 = vmul.f32 %v1103, %v85
    %v1129 = vmul.f32 %v1108, %v86
    %v1130 = vmul.f32 %v1113, %v87
    %v1131 = vmul.f32 %v1098, %v88
    %v1132 = vmul.f32 %v1103, %v89
    %v1133 = vmul.f32 %v1108, %v90
    %v1134 = vmul.f32 %v1113, %v91
    %v1135 = vsub.f32 %v1115, %v92
    %v1136 = vsub.f32 %v1116, %v93
    %v1137 = vsub.f32 %v1117, %v94
    %v1138 = vsub.f32 %v1118, %v95
    %v1139 = vsub.f32 %v1119, %v96
    %v1140 = vsub.f32 %v1120, %v97
    %v1141 = vsub.f32 %v1121, %v98
    %v1142 = vsub.f32 %v1122, %v99
    %v1143 = vsub.f32 %v1123, %v100
    %v1144 = vsub.f32 %v1124, %v101
    %v1145 = vsub.f32 %v1125, %v102
    %v1146 = vsub.f32 %v1126, %v103
    %v1147 = vsub.f32 %v1127, %v104
    %v1148 = vsub.f32 %v1128, %v105
    %v1149 = vsub.f32 %v1129, %v106
    %v1150 = vsub.f32 %v1130, %v107
    %v1151 = vsub.f32 %v1131, %v108
    %v1152 = vsub.f32 %v1132, %v109
    %v1153 = vsub.f32 %v1133, %v110
    %v1154 = vsub.f32 %v1134, %v111
    %v1155 = vsub.f32 0.0, %v1090
    %v1156 = vsub.f32 0.0, %v1091
    %v1157 = vsub.f32 0.0, %v1092
    %v1158 = vsub.f32 0.0, %v1093
    %v1159 = vsub.f32 0.0, %v1094
    %v1160 = vmul.f32 %v1155, 1.442695
    %v1161 = vpow.pop %v1160
    %v1162 = vmul.f32 %v1156, 1.442695
    %v1163 = vpow.pop %v1162
    %v1164 = vmul.f32 %v1157, 1.442695
    %v1165 = vpow.pop %v1164
    %v1166 = vmul.f32 %v1158, 1.442695
    %v1167 = vpow.pop %v1166
    %v1168 = vmul.f32 %v1159, 1.442695
    %v1169 = vpow.pop %v1168
    %v1170 = vadd.f32 %v1161, 1.0
    %v1171 = vadd.f32 %v1163, 1.0
    %v1172 = vadd.f32 %v1165, 1.0
    %v1173 = vadd.f32 %v1167, 1.0
    %v1174 = vadd.f32 %v1169, 1.0
    %v1180 = vrot.slane %v1170, 4
    %v1181 = vrot.slane %v1171, 4
    %v1182 = vrot.slane %v1172, 4
    %v1183 = vrot.slane %v1173, 4
    %v1184 = vrot.slane %v1174, 4
    %v1190 = vmul.f32 %v1170, %v1180
    %v1191 = vmul.f32 %v1171, %v1181
    %v1192 = vmul.f32 %v1172, %v1182
    %v1193 = vmul.f32 %v1173, %v1183
    %v1194 = vmul.f32 %v1174, %v1184
    %v1200 = vrot.slane %v1190, 2
    %v1201 = vrot.slane %v1191, 2
    %v1202 = vrot.slane %v1192, 2
    %v1203 = vrot.slane %v1193, 2
    %v1204 = vrot.slane %v1194, 2
    %v1210 = vmul.f32 %v1190, %v1200
    %v1211 = vmul.f32 %v1191, %v1201
    %v1212 = vmul.f32 %v1192, %v1202
    %v1213 = vmul.f32 %v1193, %v1203
    %v1214 = vmul.f32 %v1194, %v1204
    %v1220 = vrot.slane %v1210, 1
    %v1221 = vrot.slane %v1211, 1
    %v1222 = vrot.slane %v1212, 1
    %v1223 = vrot.slane %v1213, 1
    %v1224 = vrot.slane %v1214, 1
    %v1230 = vmul.f32 %v1210, %v1220
    %v1231 = vmul.f32 %v1211, %v1221
    %v1232 = vmul.f32 %v1212, %v1222
    %v1233 = vmul.f32 %v1213, %v1223
    %v1234 = vmul.f32 %v1214, %v1224
    %v1235 = vsub.f32 0.0, %v1135
    %v1236 = vsub.f32 0.0, %v1136
    %v1237 = vsub.f32 0.0, %v1137
    %v1238 = vsub.f32 0.0, %v1138
    %v1239 = vsub.f32 0.0, %v1139
    %v1240 = vsub.f32 0.0, %v1140
    %v1241 = vsub.f32 0.0, %v1141
    %v1242 = vsub.f32 0.0, %v1142
    %v1243 = vsub.f32 0.0, %v1143
    %v1244 = vsub.f32 0.0, %v1144
    %v1245 = vsub.f32 0.0, %v1145
    %v1246 = vsub.f32 0.0, %v1146
    %v1247 = vsub.f32 0.0, %v1147
    %v1248 = vsub.f32 0.0, %v1148
    %v1249 = vsub.f32 0.0, %v1149
    %v1250 = vsub.f32 0.0, %v1150
    %v1251 = vsub.f32 0.0, %v1151
    %v1252 = vsub.f32 0.0, %v1152
    %v1253 = vsub.f32 0.0, %v1153
    %v1254 = vsub.f32 0.0, %v1154
    %v1255 = vmul.f32 %v1235, 1.442695
    %v1256 = vpow.pop %v1255
    %v1257 = vmul.f32 %v1236, 1.442695
    %v1258 = vpow.pop %v1257
    %v1259 = vmul.f32 %v1237, 1.442695
    %v1260 = vpow.pop %v1259
    %v1261 = vmul.f32 %v1238, 1.442695
    %v1262 = vpow.pop %v1261
    %v1263 = vmul.f32 %v1239, 1.442695
    %v1264 = vpow.pop %v1263
    %v1265 = vmul.f32 %v1240, 1.442695
    %v1266 = vpow.pop %v1265
    %v1267 = vmul.f32 %v1241, 1.442695
    %v1268 = vpow.pop %v1267
    %v1269 = vmul.f32 %v1242, 1.442695
    %v1270 = vpow.pop %v1269
    %v1271 = vmul.f32 %v1243, 1.442695
    %v1272 = vpow.pop %v1271
    %v1273 = vmul.f32 %v1244, 1.442695
    %v1274 = vpow.pop %v1273
    %v1275 = vmul.f32 %v1245, 1.442695
    %v1276 = vpow.pop %v1275
    %v1277 = vmul.f32 %v1246, 1.442695
    %v1278 = vpow.pop %v1277
    %v1279 = vmul.f32 %v1247, 1.442695
    %v1280 = vpow.pop %v1279
    %v1281 = vmul.f32 %v1248, 1.442695
    %v1282 = vpow.pop %v1281
    %v1283 = vmul.f32 %v1249, 1.442695
    %v1284 = vpow.pop %v1283
    %v1285 = vmul.f32 %v1250, 1.442695
    %v1286 = vpow.pop %v1285
    %v1287 = vmul.f32 %v1251, 1.442695
    %v1288 = vpow.pop %v1287
    %v1289 = vmul.f32 %v1252, 1.442695
    %v1290 = vpow.pop %v1289
    %v1291 = vmul.f32 %v1253, 1.442695
    %v1292 = vpow.pop %v1291
    %v1293 = vmul.f32 %v1254, 1.442695
    %v1294 = vpow.pop %v1293
    %v1295 = vadd.f32 %v1256, 1.0
    %v1296 = vadd.f32 %v1258, 1.0
    %v1297 = vadd.f32 %v1260, 1.0
    %v1298 = vadd.f32 %v1262, 1.0
    %v1299 = vadd.f32 %v1264, 1.0
    %v1300 = vadd.f32 %v1266, 1.0
    %v1301 = vadd.f32 %v1268, 1.0
    %v1302 = vadd.f32 %v1270, 1.0
    %v1303 = vadd.f32 %v1272, 1.0
    %v1304 = vadd.f32 %v1274, 1.0
    %v1305 = vadd.f32 %v1276, 1.0
    %v1306 = vadd.f32 %v1278, 1.0
    %v1307 = vadd.f32 %v1280, 1.0
    %v1308 = vadd.f32 %v1282, 1.0
    %v1309 = vadd.f32 %v1284, 1.0
    %v1310 = vadd.f32 %v1286, 1.0
    %v1311 = vadd.f32 %v1288, 1.0
    %v1312 = vadd.f32 %v1290, 1.0
    %v1313 = vadd.f32 %v1292, 1.0
    %v1314 = vadd.f32 %v1294, 1.0
    %v1315 = vmul.f32 %v1295, %v1297
    %v1316 = vmul.f32 %v1296, %v1298
    %v1317 = vmul.f32 %v1299, %v1301
    %v1318 = vmul.f32 %v1300, %v1302
    %v1319 = vmul.f32 %v1303, %v1305
    %v1320 = vmul.f32 %v1304, %v1306
    %v1321 = vmul.f32 %v1307, %v1309
    %v1322 = vmul.f32 %v1308, %v1310
    %v1323 = vmul.f32 %v1311, %v1313
    %v1324 = vmul.f32 %v1312, %v1314
    %v1325 = vmul.f32 %v1315, %v1316
    %v1326 = vmul.f32 %v1317, %v1318
    %v1327 = vmul.f32 %v1319, %v1320
    %v1328 = vmul.f32 %v1321, %v1322
    %v1329 = vmul.f32 %v1323, %v1324
    %v1335 = vrot.slane %v1325, 4
    %v1336 = vrot.slane %v1326, 4
    %v1337 = vrot.slane %v1327, 4
    %v1338 = vrot.slane %v1328, 4
    %v1339 = vrot.slane %v1329, 4
    %v1345 = vmul.f32 %v1325, %v1335
    %v1346 = vmul.f32 %v1326, %v1336
    %v1347 = vmul.f32 %v1327, %v1337
    %v1348 = vmul.f32 %v1328, %v1338
    %v1349 = vmul.f32 %v1329, %v1339
    %v1355 = vrot.slane %v1345, 2
    %v1356 = vrot.slane %v1346, 2
    %v1357 = vrot.slane %v1347, 2
    %v1358 = vrot.slane %v1348, 2
    %v1359 = vrot.slane %v1349, 2
    %v1365 = vmul.f32 %v1345, %v1355
    %v1366 = vmul.f32 %v1346, %v1356
    %v1367 = vmul.f32 %v1347, %v1357
    %v1368 = vmul.f32 %v1348, %v1358
    %v1369 = vmul.f32 %v1349, %v1359
    %v1375 = vrot.slane %v1365, 1
    %v1376 = vrot.slane %v1366, 1
    %v1377 = vrot.slane %v1367, 1
    %v1378 = vrot.slane %v1368, 1
    %v1379 = vrot.slane %v1369, 1
    %v1385 = vmul.f32 %v1365, %v1375
    %v1386 = vmul.f32 %v1366, %v1376
    %v1387 = vmul.f32 %v1367, %v1377
    %v1388 = vmul.f32 %v1368, %v1378
    %v1389 = vmul.f32 %v1369, %v1379
    %v1390 = vmul.f32 %v1230, %v1385
    %v1391 = vmul.f32 %v1231, %v1386
    %v1392 = vmul.f32 %v1232, %v1387
    %v1393 = vmul.f32 %v1233, %v1388
    %v1394 = vmul.f32 %v1234, %v1389
    %v1395 = vrcp.pop %v1390
    %v1396 = vmul.f32 1.0, %v1395
    %v1397 = vrcp.pop %v1391
    %v1398 = vmul.f32 1.0, %v1397
    %v1399 = vrcp.pop %v1392
    %v1400 = vmul.f32 1.0, %v1399
    %v1401 = vrcp.pop %v1393
    %v1402 = vmul.f32 1.0, %v1401
    %v1403 = vrcp.pop %v1394
    %v1404 = vmul.f32 1.0, %v1403
    %v1405 = vadd.f32 %v1396, %v1398
    %v1406 = vadd.f32 %v1405, %v1400
    %v1407 = vadd.f32 %v1406, %v1402
    %v1408 = vadd.f32 %v1407, %v1404
    %v1409 = vsub.f32 %v1408, %v566
    %v1410 = vmul.f32 %v112, %v1409
    %v1411 = vxor.u32 %v1410, 2147483648
    %v1412 = vmul.f32 %v1411, 1.442695
    %v1413 = vpow.pop %v1412
    %v1414 = vadd.f32 %v1413, 1.0
    %v1415 = vrcp.pop %v1414
    %v1416 = vmul.f32 1.0, %v1415
    %v1417 = vtanh.pop %v1410
    %v1418 = vmul.f32 %v1416, %v989
    %1420 = vrot.lane.b32.xlu0 %v1417, 96
    %v1421 = vpop.permute.xlu0 %1420
    %v1423 = vmul.f32 %v1416, %v1421
    %1425 = vrot.lane.b32.xlu0 %v1423, 96
    %v1426 = vpop.permute.xlu0 %1425
    %v1428 = vadd.f32 %v1418, %v1426
    %v1429 = vtanh.pop %v1428
    %1431 = vrot.lane.b32.xlu0 %v1429, 96
    %v1432 = vpop.permute.xlu0 %1431
    %v1434 = vmul.f32 %v1416, %v1432
    %v1435 = vlaneseq
    %v1436 = vshrl.u32 %v1435, 7
    %v1437 = vsub.s32 0, %v1436
    %v1438 = vrot.slane %v1434, %v1437
    %v1439 = vmul.f32 %v596, %v1438
    %v1440 = vadd.f32 %v1439, 0.0
    %v1441 = vlaneseq
    %v1442 = vshrl.u32 %v1441, 7
    %v1443 = vsub.s32 0, %v1442
    %v1444 = vrot.slane %v1428, %v1443
    %v1445 = vmul.f32 %v596, %v1444
    %v1446 = vadd.f32 %v1445, 0.0
    %s1447 = scalar_lea.vmem %s0, 24
    %v1448 = vld [vmem:[%s1447] sm:$0xff]
    %1450 = vset.pattern.permute.xlu0 0
    %1451 = vperm.xlu0 %1450, %v1448
    %v1452 = vpop.permute.xlu0 %1451
    %v1454 = vmul.f32 %v1452, %v62
    %v1455 = vmul.f32 %v1452, %v63
    %v1456 = vmul.f32 %v1452, %v64
    %v1457 = vmul.f32 %v1452, %v65
    %v1458 = vmul.f32 %v1452, %v66
    %v1459 = vsub.f32 %v1454, %v67
    %v1460 = vsub.f32 %v1455, %v68
    %v1461 = vsub.f32 %v1456, %v69
    %v1462 = vsub.f32 %v1457, %v70
    %v1463 = vsub.f32 %v1458, %v71
    %1464 = vset.pattern.permute.xlu0 1
    %1465 = vperm.xlu0 %1464, %v1060
    %v1466 = vpop.permute.xlu0 %1465
    %1468 = vset.pattern.permute.xlu0 1
    %1469 = vperm.xlu0 %1468, %v1065
    %v1470 = vpop.permute.xlu0 %1469
    %1472 = vset.pattern.permute.xlu0 1
    %1473 = vperm.xlu0 %1472, %v1070
    %v1474 = vpop.permute.xlu0 %1473
    %1476 = vset.pattern.permute.xlu0 1
    %1477 = vperm.xlu0 %1476, %v1075
    %v1478 = vpop.permute.xlu0 %1477
    %v1480 = vmul.f32 %v1466, %v72
    %v1481 = vmul.f32 %v1470, %v73
    %v1482 = vmul.f32 %v1474, %v74
    %v1483 = vmul.f32 %v1478, %v75
    %v1484 = vmul.f32 %v1466, %v76
    %v1485 = vmul.f32 %v1470, %v77
    %v1486 = vmul.f32 %v1474, %v78
    %v1487 = vmul.f32 %v1478, %v79
    %v1488 = vmul.f32 %v1466, %v80
    %v1489 = vmul.f32 %v1470, %v81
    %v1490 = vmul.f32 %v1474, %v82
    %v1491 = vmul.f32 %v1478, %v83
    %v1492 = vmul.f32 %v1466, %v84
    %v1493 = vmul.f32 %v1470, %v85
    %v1494 = vmul.f32 %v1474, %v86
    %v1495 = vmul.f32 %v1478, %v87
    %v1496 = vmul.f32 %v1466, %v88
    %v1497 = vmul.f32 %v1470, %v89
    %v1498 = vmul.f32 %v1474, %v90
    %v1499 = vmul.f32 %v1478, %v91
    %v1500 = vsub.f32 %v1480, %v92
    %v1501 = vsub.f32 %v1481, %v93
    %v1502 = vsub.f32 %v1482, %v94
    %v1503 = vsub.f32 %v1483, %v95
    %v1504 = vsub.f32 %v1484, %v96
    %v1505 = vsub.f32 %v1485, %v97
    %v1506 = vsub.f32 %v1486, %v98
    %v1507 = vsub.f32 %v1487, %v99
    %v1508 = vsub.f32 %v1488, %v100
    %v1509 = vsub.f32 %v1489, %v101
    %v1510 = vsub.f32 %v1490, %v102
    %v1511 = vsub.f32 %v1491, %v103
    %v1512 = vsub.f32 %v1492, %v104
    %v1513 = vsub.f32 %v1493, %v105
    %v1514 = vsub.f32 %v1494, %v106
    %v1515 = vsub.f32 %v1495, %v107
    %v1516 = vsub.f32 %v1496, %v108
    %v1517 = vsub.f32 %v1497, %v109
    %v1518 = vsub.f32 %v1498, %v110
    %v1519 = vsub.f32 %v1499, %v111
    %v1520 = vsub.f32 0.0, %v1459
    %v1521 = vsub.f32 0.0, %v1460
    %v1522 = vsub.f32 0.0, %v1461
    %v1523 = vsub.f32 0.0, %v1462
    %v1524 = vsub.f32 0.0, %v1463
    %v1525 = vmul.f32 %v1520, 1.442695
    %v1526 = vpow.pop %v1525
    %v1527 = vmul.f32 %v1521, 1.442695
    %v1528 = vpow.pop %v1527
    %v1529 = vmul.f32 %v1522, 1.442695
    %v1530 = vpow.pop %v1529
    %v1531 = vmul.f32 %v1523, 1.442695
    %v1532 = vpow.pop %v1531
    %v1533 = vmul.f32 %v1524, 1.442695
    %v1534 = vpow.pop %v1533
    %v1535 = vadd.f32 %v1526, 1.0
    %v1536 = vadd.f32 %v1528, 1.0
    %v1537 = vadd.f32 %v1530, 1.0
    %v1538 = vadd.f32 %v1532, 1.0
    %v1539 = vadd.f32 %v1534, 1.0
    %v1545 = vrot.slane %v1535, 4
    %v1546 = vrot.slane %v1536, 4
    %v1547 = vrot.slane %v1537, 4
    %v1548 = vrot.slane %v1538, 4
    %v1549 = vrot.slane %v1539, 4
    %v1555 = vmul.f32 %v1535, %v1545
    %v1556 = vmul.f32 %v1536, %v1546
    %v1557 = vmul.f32 %v1537, %v1547
    %v1558 = vmul.f32 %v1538, %v1548
    %v1559 = vmul.f32 %v1539, %v1549
    %v1565 = vrot.slane %v1555, 2
    %v1566 = vrot.slane %v1556, 2
    %v1567 = vrot.slane %v1557, 2
    %v1568 = vrot.slane %v1558, 2
    %v1569 = vrot.slane %v1559, 2
    %v1575 = vmul.f32 %v1555, %v1565
    %v1576 = vmul.f32 %v1556, %v1566
    %v1577 = vmul.f32 %v1557, %v1567
    %v1578 = vmul.f32 %v1558, %v1568
    %v1579 = vmul.f32 %v1559, %v1569
    %v1585 = vrot.slane %v1575, 1
    %v1586 = vrot.slane %v1576, 1
    %v1587 = vrot.slane %v1577, 1
    %v1588 = vrot.slane %v1578, 1
    %v1589 = vrot.slane %v1579, 1
    %v1595 = vmul.f32 %v1575, %v1585
    %v1596 = vmul.f32 %v1576, %v1586
    %v1597 = vmul.f32 %v1577, %v1587
    %v1598 = vmul.f32 %v1578, %v1588
    %v1599 = vmul.f32 %v1579, %v1589
    %v1600 = vsub.f32 0.0, %v1500
    %v1601 = vsub.f32 0.0, %v1501
    %v1602 = vsub.f32 0.0, %v1502
    %v1603 = vsub.f32 0.0, %v1503
    %v1604 = vsub.f32 0.0, %v1504
    %v1605 = vsub.f32 0.0, %v1505
    %v1606 = vsub.f32 0.0, %v1506
    %v1607 = vsub.f32 0.0, %v1507
    %v1608 = vsub.f32 0.0, %v1508
    %v1609 = vsub.f32 0.0, %v1509
    %v1610 = vsub.f32 0.0, %v1510
    %v1611 = vsub.f32 0.0, %v1511
    %v1612 = vsub.f32 0.0, %v1512
    %v1613 = vsub.f32 0.0, %v1513
    %v1614 = vsub.f32 0.0, %v1514
    %v1615 = vsub.f32 0.0, %v1515
    %v1616 = vsub.f32 0.0, %v1516
    %v1617 = vsub.f32 0.0, %v1517
    %v1618 = vsub.f32 0.0, %v1518
    %v1619 = vsub.f32 0.0, %v1519
    %v1620 = vmul.f32 %v1600, 1.442695
    %v1621 = vpow.pop %v1620
    %v1622 = vmul.f32 %v1601, 1.442695
    %v1623 = vpow.pop %v1622
    %v1624 = vmul.f32 %v1602, 1.442695
    %v1625 = vpow.pop %v1624
    %v1626 = vmul.f32 %v1603, 1.442695
    %v1627 = vpow.pop %v1626
    %v1628 = vmul.f32 %v1604, 1.442695
    %v1629 = vpow.pop %v1628
    %v1630 = vmul.f32 %v1605, 1.442695
    %v1631 = vpow.pop %v1630
    %v1632 = vmul.f32 %v1606, 1.442695
    %v1633 = vpow.pop %v1632
    %v1634 = vmul.f32 %v1607, 1.442695
    %v1635 = vpow.pop %v1634
    %v1636 = vmul.f32 %v1608, 1.442695
    %v1637 = vpow.pop %v1636
    %v1638 = vmul.f32 %v1609, 1.442695
    %v1639 = vpow.pop %v1638
    %v1640 = vmul.f32 %v1610, 1.442695
    %v1641 = vpow.pop %v1640
    %v1642 = vmul.f32 %v1611, 1.442695
    %v1643 = vpow.pop %v1642
    %v1644 = vmul.f32 %v1612, 1.442695
    %v1645 = vpow.pop %v1644
    %v1646 = vmul.f32 %v1613, 1.442695
    %v1647 = vpow.pop %v1646
    %v1648 = vmul.f32 %v1614, 1.442695
    %v1649 = vpow.pop %v1648
    %v1650 = vmul.f32 %v1615, 1.442695
    %v1651 = vpow.pop %v1650
    %v1652 = vmul.f32 %v1616, 1.442695
    %v1653 = vpow.pop %v1652
    %v1654 = vmul.f32 %v1617, 1.442695
    %v1655 = vpow.pop %v1654
    %v1656 = vmul.f32 %v1618, 1.442695
    %v1657 = vpow.pop %v1656
    %v1658 = vmul.f32 %v1619, 1.442695
    %v1659 = vpow.pop %v1658
    %v1660 = vadd.f32 %v1621, 1.0
    %v1661 = vadd.f32 %v1623, 1.0
    %v1662 = vadd.f32 %v1625, 1.0
    %v1663 = vadd.f32 %v1627, 1.0
    %v1664 = vadd.f32 %v1629, 1.0
    %v1665 = vadd.f32 %v1631, 1.0
    %v1666 = vadd.f32 %v1633, 1.0
    %v1667 = vadd.f32 %v1635, 1.0
    %v1668 = vadd.f32 %v1637, 1.0
    %v1669 = vadd.f32 %v1639, 1.0
    %v1670 = vadd.f32 %v1641, 1.0
    %v1671 = vadd.f32 %v1643, 1.0
    %v1672 = vadd.f32 %v1645, 1.0
    %v1673 = vadd.f32 %v1647, 1.0
    %v1674 = vadd.f32 %v1649, 1.0
    %v1675 = vadd.f32 %v1651, 1.0
    %v1676 = vadd.f32 %v1653, 1.0
    %v1677 = vadd.f32 %v1655, 1.0
    %v1678 = vadd.f32 %v1657, 1.0
    %v1679 = vadd.f32 %v1659, 1.0
    %v1680 = vmul.f32 %v1660, %v1662
    %v1681 = vmul.f32 %v1661, %v1663
    %v1682 = vmul.f32 %v1664, %v1666
    %v1683 = vmul.f32 %v1665, %v1667
    %v1684 = vmul.f32 %v1668, %v1670
    %v1685 = vmul.f32 %v1669, %v1671
    %v1686 = vmul.f32 %v1672, %v1674
    %v1687 = vmul.f32 %v1673, %v1675
    %v1688 = vmul.f32 %v1676, %v1678
    %v1689 = vmul.f32 %v1677, %v1679
    %v1690 = vmul.f32 %v1680, %v1681
    %v1691 = vmul.f32 %v1682, %v1683
    %v1692 = vmul.f32 %v1684, %v1685
    %v1693 = vmul.f32 %v1686, %v1687
    %v1694 = vmul.f32 %v1688, %v1689
    %v1700 = vrot.slane %v1690, 4
    %v1701 = vrot.slane %v1691, 4
    %v1702 = vrot.slane %v1692, 4
    %v1703 = vrot.slane %v1693, 4
    %v1704 = vrot.slane %v1694, 4
    %v1710 = vmul.f32 %v1690, %v1700
    %v1711 = vmul.f32 %v1691, %v1701
    %v1712 = vmul.f32 %v1692, %v1702
    %v1713 = vmul.f32 %v1693, %v1703
    %v1714 = vmul.f32 %v1694, %v1704
    %v1720 = vrot.slane %v1710, 2
    %v1721 = vrot.slane %v1711, 2
    %v1722 = vrot.slane %v1712, 2
    %v1723 = vrot.slane %v1713, 2
    %v1724 = vrot.slane %v1714, 2
    %v1730 = vmul.f32 %v1710, %v1720
    %v1731 = vmul.f32 %v1711, %v1721
    %v1732 = vmul.f32 %v1712, %v1722
    %v1733 = vmul.f32 %v1713, %v1723
    %v1734 = vmul.f32 %v1714, %v1724
    %v1740 = vrot.slane %v1730, 1
    %v1741 = vrot.slane %v1731, 1
    %v1742 = vrot.slane %v1732, 1
    %v1743 = vrot.slane %v1733, 1
    %v1744 = vrot.slane %v1734, 1
    %v1750 = vmul.f32 %v1730, %v1740
    %v1751 = vmul.f32 %v1731, %v1741
    %v1752 = vmul.f32 %v1732, %v1742
    %v1753 = vmul.f32 %v1733, %v1743
    %v1754 = vmul.f32 %v1734, %v1744
    %v1755 = vmul.f32 %v1595, %v1750
    %v1756 = vmul.f32 %v1596, %v1751
    %v1757 = vmul.f32 %v1597, %v1752
    %v1758 = vmul.f32 %v1598, %v1753
    %v1759 = vmul.f32 %v1599, %v1754
    %v1760 = vrcp.pop %v1755
    %v1761 = vmul.f32 1.0, %v1760
    %v1762 = vrcp.pop %v1756
    %v1763 = vmul.f32 1.0, %v1762
    %v1764 = vrcp.pop %v1757
    %v1765 = vmul.f32 1.0, %v1764
    %v1766 = vrcp.pop %v1758
    %v1767 = vmul.f32 1.0, %v1766
    %v1768 = vrcp.pop %v1759
    %v1769 = vmul.f32 1.0, %v1768
    %v1770 = vadd.f32 %v1761, %v1763
    %v1771 = vadd.f32 %v1770, %v1765
    %v1772 = vadd.f32 %v1771, %v1767
    %v1773 = vadd.f32 %v1772, %v1769
    %v1774 = vsub.f32 %v1773, %v566
    %v1775 = vmul.f32 %v112, %v1774
    %v1776 = vxor.u32 %v1775, 2147483648
    %v1777 = vmul.f32 %v1776, 1.442695
    %v1778 = vpow.pop %v1777
    %v1779 = vadd.f32 %v1778, 1.0
    %v1780 = vrcp.pop %v1779
    %v1781 = vmul.f32 1.0, %v1780
    %v1782 = vtanh.pop %v1775
    %v1784 = vrot.slane %v989, 1
    %v1786 = vmul.f32 %v1781, %v1784
    %1788 = vrot.lane.b32.xlu0 %v1782, 96
    %v1789 = vpop.permute.xlu0 %1788
    %v1791 = vmul.f32 %v1781, %v1789
    %1793 = vrot.lane.b32.xlu0 %v1791, 96
    %v1794 = vpop.permute.xlu0 %1793
    %v1796 = vadd.f32 %v1786, %v1794
    %v1797 = vtanh.pop %v1796
    %1799 = vrot.lane.b32.xlu0 %v1797, 96
    %v1800 = vpop.permute.xlu0 %1799
    %v1802 = vmul.f32 %v1781, %v1800
    %v1803 = vlaneseq
    %v1804 = vshrl.u32 %v1803, 7
    %v1805 = vsub.s32 0, %v1804
    %v1806 = vrot.slane %v1802, %v1805
    %v1807 = vmul.f32 %v967, %v1806
    %v1808 = vadd.f32 %v1440, %v1807
    %v1809 = vlaneseq
    %v1810 = vshrl.u32 %v1809, 7
    %v1811 = vsub.s32 0, %v1810
    %v1812 = vrot.slane %v1796, %v1811
    %v1813 = vmul.f32 %v967, %v1812
    %v1814 = vadd.f32 %v1446, %v1813
    %1816 = vrot.lane.b32.xlu0 %v1808, 32
    %v1817 = vpop.permute.xlu0 %1816
    %1819 = vst.msk [vmem:[#allocation2] sm:$0x3] %vm984, %v1817
    %1820 = vst.msk [vmem:[#allocation9] sm:$0x3] %vm984, %v1814
    %s1821 = scalar_lea.vmem [#allocation8], 2
    %1822 = vst.msk [vmem:[%s1821] sm:$0x3] %vm984, %v1817
    %v1823 = vld [vmem:[#allocation2] sm:$0x3]
    %v1824 = vld [vmem:[#allocation9] sm:$0x3]
    %v1826 = vsel %vm134, %v1823, 0
    %1828 = vmatprep.subr.mxu0 0.0
    %1829 = vmatpush1.xpose.msra.mxu0 0.0
    %1830 = vmatprep.subr.mxu0 0.0
    %1831 = vmatpush1.xpose.msra.mxu0 0.0
    %1832 = vmatprep.subr.mxu0 0.0
    %1833 = vmatpush1.xpose.msra.mxu0 0.0
    %1834 = vmatprep.subr.mxu0 0.0
    %1835 = vmatpush1.xpose.msra.mxu0 0.0
    %1836 = vmatprep.subr.mxu0 0.0
    %1837 = vmatpush1.xpose.msra.mxu0 0.0
    %1838 = vmatprep.subr.mxu0 0.0
    %1839 = vmatpush1.xpose.msra.mxu0 0.0
    %1840 = vmatprep.subr.mxu0 0.0
    %1841 = vmatpush1.xpose.msra.mxu0 0.0
    %1842 = vmatprep.subr.mxu0 0.0
    %1843 = vmatpush1.xpose.msra.mxu0 0.0
    %1844 = vmatprep.subr.mxu0 0.0
    %1845 = vmatpush1.xpose.msra.mxu0 0.0
    %1846 = vmatprep.subr.mxu0 0.0
    %1847 = vmatpush1.xpose.msra.mxu0 0.0
    %1848 = vmatprep.subr.mxu0 0.0
    %1849 = vmatpush1.xpose.msra.mxu0 0.0
    %1850 = vmatprep.subr.mxu0 0.0
    %1851 = vmatpush1.xpose.msra.mxu0 0.0
    %1852 = vmatprep.subr.mxu0 0.0
    %1853 = vmatpush1.xpose.msra.mxu0 0.0
    %1854 = vmatprep.subr.mxu0 0.0
    %1855 = vmatpush1.xpose.msra.mxu0 0.0
    %1856 = vmatprep.subr.mxu0 0.0
    %1857 = vmatpush1.xpose.msra.mxu0 0.0
    %1858 = vmatprep.subr.mxu0 0.0
    %1859 = vmatpush1.xpose.msra.mxu0 %v1826
    %1860 = vmatprep.subr.mxu0 0.0
    %1861 = vmatpush2.xpose.msra.mxu0 0.0
    %1862 = vmatprep.subr.mxu0 0.0
    %1863 = vmatpush2.xpose.msra.mxu0 0.0
    %1864 = vmatprep.subr.mxu0 0.0
    %1865 = vmatpush2.xpose.msra.mxu0 0.0
    %1866 = vmatprep.subr.mxu0 0.0
    %1867 = vmatpush2.xpose.msra.mxu0 0.0
    %1868 = vmatprep.subr.mxu0 0.0
    %1869 = vmatpush2.xpose.msra.mxu0 0.0
    %1870 = vmatprep.subr.mxu0 0.0
    %1871 = vmatpush2.xpose.msra.mxu0 0.0
    %1872 = vmatprep.subr.mxu0 0.0
    %1873 = vmatpush2.xpose.msra.mxu0 0.0
    %1874 = vmatprep.subr.mxu0 0.0
    %1875 = vmatpush2.xpose.msra.mxu0 0.0
    %1876 = vmatprep.subr.mxu0 0.0
    %1877 = vmatpush2.xpose.msra.mxu0 0.0
    %1878 = vmatprep.subr.mxu0 0.0
    %1879 = vmatpush2.xpose.msra.mxu0 0.0
    %1880 = vmatprep.subr.mxu0 0.0
    %1881 = vmatpush2.xpose.msra.mxu0 0.0
    %1882 = vmatprep.subr.mxu0 0.0
    %1883 = vmatpush2.xpose.msra.mxu0 0.0
    %1884 = vmatprep.subr.mxu0 0.0
    %1885 = vmatpush2.xpose.msra.mxu0 0.0
    %1886 = vmatprep.subr.mxu0 0.0
    %1887 = vmatpush2.xpose.msra.mxu0 0.0
    %1888 = vmatprep.subr.mxu0 0.0
    %1889 = vmatpush2.xpose.msra.mxu0 0.0
    %1890 = vmatprep.subr.mxu0 0.0
    %1891 = vmatpush2.xpose.msra.mxu0 0.0
    %1892 = vmatprep.mubr.f32.mxu0 0.0
    %1893 = vmatmul.mubr.f32.gmra.mxu0 %v136
    %v1894 = vpop.f32.mrf.mxu0
    %v1895 = vadd.f32 0.0, %v1894
    %v1896 = vpop.f32.mrf.mxu0
    %1897 = vmatprep.mubr.f32.mxu0 0.0
    %1898 = vmatmul.mubr.f32.gmra.mxu0 %v139
    %v1899 = vpop.f32.mrf.mxu0
    %v1900 = vadd.f32 0.0, %v1899
    %v1901 = vpop.f32.mrf.mxu0
    %1902 = vmatprep.mubr.f32.mxu0 0.0
    %1903 = vmatmul.mubr.f32.gmra.mxu0 %v142
    %v1904 = vpop.f32.mrf.mxu0
    %v1905 = vadd.f32 0.0, %v1904
    %v1906 = vpop.f32.mrf.mxu0
    %1907 = vmatprep.mubr.f32.mxu0 0.0
    %1908 = vmatmul.mubr.f32.gmra.mxu0 %v145
    %v1909 = vpop.f32.mrf.mxu0
    %v1910 = vadd.f32 0.0, %v1909
    %v1911 = vpop.f32.mrf.mxu0
    %1912 = vdwg.mxu0
    %s1913 = scalar_lea.vmem %s0, 32
    %v1914 = vld [vmem:[%s1913] sm:$0xff]
    %1916 = vset.pattern.permute.xlu0 0
    %1917 = vperm.xlu0 %1916, %v1914
    %v1918 = vpop.permute.xlu0 %1917
    %v1920 = vmul.f32 %v1918, %v62
    %v1921 = vmul.f32 %v1918, %v63
    %v1922 = vmul.f32 %v1918, %v64
    %v1923 = vmul.f32 %v1918, %v65
    %v1924 = vmul.f32 %v1918, %v66
    %v1925 = vsub.f32 %v1920, %v67
    %v1926 = vsub.f32 %v1921, %v68
    %v1927 = vsub.f32 %v1922, %v69
    %v1928 = vsub.f32 %v1923, %v70
    %v1929 = vsub.f32 %v1924, %v71
    %1931 = vset.pattern.permute.xlu0 0
    %1932 = vperm.xlu0 %1931, %v1895
    %v1933 = vpop.permute.xlu0 %1932
    %1936 = vset.pattern.permute.xlu0 0
    %1937 = vperm.xlu0 %1936, %v1900
    %v1938 = vpop.permute.xlu0 %1937
    %1941 = vset.pattern.permute.xlu0 0
    %1942 = vperm.xlu0 %1941, %v1905
    %v1943 = vpop.permute.xlu0 %1942
    %1946 = vset.pattern.permute.xlu0 0
    %1947 = vperm.xlu0 %1946, %v1910
    %v1948 = vpop.permute.xlu0 %1947
    %v1950 = vmul.f32 %v1933, %v72
    %v1951 = vmul.f32 %v1938, %v73
    %v1952 = vmul.f32 %v1943, %v74
    %v1953 = vmul.f32 %v1948, %v75
    %v1954 = vmul.f32 %v1933, %v76
    %v1955 = vmul.f32 %v1938, %v77
    %v1956 = vmul.f32 %v1943, %v78
    %v1957 = vmul.f32 %v1948, %v79
    %v1958 = vmul.f32 %v1933, %v80
    %v1959 = vmul.f32 %v1938, %v81
    %v1960 = vmul.f32 %v1943, %v82
    %v1961 = vmul.f32 %v1948, %v83
    %v1962 = vmul.f32 %v1933, %v84
    %v1963 = vmul.f32 %v1938, %v85
    %v1964 = vmul.f32 %v1943, %v86
    %v1965 = vmul.f32 %v1948, %v87
    %v1966 = vmul.f32 %v1933, %v88
    %v1967 = vmul.f32 %v1938, %v89
    %v1968 = vmul.f32 %v1943, %v90
    %v1969 = vmul.f32 %v1948, %v91
    %v1970 = vsub.f32 %v1950, %v92
    %v1971 = vsub.f32 %v1951, %v93
    %v1972 = vsub.f32 %v1952, %v94
    %v1973 = vsub.f32 %v1953, %v95
    %v1974 = vsub.f32 %v1954, %v96
    %v1975 = vsub.f32 %v1955, %v97
    %v1976 = vsub.f32 %v1956, %v98
    %v1977 = vsub.f32 %v1957, %v99
    %v1978 = vsub.f32 %v1958, %v100
    %v1979 = vsub.f32 %v1959, %v101
    %v1980 = vsub.f32 %v1960, %v102
    %v1981 = vsub.f32 %v1961, %v103
    %v1982 = vsub.f32 %v1962, %v104
    %v1983 = vsub.f32 %v1963, %v105
    %v1984 = vsub.f32 %v1964, %v106
    %v1985 = vsub.f32 %v1965, %v107
    %v1986 = vsub.f32 %v1966, %v108
    %v1987 = vsub.f32 %v1967, %v109
    %v1988 = vsub.f32 %v1968, %v110
    %v1989 = vsub.f32 %v1969, %v111
    %v1990 = vsub.f32 0.0, %v1925
    %v1991 = vsub.f32 0.0, %v1926
    %v1992 = vsub.f32 0.0, %v1927
    %v1993 = vsub.f32 0.0, %v1928
    %v1994 = vsub.f32 0.0, %v1929
    %v1995 = vmul.f32 %v1990, 1.442695
    %v1996 = vpow.pop %v1995
    %v1997 = vmul.f32 %v1991, 1.442695
    %v1998 = vpow.pop %v1997
    %v1999 = vmul.f32 %v1992, 1.442695
    %v2000 = vpow.pop %v1999
    %v2001 = vmul.f32 %v1993, 1.442695
    %v2002 = vpow.pop %v2001
    %v2003 = vmul.f32 %v1994, 1.442695
    %v2004 = vpow.pop %v2003
    %v2005 = vadd.f32 %v1996, 1.0
    %v2006 = vadd.f32 %v1998, 1.0
    %v2007 = vadd.f32 %v2000, 1.0
    %v2008 = vadd.f32 %v2002, 1.0
    %v2009 = vadd.f32 %v2004, 1.0
    %v2015 = vrot.slane %v2005, 4
    %v2016 = vrot.slane %v2006, 4
    %v2017 = vrot.slane %v2007, 4
    %v2018 = vrot.slane %v2008, 4
    %v2019 = vrot.slane %v2009, 4
    %v2025 = vmul.f32 %v2005, %v2015
    %v2026 = vmul.f32 %v2006, %v2016
    %v2027 = vmul.f32 %v2007, %v2017
    %v2028 = vmul.f32 %v2008, %v2018
    %v2029 = vmul.f32 %v2009, %v2019
    %v2035 = vrot.slane %v2025, 2
    %v2036 = vrot.slane %v2026, 2
    %v2037 = vrot.slane %v2027, 2
    %v2038 = vrot.slane %v2028, 2
    %v2039 = vrot.slane %v2029, 2
    %v2045 = vmul.f32 %v2025, %v2035
    %v2046 = vmul.f32 %v2026, %v2036
    %v2047 = vmul.f32 %v2027, %v2037
    %v2048 = vmul.f32 %v2028, %v2038
    %v2049 = vmul.f32 %v2029, %v2039
    %v2055 = vrot.slane %v2045, 1
    %v2056 = vrot.slane %v2046, 1
    %v2057 = vrot.slane %v2047, 1
    %v2058 = vrot.slane %v2048, 1
    %v2059 = vrot.slane %v2049, 1
    %v2065 = vmul.f32 %v2045, %v2055
    %v2066 = vmul.f32 %v2046, %v2056
    %v2067 = vmul.f32 %v2047, %v2057
    %v2068 = vmul.f32 %v2048, %v2058
    %v2069 = vmul.f32 %v2049, %v2059
    %v2070 = vsub.f32 0.0, %v1970
    %v2071 = vsub.f32 0.0, %v1971
    %v2072 = vsub.f32 0.0, %v1972
    %v2073 = vsub.f32 0.0, %v1973
    %v2074 = vsub.f32 0.0, %v1974
    %v2075 = vsub.f32 0.0, %v1975
    %v2076 = vsub.f32 0.0, %v1976
    %v2077 = vsub.f32 0.0, %v1977
    %v2078 = vsub.f32 0.0, %v1978
    %v2079 = vsub.f32 0.0, %v1979
    %v2080 = vsub.f32 0.0, %v1980
    %v2081 = vsub.f32 0.0, %v1981
    %v2082 = vsub.f32 0.0, %v1982
    %v2083 = vsub.f32 0.0, %v1983
    %v2084 = vsub.f32 0.0, %v1984
    %v2085 = vsub.f32 0.0, %v1985
    %v2086 = vsub.f32 0.0, %v1986
    %v2087 = vsub.f32 0.0, %v1987
    %v2088 = vsub.f32 0.0, %v1988
    %v2089 = vsub.f32 0.0, %v1989
    %v2090 = vmul.f32 %v2070, 1.442695
    %v2091 = vpow.pop %v2090
    %v2092 = vmul.f32 %v2071, 1.442695
    %v2093 = vpow.pop %v2092
    %v2094 = vmul.f32 %v2072, 1.442695
    %v2095 = vpow.pop %v2094
    %v2096 = vmul.f32 %v2073, 1.442695
    %v2097 = vpow.pop %v2096
    %v2098 = vmul.f32 %v2074, 1.442695
    %v2099 = vpow.pop %v2098
    %v2100 = vmul.f32 %v2075, 1.442695
    %v2101 = vpow.pop %v2100
    %v2102 = vmul.f32 %v2076, 1.442695
    %v2103 = vpow.pop %v2102
    %v2104 = vmul.f32 %v2077, 1.442695
    %v2105 = vpow.pop %v2104
    %v2106 = vmul.f32 %v2078, 1.442695
    %v2107 = vpow.pop %v2106
    %v2108 = vmul.f32 %v2079, 1.442695
    %v2109 = vpow.pop %v2108
    %v2110 = vmul.f32 %v2080, 1.442695
    %v2111 = vpow.pop %v2110
    %v2112 = vmul.f32 %v2081, 1.442695
    %v2113 = vpow.pop %v2112
    %v2114 = vmul.f32 %v2082, 1.442695
    %v2115 = vpow.pop %v2114
    %v2116 = vmul.f32 %v2083, 1.442695
    %v2117 = vpow.pop %v2116
    %v2118 = vmul.f32 %v2084, 1.442695
    %v2119 = vpow.pop %v2118
    %v2120 = vmul.f32 %v2085, 1.442695
    %v2121 = vpow.pop %v2120
    %v2122 = vmul.f32 %v2086, 1.442695
    %v2123 = vpow.pop %v2122
    %v2124 = vmul.f32 %v2087, 1.442695
    %v2125 = vpow.pop %v2124
    %v2126 = vmul.f32 %v2088, 1.442695
    %v2127 = vpow.pop %v2126
    %v2128 = vmul.f32 %v2089, 1.442695
    %v2129 = vpow.pop %v2128
    %v2130 = vadd.f32 %v2091, 1.0
    %v2131 = vadd.f32 %v2093, 1.0
    %v2132 = vadd.f32 %v2095, 1.0
    %v2133 = vadd.f32 %v2097, 1.0
    %v2134 = vadd.f32 %v2099, 1.0
    %v2135 = vadd.f32 %v2101, 1.0
    %v2136 = vadd.f32 %v2103, 1.0
    %v2137 = vadd.f32 %v2105, 1.0
    %v2138 = vadd.f32 %v2107, 1.0
    %v2139 = vadd.f32 %v2109, 1.0
    %v2140 = vadd.f32 %v2111, 1.0
    %v2141 = vadd.f32 %v2113, 1.0
    %v2142 = vadd.f32 %v2115, 1.0
    %v2143 = vadd.f32 %v2117, 1.0
    %v2144 = vadd.f32 %v2119, 1.0
    %v2145 = vadd.f32 %v2121, 1.0
    %v2146 = vadd.f32 %v2123, 1.0
    %v2147 = vadd.f32 %v2125, 1.0
    %v2148 = vadd.f32 %v2127, 1.0
    %v2149 = vadd.f32 %v2129, 1.0
    %v2150 = vmul.f32 %v2130, %v2132
    %v2151 = vmul.f32 %v2131, %v2133
    %v2152 = vmul.f32 %v2134, %v2136
    %v2153 = vmul.f32 %v2135, %v2137
    %v2154 = vmul.f32 %v2138, %v2140
    %v2155 = vmul.f32 %v2139, %v2141
    %v2156 = vmul.f32 %v2142, %v2144
    %v2157 = vmul.f32 %v2143, %v2145
    %v2158 = vmul.f32 %v2146, %v2148
    %v2159 = vmul.f32 %v2147, %v2149
    %v2160 = vmul.f32 %v2150, %v2151
    %v2161 = vmul.f32 %v2152, %v2153
    %v2162 = vmul.f32 %v2154, %v2155
    %v2163 = vmul.f32 %v2156, %v2157
    %v2164 = vmul.f32 %v2158, %v2159
    %v2170 = vrot.slane %v2160, 4
    %v2171 = vrot.slane %v2161, 4
    %v2172 = vrot.slane %v2162, 4
    %v2173 = vrot.slane %v2163, 4
    %v2174 = vrot.slane %v2164, 4
    %v2180 = vmul.f32 %v2160, %v2170
    %v2181 = vmul.f32 %v2161, %v2171
    %v2182 = vmul.f32 %v2162, %v2172
    %v2183 = vmul.f32 %v2163, %v2173
    %v2184 = vmul.f32 %v2164, %v2174
    %v2190 = vrot.slane %v2180, 2
    %v2191 = vrot.slane %v2181, 2
    %v2192 = vrot.slane %v2182, 2
    %v2193 = vrot.slane %v2183, 2
    %v2194 = vrot.slane %v2184, 2
    %v2200 = vmul.f32 %v2180, %v2190
    %v2201 = vmul.f32 %v2181, %v2191
    %v2202 = vmul.f32 %v2182, %v2192
    %v2203 = vmul.f32 %v2183, %v2193
    %v2204 = vmul.f32 %v2184, %v2194
    %v2210 = vrot.slane %v2200, 1
    %v2211 = vrot.slane %v2201, 1
    %v2212 = vrot.slane %v2202, 1
    %v2213 = vrot.slane %v2203, 1
    %v2214 = vrot.slane %v2204, 1
    %v2220 = vmul.f32 %v2200, %v2210
    %v2221 = vmul.f32 %v2201, %v2211
    %v2222 = vmul.f32 %v2202, %v2212
    %v2223 = vmul.f32 %v2203, %v2213
    %v2224 = vmul.f32 %v2204, %v2214
    %v2225 = vmul.f32 %v2065, %v2220
    %v2226 = vmul.f32 %v2066, %v2221
    %v2227 = vmul.f32 %v2067, %v2222
    %v2228 = vmul.f32 %v2068, %v2223
    %v2229 = vmul.f32 %v2069, %v2224
    %v2230 = vrcp.pop %v2225
    %v2231 = vmul.f32 1.0, %v2230
    %v2232 = vrcp.pop %v2226
    %v2233 = vmul.f32 1.0, %v2232
    %v2234 = vrcp.pop %v2227
    %v2235 = vmul.f32 1.0, %v2234
    %v2236 = vrcp.pop %v2228
    %v2237 = vmul.f32 1.0, %v2236
    %v2238 = vrcp.pop %v2229
    %v2239 = vmul.f32 1.0, %v2238
    %v2240 = vadd.f32 %v2231, %v2233
    %v2241 = vadd.f32 %v2240, %v2235
    %v2242 = vadd.f32 %v2241, %v2237
    %v2243 = vadd.f32 %v2242, %v2239
    %v2244 = vsub.f32 %v2243, %v566
    %v2245 = vmul.f32 %v112, %v2244
    %v2246 = vxor.u32 %v2245, 2147483648
    %v2247 = vmul.f32 %v2246, 1.442695
    %v2248 = vpow.pop %v2247
    %v2249 = vadd.f32 %v2248, 1.0
    %v2250 = vrcp.pop %v2249
    %v2251 = vmul.f32 1.0, %v2250
    %v2252 = vtanh.pop %v2245
    %v2253 = vmul.f32 %v2251, %v1824
    %2255 = vrot.lane.b32.xlu0 %v2252, 96
    %v2256 = vpop.permute.xlu0 %2255
    %v2258 = vmul.f32 %v2251, %v2256
    %2260 = vrot.lane.b32.xlu0 %v2258, 96
    %v2261 = vpop.permute.xlu0 %2260
    %v2263 = vadd.f32 %v2253, %v2261
    %v2264 = vtanh.pop %v2263
    %2266 = vrot.lane.b32.xlu0 %v2264, 96
    %v2267 = vpop.permute.xlu0 %2266
    %v2269 = vmul.f32 %v2251, %v2267
    %v2270 = vlaneseq
    %v2271 = vshrl.u32 %v2270, 7
    %v2272 = vsub.s32 0, %v2271
    %v2273 = vrot.slane %v2269, %v2272
    %v2274 = vmul.f32 %v596, %v2273
    %v2275 = vadd.f32 %v2274, 0.0
    %v2276 = vlaneseq
    %v2277 = vshrl.u32 %v2276, 7
    %v2278 = vsub.s32 0, %v2277
    %v2279 = vrot.slane %v2263, %v2278
    %v2280 = vmul.f32 %v596, %v2279
    %v2281 = vadd.f32 %v2280, 0.0
    %s2282 = scalar_lea.vmem %s0, 40
    %v2283 = vld [vmem:[%s2282] sm:$0xff]
    %2285 = vset.pattern.permute.xlu0 0
    %2286 = vperm.xlu0 %2285, %v2283
    %v2287 = vpop.permute.xlu0 %2286
    %v2289 = vmul.f32 %v2287, %v62
    %v2290 = vmul.f32 %v2287, %v63
    %v2291 = vmul.f32 %v2287, %v64
    %v2292 = vmul.f32 %v2287, %v65
    %v2293 = vmul.f32 %v2287, %v66
    %v2294 = vsub.f32 %v2289, %v67
    %v2295 = vsub.f32 %v2290, %v68
    %v2296 = vsub.f32 %v2291, %v69
    %v2297 = vsub.f32 %v2292, %v70
    %v2298 = vsub.f32 %v2293, %v71
    %2299 = vset.pattern.permute.xlu0 1
    %2300 = vperm.xlu0 %2299, %v1895
    %v2301 = vpop.permute.xlu0 %2300
    %2303 = vset.pattern.permute.xlu0 1
    %2304 = vperm.xlu0 %2303, %v1900
    %v2305 = vpop.permute.xlu0 %2304
    %2307 = vset.pattern.permute.xlu0 1
    %2308 = vperm.xlu0 %2307, %v1905
    %v2309 = vpop.permute.xlu0 %2308
    %2311 = vset.pattern.permute.xlu0 1
    %2312 = vperm.xlu0 %2311, %v1910
    %v2313 = vpop.permute.xlu0 %2312
    %v2315 = vmul.f32 %v2301, %v72
    %v2316 = vmul.f32 %v2305, %v73
    %v2317 = vmul.f32 %v2309, %v74
    %v2318 = vmul.f32 %v2313, %v75
    %v2319 = vmul.f32 %v2301, %v76
    %v2320 = vmul.f32 %v2305, %v77
    %v2321 = vmul.f32 %v2309, %v78
    %v2322 = vmul.f32 %v2313, %v79
    %v2323 = vmul.f32 %v2301, %v80
    %v2324 = vmul.f32 %v2305, %v81
    %v2325 = vmul.f32 %v2309, %v82
    %v2326 = vmul.f32 %v2313, %v83
    %v2327 = vmul.f32 %v2301, %v84
    %v2328 = vmul.f32 %v2305, %v85
    %v2329 = vmul.f32 %v2309, %v86
    %v2330 = vmul.f32 %v2313, %v87
    %v2331 = vmul.f32 %v2301, %v88
    %v2332 = vmul.f32 %v2305, %v89
    %v2333 = vmul.f32 %v2309, %v90
    %v2334 = vmul.f32 %v2313, %v91
    %v2335 = vsub.f32 %v2315, %v92
    %v2336 = vsub.f32 %v2316, %v93
    %v2337 = vsub.f32 %v2317, %v94
    %v2338 = vsub.f32 %v2318, %v95
    %v2339 = vsub.f32 %v2319, %v96
    %v2340 = vsub.f32 %v2320, %v97
    %v2341 = vsub.f32 %v2321, %v98
    %v2342 = vsub.f32 %v2322, %v99
    %v2343 = vsub.f32 %v2323, %v100
    %v2344 = vsub.f32 %v2324, %v101
    %v2345 = vsub.f32 %v2325, %v102
    %v2346 = vsub.f32 %v2326, %v103
    %v2347 = vsub.f32 %v2327, %v104
    %v2348 = vsub.f32 %v2328, %v105
    %v2349 = vsub.f32 %v2329, %v106
    %v2350 = vsub.f32 %v2330, %v107
    %v2351 = vsub.f32 %v2331, %v108
    %v2352 = vsub.f32 %v2332, %v109
    %v2353 = vsub.f32 %v2333, %v110
    %v2354 = vsub.f32 %v2334, %v111
    %v2355 = vsub.f32 0.0, %v2294
    %v2356 = vsub.f32 0.0, %v2295
    %v2357 = vsub.f32 0.0, %v2296
    %v2358 = vsub.f32 0.0, %v2297
    %v2359 = vsub.f32 0.0, %v2298
    %v2360 = vmul.f32 %v2355, 1.442695
    %v2361 = vpow.pop %v2360
    %v2362 = vmul.f32 %v2356, 1.442695
    %v2363 = vpow.pop %v2362
    %v2364 = vmul.f32 %v2357, 1.442695
    %v2365 = vpow.pop %v2364
    %v2366 = vmul.f32 %v2358, 1.442695
    %v2367 = vpow.pop %v2366
    %v2368 = vmul.f32 %v2359, 1.442695
    %v2369 = vpow.pop %v2368
    %v2370 = vadd.f32 %v2361, 1.0
    %v2371 = vadd.f32 %v2363, 1.0
    %v2372 = vadd.f32 %v2365, 1.0
    %v2373 = vadd.f32 %v2367, 1.0
    %v2374 = vadd.f32 %v2369, 1.0
    %v2380 = vrot.slane %v2370, 4
    %v2381 = vrot.slane %v2371, 4
    %v2382 = vrot.slane %v2372, 4
    %v2383 = vrot.slane %v2373, 4
    %v2384 = vrot.slane %v2374, 4
    %v2390 = vmul.f32 %v2370, %v2380
    %v2391 = vmul.f32 %v2371, %v2381
    %v2392 = vmul.f32 %v2372, %v2382
    %v2393 = vmul.f32 %v2373, %v2383
    %v2394 = vmul.f32 %v2374, %v2384
    %v2400 = vrot.slane %v2390, 2
    %v2401 = vrot.slane %v2391, 2
    %v2402 = vrot.slane %v2392, 2
    %v2403 = vrot.slane %v2393, 2
    %v2404 = vrot.slane %v2394, 2
    %v2410 = vmul.f32 %v2390, %v2400
    %v2411 = vmul.f32 %v2391, %v2401
    %v2412 = vmul.f32 %v2392, %v2402
    %v2413 = vmul.f32 %v2393, %v2403
    %v2414 = vmul.f32 %v2394, %v2404
    %v2420 = vrot.slane %v2410, 1
    %v2421 = vrot.slane %v2411, 1
    %v2422 = vrot.slane %v2412, 1
    %v2423 = vrot.slane %v2413, 1
    %v2424 = vrot.slane %v2414, 1
    %v2430 = vmul.f32 %v2410, %v2420
    %v2431 = vmul.f32 %v2411, %v2421
    %v2432 = vmul.f32 %v2412, %v2422
    %v2433 = vmul.f32 %v2413, %v2423
    %v2434 = vmul.f32 %v2414, %v2424
    %v2435 = vsub.f32 0.0, %v2335
    %v2436 = vsub.f32 0.0, %v2336
    %v2437 = vsub.f32 0.0, %v2337
    %v2438 = vsub.f32 0.0, %v2338
    %v2439 = vsub.f32 0.0, %v2339
    %v2440 = vsub.f32 0.0, %v2340
    %v2441 = vsub.f32 0.0, %v2341
    %v2442 = vsub.f32 0.0, %v2342
    %v2443 = vsub.f32 0.0, %v2343
    %v2444 = vsub.f32 0.0, %v2344
    %v2445 = vsub.f32 0.0, %v2345
    %v2446 = vsub.f32 0.0, %v2346
    %v2447 = vsub.f32 0.0, %v2347
    %v2448 = vsub.f32 0.0, %v2348
    %v2449 = vsub.f32 0.0, %v2349
    %v2450 = vsub.f32 0.0, %v2350
    %v2451 = vsub.f32 0.0, %v2351
    %v2452 = vsub.f32 0.0, %v2352
    %v2453 = vsub.f32 0.0, %v2353
    %v2454 = vsub.f32 0.0, %v2354
    %v2455 = vmul.f32 %v2435, 1.442695
    %v2456 = vpow.pop %v2455
    %v2457 = vmul.f32 %v2436, 1.442695
    %v2458 = vpow.pop %v2457
    %v2459 = vmul.f32 %v2437, 1.442695
    %v2460 = vpow.pop %v2459
    %v2461 = vmul.f32 %v2438, 1.442695
    %v2462 = vpow.pop %v2461
    %v2463 = vmul.f32 %v2439, 1.442695
    %v2464 = vpow.pop %v2463
    %v2465 = vmul.f32 %v2440, 1.442695
    %v2466 = vpow.pop %v2465
    %v2467 = vmul.f32 %v2441, 1.442695
    %v2468 = vpow.pop %v2467
    %v2469 = vmul.f32 %v2442, 1.442695
    %v2470 = vpow.pop %v2469
    %v2471 = vmul.f32 %v2443, 1.442695
    %v2472 = vpow.pop %v2471
    %v2473 = vmul.f32 %v2444, 1.442695
    %v2474 = vpow.pop %v2473
    %v2475 = vmul.f32 %v2445, 1.442695
    %v2476 = vpow.pop %v2475
    %v2477 = vmul.f32 %v2446, 1.442695
    %v2478 = vpow.pop %v2477
    %v2479 = vmul.f32 %v2447, 1.442695
    %v2480 = vpow.pop %v2479
    %v2481 = vmul.f32 %v2448, 1.442695
    %v2482 = vpow.pop %v2481
    %v2483 = vmul.f32 %v2449, 1.442695
    %v2484 = vpow.pop %v2483
    %v2485 = vmul.f32 %v2450, 1.442695
    %v2486 = vpow.pop %v2485
    %v2487 = vmul.f32 %v2451, 1.442695
    %v2488 = vpow.pop %v2487
    %v2489 = vmul.f32 %v2452, 1.442695
    %v2490 = vpow.pop %v2489
    %v2491 = vmul.f32 %v2453, 1.442695
    %v2492 = vpow.pop %v2491
    %v2493 = vmul.f32 %v2454, 1.442695
    %v2494 = vpow.pop %v2493
    %v2495 = vadd.f32 %v2456, 1.0
    %v2496 = vadd.f32 %v2458, 1.0
    %v2497 = vadd.f32 %v2460, 1.0
    %v2498 = vadd.f32 %v2462, 1.0
    %v2499 = vadd.f32 %v2464, 1.0
    %v2500 = vadd.f32 %v2466, 1.0
    %v2501 = vadd.f32 %v2468, 1.0
    %v2502 = vadd.f32 %v2470, 1.0
    %v2503 = vadd.f32 %v2472, 1.0
    %v2504 = vadd.f32 %v2474, 1.0
    %v2505 = vadd.f32 %v2476, 1.0
    %v2506 = vadd.f32 %v2478, 1.0
    %v2507 = vadd.f32 %v2480, 1.0
    %v2508 = vadd.f32 %v2482, 1.0
    %v2509 = vadd.f32 %v2484, 1.0
    %v2510 = vadd.f32 %v2486, 1.0
    %v2511 = vadd.f32 %v2488, 1.0
    %v2512 = vadd.f32 %v2490, 1.0
    %v2513 = vadd.f32 %v2492, 1.0
    %v2514 = vadd.f32 %v2494, 1.0
    %v2515 = vmul.f32 %v2495, %v2497
    %v2516 = vmul.f32 %v2496, %v2498
    %v2517 = vmul.f32 %v2499, %v2501
    %v2518 = vmul.f32 %v2500, %v2502
    %v2519 = vmul.f32 %v2503, %v2505
    %v2520 = vmul.f32 %v2504, %v2506
    %v2521 = vmul.f32 %v2507, %v2509
    %v2522 = vmul.f32 %v2508, %v2510
    %v2523 = vmul.f32 %v2511, %v2513
    %v2524 = vmul.f32 %v2512, %v2514
    %v2525 = vmul.f32 %v2515, %v2516
    %v2526 = vmul.f32 %v2517, %v2518
    %v2527 = vmul.f32 %v2519, %v2520
    %v2528 = vmul.f32 %v2521, %v2522
    %v2529 = vmul.f32 %v2523, %v2524
    %v2535 = vrot.slane %v2525, 4
    %v2536 = vrot.slane %v2526, 4
    %v2537 = vrot.slane %v2527, 4
    %v2538 = vrot.slane %v2528, 4
    %v2539 = vrot.slane %v2529, 4
    %v2545 = vmul.f32 %v2525, %v2535
    %v2546 = vmul.f32 %v2526, %v2536
    %v2547 = vmul.f32 %v2527, %v2537
    %v2548 = vmul.f32 %v2528, %v2538
    %v2549 = vmul.f32 %v2529, %v2539
    %v2555 = vrot.slane %v2545, 2
    %v2556 = vrot.slane %v2546, 2
    %v2557 = vrot.slane %v2547, 2
    %v2558 = vrot.slane %v2548, 2
    %v2559 = vrot.slane %v2549, 2
    %v2565 = vmul.f32 %v2545, %v2555
    %v2566 = vmul.f32 %v2546, %v2556
    %v2567 = vmul.f32 %v2547, %v2557
    %v2568 = vmul.f32 %v2548, %v2558
    %v2569 = vmul.f32 %v2549, %v2559
    %v2575 = vrot.slane %v2565, 1
    %v2576 = vrot.slane %v2566, 1
    %v2577 = vrot.slane %v2567, 1
    %v2578 = vrot.slane %v2568, 1
    %v2579 = vrot.slane %v2569, 1
    %v2585 = vmul.f32 %v2565, %v2575
    %v2586 = vmul.f32 %v2566, %v2576
    %v2587 = vmul.f32 %v2567, %v2577
    %v2588 = vmul.f32 %v2568, %v2578
    %v2589 = vmul.f32 %v2569, %v2579
    %v2590 = vmul.f32 %v2430, %v2585
    %v2591 = vmul.f32 %v2431, %v2586
    %v2592 = vmul.f32 %v2432, %v2587
    %v2593 = vmul.f32 %v2433, %v2588
    %v2594 = vmul.f32 %v2434, %v2589
    %v2595 = vrcp.pop %v2590
    %v2596 = vmul.f32 1.0, %v2595
    %v2597 = vrcp.pop %v2591
    %v2598 = vmul.f32 1.0, %v2597
    %v2599 = vrcp.pop %v2592
    %v2600 = vmul.f32 1.0, %v2599
    %v2601 = vrcp.pop %v2593
    %v2602 = vmul.f32 1.0, %v2601
    %v2603 = vrcp.pop %v2594
    %v2604 = vmul.f32 1.0, %v2603
    %v2605 = vadd.f32 %v2596, %v2598
    %v2606 = vadd.f32 %v2605, %v2600
    %v2607 = vadd.f32 %v2606, %v2602
    %v2608 = vadd.f32 %v2607, %v2604
    %v2609 = vsub.f32 %v2608, %v566
    %v2610 = vmul.f32 %v112, %v2609
    %v2611 = vxor.u32 %v2610, 2147483648
    %v2612 = vmul.f32 %v2611, 1.442695
    %v2613 = vpow.pop %v2612
    %v2614 = vadd.f32 %v2613, 1.0
    %v2615 = vrcp.pop %v2614
    %v2616 = vmul.f32 1.0, %v2615
    %v2617 = vtanh.pop %v2610
    %v2619 = vrot.slane %v1824, 1
    %v2621 = vmul.f32 %v2616, %v2619
    %2623 = vrot.lane.b32.xlu0 %v2617, 96
    %v2624 = vpop.permute.xlu0 %2623
    %v2626 = vmul.f32 %v2616, %v2624
    %2628 = vrot.lane.b32.xlu0 %v2626, 96
    %v2629 = vpop.permute.xlu0 %2628
    %v2631 = vadd.f32 %v2621, %v2629
    %v2632 = vtanh.pop %v2631
    %2634 = vrot.lane.b32.xlu0 %v2632, 96
    %v2635 = vpop.permute.xlu0 %2634
    %v2637 = vmul.f32 %v2616, %v2635
    %v2638 = vlaneseq
    %v2639 = vshrl.u32 %v2638, 7
    %v2640 = vsub.s32 0, %v2639
    %v2641 = vrot.slane %v2637, %v2640
    %v2642 = vmul.f32 %v967, %v2641
    %v2643 = vadd.f32 %v2275, %v2642
    %v2644 = vlaneseq
    %v2645 = vshrl.u32 %v2644, 7
    %v2646 = vsub.s32 0, %v2645
    %v2647 = vrot.slane %v2631, %v2646
    %v2648 = vmul.f32 %v967, %v2647
    %v2649 = vadd.f32 %v2281, %v2648
    %2651 = vrot.lane.b32.xlu0 %v2643, 32
    %v2652 = vpop.permute.xlu0 %2651
    %2654 = vst.msk [vmem:[#allocation2] sm:$0x3] %vm984, %v2652
    %2655 = vst.msk [vmem:[#allocation9] sm:$0x3] %vm984, %v2649
    %s2656 = scalar_lea.vmem [#allocation8], 4
    %2657 = vst.msk [vmem:[%s2656] sm:$0x3] %vm984, %v2652
    %v2658 = vld [vmem:[#allocation2] sm:$0x3]
    %v2659 = vld [vmem:[#allocation9] sm:$0x3]
    %v2661 = vsel %vm134, %v2658, 0
    %2663 = vmatprep.subr.mxu0 0.0
    %2664 = vmatpush1.xpose.msra.mxu0 0.0
    %2665 = vmatprep.subr.mxu0 0.0
    %2666 = vmatpush1.xpose.msra.mxu0 0.0
    %2667 = vmatprep.subr.mxu0 0.0
    %2668 = vmatpush1.xpose.msra.mxu0 0.0
    %2669 = vmatprep.subr.mxu0 0.0
    %2670 = vmatpush1.xpose.msra.mxu0 0.0
    %2671 = vmatprep.subr.mxu0 0.0
    %2672 = vmatpush1.xpose.msra.mxu0 0.0
    %2673 = vmatprep.subr.mxu0 0.0
    %2674 = vmatpush1.xpose.msra.mxu0 0.0
    %2675 = vmatprep.subr.mxu0 0.0
    %2676 = vmatpush1.xpose.msra.mxu0 0.0
    %2677 = vmatprep.subr.mxu0 0.0
    %2678 = vmatpush1.xpose.msra.mxu0 0.0
    %2679 = vmatprep.subr.mxu0 0.0
    %2680 = vmatpush1.xpose.msra.mxu0 0.0
    %2681 = vmatprep.subr.mxu0 0.0
    %2682 = vmatpush1.xpose.msra.mxu0 0.0
    %2683 = vmatprep.subr.mxu0 0.0
    %2684 = vmatpush1.xpose.msra.mxu0 0.0
    %2685 = vmatprep.subr.mxu0 0.0
    %2686 = vmatpush1.xpose.msra.mxu0 0.0
    %2687 = vmatprep.subr.mxu0 0.0
    %2688 = vmatpush1.xpose.msra.mxu0 0.0
    %2689 = vmatprep.subr.mxu0 0.0
    %2690 = vmatpush1.xpose.msra.mxu0 0.0
    %2691 = vmatprep.subr.mxu0 0.0
    %2692 = vmatpush1.xpose.msra.mxu0 0.0
    %2693 = vmatprep.subr.mxu0 0.0
    %2694 = vmatpush1.xpose.msra.mxu0 %v2661
    %2695 = vmatprep.subr.mxu0 0.0
    %2696 = vmatpush2.xpose.msra.mxu0 0.0
    %2697 = vmatprep.subr.mxu0 0.0
    %2698 = vmatpush2.xpose.msra.mxu0 0.0
    %2699 = vmatprep.subr.mxu0 0.0
    %2700 = vmatpush2.xpose.msra.mxu0 0.0
    %2701 = vmatprep.subr.mxu0 0.0
    %2702 = vmatpush2.xpose.msra.mxu0 0.0
    %2703 = vmatprep.subr.mxu0 0.0
    %2704 = vmatpush2.xpose.msra.mxu0 0.0
    %2705 = vmatprep.subr.mxu0 0.0
    %2706 = vmatpush2.xpose.msra.mxu0 0.0
    %2707 = vmatprep.subr.mxu0 0.0
    %2708 = vmatpush2.xpose.msra.mxu0 0.0
    %2709 = vmatprep.subr.mxu0 0.0
    %2710 = vmatpush2.xpose.msra.mxu0 0.0
    %2711 = vmatprep.subr.mxu0 0.0
    %2712 = vmatpush2.xpose.msra.mxu0 0.0
    %2713 = vmatprep.subr.mxu0 0.0
    %2714 = vmatpush2.xpose.msra.mxu0 0.0
    %2715 = vmatprep.subr.mxu0 0.0
    %2716 = vmatpush2.xpose.msra.mxu0 0.0
    %2717 = vmatprep.subr.mxu0 0.0
    %2718 = vmatpush2.xpose.msra.mxu0 0.0
    %2719 = vmatprep.subr.mxu0 0.0
    %2720 = vmatpush2.xpose.msra.mxu0 0.0
    %2721 = vmatprep.subr.mxu0 0.0
    %2722 = vmatpush2.xpose.msra.mxu0 0.0
    %2723 = vmatprep.subr.mxu0 0.0
    %2724 = vmatpush2.xpose.msra.mxu0 0.0
    %2725 = vmatprep.subr.mxu0 0.0
    %2726 = vmatpush2.xpose.msra.mxu0 0.0
    %2727 = vmatprep.mubr.f32.mxu0 0.0
    %2728 = vmatmul.mubr.f32.gmra.mxu0 %v136
    %v2729 = vpop.f32.mrf.mxu0
    %v2730 = vadd.f32 0.0, %v2729
    %v2731 = vpop.f32.mrf.mxu0
    %2732 = vmatprep.mubr.f32.mxu0 0.0
    %2733 = vmatmul.mubr.f32.gmra.mxu0 %v139
    %v2734 = vpop.f32.mrf.mxu0
    %v2735 = vadd.f32 0.0, %v2734
    %v2736 = vpop.f32.mrf.mxu0
    %2737 = vmatprep.mubr.f32.mxu0 0.0
    %2738 = vmatmul.mubr.f32.gmra.mxu0 %v142
    %v2739 = vpop.f32.mrf.mxu0
    %v2740 = vadd.f32 0.0, %v2739
    %v2741 = vpop.f32.mrf.mxu0
    %2742 = vmatprep.mubr.f32.mxu0 0.0
    %2743 = vmatmul.mubr.f32.gmra.mxu0 %v145
    %v2744 = vpop.f32.mrf.mxu0
    %v2745 = vadd.f32 0.0, %v2744
    %v2746 = vpop.f32.mrf.mxu0
    %2747 = vdwg.mxu0
    %s2748 = scalar_lea.vmem %s0, 48
    %v2749 = vld [vmem:[%s2748] sm:$0xff]
    %2751 = vset.pattern.permute.xlu0 0
    %2752 = vperm.xlu0 %2751, %v2749
    %v2753 = vpop.permute.xlu0 %2752
    %v2755 = vmul.f32 %v2753, %v62
    %v2756 = vmul.f32 %v2753, %v63
    %v2757 = vmul.f32 %v2753, %v64
    %v2758 = vmul.f32 %v2753, %v65
    %v2759 = vmul.f32 %v2753, %v66
    %v2760 = vsub.f32 %v2755, %v67
    %v2761 = vsub.f32 %v2756, %v68
    %v2762 = vsub.f32 %v2757, %v69
    %v2763 = vsub.f32 %v2758, %v70
    %v2764 = vsub.f32 %v2759, %v71
    %2766 = vset.pattern.permute.xlu0 0
    %2767 = vperm.xlu0 %2766, %v2730
    %v2768 = vpop.permute.xlu0 %2767
    %2771 = vset.pattern.permute.xlu0 0
    %2772 = vperm.xlu0 %2771, %v2735
    %v2773 = vpop.permute.xlu0 %2772
    %2776 = vset.pattern.permute.xlu0 0
    %2777 = vperm.xlu0 %2776, %v2740
    %v2778 = vpop.permute.xlu0 %2777
    %2781 = vset.pattern.permute.xlu0 0
    %2782 = vperm.xlu0 %2781, %v2745
    %v2783 = vpop.permute.xlu0 %2782
    %v2785 = vmul.f32 %v2768, %v72
    %v2786 = vmul.f32 %v2773, %v73
    %v2787 = vmul.f32 %v2778, %v74
    %v2788 = vmul.f32 %v2783, %v75
    %v2789 = vmul.f32 %v2768, %v76
    %v2790 = vmul.f32 %v2773, %v77
    %v2791 = vmul.f32 %v2778, %v78
    %v2792 = vmul.f32 %v2783, %v79
    %v2793 = vmul.f32 %v2768, %v80
    %v2794 = vmul.f32 %v2773, %v81
    %v2795 = vmul.f32 %v2778, %v82
    %v2796 = vmul.f32 %v2783, %v83
    %v2797 = vmul.f32 %v2768, %v84
    %v2798 = vmul.f32 %v2773, %v85
    %v2799 = vmul.f32 %v2778, %v86
    %v2800 = vmul.f32 %v2783, %v87
    %v2801 = vmul.f32 %v2768, %v88
    %v2802 = vmul.f32 %v2773, %v89
    %v2803 = vmul.f32 %v2778, %v90
    %v2804 = vmul.f32 %v2783, %v91
    %v2805 = vsub.f32 %v2785, %v92
    %v2806 = vsub.f32 %v2786, %v93
    %v2807 = vsub.f32 %v2787, %v94
    %v2808 = vsub.f32 %v2788, %v95
    %v2809 = vsub.f32 %v2789, %v96
    %v2810 = vsub.f32 %v2790, %v97
    %v2811 = vsub.f32 %v2791, %v98
    %v2812 = vsub.f32 %v2792, %v99
    %v2813 = vsub.f32 %v2793, %v100
    %v2814 = vsub.f32 %v2794, %v101
    %v2815 = vsub.f32 %v2795, %v102
    %v2816 = vsub.f32 %v2796, %v103
    %v2817 = vsub.f32 %v2797, %v104
    %v2818 = vsub.f32 %v2798, %v105
    %v2819 = vsub.f32 %v2799, %v106
    %v2820 = vsub.f32 %v2800, %v107
    %v2821 = vsub.f32 %v2801, %v108
    %v2822 = vsub.f32 %v2802, %v109
    %v2823 = vsub.f32 %v2803, %v110
    %v2824 = vsub.f32 %v2804, %v111
    %v2825 = vsub.f32 0.0, %v2760
    %v2826 = vsub.f32 0.0, %v2761
    %v2827 = vsub.f32 0.0, %v2762
    %v2828 = vsub.f32 0.0, %v2763
    %v2829 = vsub.f32 0.0, %v2764
    %v2830 = vmul.f32 %v2825, 1.442695
    %v2831 = vpow.pop %v2830
    %v2832 = vmul.f32 %v2826, 1.442695
    %v2833 = vpow.pop %v2832
    %v2834 = vmul.f32 %v2827, 1.442695
    %v2835 = vpow.pop %v2834
    %v2836 = vmul.f32 %v2828, 1.442695
    %v2837 = vpow.pop %v2836
    %v2838 = vmul.f32 %v2829, 1.442695
    %v2839 = vpow.pop %v2838
    %v2840 = vadd.f32 %v2831, 1.0
    %v2841 = vadd.f32 %v2833, 1.0
    %v2842 = vadd.f32 %v2835, 1.0
    %v2843 = vadd.f32 %v2837, 1.0
    %v2844 = vadd.f32 %v2839, 1.0
    %v2850 = vrot.slane %v2840, 4
    %v2851 = vrot.slane %v2841, 4
    %v2852 = vrot.slane %v2842, 4
    %v2853 = vrot.slane %v2843, 4
    %v2854 = vrot.slane %v2844, 4
    %v2860 = vmul.f32 %v2840, %v2850
    %v2861 = vmul.f32 %v2841, %v2851
    %v2862 = vmul.f32 %v2842, %v2852
    %v2863 = vmul.f32 %v2843, %v2853
    %v2864 = vmul.f32 %v2844, %v2854
    %v2870 = vrot.slane %v2860, 2
    %v2871 = vrot.slane %v2861, 2
    %v2872 = vrot.slane %v2862, 2
    %v2873 = vrot.slane %v2863, 2
    %v2874 = vrot.slane %v2864, 2
    %v2880 = vmul.f32 %v2860, %v2870
    %v2881 = vmul.f32 %v2861, %v2871
    %v2882 = vmul.f32 %v2862, %v2872
    %v2883 = vmul.f32 %v2863, %v2873
    %v2884 = vmul.f32 %v2864, %v2874
    %v2890 = vrot.slane %v2880, 1
    %v2891 = vrot.slane %v2881, 1
    %v2892 = vrot.slane %v2882, 1
    %v2893 = vrot.slane %v2883, 1
    %v2894 = vrot.slane %v2884, 1
    %v2900 = vmul.f32 %v2880, %v2890
    %v2901 = vmul.f32 %v2881, %v2891
    %v2902 = vmul.f32 %v2882, %v2892
    %v2903 = vmul.f32 %v2883, %v2893
    %v2904 = vmul.f32 %v2884, %v2894
    %v2905 = vsub.f32 0.0, %v2805
    %v2906 = vsub.f32 0.0, %v2806
    %v2907 = vsub.f32 0.0, %v2807
    %v2908 = vsub.f32 0.0, %v2808
    %v2909 = vsub.f32 0.0, %v2809
    %v2910 = vsub.f32 0.0, %v2810
    %v2911 = vsub.f32 0.0, %v2811
    %v2912 = vsub.f32 0.0, %v2812
    %v2913 = vsub.f32 0.0, %v2813
    %v2914 = vsub.f32 0.0, %v2814
    %v2915 = vsub.f32 0.0, %v2815
    %v2916 = vsub.f32 0.0, %v2816
    %v2917 = vsub.f32 0.0, %v2817
    %v2918 = vsub.f32 0.0, %v2818
    %v2919 = vsub.f32 0.0, %v2819
    %v2920 = vsub.f32 0.0, %v2820
    %v2921 = vsub.f32 0.0, %v2821
    %v2922 = vsub.f32 0.0, %v2822
    %v2923 = vsub.f32 0.0, %v2823
    %v2924 = vsub.f32 0.0, %v2824
    %v2925 = vmul.f32 %v2905, 1.442695
    %v2926 = vpow.pop %v2925
    %v2927 = vmul.f32 %v2906, 1.442695
    %v2928 = vpow.pop %v2927
    %v2929 = vmul.f32 %v2907, 1.442695
    %v2930 = vpow.pop %v2929
    %v2931 = vmul.f32 %v2908, 1.442695
    %v2932 = vpow.pop %v2931
    %v2933 = vmul.f32 %v2909, 1.442695
    %v2934 = vpow.pop %v2933
    %v2935 = vmul.f32 %v2910, 1.442695
    %v2936 = vpow.pop %v2935
    %v2937 = vmul.f32 %v2911, 1.442695
    %v2938 = vpow.pop %v2937
    %v2939 = vmul.f32 %v2912, 1.442695
    %v2940 = vpow.pop %v2939
    %v2941 = vmul.f32 %v2913, 1.442695
    %v2942 = vpow.pop %v2941
    %v2943 = vmul.f32 %v2914, 1.442695
    %v2944 = vpow.pop %v2943
    %v2945 = vmul.f32 %v2915, 1.442695
    %v2946 = vpow.pop %v2945
    %v2947 = vmul.f32 %v2916, 1.442695
    %v2948 = vpow.pop %v2947
    %v2949 = vmul.f32 %v2917, 1.442695
    %v2950 = vpow.pop %v2949
    %v2951 = vmul.f32 %v2918, 1.442695
    %v2952 = vpow.pop %v2951
    %v2953 = vmul.f32 %v2919, 1.442695
    %v2954 = vpow.pop %v2953
    %v2955 = vmul.f32 %v2920, 1.442695
    %v2956 = vpow.pop %v2955
    %v2957 = vmul.f32 %v2921, 1.442695
    %v2958 = vpow.pop %v2957
    %v2959 = vmul.f32 %v2922, 1.442695
    %v2960 = vpow.pop %v2959
    %v2961 = vmul.f32 %v2923, 1.442695
    %v2962 = vpow.pop %v2961
    %v2963 = vmul.f32 %v2924, 1.442695
    %v2964 = vpow.pop %v2963
    %v2965 = vadd.f32 %v2926, 1.0
    %v2966 = vadd.f32 %v2928, 1.0
    %v2967 = vadd.f32 %v2930, 1.0
    %v2968 = vadd.f32 %v2932, 1.0
    %v2969 = vadd.f32 %v2934, 1.0
    %v2970 = vadd.f32 %v2936, 1.0
    %v2971 = vadd.f32 %v2938, 1.0
    %v2972 = vadd.f32 %v2940, 1.0
    %v2973 = vadd.f32 %v2942, 1.0
    %v2974 = vadd.f32 %v2944, 1.0
    %v2975 = vadd.f32 %v2946, 1.0
    %v2976 = vadd.f32 %v2948, 1.0
    %v2977 = vadd.f32 %v2950, 1.0
    %v2978 = vadd.f32 %v2952, 1.0
    %v2979 = vadd.f32 %v2954, 1.0
    %v2980 = vadd.f32 %v2956, 1.0
    %v2981 = vadd.f32 %v2958, 1.0
    %v2982 = vadd.f32 %v2960, 1.0
    %v2983 = vadd.f32 %v2962, 1.0
    %v2984 = vadd.f32 %v2964, 1.0
    %v2985 = vmul.f32 %v2965, %v2967
    %v2986 = vmul.f32 %v2966, %v2968
    %v2987 = vmul.f32 %v2969, %v2971
    %v2988 = vmul.f32 %v2970, %v2972
    %v2989 = vmul.f32 %v2973, %v2975
    %v2990 = vmul.f32 %v2974, %v2976
    %v2991 = vmul.f32 %v2977, %v2979
    %v2992 = vmul.f32 %v2978, %v2980
    %v2993 = vmul.f32 %v2981, %v2983
    %v2994 = vmul.f32 %v2982, %v2984
    %v2995 = vmul.f32 %v2985, %v2986
    %v2996 = vmul.f32 %v2987, %v2988
    %v2997 = vmul.f32 %v2989, %v2990
    %v2998 = vmul.f32 %v2991, %v2992
    %v2999 = vmul.f32 %v2993, %v2994
    %v3005 = vrot.slane %v2995, 4
    %v3006 = vrot.slane %v2996, 4
    %v3007 = vrot.slane %v2997, 4
    %v3008 = vrot.slane %v2998, 4
    %v3009 = vrot.slane %v2999, 4
    %v3015 = vmul.f32 %v2995, %v3005
    %v3016 = vmul.f32 %v2996, %v3006
    %v3017 = vmul.f32 %v2997, %v3007
    %v3018 = vmul.f32 %v2998, %v3008
    %v3019 = vmul.f32 %v2999, %v3009
    %v3025 = vrot.slane %v3015, 2
    %v3026 = vrot.slane %v3016, 2
    %v3027 = vrot.slane %v3017, 2
    %v3028 = vrot.slane %v3018, 2
    %v3029 = vrot.slane %v3019, 2
    %v3035 = vmul.f32 %v3015, %v3025
    %v3036 = vmul.f32 %v3016, %v3026
    %v3037 = vmul.f32 %v3017, %v3027
    %v3038 = vmul.f32 %v3018, %v3028
    %v3039 = vmul.f32 %v3019, %v3029
    %v3045 = vrot.slane %v3035, 1
    %v3046 = vrot.slane %v3036, 1
    %v3047 = vrot.slane %v3037, 1
    %v3048 = vrot.slane %v3038, 1
    %v3049 = vrot.slane %v3039, 1
    %v3055 = vmul.f32 %v3035, %v3045
    %v3056 = vmul.f32 %v3036, %v3046
    %v3057 = vmul.f32 %v3037, %v3047
    %v3058 = vmul.f32 %v3038, %v3048
    %v3059 = vmul.f32 %v3039, %v3049
    %v3060 = vmul.f32 %v2900, %v3055
    %v3061 = vmul.f32 %v2901, %v3056
    %v3062 = vmul.f32 %v2902, %v3057
    %v3063 = vmul.f32 %v2903, %v3058
    %v3064 = vmul.f32 %v2904, %v3059
    %v3065 = vrcp.pop %v3060
    %v3066 = vmul.f32 1.0, %v3065
    %v3067 = vrcp.pop %v3061
    %v3068 = vmul.f32 1.0, %v3067
    %v3069 = vrcp.pop %v3062
    %v3070 = vmul.f32 1.0, %v3069
    %v3071 = vrcp.pop %v3063
    %v3072 = vmul.f32 1.0, %v3071
    %v3073 = vrcp.pop %v3064
    %v3074 = vmul.f32 1.0, %v3073
    %v3075 = vadd.f32 %v3066, %v3068
    %v3076 = vadd.f32 %v3075, %v3070
    %v3077 = vadd.f32 %v3076, %v3072
    %v3078 = vadd.f32 %v3077, %v3074
    %v3079 = vsub.f32 %v3078, %v566
    %v3080 = vmul.f32 %v112, %v3079
    %v3081 = vxor.u32 %v3080, 2147483648
    %v3082 = vmul.f32 %v3081, 1.442695
    %v3083 = vpow.pop %v3082
    %v3084 = vadd.f32 %v3083, 1.0
    %v3085 = vrcp.pop %v3084
    %v3086 = vmul.f32 1.0, %v3085
    %v3087 = vtanh.pop %v3080
    %v3088 = vmul.f32 %v3086, %v2659
    %3090 = vrot.lane.b32.xlu0 %v3087, 96
    %v3091 = vpop.permute.xlu0 %3090
    %v3093 = vmul.f32 %v3086, %v3091
    %3095 = vrot.lane.b32.xlu0 %v3093, 96
    %v3096 = vpop.permute.xlu0 %3095
    %v3098 = vadd.f32 %v3088, %v3096
    %v3099 = vtanh.pop %v3098
    %3101 = vrot.lane.b32.xlu0 %v3099, 96
    %v3102 = vpop.permute.xlu0 %3101
    %v3104 = vmul.f32 %v3086, %v3102
    %v3105 = vlaneseq
    %v3106 = vshrl.u32 %v3105, 7
    %v3107 = vsub.s32 0, %v3106
    %v3108 = vrot.slane %v3104, %v3107
    %v3109 = vmul.f32 %v596, %v3108
    %v3110 = vadd.f32 %v3109, 0.0
    %v3111 = vlaneseq
    %v3112 = vshrl.u32 %v3111, 7
    %v3113 = vsub.s32 0, %v3112
    %v3114 = vrot.slane %v3098, %v3113
    %v3115 = vmul.f32 %v596, %v3114
    %v3116 = vadd.f32 %v3115, 0.0
    %s3117 = scalar_lea.vmem %s0, 56
    %v3118 = vld [vmem:[%s3117] sm:$0xff]
    %3120 = vset.pattern.permute.xlu0 0
    %3121 = vperm.xlu0 %3120, %v3118
    %v3122 = vpop.permute.xlu0 %3121
    %v3124 = vmul.f32 %v3122, %v62
    %v3125 = vmul.f32 %v3122, %v63
    %v3126 = vmul.f32 %v3122, %v64
    %v3127 = vmul.f32 %v3122, %v65
    %v3128 = vmul.f32 %v3122, %v66
    %v3129 = vsub.f32 %v3124, %v67
    %v3130 = vsub.f32 %v3125, %v68
    %v3131 = vsub.f32 %v3126, %v69
    %v3132 = vsub.f32 %v3127, %v70
    %v3133 = vsub.f32 %v3128, %v71
    %3134 = vset.pattern.permute.xlu0 1
    %3135 = vperm.xlu0 %3134, %v2730
    %v3136 = vpop.permute.xlu0 %3135
    %3138 = vset.pattern.permute.xlu0 1
    %3139 = vperm.xlu0 %3138, %v2735
    %v3140 = vpop.permute.xlu0 %3139
    %3142 = vset.pattern.permute.xlu0 1
    %3143 = vperm.xlu0 %3142, %v2740
    %v3144 = vpop.permute.xlu0 %3143
    %3146 = vset.pattern.permute.xlu0 1
    %3147 = vperm.xlu0 %3146, %v2745
    %v3148 = vpop.permute.xlu0 %3147
    %v3150 = vmul.f32 %v3136, %v72
    %v3151 = vmul.f32 %v3140, %v73
    %v3152 = vmul.f32 %v3144, %v74
    %v3153 = vmul.f32 %v3148, %v75
    %v3154 = vmul.f32 %v3136, %v76
    %v3155 = vmul.f32 %v3140, %v77
    %v3156 = vmul.f32 %v3144, %v78
    %v3157 = vmul.f32 %v3148, %v79
    %v3158 = vmul.f32 %v3136, %v80
    %v3159 = vmul.f32 %v3140, %v81
    %v3160 = vmul.f32 %v3144, %v82
    %v3161 = vmul.f32 %v3148, %v83
    %v3162 = vmul.f32 %v3136, %v84
    %v3163 = vmul.f32 %v3140, %v85
    %v3164 = vmul.f32 %v3144, %v86
    %v3165 = vmul.f32 %v3148, %v87
    %v3166 = vmul.f32 %v3136, %v88
    %v3167 = vmul.f32 %v3140, %v89
    %v3168 = vmul.f32 %v3144, %v90
    %v3169 = vmul.f32 %v3148, %v91
    %v3170 = vsub.f32 %v3150, %v92
    %v3171 = vsub.f32 %v3151, %v93
    %v3172 = vsub.f32 %v3152, %v94
    %v3173 = vsub.f32 %v3153, %v95
    %v3174 = vsub.f32 %v3154, %v96
    %v3175 = vsub.f32 %v3155, %v97
    %v3176 = vsub.f32 %v3156, %v98
    %v3177 = vsub.f32 %v3157, %v99
    %v3178 = vsub.f32 %v3158, %v100
    %v3179 = vsub.f32 %v3159, %v101
    %v3180 = vsub.f32 %v3160, %v102
    %v3181 = vsub.f32 %v3161, %v103
    %v3182 = vsub.f32 %v3162, %v104
    %v3183 = vsub.f32 %v3163, %v105
    %v3184 = vsub.f32 %v3164, %v106
    %v3185 = vsub.f32 %v3165, %v107
    %v3186 = vsub.f32 %v3166, %v108
    %v3187 = vsub.f32 %v3167, %v109
    %v3188 = vsub.f32 %v3168, %v110
    %v3189 = vsub.f32 %v3169, %v111
    %v3190 = vsub.f32 0.0, %v3129
    %v3191 = vsub.f32 0.0, %v3130
    %v3192 = vsub.f32 0.0, %v3131
    %v3193 = vsub.f32 0.0, %v3132
    %v3194 = vsub.f32 0.0, %v3133
    %v3195 = vmul.f32 %v3190, 1.442695
    %v3196 = vpow.pop %v3195
    %v3197 = vmul.f32 %v3191, 1.442695
    %v3198 = vpow.pop %v3197
    %v3199 = vmul.f32 %v3192, 1.442695
    %v3200 = vpow.pop %v3199
    %v3201 = vmul.f32 %v3193, 1.442695
    %v3202 = vpow.pop %v3201
    %v3203 = vmul.f32 %v3194, 1.442695
    %v3204 = vpow.pop %v3203
    %v3205 = vadd.f32 %v3196, 1.0
    %v3206 = vadd.f32 %v3198, 1.0
    %v3207 = vadd.f32 %v3200, 1.0
    %v3208 = vadd.f32 %v3202, 1.0
    %v3209 = vadd.f32 %v3204, 1.0
    %v3215 = vrot.slane %v3205, 4
    %v3216 = vrot.slane %v3206, 4
    %v3217 = vrot.slane %v3207, 4
    %v3218 = vrot.slane %v3208, 4
    %v3219 = vrot.slane %v3209, 4
    %v3225 = vmul.f32 %v3205, %v3215
    %v3226 = vmul.f32 %v3206, %v3216
    %v3227 = vmul.f32 %v3207, %v3217
    %v3228 = vmul.f32 %v3208, %v3218
    %v3229 = vmul.f32 %v3209, %v3219
    %v3235 = vrot.slane %v3225, 2
    %v3236 = vrot.slane %v3226, 2
    %v3237 = vrot.slane %v3227, 2
    %v3238 = vrot.slane %v3228, 2
    %v3239 = vrot.slane %v3229, 2
    %v3245 = vmul.f32 %v3225, %v3235
    %v3246 = vmul.f32 %v3226, %v3236
    %v3247 = vmul.f32 %v3227, %v3237
    %v3248 = vmul.f32 %v3228, %v3238
    %v3249 = vmul.f32 %v3229, %v3239
    %v3255 = vrot.slane %v3245, 1
    %v3256 = vrot.slane %v3246, 1
    %v3257 = vrot.slane %v3247, 1
    %v3258 = vrot.slane %v3248, 1
    %v3259 = vrot.slane %v3249, 1
    %v3265 = vmul.f32 %v3245, %v3255
    %v3266 = vmul.f32 %v3246, %v3256
    %v3267 = vmul.f32 %v3247, %v3257
    %v3268 = vmul.f32 %v3248, %v3258
    %v3269 = vmul.f32 %v3249, %v3259
    %v3270 = vsub.f32 0.0, %v3170
    %v3271 = vsub.f32 0.0, %v3171
    %v3272 = vsub.f32 0.0, %v3172
    %v3273 = vsub.f32 0.0, %v3173
    %v3274 = vsub.f32 0.0, %v3174
    %v3275 = vsub.f32 0.0, %v3175
    %v3276 = vsub.f32 0.0, %v3176
    %v3277 = vsub.f32 0.0, %v3177
    %v3278 = vsub.f32 0.0, %v3178
    %v3279 = vsub.f32 0.0, %v3179
    %v3280 = vsub.f32 0.0, %v3180
    %v3281 = vsub.f32 0.0, %v3181
    %v3282 = vsub.f32 0.0, %v3182
    %v3283 = vsub.f32 0.0, %v3183
    %v3284 = vsub.f32 0.0, %v3184
    %v3285 = vsub.f32 0.0, %v3185
    %v3286 = vsub.f32 0.0, %v3186
    %v3287 = vsub.f32 0.0, %v3187
    %v3288 = vsub.f32 0.0, %v3188
    %v3289 = vsub.f32 0.0, %v3189
    %v3290 = vmul.f32 %v3270, 1.442695
    %v3291 = vpow.pop %v3290
    %v3292 = vmul.f32 %v3271, 1.442695
    %v3293 = vpow.pop %v3292
    %v3294 = vmul.f32 %v3272, 1.442695
    %v3295 = vpow.pop %v3294
    %v3296 = vmul.f32 %v3273, 1.442695
    %v3297 = vpow.pop %v3296
    %v3298 = vmul.f32 %v3274, 1.442695
    %v3299 = vpow.pop %v3298
    %v3300 = vmul.f32 %v3275, 1.442695
    %v3301 = vpow.pop %v3300
    %v3302 = vmul.f32 %v3276, 1.442695
    %v3303 = vpow.pop %v3302
    %v3304 = vmul.f32 %v3277, 1.442695
    %v3305 = vpow.pop %v3304
    %v3306 = vmul.f32 %v3278, 1.442695
    %v3307 = vpow.pop %v3306
    %v3308 = vmul.f32 %v3279, 1.442695
    %v3309 = vpow.pop %v3308
    %v3310 = vmul.f32 %v3280, 1.442695
    %v3311 = vpow.pop %v3310
    %v3312 = vmul.f32 %v3281, 1.442695
    %v3313 = vpow.pop %v3312
    %v3314 = vmul.f32 %v3282, 1.442695
    %v3315 = vpow.pop %v3314
    %v3316 = vmul.f32 %v3283, 1.442695
    %v3317 = vpow.pop %v3316
    %v3318 = vmul.f32 %v3284, 1.442695
    %v3319 = vpow.pop %v3318
    %v3320 = vmul.f32 %v3285, 1.442695
    %v3321 = vpow.pop %v3320
    %v3322 = vmul.f32 %v3286, 1.442695
    %v3323 = vpow.pop %v3322
    %v3324 = vmul.f32 %v3287, 1.442695
    %v3325 = vpow.pop %v3324
    %v3326 = vmul.f32 %v3288, 1.442695
    %v3327 = vpow.pop %v3326
    %v3328 = vmul.f32 %v3289, 1.442695
    %v3329 = vpow.pop %v3328
    %v3330 = vadd.f32 %v3291, 1.0
    %v3331 = vadd.f32 %v3293, 1.0
    %v3332 = vadd.f32 %v3295, 1.0
    %v3333 = vadd.f32 %v3297, 1.0
    %v3334 = vadd.f32 %v3299, 1.0
    %v3335 = vadd.f32 %v3301, 1.0
    %v3336 = vadd.f32 %v3303, 1.0
    %v3337 = vadd.f32 %v3305, 1.0
    %v3338 = vadd.f32 %v3307, 1.0
    %v3339 = vadd.f32 %v3309, 1.0
    %v3340 = vadd.f32 %v3311, 1.0
    %v3341 = vadd.f32 %v3313, 1.0
    %v3342 = vadd.f32 %v3315, 1.0
    %v3343 = vadd.f32 %v3317, 1.0
    %v3344 = vadd.f32 %v3319, 1.0
    %v3345 = vadd.f32 %v3321, 1.0
    %v3346 = vadd.f32 %v3323, 1.0
    %v3347 = vadd.f32 %v3325, 1.0
    %v3348 = vadd.f32 %v3327, 1.0
    %v3349 = vadd.f32 %v3329, 1.0
    %v3350 = vmul.f32 %v3330, %v3332
    %v3351 = vmul.f32 %v3331, %v3333
    %v3352 = vmul.f32 %v3334, %v3336
    %v3353 = vmul.f32 %v3335, %v3337
    %v3354 = vmul.f32 %v3338, %v3340
    %v3355 = vmul.f32 %v3339, %v3341
    %v3356 = vmul.f32 %v3342, %v3344
    %v3357 = vmul.f32 %v3343, %v3345
    %v3358 = vmul.f32 %v3346, %v3348
    %v3359 = vmul.f32 %v3347, %v3349
    %v3360 = vmul.f32 %v3350, %v3351
    %v3361 = vmul.f32 %v3352, %v3353
    %v3362 = vmul.f32 %v3354, %v3355
    %v3363 = vmul.f32 %v3356, %v3357
    %v3364 = vmul.f32 %v3358, %v3359
    %v3370 = vrot.slane %v3360, 4
    %v3371 = vrot.slane %v3361, 4
    %v3372 = vrot.slane %v3362, 4
    %v3373 = vrot.slane %v3363, 4
    %v3374 = vrot.slane %v3364, 4
    %v3380 = vmul.f32 %v3360, %v3370
    %v3381 = vmul.f32 %v3361, %v3371
    %v3382 = vmul.f32 %v3362, %v3372
    %v3383 = vmul.f32 %v3363, %v3373
    %v3384 = vmul.f32 %v3364, %v3374
    %v3390 = vrot.slane %v3380, 2
    %v3391 = vrot.slane %v3381, 2
    %v3392 = vrot.slane %v3382, 2
    %v3393 = vrot.slane %v3383, 2
    %v3394 = vrot.slane %v3384, 2
    %v3400 = vmul.f32 %v3380, %v3390
    %v3401 = vmul.f32 %v3381, %v3391
    %v3402 = vmul.f32 %v3382, %v3392
    %v3403 = vmul.f32 %v3383, %v3393
    %v3404 = vmul.f32 %v3384, %v3394
    %v3410 = vrot.slane %v3400, 1
    %v3411 = vrot.slane %v3401, 1
    %v3412 = vrot.slane %v3402, 1
    %v3413 = vrot.slane %v3403, 1
    %v3414 = vrot.slane %v3404, 1
    %v3420 = vmul.f32 %v3400, %v3410
    %v3421 = vmul.f32 %v3401, %v3411
    %v3422 = vmul.f32 %v3402, %v3412
    %v3423 = vmul.f32 %v3403, %v3413
    %v3424 = vmul.f32 %v3404, %v3414
    %v3425 = vmul.f32 %v3265, %v3420
    %v3426 = vmul.f32 %v3266, %v3421
    %v3427 = vmul.f32 %v3267, %v3422
    %v3428 = vmul.f32 %v3268, %v3423
    %v3429 = vmul.f32 %v3269, %v3424
    %v3430 = vrcp.pop %v3425
    %v3431 = vmul.f32 1.0, %v3430
    %v3432 = vrcp.pop %v3426
    %v3433 = vmul.f32 1.0, %v3432
    %v3434 = vrcp.pop %v3427
    %v3435 = vmul.f32 1.0, %v3434
    %v3436 = vrcp.pop %v3428
    %v3437 = vmul.f32 1.0, %v3436
    %v3438 = vrcp.pop %v3429
    %v3439 = vmul.f32 1.0, %v3438
    %v3440 = vadd.f32 %v3431, %v3433
    %v3441 = vadd.f32 %v3440, %v3435
    %v3442 = vadd.f32 %v3441, %v3437
    %v3443 = vadd.f32 %v3442, %v3439
    %v3444 = vsub.f32 %v3443, %v566
    %v3445 = vmul.f32 %v112, %v3444
    %v3446 = vxor.u32 %v3445, 2147483648
    %v3447 = vmul.f32 %v3446, 1.442695
    %v3448 = vpow.pop %v3447
    %v3449 = vadd.f32 %v3448, 1.0
    %v3450 = vrcp.pop %v3449
    %v3451 = vmul.f32 1.0, %v3450
    %v3452 = vtanh.pop %v3445
    %v3454 = vrot.slane %v2659, 1
    %v3456 = vmul.f32 %v3451, %v3454
    %3458 = vrot.lane.b32.xlu0 %v3452, 96
    %v3459 = vpop.permute.xlu0 %3458
    %v3461 = vmul.f32 %v3451, %v3459
    %3463 = vrot.lane.b32.xlu0 %v3461, 96
    %v3464 = vpop.permute.xlu0 %3463
    %v3466 = vadd.f32 %v3456, %v3464
    %v3467 = vtanh.pop %v3466
    %3469 = vrot.lane.b32.xlu0 %v3467, 96
    %v3470 = vpop.permute.xlu0 %3469
    %v3472 = vmul.f32 %v3451, %v3470
    %v3473 = vlaneseq
    %v3474 = vshrl.u32 %v3473, 7
    %v3475 = vsub.s32 0, %v3474
    %v3476 = vrot.slane %v3472, %v3475
    %v3477 = vmul.f32 %v967, %v3476
    %v3478 = vadd.f32 %v3110, %v3477
    %v3479 = vlaneseq
    %v3480 = vshrl.u32 %v3479, 7
    %v3481 = vsub.s32 0, %v3480
    %v3482 = vrot.slane %v3466, %v3481
    %v3483 = vmul.f32 %v967, %v3482
    %v3484 = vadd.f32 %v3116, %v3483
    %3486 = vrot.lane.b32.xlu0 %v3478, 32
    %v3487 = vpop.permute.xlu0 %3486
    %3489 = vst.msk [vmem:[#allocation2] sm:$0x3] %vm984, %v3487
    %3490 = vst.msk [vmem:[#allocation9] sm:$0x3] %vm984, %v3484
    %s3491 = scalar_lea.vmem [#allocation8], 6
    %3492 = vst.msk [vmem:[%s3491] sm:$0x3] %vm984, %v3487
    %v3493 = vld [vmem:[#allocation2] sm:$0x3]
    %v3494 = vld [vmem:[#allocation9] sm:$0x3]
    %v3496 = vsel %vm134, %v3493, 0
    %3498 = vmatprep.subr.mxu0 0.0
    %3499 = vmatpush1.xpose.msra.mxu0 0.0
    %3500 = vmatprep.subr.mxu0 0.0
    %3501 = vmatpush1.xpose.msra.mxu0 0.0
    %3502 = vmatprep.subr.mxu0 0.0
    %3503 = vmatpush1.xpose.msra.mxu0 0.0
    %3504 = vmatprep.subr.mxu0 0.0
    %3505 = vmatpush1.xpose.msra.mxu0 0.0
    %3506 = vmatprep.subr.mxu0 0.0
    %3507 = vmatpush1.xpose.msra.mxu0 0.0
    %3508 = vmatprep.subr.mxu0 0.0
    %3509 = vmatpush1.xpose.msra.mxu0 0.0
    %3510 = vmatprep.subr.mxu0 0.0
    %3511 = vmatpush1.xpose.msra.mxu0 0.0
    %3512 = vmatprep.subr.mxu0 0.0
    %3513 = vmatpush1.xpose.msra.mxu0 0.0
    %3514 = vmatprep.subr.mxu0 0.0
    %3515 = vmatpush1.xpose.msra.mxu0 0.0
    %3516 = vmatprep.subr.mxu0 0.0
    %3517 = vmatpush1.xpose.msra.mxu0 0.0
    %3518 = vmatprep.subr.mxu0 0.0
    %3519 = vmatpush1.xpose.msra.mxu0 0.0
    %3520 = vmatprep.subr.mxu0 0.0
    %3521 = vmatpush1.xpose.msra.mxu0 0.0
    %3522 = vmatprep.subr.mxu0 0.0
    %3523 = vmatpush1.xpose.msra.mxu0 0.0
    %3524 = vmatprep.subr.mxu0 0.0
    %3525 = vmatpush1.xpose.msra.mxu0 0.0
    %3526 = vmatprep.subr.mxu0 0.0
    %3527 = vmatpush1.xpose.msra.mxu0 0.0
    %3528 = vmatprep.subr.mxu0 0.0
    %3529 = vmatpush1.xpose.msra.mxu0 %v3496
    %3530 = vmatprep.subr.mxu0 0.0
    %3531 = vmatpush2.xpose.msra.mxu0 0.0
    %3532 = vmatprep.subr.mxu0 0.0
    %3533 = vmatpush2.xpose.msra.mxu0 0.0
    %3534 = vmatprep.subr.mxu0 0.0
    %3535 = vmatpush2.xpose.msra.mxu0 0.0
    %3536 = vmatprep.subr.mxu0 0.0
    %3537 = vmatpush2.xpose.msra.mxu0 0.0
    %3538 = vmatprep.subr.mxu0 0.0
    %3539 = vmatpush2.xpose.msra.mxu0 0.0
    %3540 = vmatprep.subr.mxu0 0.0
    %3541 = vmatpush2.xpose.msra.mxu0 0.0
    %3542 = vmatprep.subr.mxu0 0.0
    %3543 = vmatpush2.xpose.msra.mxu0 0.0
    %3544 = vmatprep.subr.mxu0 0.0
    %3545 = vmatpush2.xpose.msra.mxu0 0.0
    %3546 = vmatprep.subr.mxu0 0.0
    %3547 = vmatpush2.xpose.msra.mxu0 0.0
    %3548 = vmatprep.subr.mxu0 0.0
    %3549 = vmatpush2.xpose.msra.mxu0 0.0
    %3550 = vmatprep.subr.mxu0 0.0
    %3551 = vmatpush2.xpose.msra.mxu0 0.0
    %3552 = vmatprep.subr.mxu0 0.0
    %3553 = vmatpush2.xpose.msra.mxu0 0.0
    %3554 = vmatprep.subr.mxu0 0.0
    %3555 = vmatpush2.xpose.msra.mxu0 0.0
    %3556 = vmatprep.subr.mxu0 0.0
    %3557 = vmatpush2.xpose.msra.mxu0 0.0
    %3558 = vmatprep.subr.mxu0 0.0
    %3559 = vmatpush2.xpose.msra.mxu0 0.0
    %3560 = vmatprep.subr.mxu0 0.0
    %3561 = vmatpush2.xpose.msra.mxu0 0.0
    %3562 = vmatprep.mubr.f32.mxu0 0.0
    %3563 = vmatmul.mubr.f32.gmra.mxu0 %v136
    %v3564 = vpop.f32.mrf.mxu0
    %v3565 = vadd.f32 0.0, %v3564
    %v3566 = vpop.f32.mrf.mxu0
    %3567 = vmatprep.mubr.f32.mxu0 0.0
    %3568 = vmatmul.mubr.f32.gmra.mxu0 %v139
    %v3569 = vpop.f32.mrf.mxu0
    %v3570 = vadd.f32 0.0, %v3569
    %v3571 = vpop.f32.mrf.mxu0
    %3572 = vmatprep.mubr.f32.mxu0 0.0
    %3573 = vmatmul.mubr.f32.gmra.mxu0 %v142
    %v3574 = vpop.f32.mrf.mxu0
    %v3575 = vadd.f32 0.0, %v3574
    %v3576 = vpop.f32.mrf.mxu0
    %3577 = vmatprep.mubr.f32.mxu0 0.0
    %3578 = vmatmul.mubr.f32.gmra.mxu0 %v145
    %v3579 = vpop.f32.mrf.mxu0
    %v3580 = vadd.f32 0.0, %v3579
    %v3581 = vpop.f32.mrf.mxu0
    %3582 = vdwg.mxu0
    %s3583 = scalar_lea.vmem %s0, 64
    %v3584 = vld [vmem:[%s3583] sm:$0xff]
    %3586 = vset.pattern.permute.xlu0 0
    %3587 = vperm.xlu0 %3586, %v3584
    %v3588 = vpop.permute.xlu0 %3587
    %v3590 = vmul.f32 %v3588, %v62
    %v3591 = vmul.f32 %v3588, %v63
    %v3592 = vmul.f32 %v3588, %v64
    %v3593 = vmul.f32 %v3588, %v65
    %v3594 = vmul.f32 %v3588, %v66
    %v3595 = vsub.f32 %v3590, %v67
    %v3596 = vsub.f32 %v3591, %v68
    %v3597 = vsub.f32 %v3592, %v69
    %v3598 = vsub.f32 %v3593, %v70
    %v3599 = vsub.f32 %v3594, %v71
    %3601 = vset.pattern.permute.xlu0 0
    %3602 = vperm.xlu0 %3601, %v3565
    %v3603 = vpop.permute.xlu0 %3602
    %3606 = vset.pattern.permute.xlu0 0
    %3607 = vperm.xlu0 %3606, %v3570
    %v3608 = vpop.permute.xlu0 %3607
    %3611 = vset.pattern.permute.xlu0 0
    %3612 = vperm.xlu0 %3611, %v3575
    %v3613 = vpop.permute.xlu0 %3612
    %3616 = vset.pattern.permute.xlu0 0
    %3617 = vperm.xlu0 %3616, %v3580
    %v3618 = vpop.permute.xlu0 %3617
    %v3620 = vmul.f32 %v3603, %v72
    %v3621 = vmul.f32 %v3608, %v73
    %v3622 = vmul.f32 %v3613, %v74
    %v3623 = vmul.f32 %v3618, %v75
    %v3624 = vmul.f32 %v3603, %v76
    %v3625 = vmul.f32 %v3608, %v77
    %v3626 = vmul.f32 %v3613, %v78
    %v3627 = vmul.f32 %v3618, %v79
    %v3628 = vmul.f32 %v3603, %v80
    %v3629 = vmul.f32 %v3608, %v81
    %v3630 = vmul.f32 %v3613, %v82
    %v3631 = vmul.f32 %v3618, %v83
    %v3632 = vmul.f32 %v3603, %v84
    %v3633 = vmul.f32 %v3608, %v85
    %v3634 = vmul.f32 %v3613, %v86
    %v3635 = vmul.f32 %v3618, %v87
    %v3636 = vmul.f32 %v3603, %v88
    %v3637 = vmul.f32 %v3608, %v89
    %v3638 = vmul.f32 %v3613, %v90
    %v3639 = vmul.f32 %v3618, %v91
    %v3640 = vsub.f32 %v3620, %v92
    %v3641 = vsub.f32 %v3621, %v93
    %v3642 = vsub.f32 %v3622, %v94
    %v3643 = vsub.f32 %v3623, %v95
    %v3644 = vsub.f32 %v3624, %v96
    %v3645 = vsub.f32 %v3625, %v97
    %v3646 = vsub.f32 %v3626, %v98
    %v3647 = vsub.f32 %v3627, %v99
    %v3648 = vsub.f32 %v3628, %v100
    %v3649 = vsub.f32 %v3629, %v101
    %v3650 = vsub.f32 %v3630, %v102
    %v3651 = vsub.f32 %v3631, %v103
    %v3652 = vsub.f32 %v3632, %v104
    %v3653 = vsub.f32 %v3633, %v105
    %v3654 = vsub.f32 %v3634, %v106
    %v3655 = vsub.f32 %v3635, %v107
    %v3656 = vsub.f32 %v3636, %v108
    %v3657 = vsub.f32 %v3637, %v109
    %v3658 = vsub.f32 %v3638, %v110
    %v3659 = vsub.f32 %v3639, %v111
    %v3660 = vsub.f32 0.0, %v3595
    %v3661 = vsub.f32 0.0, %v3596
    %v3662 = vsub.f32 0.0, %v3597
    %v3663 = vsub.f32 0.0, %v3598
    %v3664 = vsub.f32 0.0, %v3599
    %v3665 = vmul.f32 %v3660, 1.442695
    %v3666 = vpow.pop %v3665
    %v3667 = vmul.f32 %v3661, 1.442695
    %v3668 = vpow.pop %v3667
    %v3669 = vmul.f32 %v3662, 1.442695
    %v3670 = vpow.pop %v3669
    %v3671 = vmul.f32 %v3663, 1.442695
    %v3672 = vpow.pop %v3671
    %v3673 = vmul.f32 %v3664, 1.442695
    %v3674 = vpow.pop %v3673
    %v3675 = vadd.f32 %v3666, 1.0
    %v3676 = vadd.f32 %v3668, 1.0
    %v3677 = vadd.f32 %v3670, 1.0
    %v3678 = vadd.f32 %v3672, 1.0
    %v3679 = vadd.f32 %v3674, 1.0
    %v3685 = vrot.slane %v3675, 4
    %v3686 = vrot.slane %v3676, 4
    %v3687 = vrot.slane %v3677, 4
    %v3688 = vrot.slane %v3678, 4
    %v3689 = vrot.slane %v3679, 4
    %v3695 = vmul.f32 %v3675, %v3685
    %v3696 = vmul.f32 %v3676, %v3686
    %v3697 = vmul.f32 %v3677, %v3687
    %v3698 = vmul.f32 %v3678, %v3688
    %v3699 = vmul.f32 %v3679, %v3689
    %v3705 = vrot.slane %v3695, 2
    %v3706 = vrot.slane %v3696, 2
    %v3707 = vrot.slane %v3697, 2
    %v3708 = vrot.slane %v3698, 2
    %v3709 = vrot.slane %v3699, 2
    %v3715 = vmul.f32 %v3695, %v3705
    %v3716 = vmul.f32 %v3696, %v3706
    %v3717 = vmul.f32 %v3697, %v3707
    %v3718 = vmul.f32 %v3698, %v3708
    %v3719 = vmul.f32 %v3699, %v3709
    %v3725 = vrot.slane %v3715, 1
    %v3726 = vrot.slane %v3716, 1
    %v3727 = vrot.slane %v3717, 1
    %v3728 = vrot.slane %v3718, 1
    %v3729 = vrot.slane %v3719, 1
    %v3735 = vmul.f32 %v3715, %v3725
    %v3736 = vmul.f32 %v3716, %v3726
    %v3737 = vmul.f32 %v3717, %v3727
    %v3738 = vmul.f32 %v3718, %v3728
    %v3739 = vmul.f32 %v3719, %v3729
    %v3740 = vsub.f32 0.0, %v3640
    %v3741 = vsub.f32 0.0, %v3641
    %v3742 = vsub.f32 0.0, %v3642
    %v3743 = vsub.f32 0.0, %v3643
    %v3744 = vsub.f32 0.0, %v3644
    %v3745 = vsub.f32 0.0, %v3645
    %v3746 = vsub.f32 0.0, %v3646
    %v3747 = vsub.f32 0.0, %v3647
    %v3748 = vsub.f32 0.0, %v3648
    %v3749 = vsub.f32 0.0, %v3649
    %v3750 = vsub.f32 0.0, %v3650
    %v3751 = vsub.f32 0.0, %v3651
    %v3752 = vsub.f32 0.0, %v3652
    %v3753 = vsub.f32 0.0, %v3653
    %v3754 = vsub.f32 0.0, %v3654
    %v3755 = vsub.f32 0.0, %v3655
    %v3756 = vsub.f32 0.0, %v3656
    %v3757 = vsub.f32 0.0, %v3657
    %v3758 = vsub.f32 0.0, %v3658
    %v3759 = vsub.f32 0.0, %v3659
    %v3760 = vmul.f32 %v3740, 1.442695
    %v3761 = vpow.pop %v3760
    %v3762 = vmul.f32 %v3741, 1.442695
    %v3763 = vpow.pop %v3762
    %v3764 = vmul.f32 %v3742, 1.442695
    %v3765 = vpow.pop %v3764
    %v3766 = vmul.f32 %v3743, 1.442695
    %v3767 = vpow.pop %v3766
    %v3768 = vmul.f32 %v3744, 1.442695
    %v3769 = vpow.pop %v3768
    %v3770 = vmul.f32 %v3745, 1.442695
    %v3771 = vpow.pop %v3770
    %v3772 = vmul.f32 %v3746, 1.442695
    %v3773 = vpow.pop %v3772
    %v3774 = vmul.f32 %v3747, 1.442695
    %v3775 = vpow.pop %v3774
    %v3776 = vmul.f32 %v3748, 1.442695
    %v3777 = vpow.pop %v3776
    %v3778 = vmul.f32 %v3749, 1.442695
    %v3779 = vpow.pop %v3778
    %v3780 = vmul.f32 %v3750, 1.442695
    %v3781 = vpow.pop %v3780
    %v3782 = vmul.f32 %v3751, 1.442695
    %v3783 = vpow.pop %v3782
    %v3784 = vmul.f32 %v3752, 1.442695
    %v3785 = vpow.pop %v3784
    %v3786 = vmul.f32 %v3753, 1.442695
    %v3787 = vpow.pop %v3786
    %v3788 = vmul.f32 %v3754, 1.442695
    %v3789 = vpow.pop %v3788
    %v3790 = vmul.f32 %v3755, 1.442695
    %v3791 = vpow.pop %v3790
    %v3792 = vmul.f32 %v3756, 1.442695
    %v3793 = vpow.pop %v3792
    %v3794 = vmul.f32 %v3757, 1.442695
    %v3795 = vpow.pop %v3794
    %v3796 = vmul.f32 %v3758, 1.442695
    %v3797 = vpow.pop %v3796
    %v3798 = vmul.f32 %v3759, 1.442695
    %v3799 = vpow.pop %v3798
    %v3800 = vadd.f32 %v3761, 1.0
    %v3801 = vadd.f32 %v3763, 1.0
    %v3802 = vadd.f32 %v3765, 1.0
    %v3803 = vadd.f32 %v3767, 1.0
    %v3804 = vadd.f32 %v3769, 1.0
    %v3805 = vadd.f32 %v3771, 1.0
    %v3806 = vadd.f32 %v3773, 1.0
    %v3807 = vadd.f32 %v3775, 1.0
    %v3808 = vadd.f32 %v3777, 1.0
    %v3809 = vadd.f32 %v3779, 1.0
    %v3810 = vadd.f32 %v3781, 1.0
    %v3811 = vadd.f32 %v3783, 1.0
    %v3812 = vadd.f32 %v3785, 1.0
    %v3813 = vadd.f32 %v3787, 1.0
    %v3814 = vadd.f32 %v3789, 1.0
    %v3815 = vadd.f32 %v3791, 1.0
    %v3816 = vadd.f32 %v3793, 1.0
    %v3817 = vadd.f32 %v3795, 1.0
    %v3818 = vadd.f32 %v3797, 1.0
    %v3819 = vadd.f32 %v3799, 1.0
    %v3820 = vmul.f32 %v3800, %v3802
    %v3821 = vmul.f32 %v3801, %v3803
    %v3822 = vmul.f32 %v3804, %v3806
    %v3823 = vmul.f32 %v3805, %v3807
    %v3824 = vmul.f32 %v3808, %v3810
    %v3825 = vmul.f32 %v3809, %v3811
    %v3826 = vmul.f32 %v3812, %v3814
    %v3827 = vmul.f32 %v3813, %v3815
    %v3828 = vmul.f32 %v3816, %v3818
    %v3829 = vmul.f32 %v3817, %v3819
    %v3830 = vmul.f32 %v3820, %v3821
    %v3831 = vmul.f32 %v3822, %v3823
    %v3832 = vmul.f32 %v3824, %v3825
    %v3833 = vmul.f32 %v3826, %v3827
    %v3834 = vmul.f32 %v3828, %v3829
    %v3840 = vrot.slane %v3830, 4
    %v3841 = vrot.slane %v3831, 4
    %v3842 = vrot.slane %v3832, 4
    %v3843 = vrot.slane %v3833, 4
    %v3844 = vrot.slane %v3834, 4
    %v3850 = vmul.f32 %v3830, %v3840
    %v3851 = vmul.f32 %v3831, %v3841
    %v3852 = vmul.f32 %v3832, %v3842
    %v3853 = vmul.f32 %v3833, %v3843
    %v3854 = vmul.f32 %v3834, %v3844
    %v3860 = vrot.slane %v3850, 2
    %v3861 = vrot.slane %v3851, 2
    %v3862 = vrot.slane %v3852, 2
    %v3863 = vrot.slane %v3853, 2
    %v3864 = vrot.slane %v3854, 2
    %v3870 = vmul.f32 %v3850, %v3860
    %v3871 = vmul.f32 %v3851, %v3861
    %v3872 = vmul.f32 %v3852, %v3862
    %v3873 = vmul.f32 %v3853, %v3863
    %v3874 = vmul.f32 %v3854, %v3864
    %v3880 = vrot.slane %v3870, 1
    %v3881 = vrot.slane %v3871, 1
    %v3882 = vrot.slane %v3872, 1
    %v3883 = vrot.slane %v3873, 1
    %v3884 = vrot.slane %v3874, 1
    %v3890 = vmul.f32 %v3870, %v3880
    %v3891 = vmul.f32 %v3871, %v3881
    %v3892 = vmul.f32 %v3872, %v3882
    %v3893 = vmul.f32 %v3873, %v3883
    %v3894 = vmul.f32 %v3874, %v3884
    %v3895 = vmul.f32 %v3735, %v3890
    %v3896 = vmul.f32 %v3736, %v3891
    %v3897 = vmul.f32 %v3737, %v3892
    %v3898 = vmul.f32 %v3738, %v3893
    %v3899 = vmul.f32 %v3739, %v3894
    %v3900 = vrcp.pop %v3895
    %v3901 = vmul.f32 1.0, %v3900
    %v3902 = vrcp.pop %v3896
    %v3903 = vmul.f32 1.0, %v3902
    %v3904 = vrcp.pop %v3897
    %v3905 = vmul.f32 1.0, %v3904
    %v3906 = vrcp.pop %v3898
    %v3907 = vmul.f32 1.0, %v3906
    %v3908 = vrcp.pop %v3899
    %v3909 = vmul.f32 1.0, %v3908
    %v3910 = vadd.f32 %v3901, %v3903
    %v3911 = vadd.f32 %v3910, %v3905
    %v3912 = vadd.f32 %v3911, %v3907
    %v3913 = vadd.f32 %v3912, %v3909
    %v3914 = vsub.f32 %v3913, %v566
    %v3915 = vmul.f32 %v112, %v3914
    %v3916 = vxor.u32 %v3915, 2147483648
    %v3917 = vmul.f32 %v3916, 1.442695
    %v3918 = vpow.pop %v3917
    %v3919 = vadd.f32 %v3918, 1.0
    %v3920 = vrcp.pop %v3919
    %v3921 = vmul.f32 1.0, %v3920
    %v3922 = vtanh.pop %v3915
    %v3923 = vmul.f32 %v3921, %v3494
    %3925 = vrot.lane.b32.xlu0 %v3922, 96
    %v3926 = vpop.permute.xlu0 %3925
    %v3928 = vmul.f32 %v3921, %v3926
    %3930 = vrot.lane.b32.xlu0 %v3928, 96
    %v3931 = vpop.permute.xlu0 %3930
    %v3933 = vadd.f32 %v3923, %v3931
    %v3934 = vtanh.pop %v3933
    %3936 = vrot.lane.b32.xlu0 %v3934, 96
    %v3937 = vpop.permute.xlu0 %3936
    %v3939 = vmul.f32 %v3921, %v3937
    %v3940 = vlaneseq
    %v3941 = vshrl.u32 %v3940, 7
    %v3942 = vsub.s32 0, %v3941
    %v3943 = vrot.slane %v3939, %v3942
    %v3944 = vmul.f32 %v596, %v3943
    %v3945 = vadd.f32 %v3944, 0.0
    %v3946 = vlaneseq
    %v3947 = vshrl.u32 %v3946, 7
    %v3948 = vsub.s32 0, %v3947
    %v3949 = vrot.slane %v3933, %v3948
    %v3950 = vmul.f32 %v596, %v3949
    %v3951 = vadd.f32 %v3950, 0.0
    %s3952 = scalar_lea.vmem %s0, 72
    %v3953 = vld [vmem:[%s3952] sm:$0xff]
    %3955 = vset.pattern.permute.xlu0 0
    %3956 = vperm.xlu0 %3955, %v3953
    %v3957 = vpop.permute.xlu0 %3956
    %v3959 = vmul.f32 %v3957, %v62
    %v3960 = vmul.f32 %v3957, %v63
    %v3961 = vmul.f32 %v3957, %v64
    %v3962 = vmul.f32 %v3957, %v65
    %v3963 = vmul.f32 %v3957, %v66
    %v3964 = vsub.f32 %v3959, %v67
    %v3965 = vsub.f32 %v3960, %v68
    %v3966 = vsub.f32 %v3961, %v69
    %v3967 = vsub.f32 %v3962, %v70
    %v3968 = vsub.f32 %v3963, %v71
    %3969 = vset.pattern.permute.xlu0 1
    %3970 = vperm.xlu0 %3969, %v3565
    %v3971 = vpop.permute.xlu0 %3970
    %3973 = vset.pattern.permute.xlu0 1
    %3974 = vperm.xlu0 %3973, %v3570
    %v3975 = vpop.permute.xlu0 %3974
    %3977 = vset.pattern.permute.xlu0 1
    %3978 = vperm.xlu0 %3977, %v3575
    %v3979 = vpop.permute.xlu0 %3978
    %3981 = vset.pattern.permute.xlu0 1
    %3982 = vperm.xlu0 %3981, %v3580
    %v3983 = vpop.permute.xlu0 %3982
    %v3985 = vmul.f32 %v3971, %v72
    %v3986 = vmul.f32 %v3975, %v73
    %v3987 = vmul.f32 %v3979, %v74
    %v3988 = vmul.f32 %v3983, %v75
    %v3989 = vmul.f32 %v3971, %v76
    %v3990 = vmul.f32 %v3975, %v77
    %v3991 = vmul.f32 %v3979, %v78
    %v3992 = vmul.f32 %v3983, %v79
    %v3993 = vmul.f32 %v3971, %v80
    %v3994 = vmul.f32 %v3975, %v81
    %v3995 = vmul.f32 %v3979, %v82
    %v3996 = vmul.f32 %v3983, %v83
    %v3997 = vmul.f32 %v3971, %v84
    %v3998 = vmul.f32 %v3975, %v85
    %v3999 = vmul.f32 %v3979, %v86
    %v4000 = vmul.f32 %v3983, %v87
    %v4001 = vmul.f32 %v3971, %v88
    %v4002 = vmul.f32 %v3975, %v89
    %v4003 = vmul.f32 %v3979, %v90
    %v4004 = vmul.f32 %v3983, %v91
    %v4005 = vsub.f32 %v3985, %v92
    %v4006 = vsub.f32 %v3986, %v93
    %v4007 = vsub.f32 %v3987, %v94
    %v4008 = vsub.f32 %v3988, %v95
    %v4009 = vsub.f32 %v3989, %v96
    %v4010 = vsub.f32 %v3990, %v97
    %v4011 = vsub.f32 %v3991, %v98
    %v4012 = vsub.f32 %v3992, %v99
    %v4013 = vsub.f32 %v3993, %v100
    %v4014 = vsub.f32 %v3994, %v101
    %v4015 = vsub.f32 %v3995, %v102
    %v4016 = vsub.f32 %v3996, %v103
    %v4017 = vsub.f32 %v3997, %v104
    %v4018 = vsub.f32 %v3998, %v105
    %v4019 = vsub.f32 %v3999, %v106
    %v4020 = vsub.f32 %v4000, %v107
    %v4021 = vsub.f32 %v4001, %v108
    %v4022 = vsub.f32 %v4002, %v109
    %v4023 = vsub.f32 %v4003, %v110
    %v4024 = vsub.f32 %v4004, %v111
    %v4025 = vsub.f32 0.0, %v3964
    %v4026 = vsub.f32 0.0, %v3965
    %v4027 = vsub.f32 0.0, %v3966
    %v4028 = vsub.f32 0.0, %v3967
    %v4029 = vsub.f32 0.0, %v3968
    %v4030 = vmul.f32 %v4025, 1.442695
    %v4031 = vpow.pop %v4030
    %v4032 = vmul.f32 %v4026, 1.442695
    %v4033 = vpow.pop %v4032
    %v4034 = vmul.f32 %v4027, 1.442695
    %v4035 = vpow.pop %v4034
    %v4036 = vmul.f32 %v4028, 1.442695
    %v4037 = vpow.pop %v4036
    %v4038 = vmul.f32 %v4029, 1.442695
    %v4039 = vpow.pop %v4038
    %v4040 = vadd.f32 %v4031, 1.0
    %v4041 = vadd.f32 %v4033, 1.0
    %v4042 = vadd.f32 %v4035, 1.0
    %v4043 = vadd.f32 %v4037, 1.0
    %v4044 = vadd.f32 %v4039, 1.0
    %v4050 = vrot.slane %v4040, 4
    %v4051 = vrot.slane %v4041, 4
    %v4052 = vrot.slane %v4042, 4
    %v4053 = vrot.slane %v4043, 4
    %v4054 = vrot.slane %v4044, 4
    %v4060 = vmul.f32 %v4040, %v4050
    %v4061 = vmul.f32 %v4041, %v4051
    %v4062 = vmul.f32 %v4042, %v4052
    %v4063 = vmul.f32 %v4043, %v4053
    %v4064 = vmul.f32 %v4044, %v4054
    %v4070 = vrot.slane %v4060, 2
    %v4071 = vrot.slane %v4061, 2
    %v4072 = vrot.slane %v4062, 2
    %v4073 = vrot.slane %v4063, 2
    %v4074 = vrot.slane %v4064, 2
    %v4080 = vmul.f32 %v4060, %v4070
    %v4081 = vmul.f32 %v4061, %v4071
    %v4082 = vmul.f32 %v4062, %v4072
    %v4083 = vmul.f32 %v4063, %v4073
    %v4084 = vmul.f32 %v4064, %v4074
    %v4090 = vrot.slane %v4080, 1
    %v4091 = vrot.slane %v4081, 1
    %v4092 = vrot.slane %v4082, 1
    %v4093 = vrot.slane %v4083, 1
    %v4094 = vrot.slane %v4084, 1
    %v4100 = vmul.f32 %v4080, %v4090
    %v4101 = vmul.f32 %v4081, %v4091
    %v4102 = vmul.f32 %v4082, %v4092
    %v4103 = vmul.f32 %v4083, %v4093
    %v4104 = vmul.f32 %v4084, %v4094
    %v4105 = vsub.f32 0.0, %v4005
    %v4106 = vsub.f32 0.0, %v4006
    %v4107 = vsub.f32 0.0, %v4007
    %v4108 = vsub.f32 0.0, %v4008
    %v4109 = vsub.f32 0.0, %v4009
    %v4110 = vsub.f32 0.0, %v4010
    %v4111 = vsub.f32 0.0, %v4011
    %v4112 = vsub.f32 0.0, %v4012
    %v4113 = vsub.f32 0.0, %v4013
    %v4114 = vsub.f32 0.0, %v4014
    %v4115 = vsub.f32 0.0, %v4015
    %v4116 = vsub.f32 0.0, %v4016
    %v4117 = vsub.f32 0.0, %v4017
    %v4118 = vsub.f32 0.0, %v4018
    %v4119 = vsub.f32 0.0, %v4019
    %v4120 = vsub.f32 0.0, %v4020
    %v4121 = vsub.f32 0.0, %v4021
    %v4122 = vsub.f32 0.0, %v4022
    %v4123 = vsub.f32 0.0, %v4023
    %v4124 = vsub.f32 0.0, %v4024
    %v4125 = vmul.f32 %v4105, 1.442695
    %v4126 = vpow.pop %v4125
    %v4127 = vmul.f32 %v4106, 1.442695
    %v4128 = vpow.pop %v4127
    %v4129 = vmul.f32 %v4107, 1.442695
    %v4130 = vpow.pop %v4129
    %v4131 = vmul.f32 %v4108, 1.442695
    %v4132 = vpow.pop %v4131
    %v4133 = vmul.f32 %v4109, 1.442695
    %v4134 = vpow.pop %v4133
    %v4135 = vmul.f32 %v4110, 1.442695
    %v4136 = vpow.pop %v4135
    %v4137 = vmul.f32 %v4111, 1.442695
    %v4138 = vpow.pop %v4137
    %v4139 = vmul.f32 %v4112, 1.442695
    %v4140 = vpow.pop %v4139
    %v4141 = vmul.f32 %v4113, 1.442695
    %v4142 = vpow.pop %v4141
    %v4143 = vmul.f32 %v4114, 1.442695
    %v4144 = vpow.pop %v4143
    %v4145 = vmul.f32 %v4115, 1.442695
    %v4146 = vpow.pop %v4145
    %v4147 = vmul.f32 %v4116, 1.442695
    %v4148 = vpow.pop %v4147
    %v4149 = vmul.f32 %v4117, 1.442695
    %v4150 = vpow.pop %v4149
    %v4151 = vmul.f32 %v4118, 1.442695
    %v4152 = vpow.pop %v4151
    %v4153 = vmul.f32 %v4119, 1.442695
    %v4154 = vpow.pop %v4153
    %v4155 = vmul.f32 %v4120, 1.442695
    %v4156 = vpow.pop %v4155
    %v4157 = vmul.f32 %v4121, 1.442695
    %v4158 = vpow.pop %v4157
    %v4159 = vmul.f32 %v4122, 1.442695
    %v4160 = vpow.pop %v4159
    %v4161 = vmul.f32 %v4123, 1.442695
    %v4162 = vpow.pop %v4161
    %v4163 = vmul.f32 %v4124, 1.442695
    %v4164 = vpow.pop %v4163
    %v4165 = vadd.f32 %v4126, 1.0
    %v4166 = vadd.f32 %v4128, 1.0
    %v4167 = vadd.f32 %v4130, 1.0
    %v4168 = vadd.f32 %v4132, 1.0
    %v4169 = vadd.f32 %v4134, 1.0
    %v4170 = vadd.f32 %v4136, 1.0
    %v4171 = vadd.f32 %v4138, 1.0
    %v4172 = vadd.f32 %v4140, 1.0
    %v4173 = vadd.f32 %v4142, 1.0
    %v4174 = vadd.f32 %v4144, 1.0
    %v4175 = vadd.f32 %v4146, 1.0
    %v4176 = vadd.f32 %v4148, 1.0
    %v4177 = vadd.f32 %v4150, 1.0
    %v4178 = vadd.f32 %v4152, 1.0
    %v4179 = vadd.f32 %v4154, 1.0
    %v4180 = vadd.f32 %v4156, 1.0
    %v4181 = vadd.f32 %v4158, 1.0
    %v4182 = vadd.f32 %v4160, 1.0
    %v4183 = vadd.f32 %v4162, 1.0
    %v4184 = vadd.f32 %v4164, 1.0
    %v4185 = vmul.f32 %v4165, %v4167
    %v4186 = vmul.f32 %v4166, %v4168
    %v4187 = vmul.f32 %v4169, %v4171
    %v4188 = vmul.f32 %v4170, %v4172
    %v4189 = vmul.f32 %v4173, %v4175
    %v4190 = vmul.f32 %v4174, %v4176
    %v4191 = vmul.f32 %v4177, %v4179
    %v4192 = vmul.f32 %v4178, %v4180
    %v4193 = vmul.f32 %v4181, %v4183
    %v4194 = vmul.f32 %v4182, %v4184
    %v4195 = vmul.f32 %v4185, %v4186
    %v4196 = vmul.f32 %v4187, %v4188
    %v4197 = vmul.f32 %v4189, %v4190
    %v4198 = vmul.f32 %v4191, %v4192
    %v4199 = vmul.f32 %v4193, %v4194
    %v4205 = vrot.slane %v4195, 4
    %v4206 = vrot.slane %v4196, 4
    %v4207 = vrot.slane %v4197, 4
    %v4208 = vrot.slane %v4198, 4
    %v4209 = vrot.slane %v4199, 4
    %v4215 = vmul.f32 %v4195, %v4205
    %v4216 = vmul.f32 %v4196, %v4206
    %v4217 = vmul.f32 %v4197, %v4207
    %v4218 = vmul.f32 %v4198, %v4208
    %v4219 = vmul.f32 %v4199, %v4209
    %v4225 = vrot.slane %v4215, 2
    %v4226 = vrot.slane %v4216, 2
    %v4227 = vrot.slane %v4217, 2
    %v4228 = vrot.slane %v4218, 2
    %v4229 = vrot.slane %v4219, 2
    %v4235 = vmul.f32 %v4215, %v4225
    %v4236 = vmul.f32 %v4216, %v4226
    %v4237 = vmul.f32 %v4217, %v4227
    %v4238 = vmul.f32 %v4218, %v4228
    %v4239 = vmul.f32 %v4219, %v4229
    %v4245 = vrot.slane %v4235, 1
    %v4246 = vrot.slane %v4236, 1
    %v4247 = vrot.slane %v4237, 1
    %v4248 = vrot.slane %v4238, 1
    %v4249 = vrot.slane %v4239, 1
    %v4255 = vmul.f32 %v4235, %v4245
    %v4256 = vmul.f32 %v4236, %v4246
    %v4257 = vmul.f32 %v4237, %v4247
    %v4258 = vmul.f32 %v4238, %v4248
    %v4259 = vmul.f32 %v4239, %v4249
    %v4260 = vmul.f32 %v4100, %v4255
    %v4261 = vmul.f32 %v4101, %v4256
    %v4262 = vmul.f32 %v4102, %v4257
    %v4263 = vmul.f32 %v4103, %v4258
    %v4264 = vmul.f32 %v4104, %v4259
    %v4265 = vrcp.pop %v4260
    %v4266 = vmul.f32 1.0, %v4265
    %v4267 = vrcp.pop %v4261
    %v4268 = vmul.f32 1.0, %v4267
    %v4269 = vrcp.pop %v4262
    %v4270 = vmul.f32 1.0, %v4269
    %v4271 = vrcp.pop %v4263
    %v4272 = vmul.f32 1.0, %v4271
    %v4273 = vrcp.pop %v4264
    %v4274 = vmul.f32 1.0, %v4273
    %v4275 = vadd.f32 %v4266, %v4268
    %v4276 = vadd.f32 %v4275, %v4270
    %v4277 = vadd.f32 %v4276, %v4272
    %v4278 = vadd.f32 %v4277, %v4274
    %v4279 = vsub.f32 %v4278, %v566
    %v4280 = vmul.f32 %v112, %v4279
    %v4281 = vxor.u32 %v4280, 2147483648
    %v4282 = vmul.f32 %v4281, 1.442695
    %v4283 = vpow.pop %v4282
    %v4284 = vadd.f32 %v4283, 1.0
    %v4285 = vrcp.pop %v4284
    %v4286 = vmul.f32 1.0, %v4285
    %v4287 = vtanh.pop %v4280
    %v4289 = vrot.slane %v3494, 1
    %v4291 = vmul.f32 %v4286, %v4289
    %4293 = vrot.lane.b32.xlu0 %v4287, 96
    %v4294 = vpop.permute.xlu0 %4293
    %v4296 = vmul.f32 %v4286, %v4294
    %4298 = vrot.lane.b32.xlu0 %v4296, 96
    %v4299 = vpop.permute.xlu0 %4298
    %v4301 = vadd.f32 %v4291, %v4299
    %v4302 = vtanh.pop %v4301
    %4304 = vrot.lane.b32.xlu0 %v4302, 96
    %v4305 = vpop.permute.xlu0 %4304
    %v4307 = vmul.f32 %v4286, %v4305
    %v4308 = vlaneseq
    %v4309 = vshrl.u32 %v4308, 7
    %v4310 = vsub.s32 0, %v4309
    %v4311 = vrot.slane %v4307, %v4310
    %v4312 = vmul.f32 %v967, %v4311
    %v4313 = vadd.f32 %v3945, %v4312
    %v4314 = vlaneseq
    %v4315 = vshrl.u32 %v4314, 7
    %v4316 = vsub.s32 0, %v4315
    %v4317 = vrot.slane %v4301, %v4316
    %v4318 = vmul.f32 %v967, %v4317
    %v4319 = vadd.f32 %v3951, %v4318
    %4321 = vrot.lane.b32.xlu0 %v4313, 32
    %v4322 = vpop.permute.xlu0 %4321
    %4324 = vst.msk [vmem:[#allocation2] sm:$0x3] %vm984, %v4322
    %4325 = vst.msk [vmem:[#allocation9] sm:$0x3] %vm984, %v4319
    %s4326 = scalar_lea.vmem [#allocation8], 8
    %4327 = vst.msk [vmem:[%s4326] sm:$0x3] %vm984, %v4322
    %v4328 = vld [vmem:[#allocation2] sm:$0x3]
    %v4329 = vld [vmem:[#allocation9] sm:$0x3]
    %v4331 = vsel %vm134, %v4328, 0
    %4333 = vmatprep.subr.mxu0 0.0
    %4334 = vmatpush1.xpose.msra.mxu0 0.0
    %4335 = vmatprep.subr.mxu0 0.0
    %4336 = vmatpush1.xpose.msra.mxu0 0.0
    %4337 = vmatprep.subr.mxu0 0.0
    %4338 = vmatpush1.xpose.msra.mxu0 0.0
    %4339 = vmatprep.subr.mxu0 0.0
    %4340 = vmatpush1.xpose.msra.mxu0 0.0
    %4341 = vmatprep.subr.mxu0 0.0
    %4342 = vmatpush1.xpose.msra.mxu0 0.0
    %4343 = vmatprep.subr.mxu0 0.0
    %4344 = vmatpush1.xpose.msra.mxu0 0.0
    %4345 = vmatprep.subr.mxu0 0.0
    %4346 = vmatpush1.xpose.msra.mxu0 0.0
    %4347 = vmatprep.subr.mxu0 0.0
    %4348 = vmatpush1.xpose.msra.mxu0 0.0
    %4349 = vmatprep.subr.mxu0 0.0
    %4350 = vmatpush1.xpose.msra.mxu0 0.0
    %4351 = vmatprep.subr.mxu0 0.0
    %4352 = vmatpush1.xpose.msra.mxu0 0.0
    %4353 = vmatprep.subr.mxu0 0.0
    %4354 = vmatpush1.xpose.msra.mxu0 0.0
    %4355 = vmatprep.subr.mxu0 0.0
    %4356 = vmatpush1.xpose.msra.mxu0 0.0
    %4357 = vmatprep.subr.mxu0 0.0
    %4358 = vmatpush1.xpose.msra.mxu0 0.0
    %4359 = vmatprep.subr.mxu0 0.0
    %4360 = vmatpush1.xpose.msra.mxu0 0.0
    %4361 = vmatprep.subr.mxu0 0.0
    %4362 = vmatpush1.xpose.msra.mxu0 0.0
    %4363 = vmatprep.subr.mxu0 0.0
    %4364 = vmatpush1.xpose.msra.mxu0 %v4331
    %4365 = vmatprep.subr.mxu0 0.0
    %4366 = vmatpush2.xpose.msra.mxu0 0.0
    %4367 = vmatprep.subr.mxu0 0.0
    %4368 = vmatpush2.xpose.msra.mxu0 0.0
    %4369 = vmatprep.subr.mxu0 0.0
    %4370 = vmatpush2.xpose.msra.mxu0 0.0
    %4371 = vmatprep.subr.mxu0 0.0
    %4372 = vmatpush2.xpose.msra.mxu0 0.0
    %4373 = vmatprep.subr.mxu0 0.0
    %4374 = vmatpush2.xpose.msra.mxu0 0.0
    %4375 = vmatprep.subr.mxu0 0.0
    %4376 = vmatpush2.xpose.msra.mxu0 0.0
    %4377 = vmatprep.subr.mxu0 0.0
    %4378 = vmatpush2.xpose.msra.mxu0 0.0
    %4379 = vmatprep.subr.mxu0 0.0
    %4380 = vmatpush2.xpose.msra.mxu0 0.0
    %4381 = vmatprep.subr.mxu0 0.0
    %4382 = vmatpush2.xpose.msra.mxu0 0.0
    %4383 = vmatprep.subr.mxu0 0.0
    %4384 = vmatpush2.xpose.msra.mxu0 0.0
    %4385 = vmatprep.subr.mxu0 0.0
    %4386 = vmatpush2.xpose.msra.mxu0 0.0
    %4387 = vmatprep.subr.mxu0 0.0
    %4388 = vmatpush2.xpose.msra.mxu0 0.0
    %4389 = vmatprep.subr.mxu0 0.0
    %4390 = vmatpush2.xpose.msra.mxu0 0.0
    %4391 = vmatprep.subr.mxu0 0.0
    %4392 = vmatpush2.xpose.msra.mxu0 0.0
    %4393 = vmatprep.subr.mxu0 0.0
    %4394 = vmatpush2.xpose.msra.mxu0 0.0
    %4395 = vmatprep.subr.mxu0 0.0
    %4396 = vmatpush2.xpose.msra.mxu0 0.0
    %4397 = vmatprep.mubr.f32.mxu0 0.0
    %4398 = vmatmul.mubr.f32.gmra.mxu0 %v136
    %v4399 = vpop.f32.mrf.mxu0
    %v4400 = vadd.f32 0.0, %v4399
    %v4401 = vpop.f32.mrf.mxu0
    %4402 = vmatprep.mubr.f32.mxu0 0.0
    %4403 = vmatmul.mubr.f32.gmra.mxu0 %v139
    %v4404 = vpop.f32.mrf.mxu0
    %v4405 = vadd.f32 0.0, %v4404
    %v4406 = vpop.f32.mrf.mxu0
    %4407 = vmatprep.mubr.f32.mxu0 0.0
    %4408 = vmatmul.mubr.f32.gmra.mxu0 %v142
    %v4409 = vpop.f32.mrf.mxu0
    %v4410 = vadd.f32 0.0, %v4409
    %v4411 = vpop.f32.mrf.mxu0
    %4412 = vmatprep.mubr.f32.mxu0 0.0
    %4413 = vmatmul.mubr.f32.gmra.mxu0 %v145
    %v4414 = vpop.f32.mrf.mxu0
    %v4415 = vadd.f32 0.0, %v4414
    %v4416 = vpop.f32.mrf.mxu0
    %4417 = vdwg.mxu0
    %s4418 = scalar_lea.vmem %s0, 80
    %v4419 = vld [vmem:[%s4418] sm:$0xff]
    %4421 = vset.pattern.permute.xlu0 0
    %4422 = vperm.xlu0 %4421, %v4419
    %v4423 = vpop.permute.xlu0 %4422
    %v4425 = vmul.f32 %v4423, %v62
    %v4426 = vmul.f32 %v4423, %v63
    %v4427 = vmul.f32 %v4423, %v64
    %v4428 = vmul.f32 %v4423, %v65
    %v4429 = vmul.f32 %v4423, %v66
    %v4430 = vsub.f32 %v4425, %v67
    %v4431 = vsub.f32 %v4426, %v68
    %v4432 = vsub.f32 %v4427, %v69
    %v4433 = vsub.f32 %v4428, %v70
    %v4434 = vsub.f32 %v4429, %v71
    %4436 = vset.pattern.permute.xlu0 0
    %4437 = vperm.xlu0 %4436, %v4400
    %v4438 = vpop.permute.xlu0 %4437
    %4441 = vset.pattern.permute.xlu0 0
    %4442 = vperm.xlu0 %4441, %v4405
    %v4443 = vpop.permute.xlu0 %4442
    %4446 = vset.pattern.permute.xlu0 0
    %4447 = vperm.xlu0 %4446, %v4410
    %v4448 = vpop.permute.xlu0 %4447
    %4451 = vset.pattern.permute.xlu0 0
    %4452 = vperm.xlu0 %4451, %v4415
    %v4453 = vpop.permute.xlu0 %4452
    %v4455 = vmul.f32 %v4438, %v72
    %v4456 = vmul.f32 %v4443, %v73
    %v4457 = vmul.f32 %v4448, %v74
    %v4458 = vmul.f32 %v4453, %v75
    %v4459 = vmul.f32 %v4438, %v76
    %v4460 = vmul.f32 %v4443, %v77
    %v4461 = vmul.f32 %v4448, %v78
    %v4462 = vmul.f32 %v4453, %v79
    %v4463 = vmul.f32 %v4438, %v80
    %v4464 = vmul.f32 %v4443, %v81
    %v4465 = vmul.f32 %v4448, %v82
    %v4466 = vmul.f32 %v4453, %v83
    %v4467 = vmul.f32 %v4438, %v84
    %v4468 = vmul.f32 %v4443, %v85
    %v4469 = vmul.f32 %v4448, %v86
    %v4470 = vmul.f32 %v4453, %v87
    %v4471 = vmul.f32 %v4438, %v88
    %v4472 = vmul.f32 %v4443, %v89
    %v4473 = vmul.f32 %v4448, %v90
    %v4474 = vmul.f32 %v4453, %v91
    %v4475 = vsub.f32 %v4455, %v92
    %v4476 = vsub.f32 %v4456, %v93
    %v4477 = vsub.f32 %v4457, %v94
    %v4478 = vsub.f32 %v4458, %v95
    %v4479 = vsub.f32 %v4459, %v96
    %v4480 = vsub.f32 %v4460, %v97
    %v4481 = vsub.f32 %v4461, %v98
    %v4482 = vsub.f32 %v4462, %v99
    %v4483 = vsub.f32 %v4463, %v100
    %v4484 = vsub.f32 %v4464, %v101
    %v4485 = vsub.f32 %v4465, %v102
    %v4486 = vsub.f32 %v4466, %v103
    %v4487 = vsub.f32 %v4467, %v104
    %v4488 = vsub.f32 %v4468, %v105
    %v4489 = vsub.f32 %v4469, %v106
    %v4490 = vsub.f32 %v4470, %v107
    %v4491 = vsub.f32 %v4471, %v108
    %v4492 = vsub.f32 %v4472, %v109
    %v4493 = vsub.f32 %v4473, %v110
    %v4494 = vsub.f32 %v4474, %v111
    %v4495 = vsub.f32 0.0, %v4430
    %v4496 = vsub.f32 0.0, %v4431
    %v4497 = vsub.f32 0.0, %v4432
    %v4498 = vsub.f32 0.0, %v4433
    %v4499 = vsub.f32 0.0, %v4434
    %v4500 = vmul.f32 %v4495, 1.442695
    %v4501 = vpow.pop %v4500
    %v4502 = vmul.f32 %v4496, 1.442695
    %v4503 = vpow.pop %v4502
    %v4504 = vmul.f32 %v4497, 1.442695
    %v4505 = vpow.pop %v4504
    %v4506 = vmul.f32 %v4498, 1.442695
    %v4507 = vpow.pop %v4506
    %v4508 = vmul.f32 %v4499, 1.442695
    %v4509 = vpow.pop %v4508
    %v4510 = vadd.f32 %v4501, 1.0
    %v4511 = vadd.f32 %v4503, 1.0
    %v4512 = vadd.f32 %v4505, 1.0
    %v4513 = vadd.f32 %v4507, 1.0
    %v4514 = vadd.f32 %v4509, 1.0
    %v4520 = vrot.slane %v4510, 4
    %v4521 = vrot.slane %v4511, 4
    %v4522 = vrot.slane %v4512, 4
    %v4523 = vrot.slane %v4513, 4
    %v4524 = vrot.slane %v4514, 4
    %v4530 = vmul.f32 %v4510, %v4520
    %v4531 = vmul.f32 %v4511, %v4521
    %v4532 = vmul.f32 %v4512, %v4522
    %v4533 = vmul.f32 %v4513, %v4523
    %v4534 = vmul.f32 %v4514, %v4524
    %v4540 = vrot.slane %v4530, 2
    %v4541 = vrot.slane %v4531, 2
    %v4542 = vrot.slane %v4532, 2
    %v4543 = vrot.slane %v4533, 2
    %v4544 = vrot.slane %v4534, 2
    %v4550 = vmul.f32 %v4530, %v4540
    %v4551 = vmul.f32 %v4531, %v4541
    %v4552 = vmul.f32 %v4532, %v4542
    %v4553 = vmul.f32 %v4533, %v4543
    %v4554 = vmul.f32 %v4534, %v4544
    %v4560 = vrot.slane %v4550, 1
    %v4561 = vrot.slane %v4551, 1
    %v4562 = vrot.slane %v4552, 1
    %v4563 = vrot.slane %v4553, 1
    %v4564 = vrot.slane %v4554, 1
    %v4570 = vmul.f32 %v4550, %v4560
    %v4571 = vmul.f32 %v4551, %v4561
    %v4572 = vmul.f32 %v4552, %v4562
    %v4573 = vmul.f32 %v4553, %v4563
    %v4574 = vmul.f32 %v4554, %v4564
    %v4575 = vsub.f32 0.0, %v4475
    %v4576 = vsub.f32 0.0, %v4476
    %v4577 = vsub.f32 0.0, %v4477
    %v4578 = vsub.f32 0.0, %v4478
    %v4579 = vsub.f32 0.0, %v4479
    %v4580 = vsub.f32 0.0, %v4480
    %v4581 = vsub.f32 0.0, %v4481
    %v4582 = vsub.f32 0.0, %v4482
    %v4583 = vsub.f32 0.0, %v4483
    %v4584 = vsub.f32 0.0, %v4484
    %v4585 = vsub.f32 0.0, %v4485
    %v4586 = vsub.f32 0.0, %v4486
    %v4587 = vsub.f32 0.0, %v4487
    %v4588 = vsub.f32 0.0, %v4488
    %v4589 = vsub.f32 0.0, %v4489
    %v4590 = vsub.f32 0.0, %v4490
    %v4591 = vsub.f32 0.0, %v4491
    %v4592 = vsub.f32 0.0, %v4492
    %v4593 = vsub.f32 0.0, %v4493
    %v4594 = vsub.f32 0.0, %v4494
    %v4595 = vmul.f32 %v4575, 1.442695
    %v4596 = vpow.pop %v4595
    %v4597 = vmul.f32 %v4576, 1.442695
    %v4598 = vpow.pop %v4597
    %v4599 = vmul.f32 %v4577, 1.442695
    %v4600 = vpow.pop %v4599
    %v4601 = vmul.f32 %v4578, 1.442695
    %v4602 = vpow.pop %v4601
    %v4603 = vmul.f32 %v4579, 1.442695
    %v4604 = vpow.pop %v4603
    %v4605 = vmul.f32 %v4580, 1.442695
    %v4606 = vpow.pop %v4605
    %v4607 = vmul.f32 %v4581, 1.442695
    %v4608 = vpow.pop %v4607
    %v4609 = vmul.f32 %v4582, 1.442695
    %v4610 = vpow.pop %v4609
    %v4611 = vmul.f32 %v4583, 1.442695
    %v4612 = vpow.pop %v4611
    %v4613 = vmul.f32 %v4584, 1.442695
    %v4614 = vpow.pop %v4613
    %v4615 = vmul.f32 %v4585, 1.442695
    %v4616 = vpow.pop %v4615
    %v4617 = vmul.f32 %v4586, 1.442695
    %v4618 = vpow.pop %v4617
    %v4619 = vmul.f32 %v4587, 1.442695
    %v4620 = vpow.pop %v4619
    %v4621 = vmul.f32 %v4588, 1.442695
    %v4622 = vpow.pop %v4621
    %v4623 = vmul.f32 %v4589, 1.442695
    %v4624 = vpow.pop %v4623
    %v4625 = vmul.f32 %v4590, 1.442695
    %v4626 = vpow.pop %v4625
    %v4627 = vmul.f32 %v4591, 1.442695
    %v4628 = vpow.pop %v4627
    %v4629 = vmul.f32 %v4592, 1.442695
    %v4630 = vpow.pop %v4629
    %v4631 = vmul.f32 %v4593, 1.442695
    %v4632 = vpow.pop %v4631
    %v4633 = vmul.f32 %v4594, 1.442695
    %v4634 = vpow.pop %v4633
    %v4635 = vadd.f32 %v4596, 1.0
    %v4636 = vadd.f32 %v4598, 1.0
    %v4637 = vadd.f32 %v4600, 1.0
    %v4638 = vadd.f32 %v4602, 1.0
    %v4639 = vadd.f32 %v4604, 1.0
    %v4640 = vadd.f32 %v4606, 1.0
    %v4641 = vadd.f32 %v4608, 1.0
    %v4642 = vadd.f32 %v4610, 1.0
    %v4643 = vadd.f32 %v4612, 1.0
    %v4644 = vadd.f32 %v4614, 1.0
    %v4645 = vadd.f32 %v4616, 1.0
    %v4646 = vadd.f32 %v4618, 1.0
    %v4647 = vadd.f32 %v4620, 1.0
    %v4648 = vadd.f32 %v4622, 1.0
    %v4649 = vadd.f32 %v4624, 1.0
    %v4650 = vadd.f32 %v4626, 1.0
    %v4651 = vadd.f32 %v4628, 1.0
    %v4652 = vadd.f32 %v4630, 1.0
    %v4653 = vadd.f32 %v4632, 1.0
    %v4654 = vadd.f32 %v4634, 1.0
    %v4655 = vmul.f32 %v4635, %v4637
    %v4656 = vmul.f32 %v4636, %v4638
    %v4657 = vmul.f32 %v4639, %v4641
    %v4658 = vmul.f32 %v4640, %v4642
    %v4659 = vmul.f32 %v4643, %v4645
    %v4660 = vmul.f32 %v4644, %v4646
    %v4661 = vmul.f32 %v4647, %v4649
    %v4662 = vmul.f32 %v4648, %v4650
    %v4663 = vmul.f32 %v4651, %v4653
    %v4664 = vmul.f32 %v4652, %v4654
    %v4665 = vmul.f32 %v4655, %v4656
    %v4666 = vmul.f32 %v4657, %v4658
    %v4667 = vmul.f32 %v4659, %v4660
    %v4668 = vmul.f32 %v4661, %v4662
    %v4669 = vmul.f32 %v4663, %v4664
    %v4675 = vrot.slane %v4665, 4
    %v4676 = vrot.slane %v4666, 4
    %v4677 = vrot.slane %v4667, 4
    %v4678 = vrot.slane %v4668, 4
    %v4679 = vrot.slane %v4669, 4
    %v4685 = vmul.f32 %v4665, %v4675
    %v4686 = vmul.f32 %v4666, %v4676
    %v4687 = vmul.f32 %v4667, %v4677
    %v4688 = vmul.f32 %v4668, %v4678
    %v4689 = vmul.f32 %v4669, %v4679
    %v4695 = vrot.slane %v4685, 2
    %v4696 = vrot.slane %v4686, 2
    %v4697 = vrot.slane %v4687, 2
    %v4698 = vrot.slane %v4688, 2
    %v4699 = vrot.slane %v4689, 2
    %v4705 = vmul.f32 %v4685, %v4695
    %v4706 = vmul.f32 %v4686, %v4696
    %v4707 = vmul.f32 %v4687, %v4697
    %v4708 = vmul.f32 %v4688, %v4698
    %v4709 = vmul.f32 %v4689, %v4699
    %v4715 = vrot.slane %v4705, 1
    %v4716 = vrot.slane %v4706, 1
    %v4717 = vrot.slane %v4707, 1
    %v4718 = vrot.slane %v4708, 1
    %v4719 = vrot.slane %v4709, 1
    %v4725 = vmul.f32 %v4705, %v4715
    %v4726 = vmul.f32 %v4706, %v4716
    %v4727 = vmul.f32 %v4707, %v4717
    %v4728 = vmul.f32 %v4708, %v4718
    %v4729 = vmul.f32 %v4709, %v4719
    %v4730 = vmul.f32 %v4570, %v4725
    %v4731 = vmul.f32 %v4571, %v4726
    %v4732 = vmul.f32 %v4572, %v4727
    %v4733 = vmul.f32 %v4573, %v4728
    %v4734 = vmul.f32 %v4574, %v4729
    %v4735 = vrcp.pop %v4730
    %v4736 = vmul.f32 1.0, %v4735
    %v4737 = vrcp.pop %v4731
    %v4738 = vmul.f32 1.0, %v4737
    %v4739 = vrcp.pop %v4732
    %v4740 = vmul.f32 1.0, %v4739
    %v4741 = vrcp.pop %v4733
    %v4742 = vmul.f32 1.0, %v4741
    %v4743 = vrcp.pop %v4734
    %v4744 = vmul.f32 1.0, %v4743
    %v4745 = vadd.f32 %v4736, %v4738
    %v4746 = vadd.f32 %v4745, %v4740
    %v4747 = vadd.f32 %v4746, %v4742
    %v4748 = vadd.f32 %v4747, %v4744
    %v4749 = vsub.f32 %v4748, %v566
    %v4750 = vmul.f32 %v112, %v4749
    %v4751 = vxor.u32 %v4750, 2147483648
    %v4752 = vmul.f32 %v4751, 1.442695
    %v4753 = vpow.pop %v4752
    %v4754 = vadd.f32 %v4753, 1.0
    %v4755 = vrcp.pop %v4754
    %v4756 = vmul.f32 1.0, %v4755
    %v4757 = vtanh.pop %v4750
    %v4758 = vmul.f32 %v4756, %v4329
    %4760 = vrot.lane.b32.xlu0 %v4757, 96
    %v4761 = vpop.permute.xlu0 %4760
    %v4763 = vmul.f32 %v4756, %v4761
    %4765 = vrot.lane.b32.xlu0 %v4763, 96
    %v4766 = vpop.permute.xlu0 %4765
    %v4768 = vadd.f32 %v4758, %v4766
    %v4769 = vtanh.pop %v4768
    %4771 = vrot.lane.b32.xlu0 %v4769, 96
    %v4772 = vpop.permute.xlu0 %4771
    %v4774 = vmul.f32 %v4756, %v4772
    %v4775 = vlaneseq
    %v4776 = vshrl.u32 %v4775, 7
    %v4777 = vsub.s32 0, %v4776
    %v4778 = vrot.slane %v4774, %v4777
    %v4779 = vmul.f32 %v596, %v4778
    %v4780 = vadd.f32 %v4779, 0.0
    %v4781 = vlaneseq
    %v4782 = vshrl.u32 %v4781, 7
    %v4783 = vsub.s32 0, %v4782
    %v4784 = vrot.slane %v4768, %v4783
    %v4785 = vmul.f32 %v596, %v4784
    %v4786 = vadd.f32 %v4785, 0.0
    %s4787 = scalar_lea.vmem %s0, 88
    %v4788 = vld [vmem:[%s4787] sm:$0xff]
    %4790 = vset.pattern.permute.xlu0 0
    %4791 = vperm.xlu0 %4790, %v4788
    %v4792 = vpop.permute.xlu0 %4791
    %v4794 = vmul.f32 %v4792, %v62
    %v4795 = vmul.f32 %v4792, %v63
    %v4796 = vmul.f32 %v4792, %v64
    %v4797 = vmul.f32 %v4792, %v65
    %v4798 = vmul.f32 %v4792, %v66
    %v4799 = vsub.f32 %v4794, %v67
    %v4800 = vsub.f32 %v4795, %v68
    %v4801 = vsub.f32 %v4796, %v69
    %v4802 = vsub.f32 %v4797, %v70
    %v4803 = vsub.f32 %v4798, %v71
    %4804 = vset.pattern.permute.xlu0 1
    %4805 = vperm.xlu0 %4804, %v4400
    %v4806 = vpop.permute.xlu0 %4805
    %4808 = vset.pattern.permute.xlu0 1
    %4809 = vperm.xlu0 %4808, %v4405
    %v4810 = vpop.permute.xlu0 %4809
    %4812 = vset.pattern.permute.xlu0 1
    %4813 = vperm.xlu0 %4812, %v4410
    %v4814 = vpop.permute.xlu0 %4813
    %4816 = vset.pattern.permute.xlu0 1
    %4817 = vperm.xlu0 %4816, %v4415
    %v4818 = vpop.permute.xlu0 %4817
    %v4820 = vmul.f32 %v4806, %v72
    %v4821 = vmul.f32 %v4810, %v73
    %v4822 = vmul.f32 %v4814, %v74
    %v4823 = vmul.f32 %v4818, %v75
    %v4824 = vmul.f32 %v4806, %v76
    %v4825 = vmul.f32 %v4810, %v77
    %v4826 = vmul.f32 %v4814, %v78
    %v4827 = vmul.f32 %v4818, %v79
    %v4828 = vmul.f32 %v4806, %v80
    %v4829 = vmul.f32 %v4810, %v81
    %v4830 = vmul.f32 %v4814, %v82
    %v4831 = vmul.f32 %v4818, %v83
    %v4832 = vmul.f32 %v4806, %v84
    %v4833 = vmul.f32 %v4810, %v85
    %v4834 = vmul.f32 %v4814, %v86
    %v4835 = vmul.f32 %v4818, %v87
    %v4836 = vmul.f32 %v4806, %v88
    %v4837 = vmul.f32 %v4810, %v89
    %v4838 = vmul.f32 %v4814, %v90
    %v4839 = vmul.f32 %v4818, %v91
    %v4840 = vsub.f32 %v4820, %v92
    %v4841 = vsub.f32 %v4821, %v93
    %v4842 = vsub.f32 %v4822, %v94
    %v4843 = vsub.f32 %v4823, %v95
    %v4844 = vsub.f32 %v4824, %v96
    %v4845 = vsub.f32 %v4825, %v97
    %v4846 = vsub.f32 %v4826, %v98
    %v4847 = vsub.f32 %v4827, %v99
    %v4848 = vsub.f32 %v4828, %v100
    %v4849 = vsub.f32 %v4829, %v101
    %v4850 = vsub.f32 %v4830, %v102
    %v4851 = vsub.f32 %v4831, %v103
    %v4852 = vsub.f32 %v4832, %v104
    %v4853 = vsub.f32 %v4833, %v105
    %v4854 = vsub.f32 %v4834, %v106
    %v4855 = vsub.f32 %v4835, %v107
    %v4856 = vsub.f32 %v4836, %v108
    %v4857 = vsub.f32 %v4837, %v109
    %v4858 = vsub.f32 %v4838, %v110
    %v4859 = vsub.f32 %v4839, %v111
    %v4860 = vsub.f32 0.0, %v4799
    %v4861 = vsub.f32 0.0, %v4800
    %v4862 = vsub.f32 0.0, %v4801
    %v4863 = vsub.f32 0.0, %v4802
    %v4864 = vsub.f32 0.0, %v4803
    %v4865 = vmul.f32 %v4860, 1.442695
    %v4866 = vpow.pop %v4865
    %v4867 = vmul.f32 %v4861, 1.442695
    %v4868 = vpow.pop %v4867
    %v4869 = vmul.f32 %v4862, 1.442695
    %v4870 = vpow.pop %v4869
    %v4871 = vmul.f32 %v4863, 1.442695
    %v4872 = vpow.pop %v4871
    %v4873 = vmul.f32 %v4864, 1.442695
    %v4874 = vpow.pop %v4873
    %v4875 = vadd.f32 %v4866, 1.0
    %v4876 = vadd.f32 %v4868, 1.0
    %v4877 = vadd.f32 %v4870, 1.0
    %v4878 = vadd.f32 %v4872, 1.0
    %v4879 = vadd.f32 %v4874, 1.0
    %v4885 = vrot.slane %v4875, 4
    %v4886 = vrot.slane %v4876, 4
    %v4887 = vrot.slane %v4877, 4
    %v4888 = vrot.slane %v4878, 4
    %v4889 = vrot.slane %v4879, 4
    %v4895 = vmul.f32 %v4875, %v4885
    %v4896 = vmul.f32 %v4876, %v4886
    %v4897 = vmul.f32 %v4877, %v4887
    %v4898 = vmul.f32 %v4878, %v4888
    %v4899 = vmul.f32 %v4879, %v4889
    %v4905 = vrot.slane %v4895, 2
    %v4906 = vrot.slane %v4896, 2
    %v4907 = vrot.slane %v4897, 2
    %v4908 = vrot.slane %v4898, 2
    %v4909 = vrot.slane %v4899, 2
    %v4915 = vmul.f32 %v4895, %v4905
    %v4916 = vmul.f32 %v4896, %v4906
    %v4917 = vmul.f32 %v4897, %v4907
    %v4918 = vmul.f32 %v4898, %v4908
    %v4919 = vmul.f32 %v4899, %v4909
    %v4925 = vrot.slane %v4915, 1
    %v4926 = vrot.slane %v4916, 1
    %v4927 = vrot.slane %v4917, 1
    %v4928 = vrot.slane %v4918, 1
    %v4929 = vrot.slane %v4919, 1
    %v4935 = vmul.f32 %v4915, %v4925
    %v4936 = vmul.f32 %v4916, %v4926
    %v4937 = vmul.f32 %v4917, %v4927
    %v4938 = vmul.f32 %v4918, %v4928
    %v4939 = vmul.f32 %v4919, %v4929
    %v4940 = vsub.f32 0.0, %v4840
    %v4941 = vsub.f32 0.0, %v4841
    %v4942 = vsub.f32 0.0, %v4842
    %v4943 = vsub.f32 0.0, %v4843
    %v4944 = vsub.f32 0.0, %v4844
    %v4945 = vsub.f32 0.0, %v4845
    %v4946 = vsub.f32 0.0, %v4846
    %v4947 = vsub.f32 0.0, %v4847
    %v4948 = vsub.f32 0.0, %v4848
    %v4949 = vsub.f32 0.0, %v4849
    %v4950 = vsub.f32 0.0, %v4850
    %v4951 = vsub.f32 0.0, %v4851
    %v4952 = vsub.f32 0.0, %v4852
    %v4953 = vsub.f32 0.0, %v4853
    %v4954 = vsub.f32 0.0, %v4854
    %v4955 = vsub.f32 0.0, %v4855
    %v4956 = vsub.f32 0.0, %v4856
    %v4957 = vsub.f32 0.0, %v4857
    %v4958 = vsub.f32 0.0, %v4858
    %v4959 = vsub.f32 0.0, %v4859
    %v4960 = vmul.f32 %v4940, 1.442695
    %v4961 = vpow.pop %v4960
    %v4962 = vmul.f32 %v4941, 1.442695
    %v4963 = vpow.pop %v4962
    %v4964 = vmul.f32 %v4942, 1.442695
    %v4965 = vpow.pop %v4964
    %v4966 = vmul.f32 %v4943, 1.442695
    %v4967 = vpow.pop %v4966
    %v4968 = vmul.f32 %v4944, 1.442695
    %v4969 = vpow.pop %v4968
    %v4970 = vmul.f32 %v4945, 1.442695
    %v4971 = vpow.pop %v4970
    %v4972 = vmul.f32 %v4946, 1.442695
    %v4973 = vpow.pop %v4972
    %v4974 = vmul.f32 %v4947, 1.442695
    %v4975 = vpow.pop %v4974
    %v4976 = vmul.f32 %v4948, 1.442695
    %v4977 = vpow.pop %v4976
    %v4978 = vmul.f32 %v4949, 1.442695
    %v4979 = vpow.pop %v4978
    %v4980 = vmul.f32 %v4950, 1.442695
    %v4981 = vpow.pop %v4980
    %v4982 = vmul.f32 %v4951, 1.442695
    %v4983 = vpow.pop %v4982
    %v4984 = vmul.f32 %v4952, 1.442695
    %v4985 = vpow.pop %v4984
    %v4986 = vmul.f32 %v4953, 1.442695
    %v4987 = vpow.pop %v4986
    %v4988 = vmul.f32 %v4954, 1.442695
    %v4989 = vpow.pop %v4988
    %v4990 = vmul.f32 %v4955, 1.442695
    %v4991 = vpow.pop %v4990
    %v4992 = vmul.f32 %v4956, 1.442695
    %v4993 = vpow.pop %v4992
    %v4994 = vmul.f32 %v4957, 1.442695
    %v4995 = vpow.pop %v4994
    %v4996 = vmul.f32 %v4958, 1.442695
    %v4997 = vpow.pop %v4996
    %v4998 = vmul.f32 %v4959, 1.442695
    %v4999 = vpow.pop %v4998
    %v5000 = vadd.f32 %v4961, 1.0
    %v5001 = vadd.f32 %v4963, 1.0
    %v5002 = vadd.f32 %v4965, 1.0
    %v5003 = vadd.f32 %v4967, 1.0
    %v5004 = vadd.f32 %v4969, 1.0
    %v5005 = vadd.f32 %v4971, 1.0
    %v5006 = vadd.f32 %v4973, 1.0
    %v5007 = vadd.f32 %v4975, 1.0
    %v5008 = vadd.f32 %v4977, 1.0
    %v5009 = vadd.f32 %v4979, 1.0
    %v5010 = vadd.f32 %v4981, 1.0
    %v5011 = vadd.f32 %v4983, 1.0
    %v5012 = vadd.f32 %v4985, 1.0
    %v5013 = vadd.f32 %v4987, 1.0
    %v5014 = vadd.f32 %v4989, 1.0
    %v5015 = vadd.f32 %v4991, 1.0
    %v5016 = vadd.f32 %v4993, 1.0
    %v5017 = vadd.f32 %v4995, 1.0
    %v5018 = vadd.f32 %v4997, 1.0
    %v5019 = vadd.f32 %v4999, 1.0
    %v5020 = vmul.f32 %v5000, %v5002
    %v5021 = vmul.f32 %v5001, %v5003
    %v5022 = vmul.f32 %v5004, %v5006
    %v5023 = vmul.f32 %v5005, %v5007
    %v5024 = vmul.f32 %v5008, %v5010
    %v5025 = vmul.f32 %v5009, %v5011
    %v5026 = vmul.f32 %v5012, %v5014
    %v5027 = vmul.f32 %v5013, %v5015
    %v5028 = vmul.f32 %v5016, %v5018
    %v5029 = vmul.f32 %v5017, %v5019
    %v5030 = vmul.f32 %v5020, %v5021
    %v5031 = vmul.f32 %v5022, %v5023
    %v5032 = vmul.f32 %v5024, %v5025
    %v5033 = vmul.f32 %v5026, %v5027
    %v5034 = vmul.f32 %v5028, %v5029
    %v5040 = vrot.slane %v5030, 4
    %v5041 = vrot.slane %v5031, 4
    %v5042 = vrot.slane %v5032, 4
    %v5043 = vrot.slane %v5033, 4
    %v5044 = vrot.slane %v5034, 4
    %v5050 = vmul.f32 %v5030, %v5040
    %v5051 = vmul.f32 %v5031, %v5041
    %v5052 = vmul.f32 %v5032, %v5042
    %v5053 = vmul.f32 %v5033, %v5043
    %v5054 = vmul.f32 %v5034, %v5044
    %v5060 = vrot.slane %v5050, 2
    %v5061 = vrot.slane %v5051, 2
    %v5062 = vrot.slane %v5052, 2
    %v5063 = vrot.slane %v5053, 2
    %v5064 = vrot.slane %v5054, 2
    %v5070 = vmul.f32 %v5050, %v5060
    %v5071 = vmul.f32 %v5051, %v5061
    %v5072 = vmul.f32 %v5052, %v5062
    %v5073 = vmul.f32 %v5053, %v5063
    %v5074 = vmul.f32 %v5054, %v5064
    %v5080 = vrot.slane %v5070, 1
    %v5081 = vrot.slane %v5071, 1
    %v5082 = vrot.slane %v5072, 1
    %v5083 = vrot.slane %v5073, 1
    %v5084 = vrot.slane %v5074, 1
    %v5090 = vmul.f32 %v5070, %v5080
    %v5091 = vmul.f32 %v5071, %v5081
    %v5092 = vmul.f32 %v5072, %v5082
    %v5093 = vmul.f32 %v5073, %v5083
    %v5094 = vmul.f32 %v5074, %v5084
    %v5095 = vmul.f32 %v4935, %v5090
    %v5096 = vmul.f32 %v4936, %v5091
    %v5097 = vmul.f32 %v4937, %v5092
    %v5098 = vmul.f32 %v4938, %v5093
    %v5099 = vmul.f32 %v4939, %v5094
    %v5100 = vrcp.pop %v5095
    %v5101 = vmul.f32 1.0, %v5100
    %v5102 = vrcp.pop %v5096
    %v5103 = vmul.f32 1.0, %v5102
    %v5104 = vrcp.pop %v5097
    %v5105 = vmul.f32 1.0, %v5104
    %v5106 = vrcp.pop %v5098
    %v5107 = vmul.f32 1.0, %v5106
    %v5108 = vrcp.pop %v5099
    %v5109 = vmul.f32 1.0, %v5108
    %v5110 = vadd.f32 %v5101, %v5103
    %v5111 = vadd.f32 %v5110, %v5105
    %v5112 = vadd.f32 %v5111, %v5107
    %v5113 = vadd.f32 %v5112, %v5109
    %v5114 = vsub.f32 %v5113, %v566
    %v5115 = vmul.f32 %v112, %v5114
    %v5116 = vxor.u32 %v5115, 2147483648
    %v5117 = vmul.f32 %v5116, 1.442695
    %v5118 = vpow.pop %v5117
    %v5119 = vadd.f32 %v5118, 1.0
    %v5120 = vrcp.pop %v5119
    %v5121 = vmul.f32 1.0, %v5120
    %v5122 = vtanh.pop %v5115
    %v5124 = vrot.slane %v4329, 1
    %v5126 = vmul.f32 %v5121, %v5124
    %5128 = vrot.lane.b32.xlu0 %v5122, 96
    %v5129 = vpop.permute.xlu0 %5128
    %v5131 = vmul.f32 %v5121, %v5129
    %5133 = vrot.lane.b32.xlu0 %v5131, 96
    %v5134 = vpop.permute.xlu0 %5133
    %v5136 = vadd.f32 %v5126, %v5134
    %v5137 = vtanh.pop %v5136
    %5139 = vrot.lane.b32.xlu0 %v5137, 96
    %v5140 = vpop.permute.xlu0 %5139
    %v5142 = vmul.f32 %v5121, %v5140
    %v5143 = vlaneseq
    %v5144 = vshrl.u32 %v5143, 7
    %v5145 = vsub.s32 0, %v5144
    %v5146 = vrot.slane %v5142, %v5145
    %v5147 = vmul.f32 %v967, %v5146
    %v5148 = vadd.f32 %v4780, %v5147
    %v5149 = vlaneseq
    %v5150 = vshrl.u32 %v5149, 7
    %v5151 = vsub.s32 0, %v5150
    %v5152 = vrot.slane %v5136, %v5151
    %v5153 = vmul.f32 %v967, %v5152
    %v5154 = vadd.f32 %v4786, %v5153
    %5156 = vrot.lane.b32.xlu0 %v5148, 32
    %v5157 = vpop.permute.xlu0 %5156
    %5159 = vst.msk [vmem:[#allocation2] sm:$0x3] %vm984, %v5157
    %5160 = vst.msk [vmem:[#allocation9] sm:$0x3] %vm984, %v5154
    %s5161 = scalar_lea.vmem [#allocation8], 10
    %5162 = vst.msk [vmem:[%s5161] sm:$0x3] %vm984, %v5157
    %v5163 = vld [vmem:[#allocation2] sm:$0x3]
    %v5164 = vld [vmem:[#allocation9] sm:$0x3]
    %v5166 = vsel %vm134, %v5163, 0
    %5168 = vmatprep.subr.mxu0 0.0
    %5169 = vmatpush1.xpose.msra.mxu0 0.0
    %5170 = vmatprep.subr.mxu0 0.0
    %5171 = vmatpush1.xpose.msra.mxu0 0.0
    %5172 = vmatprep.subr.mxu0 0.0
    %5173 = vmatpush1.xpose.msra.mxu0 0.0
    %5174 = vmatprep.subr.mxu0 0.0
    %5175 = vmatpush1.xpose.msra.mxu0 0.0
    %5176 = vmatprep.subr.mxu0 0.0
    %5177 = vmatpush1.xpose.msra.mxu0 0.0
    %5178 = vmatprep.subr.mxu0 0.0
    %5179 = vmatpush1.xpose.msra.mxu0 0.0
    %5180 = vmatprep.subr.mxu0 0.0
    %5181 = vmatpush1.xpose.msra.mxu0 0.0
    %5182 = vmatprep.subr.mxu0 0.0
    %5183 = vmatpush1.xpose.msra.mxu0 0.0
    %5184 = vmatprep.subr.mxu0 0.0
    %5185 = vmatpush1.xpose.msra.mxu0 0.0
    %5186 = vmatprep.subr.mxu0 0.0
    %5187 = vmatpush1.xpose.msra.mxu0 0.0
    %5188 = vmatprep.subr.mxu0 0.0
    %5189 = vmatpush1.xpose.msra.mxu0 0.0
    %5190 = vmatprep.subr.mxu0 0.0
    %5191 = vmatpush1.xpose.msra.mxu0 0.0
    %5192 = vmatprep.subr.mxu0 0.0
    %5193 = vmatpush1.xpose.msra.mxu0 0.0
    %5194 = vmatprep.subr.mxu0 0.0
    %5195 = vmatpush1.xpose.msra.mxu0 0.0
    %5196 = vmatprep.subr.mxu0 0.0
    %5197 = vmatpush1.xpose.msra.mxu0 0.0
    %5198 = vmatprep.subr.mxu0 0.0
    %5199 = vmatpush1.xpose.msra.mxu0 %v5166
    %5200 = vmatprep.subr.mxu0 0.0
    %5201 = vmatpush2.xpose.msra.mxu0 0.0
    %5202 = vmatprep.subr.mxu0 0.0
    %5203 = vmatpush2.xpose.msra.mxu0 0.0
    %5204 = vmatprep.subr.mxu0 0.0
    %5205 = vmatpush2.xpose.msra.mxu0 0.0
    %5206 = vmatprep.subr.mxu0 0.0
    %5207 = vmatpush2.xpose.msra.mxu0 0.0
    %5208 = vmatprep.subr.mxu0 0.0
    %5209 = vmatpush2.xpose.msra.mxu0 0.0
    %5210 = vmatprep.subr.mxu0 0.0
    %5211 = vmatpush2.xpose.msra.mxu0 0.0
    %5212 = vmatprep.subr.mxu0 0.0
    %5213 = vmatpush2.xpose.msra.mxu0 0.0
    %5214 = vmatprep.subr.mxu0 0.0
    %5215 = vmatpush2.xpose.msra.mxu0 0.0
    %5216 = vmatprep.subr.mxu0 0.0
    %5217 = vmatpush2.xpose.msra.mxu0 0.0
    %5218 = vmatprep.subr.mxu0 0.0
    %5219 = vmatpush2.xpose.msra.mxu0 0.0
    %5220 = vmatprep.subr.mxu0 0.0
    %5221 = vmatpush2.xpose.msra.mxu0 0.0
    %5222 = vmatprep.subr.mxu0 0.0
    %5223 = vmatpush2.xpose.msra.mxu0 0.0
    %5224 = vmatprep.subr.mxu0 0.0
    %5225 = vmatpush2.xpose.msra.mxu0 0.0
    %5226 = vmatprep.subr.mxu0 0.0
    %5227 = vmatpush2.xpose.msra.mxu0 0.0
    %5228 = vmatprep.subr.mxu0 0.0
    %5229 = vmatpush2.xpose.msra.mxu0 0.0
    %5230 = vmatprep.subr.mxu0 0.0
    %5231 = vmatpush2.xpose.msra.mxu0 0.0
    %5232 = vmatprep.mubr.f32.mxu0 0.0
    %5233 = vmatmul.mubr.f32.gmra.mxu0 %v136
    %v5234 = vpop.f32.mrf.mxu0
    %v5235 = vadd.f32 0.0, %v5234
    %v5236 = vpop.f32.mrf.mxu0
    %5237 = vmatprep.mubr.f32.mxu0 0.0
    %5238 = vmatmul.mubr.f32.gmra.mxu0 %v139
    %v5239 = vpop.f32.mrf.mxu0
    %v5240 = vadd.f32 0.0, %v5239
    %v5241 = vpop.f32.mrf.mxu0
    %5242 = vmatprep.mubr.f32.mxu0 0.0
    %5243 = vmatmul.mubr.f32.gmra.mxu0 %v142
    %v5244 = vpop.f32.mrf.mxu0
    %v5245 = vadd.f32 0.0, %v5244
    %v5246 = vpop.f32.mrf.mxu0
    %5247 = vmatprep.mubr.f32.mxu0 0.0
    %5248 = vmatmul.mubr.f32.gmra.mxu0 %v145
    %v5249 = vpop.f32.mrf.mxu0
    %v5250 = vadd.f32 0.0, %v5249
    %v5251 = vpop.f32.mrf.mxu0
    %5252 = vdwg.mxu0
    %s5253 = scalar_lea.vmem %s0, 96
    %v5254 = vld [vmem:[%s5253] sm:$0xff]
    %5256 = vset.pattern.permute.xlu0 0
    %5257 = vperm.xlu0 %5256, %v5254
    %v5258 = vpop.permute.xlu0 %5257
    %v5260 = vmul.f32 %v5258, %v62
    %v5261 = vmul.f32 %v5258, %v63
    %v5262 = vmul.f32 %v5258, %v64
    %v5263 = vmul.f32 %v5258, %v65
    %v5264 = vmul.f32 %v5258, %v66
    %v5265 = vsub.f32 %v5260, %v67
    %v5266 = vsub.f32 %v5261, %v68
    %v5267 = vsub.f32 %v5262, %v69
    %v5268 = vsub.f32 %v5263, %v70
    %v5269 = vsub.f32 %v5264, %v71
    %5271 = vset.pattern.permute.xlu0 0
    %5272 = vperm.xlu0 %5271, %v5235
    %v5273 = vpop.permute.xlu0 %5272
    %5276 = vset.pattern.permute.xlu0 0
    %5277 = vperm.xlu0 %5276, %v5240
    %v5278 = vpop.permute.xlu0 %5277
    %5281 = vset.pattern.permute.xlu0 0
    %5282 = vperm.xlu0 %5281, %v5245
    %v5283 = vpop.permute.xlu0 %5282
    %5286 = vset.pattern.permute.xlu0 0
    %5287 = vperm.xlu0 %5286, %v5250
    %v5288 = vpop.permute.xlu0 %5287
    %v5290 = vmul.f32 %v5273, %v72
    %v5291 = vmul.f32 %v5278, %v73
    %v5292 = vmul.f32 %v5283, %v74
    %v5293 = vmul.f32 %v5288, %v75
    %v5294 = vmul.f32 %v5273, %v76
    %v5295 = vmul.f32 %v5278, %v77
    %v5296 = vmul.f32 %v5283, %v78
    %v5297 = vmul.f32 %v5288, %v79
    %v5298 = vmul.f32 %v5273, %v80
    %v5299 = vmul.f32 %v5278, %v81
    %v5300 = vmul.f32 %v5283, %v82
    %v5301 = vmul.f32 %v5288, %v83
    %v5302 = vmul.f32 %v5273, %v84
    %v5303 = vmul.f32 %v5278, %v85
    %v5304 = vmul.f32 %v5283, %v86
    %v5305 = vmul.f32 %v5288, %v87
    %v5306 = vmul.f32 %v5273, %v88
    %v5307 = vmul.f32 %v5278, %v89
    %v5308 = vmul.f32 %v5283, %v90
    %v5309 = vmul.f32 %v5288, %v91
    %v5310 = vsub.f32 %v5290, %v92
    %v5311 = vsub.f32 %v5291, %v93
    %v5312 = vsub.f32 %v5292, %v94
    %v5313 = vsub.f32 %v5293, %v95
    %v5314 = vsub.f32 %v5294, %v96
    %v5315 = vsub.f32 %v5295, %v97
    %v5316 = vsub.f32 %v5296, %v98
    %v5317 = vsub.f32 %v5297, %v99
    %v5318 = vsub.f32 %v5298, %v100
    %v5319 = vsub.f32 %v5299, %v101
    %v5320 = vsub.f32 %v5300, %v102
    %v5321 = vsub.f32 %v5301, %v103
    %v5322 = vsub.f32 %v5302, %v104
    %v5323 = vsub.f32 %v5303, %v105
    %v5324 = vsub.f32 %v5304, %v106
    %v5325 = vsub.f32 %v5305, %v107
    %v5326 = vsub.f32 %v5306, %v108
    %v5327 = vsub.f32 %v5307, %v109
    %v5328 = vsub.f32 %v5308, %v110
    %v5329 = vsub.f32 %v5309, %v111
    %v5330 = vsub.f32 0.0, %v5265
    %v5331 = vsub.f32 0.0, %v5266
    %v5332 = vsub.f32 0.0, %v5267
    %v5333 = vsub.f32 0.0, %v5268
    %v5334 = vsub.f32 0.0, %v5269
    %v5335 = vmul.f32 %v5330, 1.442695
    %v5336 = vpow.pop %v5335
    %v5337 = vmul.f32 %v5331, 1.442695
    %v5338 = vpow.pop %v5337
    %v5339 = vmul.f32 %v5332, 1.442695
    %v5340 = vpow.pop %v5339
    %v5341 = vmul.f32 %v5333, 1.442695
    %v5342 = vpow.pop %v5341
    %v5343 = vmul.f32 %v5334, 1.442695
    %v5344 = vpow.pop %v5343
    %v5345 = vadd.f32 %v5336, 1.0
    %v5346 = vadd.f32 %v5338, 1.0
    %v5347 = vadd.f32 %v5340, 1.0
    %v5348 = vadd.f32 %v5342, 1.0
    %v5349 = vadd.f32 %v5344, 1.0
    %v5355 = vrot.slane %v5345, 4
    %v5356 = vrot.slane %v5346, 4
    %v5357 = vrot.slane %v5347, 4
    %v5358 = vrot.slane %v5348, 4
    %v5359 = vrot.slane %v5349, 4
    %v5365 = vmul.f32 %v5345, %v5355
    %v5366 = vmul.f32 %v5346, %v5356
    %v5367 = vmul.f32 %v5347, %v5357
    %v5368 = vmul.f32 %v5348, %v5358
    %v5369 = vmul.f32 %v5349, %v5359
    %v5375 = vrot.slane %v5365, 2
    %v5376 = vrot.slane %v5366, 2
    %v5377 = vrot.slane %v5367, 2
    %v5378 = vrot.slane %v5368, 2
    %v5379 = vrot.slane %v5369, 2
    %v5385 = vmul.f32 %v5365, %v5375
    %v5386 = vmul.f32 %v5366, %v5376
    %v5387 = vmul.f32 %v5367, %v5377
    %v5388 = vmul.f32 %v5368, %v5378
    %v5389 = vmul.f32 %v5369, %v5379
    %v5395 = vrot.slane %v5385, 1
    %v5396 = vrot.slane %v5386, 1
    %v5397 = vrot.slane %v5387, 1
    %v5398 = vrot.slane %v5388, 1
    %v5399 = vrot.slane %v5389, 1
    %v5405 = vmul.f32 %v5385, %v5395
    %v5406 = vmul.f32 %v5386, %v5396
    %v5407 = vmul.f32 %v5387, %v5397
    %v5408 = vmul.f32 %v5388, %v5398
    %v5409 = vmul.f32 %v5389, %v5399
    %v5410 = vsub.f32 0.0, %v5310
    %v5411 = vsub.f32 0.0, %v5311
    %v5412 = vsub.f32 0.0, %v5312
    %v5413 = vsub.f32 0.0, %v5313
    %v5414 = vsub.f32 0.0, %v5314
    %v5415 = vsub.f32 0.0, %v5315
    %v5416 = vsub.f32 0.0, %v5316
    %v5417 = vsub.f32 0.0, %v5317
    %v5418 = vsub.f32 0.0, %v5318
    %v5419 = vsub.f32 0.0, %v5319
    %v5420 = vsub.f32 0.0, %v5320
    %v5421 = vsub.f32 0.0, %v5321
    %v5422 = vsub.f32 0.0, %v5322
    %v5423 = vsub.f32 0.0, %v5323
    %v5424 = vsub.f32 0.0, %v5324
    %v5425 = vsub.f32 0.0, %v5325
    %v5426 = vsub.f32 0.0, %v5326
    %v5427 = vsub.f32 0.0, %v5327
    %v5428 = vsub.f32 0.0, %v5328
    %v5429 = vsub.f32 0.0, %v5329
    %v5430 = vmul.f32 %v5410, 1.442695
    %v5431 = vpow.pop %v5430
    %v5432 = vmul.f32 %v5411, 1.442695
    %v5433 = vpow.pop %v5432
    %v5434 = vmul.f32 %v5412, 1.442695
    %v5435 = vpow.pop %v5434
    %v5436 = vmul.f32 %v5413, 1.442695
    %v5437 = vpow.pop %v5436
    %v5438 = vmul.f32 %v5414, 1.442695
    %v5439 = vpow.pop %v5438
    %v5440 = vmul.f32 %v5415, 1.442695
    %v5441 = vpow.pop %v5440
    %v5442 = vmul.f32 %v5416, 1.442695
    %v5443 = vpow.pop %v5442
    %v5444 = vmul.f32 %v5417, 1.442695
    %v5445 = vpow.pop %v5444
    %v5446 = vmul.f32 %v5418, 1.442695
    %v5447 = vpow.pop %v5446
    %v5448 = vmul.f32 %v5419, 1.442695
    %v5449 = vpow.pop %v5448
    %v5450 = vmul.f32 %v5420, 1.442695
    %v5451 = vpow.pop %v5450
    %v5452 = vmul.f32 %v5421, 1.442695
    %v5453 = vpow.pop %v5452
    %v5454 = vmul.f32 %v5422, 1.442695
    %v5455 = vpow.pop %v5454
    %v5456 = vmul.f32 %v5423, 1.442695
    %v5457 = vpow.pop %v5456
    %v5458 = vmul.f32 %v5424, 1.442695
    %v5459 = vpow.pop %v5458
    %v5460 = vmul.f32 %v5425, 1.442695
    %v5461 = vpow.pop %v5460
    %v5462 = vmul.f32 %v5426, 1.442695
    %v5463 = vpow.pop %v5462
    %v5464 = vmul.f32 %v5427, 1.442695
    %v5465 = vpow.pop %v5464
    %v5466 = vmul.f32 %v5428, 1.442695
    %v5467 = vpow.pop %v5466
    %v5468 = vmul.f32 %v5429, 1.442695
    %v5469 = vpow.pop %v5468
    %v5470 = vadd.f32 %v5431, 1.0
    %v5471 = vadd.f32 %v5433, 1.0
    %v5472 = vadd.f32 %v5435, 1.0
    %v5473 = vadd.f32 %v5437, 1.0
    %v5474 = vadd.f32 %v5439, 1.0
    %v5475 = vadd.f32 %v5441, 1.0
    %v5476 = vadd.f32 %v5443, 1.0
    %v5477 = vadd.f32 %v5445, 1.0
    %v5478 = vadd.f32 %v5447, 1.0
    %v5479 = vadd.f32 %v5449, 1.0
    %v5480 = vadd.f32 %v5451, 1.0
    %v5481 = vadd.f32 %v5453, 1.0
    %v5482 = vadd.f32 %v5455, 1.0
    %v5483 = vadd.f32 %v5457, 1.0
    %v5484 = vadd.f32 %v5459, 1.0
    %v5485 = vadd.f32 %v5461, 1.0
    %v5486 = vadd.f32 %v5463, 1.0
    %v5487 = vadd.f32 %v5465, 1.0
    %v5488 = vadd.f32 %v5467, 1.0
    %v5489 = vadd.f32 %v5469, 1.0
    %v5490 = vmul.f32 %v5470, %v5472
    %v5491 = vmul.f32 %v5471, %v5473
    %v5492 = vmul.f32 %v5474, %v5476
    %v5493 = vmul.f32 %v5475, %v5477
    %v5494 = vmul.f32 %v5478, %v5480
    %v5495 = vmul.f32 %v5479, %v5481
    %v5496 = vmul.f32 %v5482, %v5484
    %v5497 = vmul.f32 %v5483, %v5485
    %v5498 = vmul.f32 %v5486, %v5488
    %v5499 = vmul.f32 %v5487, %v5489
    %v5500 = vmul.f32 %v5490, %v5491
    %v5501 = vmul.f32 %v5492, %v5493
    %v5502 = vmul.f32 %v5494, %v5495
    %v5503 = vmul.f32 %v5496, %v5497
    %v5504 = vmul.f32 %v5498, %v5499
    %v5510 = vrot.slane %v5500, 4
    %v5511 = vrot.slane %v5501, 4
    %v5512 = vrot.slane %v5502, 4
    %v5513 = vrot.slane %v5503, 4
    %v5514 = vrot.slane %v5504, 4
    %v5520 = vmul.f32 %v5500, %v5510
    %v5521 = vmul.f32 %v5501, %v5511
    %v5522 = vmul.f32 %v5502, %v5512
    %v5523 = vmul.f32 %v5503, %v5513
    %v5524 = vmul.f32 %v5504, %v5514
    %v5530 = vrot.slane %v5520, 2
    %v5531 = vrot.slane %v5521, 2
    %v5532 = vrot.slane %v5522, 2
    %v5533 = vrot.slane %v5523, 2
    %v5534 = vrot.slane %v5524, 2
    %v5540 = vmul.f32 %v5520, %v5530
    %v5541 = vmul.f32 %v5521, %v5531
    %v5542 = vmul.f32 %v5522, %v5532
    %v5543 = vmul.f32 %v5523, %v5533
    %v5544 = vmul.f32 %v5524, %v5534
    %v5550 = vrot.slane %v5540, 1
    %v5551 = vrot.slane %v5541, 1
    %v5552 = vrot.slane %v5542, 1
    %v5553 = vrot.slane %v5543, 1
    %v5554 = vrot.slane %v5544, 1
    %v5560 = vmul.f32 %v5540, %v5550
    %v5561 = vmul.f32 %v5541, %v5551
    %v5562 = vmul.f32 %v5542, %v5552
    %v5563 = vmul.f32 %v5543, %v5553
    %v5564 = vmul.f32 %v5544, %v5554
    %v5565 = vmul.f32 %v5405, %v5560
    %v5566 = vmul.f32 %v5406, %v5561
    %v5567 = vmul.f32 %v5407, %v5562
    %v5568 = vmul.f32 %v5408, %v5563
    %v5569 = vmul.f32 %v5409, %v5564
    %v5570 = vrcp.pop %v5565
    %v5571 = vmul.f32 1.0, %v5570
    %v5572 = vrcp.pop %v5566
    %v5573 = vmul.f32 1.0, %v5572
    %v5574 = vrcp.pop %v5567
    %v5575 = vmul.f32 1.0, %v5574
    %v5576 = vrcp.pop %v5568
    %v5577 = vmul.f32 1.0, %v5576
    %v5578 = vrcp.pop %v5569
    %v5579 = vmul.f32 1.0, %v5578
    %v5580 = vadd.f32 %v5571, %v5573
    %v5581 = vadd.f32 %v5580, %v5575
    %v5582 = vadd.f32 %v5581, %v5577
    %v5583 = vadd.f32 %v5582, %v5579
    %v5584 = vsub.f32 %v5583, %v566
    %v5585 = vmul.f32 %v112, %v5584
    %v5586 = vxor.u32 %v5585, 2147483648
    %v5587 = vmul.f32 %v5586, 1.442695
    %v5588 = vpow.pop %v5587
    %v5589 = vadd.f32 %v5588, 1.0
    %v5590 = vrcp.pop %v5589
    %v5591 = vmul.f32 1.0, %v5590
    %v5592 = vtanh.pop %v5585
    %v5593 = vmul.f32 %v5591, %v5164
    %5595 = vrot.lane.b32.xlu0 %v5592, 96
    %v5596 = vpop.permute.xlu0 %5595
    %v5598 = vmul.f32 %v5591, %v5596
    %5600 = vrot.lane.b32.xlu0 %v5598, 96
    %v5601 = vpop.permute.xlu0 %5600
    %v5603 = vadd.f32 %v5593, %v5601
    %v5604 = vtanh.pop %v5603
    %5606 = vrot.lane.b32.xlu0 %v5604, 96
    %v5607 = vpop.permute.xlu0 %5606
    %v5609 = vmul.f32 %v5591, %v5607
    %v5610 = vlaneseq
    %v5611 = vshrl.u32 %v5610, 7
    %v5612 = vsub.s32 0, %v5611
    %v5613 = vrot.slane %v5609, %v5612
    %v5614 = vmul.f32 %v596, %v5613
    %v5615 = vadd.f32 %v5614, 0.0
    %v5616 = vlaneseq
    %v5617 = vshrl.u32 %v5616, 7
    %v5618 = vsub.s32 0, %v5617
    %v5619 = vrot.slane %v5603, %v5618
    %v5620 = vmul.f32 %v596, %v5619
    %v5621 = vadd.f32 %v5620, 0.0
    %s5622 = scalar_lea.vmem %s0, 104
    %v5623 = vld [vmem:[%s5622] sm:$0xff]
    %5625 = vset.pattern.permute.xlu0 0
    %5626 = vperm.xlu0 %5625, %v5623
    %v5627 = vpop.permute.xlu0 %5626
    %v5629 = vmul.f32 %v5627, %v62
    %v5630 = vmul.f32 %v5627, %v63
    %v5631 = vmul.f32 %v5627, %v64
    %v5632 = vmul.f32 %v5627, %v65
    %v5633 = vmul.f32 %v5627, %v66
    %v5634 = vsub.f32 %v5629, %v67
    %v5635 = vsub.f32 %v5630, %v68
    %v5636 = vsub.f32 %v5631, %v69
    %v5637 = vsub.f32 %v5632, %v70
    %v5638 = vsub.f32 %v5633, %v71
    %5639 = vset.pattern.permute.xlu0 1
    %5640 = vperm.xlu0 %5639, %v5235
    %v5641 = vpop.permute.xlu0 %5640
    %5643 = vset.pattern.permute.xlu0 1
    %5644 = vperm.xlu0 %5643, %v5240
    %v5645 = vpop.permute.xlu0 %5644
    %5647 = vset.pattern.permute.xlu0 1
    %5648 = vperm.xlu0 %5647, %v5245
    %v5649 = vpop.permute.xlu0 %5648
    %5651 = vset.pattern.permute.xlu0 1
    %5652 = vperm.xlu0 %5651, %v5250
    %v5653 = vpop.permute.xlu0 %5652
    %v5655 = vmul.f32 %v5641, %v72
    %v5656 = vmul.f32 %v5645, %v73
    %v5657 = vmul.f32 %v5649, %v74
    %v5658 = vmul.f32 %v5653, %v75
    %v5659 = vmul.f32 %v5641, %v76
    %v5660 = vmul.f32 %v5645, %v77
    %v5661 = vmul.f32 %v5649, %v78
    %v5662 = vmul.f32 %v5653, %v79
    %v5663 = vmul.f32 %v5641, %v80
    %v5664 = vmul.f32 %v5645, %v81
    %v5665 = vmul.f32 %v5649, %v82
    %v5666 = vmul.f32 %v5653, %v83
    %v5667 = vmul.f32 %v5641, %v84
    %v5668 = vmul.f32 %v5645, %v85
    %v5669 = vmul.f32 %v5649, %v86
    %v5670 = vmul.f32 %v5653, %v87
    %v5671 = vmul.f32 %v5641, %v88
    %v5672 = vmul.f32 %v5645, %v89
    %v5673 = vmul.f32 %v5649, %v90
    %v5674 = vmul.f32 %v5653, %v91
    %v5675 = vsub.f32 %v5655, %v92
    %v5676 = vsub.f32 %v5656, %v93
    %v5677 = vsub.f32 %v5657, %v94
    %v5678 = vsub.f32 %v5658, %v95
    %v5679 = vsub.f32 %v5659, %v96
    %v5680 = vsub.f32 %v5660, %v97
    %v5681 = vsub.f32 %v5661, %v98
    %v5682 = vsub.f32 %v5662, %v99
    %v5683 = vsub.f32 %v5663, %v100
    %v5684 = vsub.f32 %v5664, %v101
    %v5685 = vsub.f32 %v5665, %v102
    %v5686 = vsub.f32 %v5666, %v103
    %v5687 = vsub.f32 %v5667, %v104
    %v5688 = vsub.f32 %v5668, %v105
    %v5689 = vsub.f32 %v5669, %v106
    %v5690 = vsub.f32 %v5670, %v107
    %v5691 = vsub.f32 %v5671, %v108
    %v5692 = vsub.f32 %v5672, %v109
    %v5693 = vsub.f32 %v5673, %v110
    %v5694 = vsub.f32 %v5674, %v111
    %v5695 = vsub.f32 0.0, %v5634
    %v5696 = vsub.f32 0.0, %v5635
    %v5697 = vsub.f32 0.0, %v5636
    %v5698 = vsub.f32 0.0, %v5637
    %v5699 = vsub.f32 0.0, %v5638
    %v5700 = vmul.f32 %v5695, 1.442695
    %v5701 = vpow.pop %v5700
    %v5702 = vmul.f32 %v5696, 1.442695
    %v5703 = vpow.pop %v5702
    %v5704 = vmul.f32 %v5697, 1.442695
    %v5705 = vpow.pop %v5704
    %v5706 = vmul.f32 %v5698, 1.442695
    %v5707 = vpow.pop %v5706
    %v5708 = vmul.f32 %v5699, 1.442695
    %v5709 = vpow.pop %v5708
    %v5710 = vadd.f32 %v5701, 1.0
    %v5711 = vadd.f32 %v5703, 1.0
    %v5712 = vadd.f32 %v5705, 1.0
    %v5713 = vadd.f32 %v5707, 1.0
    %v5714 = vadd.f32 %v5709, 1.0
    %v5720 = vrot.slane %v5710, 4
    %v5721 = vrot.slane %v5711, 4
    %v5722 = vrot.slane %v5712, 4
    %v5723 = vrot.slane %v5713, 4
    %v5724 = vrot.slane %v5714, 4
    %v5730 = vmul.f32 %v5710, %v5720
    %v5731 = vmul.f32 %v5711, %v5721
    %v5732 = vmul.f32 %v5712, %v5722
    %v5733 = vmul.f32 %v5713, %v5723
    %v5734 = vmul.f32 %v5714, %v5724
    %v5740 = vrot.slane %v5730, 2
    %v5741 = vrot.slane %v5731, 2
    %v5742 = vrot.slane %v5732, 2
    %v5743 = vrot.slane %v5733, 2
    %v5744 = vrot.slane %v5734, 2
    %v5750 = vmul.f32 %v5730, %v5740
    %v5751 = vmul.f32 %v5731, %v5741
    %v5752 = vmul.f32 %v5732, %v5742
    %v5753 = vmul.f32 %v5733, %v5743
    %v5754 = vmul.f32 %v5734, %v5744
    %v5760 = vrot.slane %v5750, 1
    %v5761 = vrot.slane %v5751, 1
    %v5762 = vrot.slane %v5752, 1
    %v5763 = vrot.slane %v5753, 1
    %v5764 = vrot.slane %v5754, 1
    %v5770 = vmul.f32 %v5750, %v5760
    %v5771 = vmul.f32 %v5751, %v5761
    %v5772 = vmul.f32 %v5752, %v5762
    %v5773 = vmul.f32 %v5753, %v5763
    %v5774 = vmul.f32 %v5754, %v5764
    %v5775 = vsub.f32 0.0, %v5675
    %v5776 = vsub.f32 0.0, %v5676
    %v5777 = vsub.f32 0.0, %v5677
    %v5778 = vsub.f32 0.0, %v5678
    %v5779 = vsub.f32 0.0, %v5679
    %v5780 = vsub.f32 0.0, %v5680
    %v5781 = vsub.f32 0.0, %v5681
    %v5782 = vsub.f32 0.0, %v5682
    %v5783 = vsub.f32 0.0, %v5683
    %v5784 = vsub.f32 0.0, %v5684
    %v5785 = vsub.f32 0.0, %v5685
    %v5786 = vsub.f32 0.0, %v5686
    %v5787 = vsub.f32 0.0, %v5687
    %v5788 = vsub.f32 0.0, %v5688
    %v5789 = vsub.f32 0.0, %v5689
    %v5790 = vsub.f32 0.0, %v5690
    %v5791 = vsub.f32 0.0, %v5691
    %v5792 = vsub.f32 0.0, %v5692
    %v5793 = vsub.f32 0.0, %v5693
    %v5794 = vsub.f32 0.0, %v5694
    %v5795 = vmul.f32 %v5775, 1.442695
    %v5796 = vpow.pop %v5795
    %v5797 = vmul.f32 %v5776, 1.442695
    %v5798 = vpow.pop %v5797
    %v5799 = vmul.f32 %v5777, 1.442695
    %v5800 = vpow.pop %v5799
    %v5801 = vmul.f32 %v5778, 1.442695
    %v5802 = vpow.pop %v5801
    %v5803 = vmul.f32 %v5779, 1.442695
    %v5804 = vpow.pop %v5803
    %v5805 = vmul.f32 %v5780, 1.442695
    %v5806 = vpow.pop %v5805
    %v5807 = vmul.f32 %v5781, 1.442695
    %v5808 = vpow.pop %v5807
    %v5809 = vmul.f32 %v5782, 1.442695
    %v5810 = vpow.pop %v5809
    %v5811 = vmul.f32 %v5783, 1.442695
    %v5812 = vpow.pop %v5811
    %v5813 = vmul.f32 %v5784, 1.442695
    %v5814 = vpow.pop %v5813
    %v5815 = vmul.f32 %v5785, 1.442695
    %v5816 = vpow.pop %v5815
    %v5817 = vmul.f32 %v5786, 1.442695
    %v5818 = vpow.pop %v5817
    %v5819 = vmul.f32 %v5787, 1.442695
    %v5820 = vpow.pop %v5819
    %v5821 = vmul.f32 %v5788, 1.442695
    %v5822 = vpow.pop %v5821
    %v5823 = vmul.f32 %v5789, 1.442695
    %v5824 = vpow.pop %v5823
    %v5825 = vmul.f32 %v5790, 1.442695
    %v5826 = vpow.pop %v5825
    %v5827 = vmul.f32 %v5791, 1.442695
    %v5828 = vpow.pop %v5827
    %v5829 = vmul.f32 %v5792, 1.442695
    %v5830 = vpow.pop %v5829
    %v5831 = vmul.f32 %v5793, 1.442695
    %v5832 = vpow.pop %v5831
    %v5833 = vmul.f32 %v5794, 1.442695
    %v5834 = vpow.pop %v5833
    %v5835 = vadd.f32 %v5796, 1.0
    %v5836 = vadd.f32 %v5798, 1.0
    %v5837 = vadd.f32 %v5800, 1.0
    %v5838 = vadd.f32 %v5802, 1.0
    %v5839 = vadd.f32 %v5804, 1.0
    %v5840 = vadd.f32 %v5806, 1.0
    %v5841 = vadd.f32 %v5808, 1.0
    %v5842 = vadd.f32 %v5810, 1.0
    %v5843 = vadd.f32 %v5812, 1.0
    %v5844 = vadd.f32 %v5814, 1.0
    %v5845 = vadd.f32 %v5816, 1.0
    %v5846 = vadd.f32 %v5818, 1.0
    %v5847 = vadd.f32 %v5820, 1.0
    %v5848 = vadd.f32 %v5822, 1.0
    %v5849 = vadd.f32 %v5824, 1.0
    %v5850 = vadd.f32 %v5826, 1.0
    %v5851 = vadd.f32 %v5828, 1.0
    %v5852 = vadd.f32 %v5830, 1.0
    %v5853 = vadd.f32 %v5832, 1.0
    %v5854 = vadd.f32 %v5834, 1.0
    %v5855 = vmul.f32 %v5835, %v5837
    %v5856 = vmul.f32 %v5836, %v5838
    %v5857 = vmul.f32 %v5839, %v5841
    %v5858 = vmul.f32 %v5840, %v5842
    %v5859 = vmul.f32 %v5843, %v5845
    %v5860 = vmul.f32 %v5844, %v5846
    %v5861 = vmul.f32 %v5847, %v5849
    %v5862 = vmul.f32 %v5848, %v5850
    %v5863 = vmul.f32 %v5851, %v5853
    %v5864 = vmul.f32 %v5852, %v5854
    %v5865 = vmul.f32 %v5855, %v5856
    %v5866 = vmul.f32 %v5857, %v5858
    %v5867 = vmul.f32 %v5859, %v5860
    %v5868 = vmul.f32 %v5861, %v5862
    %v5869 = vmul.f32 %v5863, %v5864
    %v5875 = vrot.slane %v5865, 4
    %v5876 = vrot.slane %v5866, 4
    %v5877 = vrot.slane %v5867, 4
    %v5878 = vrot.slane %v5868, 4
    %v5879 = vrot.slane %v5869, 4
    %v5885 = vmul.f32 %v5865, %v5875
    %v5886 = vmul.f32 %v5866, %v5876
    %v5887 = vmul.f32 %v5867, %v5877
    %v5888 = vmul.f32 %v5868, %v5878
    %v5889 = vmul.f32 %v5869, %v5879
    %v5895 = vrot.slane %v5885, 2
    %v5896 = vrot.slane %v5886, 2
    %v5897 = vrot.slane %v5887, 2
    %v5898 = vrot.slane %v5888, 2
    %v5899 = vrot.slane %v5889, 2
    %v5905 = vmul.f32 %v5885, %v5895
    %v5906 = vmul.f32 %v5886, %v5896
    %v5907 = vmul.f32 %v5887, %v5897
    %v5908 = vmul.f32 %v5888, %v5898
    %v5909 = vmul.f32 %v5889, %v5899
    %v5915 = vrot.slane %v5905, 1
    %v5916 = vrot.slane %v5906, 1
    %v5917 = vrot.slane %v5907, 1
    %v5918 = vrot.slane %v5908, 1
    %v5919 = vrot.slane %v5909, 1
    %v5925 = vmul.f32 %v5905, %v5915
    %v5926 = vmul.f32 %v5906, %v5916
    %v5927 = vmul.f32 %v5907, %v5917
    %v5928 = vmul.f32 %v5908, %v5918
    %v5929 = vmul.f32 %v5909, %v5919
    %v5930 = vmul.f32 %v5770, %v5925
    %v5931 = vmul.f32 %v5771, %v5926
    %v5932 = vmul.f32 %v5772, %v5927
    %v5933 = vmul.f32 %v5773, %v5928
    %v5934 = vmul.f32 %v5774, %v5929
    %v5935 = vrcp.pop %v5930
    %v5936 = vmul.f32 1.0, %v5935
    %v5937 = vrcp.pop %v5931
    %v5938 = vmul.f32 1.0, %v5937
    %v5939 = vrcp.pop %v5932
    %v5940 = vmul.f32 1.0, %v5939
    %v5941 = vrcp.pop %v5933
    %v5942 = vmul.f32 1.0, %v5941
    %v5943 = vrcp.pop %v5934
    %v5944 = vmul.f32 1.0, %v5943
    %v5945 = vadd.f32 %v5936, %v5938
    %v5946 = vadd.f32 %v5945, %v5940
    %v5947 = vadd.f32 %v5946, %v5942
    %v5948 = vadd.f32 %v5947, %v5944
    %v5949 = vsub.f32 %v5948, %v566
    %v5950 = vmul.f32 %v112, %v5949
    %v5951 = vxor.u32 %v5950, 2147483648
    %v5952 = vmul.f32 %v5951, 1.442695
    %v5953 = vpow.pop %v5952
    %v5954 = vadd.f32 %v5953, 1.0
    %v5955 = vrcp.pop %v5954
    %v5956 = vmul.f32 1.0, %v5955
    %v5957 = vtanh.pop %v5950
    %v5959 = vrot.slane %v5164, 1
    %v5961 = vmul.f32 %v5956, %v5959
    %5963 = vrot.lane.b32.xlu0 %v5957, 96
    %v5964 = vpop.permute.xlu0 %5963
    %v5966 = vmul.f32 %v5956, %v5964
    %5968 = vrot.lane.b32.xlu0 %v5966, 96
    %v5969 = vpop.permute.xlu0 %5968
    %v5971 = vadd.f32 %v5961, %v5969
    %v5972 = vtanh.pop %v5971
    %5974 = vrot.lane.b32.xlu0 %v5972, 96
    %v5975 = vpop.permute.xlu0 %5974
    %v5977 = vmul.f32 %v5956, %v5975
    %v5978 = vlaneseq
    %v5979 = vshrl.u32 %v5978, 7
    %v5980 = vsub.s32 0, %v5979
    %v5981 = vrot.slane %v5977, %v5980
    %v5982 = vmul.f32 %v967, %v5981
    %v5983 = vadd.f32 %v5615, %v5982
    %v5984 = vlaneseq
    %v5985 = vshrl.u32 %v5984, 7
    %v5986 = vsub.s32 0, %v5985
    %v5987 = vrot.slane %v5971, %v5986
    %v5988 = vmul.f32 %v967, %v5987
    %v5989 = vadd.f32 %v5621, %v5988
    %5991 = vrot.lane.b32.xlu0 %v5983, 32
    %v5992 = vpop.permute.xlu0 %5991
    %5994 = vst.msk [vmem:[#allocation2] sm:$0x3] %vm984, %v5992
    %5995 = vst.msk [vmem:[#allocation9] sm:$0x3] %vm984, %v5989
    %s5996 = scalar_lea.vmem [#allocation8], 12
    %5997 = vst.msk [vmem:[%s5996] sm:$0x3] %vm984, %v5992
    %v5998 = vld [vmem:[#allocation2] sm:$0x3]
    %v5999 = vld [vmem:[#allocation9] sm:$0x3]
    %v6001 = vsel %vm134, %v5998, 0
    %6003 = vmatprep.subr.mxu0 0.0
    %6004 = vmatpush1.xpose.msra.mxu0 0.0
    %6005 = vmatprep.subr.mxu0 0.0
    %6006 = vmatpush1.xpose.msra.mxu0 0.0
    %6007 = vmatprep.subr.mxu0 0.0
    %6008 = vmatpush1.xpose.msra.mxu0 0.0
    %6009 = vmatprep.subr.mxu0 0.0
    %6010 = vmatpush1.xpose.msra.mxu0 0.0
    %6011 = vmatprep.subr.mxu0 0.0
    %6012 = vmatpush1.xpose.msra.mxu0 0.0
    %6013 = vmatprep.subr.mxu0 0.0
    %6014 = vmatpush1.xpose.msra.mxu0 0.0
    %6015 = vmatprep.subr.mxu0 0.0
    %6016 = vmatpush1.xpose.msra.mxu0 0.0
    %6017 = vmatprep.subr.mxu0 0.0
    %6018 = vmatpush1.xpose.msra.mxu0 0.0
    %6019 = vmatprep.subr.mxu0 0.0
    %6020 = vmatpush1.xpose.msra.mxu0 0.0
    %6021 = vmatprep.subr.mxu0 0.0
    %6022 = vmatpush1.xpose.msra.mxu0 0.0
    %6023 = vmatprep.subr.mxu0 0.0
    %6024 = vmatpush1.xpose.msra.mxu0 0.0
    %6025 = vmatprep.subr.mxu0 0.0
    %6026 = vmatpush1.xpose.msra.mxu0 0.0
    %6027 = vmatprep.subr.mxu0 0.0
    %6028 = vmatpush1.xpose.msra.mxu0 0.0
    %6029 = vmatprep.subr.mxu0 0.0
    %6030 = vmatpush1.xpose.msra.mxu0 0.0
    %6031 = vmatprep.subr.mxu0 0.0
    %6032 = vmatpush1.xpose.msra.mxu0 0.0
    %6033 = vmatprep.subr.mxu0 0.0
    %6034 = vmatpush1.xpose.msra.mxu0 %v6001
    %6035 = vmatprep.subr.mxu0 0.0
    %6036 = vmatpush2.xpose.msra.mxu0 0.0
    %6037 = vmatprep.subr.mxu0 0.0
    %6038 = vmatpush2.xpose.msra.mxu0 0.0
    %6039 = vmatprep.subr.mxu0 0.0
    %6040 = vmatpush2.xpose.msra.mxu0 0.0
    %6041 = vmatprep.subr.mxu0 0.0
    %6042 = vmatpush2.xpose.msra.mxu0 0.0
    %6043 = vmatprep.subr.mxu0 0.0
    %6044 = vmatpush2.xpose.msra.mxu0 0.0
    %6045 = vmatprep.subr.mxu0 0.0
    %6046 = vmatpush2.xpose.msra.mxu0 0.0
    %6047 = vmatprep.subr.mxu0 0.0
    %6048 = vmatpush2.xpose.msra.mxu0 0.0
    %6049 = vmatprep.subr.mxu0 0.0
    %6050 = vmatpush2.xpose.msra.mxu0 0.0
    %6051 = vmatprep.subr.mxu0 0.0
    %6052 = vmatpush2.xpose.msra.mxu0 0.0
    %6053 = vmatprep.subr.mxu0 0.0
    %6054 = vmatpush2.xpose.msra.mxu0 0.0
    %6055 = vmatprep.subr.mxu0 0.0
    %6056 = vmatpush2.xpose.msra.mxu0 0.0
    %6057 = vmatprep.subr.mxu0 0.0
    %6058 = vmatpush2.xpose.msra.mxu0 0.0
    %6059 = vmatprep.subr.mxu0 0.0
    %6060 = vmatpush2.xpose.msra.mxu0 0.0
    %6061 = vmatprep.subr.mxu0 0.0
    %6062 = vmatpush2.xpose.msra.mxu0 0.0
    %6063 = vmatprep.subr.mxu0 0.0
    %6064 = vmatpush2.xpose.msra.mxu0 0.0
    %6065 = vmatprep.subr.mxu0 0.0
    %6066 = vmatpush2.xpose.msra.mxu0 0.0
    %6067 = vmatprep.mubr.f32.mxu0 0.0
    %6068 = vmatmul.mubr.f32.gmra.mxu0 %v136
    %v6069 = vpop.f32.mrf.mxu0
    %v6070 = vadd.f32 0.0, %v6069
    %v6071 = vpop.f32.mrf.mxu0
    %6072 = vmatprep.mubr.f32.mxu0 0.0
    %6073 = vmatmul.mubr.f32.gmra.mxu0 %v139
    %v6074 = vpop.f32.mrf.mxu0
    %v6075 = vadd.f32 0.0, %v6074
    %v6076 = vpop.f32.mrf.mxu0
    %6077 = vmatprep.mubr.f32.mxu0 0.0
    %6078 = vmatmul.mubr.f32.gmra.mxu0 %v142
    %v6079 = vpop.f32.mrf.mxu0
    %v6080 = vadd.f32 0.0, %v6079
    %v6081 = vpop.f32.mrf.mxu0
    %6082 = vmatprep.mubr.f32.mxu0 0.0
    %6083 = vmatmul.mubr.f32.gmra.mxu0 %v145
    %v6084 = vpop.f32.mrf.mxu0
    %v6085 = vadd.f32 0.0, %v6084
    %v6086 = vpop.f32.mrf.mxu0
    %6087 = vdwg.mxu0
    %s6088 = scalar_lea.vmem %s0, 112
    %v6089 = vld [vmem:[%s6088] sm:$0xff]
    %6091 = vset.pattern.permute.xlu0 0
    %6092 = vperm.xlu0 %6091, %v6089
    %v6093 = vpop.permute.xlu0 %6092
    %v6095 = vmul.f32 %v6093, %v62
    %v6096 = vmul.f32 %v6093, %v63
    %v6097 = vmul.f32 %v6093, %v64
    %v6098 = vmul.f32 %v6093, %v65
    %v6099 = vmul.f32 %v6093, %v66
    %v6100 = vsub.f32 %v6095, %v67
    %v6101 = vsub.f32 %v6096, %v68
    %v6102 = vsub.f32 %v6097, %v69
    %v6103 = vsub.f32 %v6098, %v70
    %v6104 = vsub.f32 %v6099, %v71
    %6106 = vset.pattern.permute.xlu0 0
    %6107 = vperm.xlu0 %6106, %v6070
    %v6108 = vpop.permute.xlu0 %6107
    %6111 = vset.pattern.permute.xlu0 0
    %6112 = vperm.xlu0 %6111, %v6075
    %v6113 = vpop.permute.xlu0 %6112
    %6116 = vset.pattern.permute.xlu0 0
    %6117 = vperm.xlu0 %6116, %v6080
    %v6118 = vpop.permute.xlu0 %6117
    %6121 = vset.pattern.permute.xlu0 0
    %6122 = vperm.xlu0 %6121, %v6085
    %v6123 = vpop.permute.xlu0 %6122
    %v6125 = vmul.f32 %v6108, %v72
    %v6126 = vmul.f32 %v6113, %v73
    %v6127 = vmul.f32 %v6118, %v74
    %v6128 = vmul.f32 %v6123, %v75
    %v6129 = vmul.f32 %v6108, %v76
    %v6130 = vmul.f32 %v6113, %v77
    %v6131 = vmul.f32 %v6118, %v78
    %v6132 = vmul.f32 %v6123, %v79
    %v6133 = vmul.f32 %v6108, %v80
    %v6134 = vmul.f32 %v6113, %v81
    %v6135 = vmul.f32 %v6118, %v82
    %v6136 = vmul.f32 %v6123, %v83
    %v6137 = vmul.f32 %v6108, %v84
    %v6138 = vmul.f32 %v6113, %v85
    %v6139 = vmul.f32 %v6118, %v86
    %v6140 = vmul.f32 %v6123, %v87
    %v6141 = vmul.f32 %v6108, %v88
    %v6142 = vmul.f32 %v6113, %v89
    %v6143 = vmul.f32 %v6118, %v90
    %v6144 = vmul.f32 %v6123, %v91
    %v6145 = vsub.f32 %v6125, %v92
    %v6146 = vsub.f32 %v6126, %v93
    %v6147 = vsub.f32 %v6127, %v94
    %v6148 = vsub.f32 %v6128, %v95
    %v6149 = vsub.f32 %v6129, %v96
    %v6150 = vsub.f32 %v6130, %v97
    %v6151 = vsub.f32 %v6131, %v98
    %v6152 = vsub.f32 %v6132, %v99
    %v6153 = vsub.f32 %v6133, %v100
    %v6154 = vsub.f32 %v6134, %v101
    %v6155 = vsub.f32 %v6135, %v102
    %v6156 = vsub.f32 %v6136, %v103
    %v6157 = vsub.f32 %v6137, %v104
    %v6158 = vsub.f32 %v6138, %v105
    %v6159 = vsub.f32 %v6139, %v106
    %v6160 = vsub.f32 %v6140, %v107
    %v6161 = vsub.f32 %v6141, %v108
    %v6162 = vsub.f32 %v6142, %v109
    %v6163 = vsub.f32 %v6143, %v110
    %v6164 = vsub.f32 %v6144, %v111
    %v6165 = vsub.f32 0.0, %v6100
    %v6166 = vsub.f32 0.0, %v6101
    %v6167 = vsub.f32 0.0, %v6102
    %v6168 = vsub.f32 0.0, %v6103
    %v6169 = vsub.f32 0.0, %v6104
    %v6170 = vmul.f32 %v6165, 1.442695
    %v6171 = vpow.pop %v6170
    %v6172 = vmul.f32 %v6166, 1.442695
    %v6173 = vpow.pop %v6172
    %v6174 = vmul.f32 %v6167, 1.442695
    %v6175 = vpow.pop %v6174
    %v6176 = vmul.f32 %v6168, 1.442695
    %v6177 = vpow.pop %v6176
    %v6178 = vmul.f32 %v6169, 1.442695
    %v6179 = vpow.pop %v6178
    %v6180 = vadd.f32 %v6171, 1.0
    %v6181 = vadd.f32 %v6173, 1.0
    %v6182 = vadd.f32 %v6175, 1.0
    %v6183 = vadd.f32 %v6177, 1.0
    %v6184 = vadd.f32 %v6179, 1.0
    %v6190 = vrot.slane %v6180, 4
    %v6191 = vrot.slane %v6181, 4
    %v6192 = vrot.slane %v6182, 4
    %v6193 = vrot.slane %v6183, 4
    %v6194 = vrot.slane %v6184, 4
    %v6200 = vmul.f32 %v6180, %v6190
    %v6201 = vmul.f32 %v6181, %v6191
    %v6202 = vmul.f32 %v6182, %v6192
    %v6203 = vmul.f32 %v6183, %v6193
    %v6204 = vmul.f32 %v6184, %v6194
    %v6210 = vrot.slane %v6200, 2
    %v6211 = vrot.slane %v6201, 2
    %v6212 = vrot.slane %v6202, 2
    %v6213 = vrot.slane %v6203, 2
    %v6214 = vrot.slane %v6204, 2
    %v6220 = vmul.f32 %v6200, %v6210
    %v6221 = vmul.f32 %v6201, %v6211
    %v6222 = vmul.f32 %v6202, %v6212
    %v6223 = vmul.f32 %v6203, %v6213
    %v6224 = vmul.f32 %v6204, %v6214
    %v6230 = vrot.slane %v6220, 1
    %v6231 = vrot.slane %v6221, 1
    %v6232 = vrot.slane %v6222, 1
    %v6233 = vrot.slane %v6223, 1
    %v6234 = vrot.slane %v6224, 1
    %v6240 = vmul.f32 %v6220, %v6230
    %v6241 = vmul.f32 %v6221, %v6231
    %v6242 = vmul.f32 %v6222, %v6232
    %v6243 = vmul.f32 %v6223, %v6233
    %v6244 = vmul.f32 %v6224, %v6234
    %v6245 = vsub.f32 0.0, %v6145
    %v6246 = vsub.f32 0.0, %v6146
    %v6247 = vsub.f32 0.0, %v6147
    %v6248 = vsub.f32 0.0, %v6148
    %v6249 = vsub.f32 0.0, %v6149
    %v6250 = vsub.f32 0.0, %v6150
    %v6251 = vsub.f32 0.0, %v6151
    %v6252 = vsub.f32 0.0, %v6152
    %v6253 = vsub.f32 0.0, %v6153
    %v6254 = vsub.f32 0.0, %v6154
    %v6255 = vsub.f32 0.0, %v6155
    %v6256 = vsub.f32 0.0, %v6156
    %v6257 = vsub.f32 0.0, %v6157
    %v6258 = vsub.f32 0.0, %v6158
    %v6259 = vsub.f32 0.0, %v6159
    %v6260 = vsub.f32 0.0, %v6160
    %v6261 = vsub.f32 0.0, %v6161
    %v6262 = vsub.f32 0.0, %v6162
    %v6263 = vsub.f32 0.0, %v6163
    %v6264 = vsub.f32 0.0, %v6164
    %v6265 = vmul.f32 %v6245, 1.442695
    %v6266 = vpow.pop %v6265
    %v6267 = vmul.f32 %v6246, 1.442695
    %v6268 = vpow.pop %v6267
    %v6269 = vmul.f32 %v6247, 1.442695
    %v6270 = vpow.pop %v6269
    %v6271 = vmul.f32 %v6248, 1.442695
    %v6272 = vpow.pop %v6271
    %v6273 = vmul.f32 %v6249, 1.442695
    %v6274 = vpow.pop %v6273
    %v6275 = vmul.f32 %v6250, 1.442695
    %v6276 = vpow.pop %v6275
    %v6277 = vmul.f32 %v6251, 1.442695
    %v6278 = vpow.pop %v6277
    %v6279 = vmul.f32 %v6252, 1.442695
    %v6280 = vpow.pop %v6279
    %v6281 = vmul.f32 %v6253, 1.442695
    %v6282 = vpow.pop %v6281
    %v6283 = vmul.f32 %v6254, 1.442695
    %v6284 = vpow.pop %v6283
    %v6285 = vmul.f32 %v6255, 1.442695
    %v6286 = vpow.pop %v6285
    %v6287 = vmul.f32 %v6256, 1.442695
    %v6288 = vpow.pop %v6287
    %v6289 = vmul.f32 %v6257, 1.442695
    %v6290 = vpow.pop %v6289
    %v6291 = vmul.f32 %v6258, 1.442695
    %v6292 = vpow.pop %v6291
    %v6293 = vmul.f32 %v6259, 1.442695
    %v6294 = vpow.pop %v6293
    %v6295 = vmul.f32 %v6260, 1.442695
    %v6296 = vpow.pop %v6295
    %v6297 = vmul.f32 %v6261, 1.442695
    %v6298 = vpow.pop %v6297
    %v6299 = vmul.f32 %v6262, 1.442695
    %v6300 = vpow.pop %v6299
    %v6301 = vmul.f32 %v6263, 1.442695
    %v6302 = vpow.pop %v6301
    %v6303 = vmul.f32 %v6264, 1.442695
    %v6304 = vpow.pop %v6303
    %v6305 = vadd.f32 %v6266, 1.0
    %v6306 = vadd.f32 %v6268, 1.0
    %v6307 = vadd.f32 %v6270, 1.0
    %v6308 = vadd.f32 %v6272, 1.0
    %v6309 = vadd.f32 %v6274, 1.0
    %v6310 = vadd.f32 %v6276, 1.0
    %v6311 = vadd.f32 %v6278, 1.0
    %v6312 = vadd.f32 %v6280, 1.0
    %v6313 = vadd.f32 %v6282, 1.0
    %v6314 = vadd.f32 %v6284, 1.0
    %v6315 = vadd.f32 %v6286, 1.0
    %v6316 = vadd.f32 %v6288, 1.0
    %v6317 = vadd.f32 %v6290, 1.0
    %v6318 = vadd.f32 %v6292, 1.0
    %v6319 = vadd.f32 %v6294, 1.0
    %v6320 = vadd.f32 %v6296, 1.0
    %v6321 = vadd.f32 %v6298, 1.0
    %v6322 = vadd.f32 %v6300, 1.0
    %v6323 = vadd.f32 %v6302, 1.0
    %v6324 = vadd.f32 %v6304, 1.0
    %v6325 = vmul.f32 %v6305, %v6307
    %v6326 = vmul.f32 %v6306, %v6308
    %v6327 = vmul.f32 %v6309, %v6311
    %v6328 = vmul.f32 %v6310, %v6312
    %v6329 = vmul.f32 %v6313, %v6315
    %v6330 = vmul.f32 %v6314, %v6316
    %v6331 = vmul.f32 %v6317, %v6319
    %v6332 = vmul.f32 %v6318, %v6320
    %v6333 = vmul.f32 %v6321, %v6323
    %v6334 = vmul.f32 %v6322, %v6324
    %v6335 = vmul.f32 %v6325, %v6326
    %v6336 = vmul.f32 %v6327, %v6328
    %v6337 = vmul.f32 %v6329, %v6330
    %v6338 = vmul.f32 %v6331, %v6332
    %v6339 = vmul.f32 %v6333, %v6334
    %v6345 = vrot.slane %v6335, 4
    %v6346 = vrot.slane %v6336, 4
    %v6347 = vrot.slane %v6337, 4
    %v6348 = vrot.slane %v6338, 4
    %v6349 = vrot.slane %v6339, 4
    %v6355 = vmul.f32 %v6335, %v6345
    %v6356 = vmul.f32 %v6336, %v6346
    %v6357 = vmul.f32 %v6337, %v6347
    %v6358 = vmul.f32 %v6338, %v6348
    %v6359 = vmul.f32 %v6339, %v6349
    %v6365 = vrot.slane %v6355, 2
    %v6366 = vrot.slane %v6356, 2
    %v6367 = vrot.slane %v6357, 2
    %v6368 = vrot.slane %v6358, 2
    %v6369 = vrot.slane %v6359, 2
    %v6375 = vmul.f32 %v6355, %v6365
    %v6376 = vmul.f32 %v6356, %v6366
    %v6377 = vmul.f32 %v6357, %v6367
    %v6378 = vmul.f32 %v6358, %v6368
    %v6379 = vmul.f32 %v6359, %v6369
    %v6385 = vrot.slane %v6375, 1
    %v6386 = vrot.slane %v6376, 1
    %v6387 = vrot.slane %v6377, 1
    %v6388 = vrot.slane %v6378, 1
    %v6389 = vrot.slane %v6379, 1
    %v6395 = vmul.f32 %v6375, %v6385
    %v6396 = vmul.f32 %v6376, %v6386
    %v6397 = vmul.f32 %v6377, %v6387
    %v6398 = vmul.f32 %v6378, %v6388
    %v6399 = vmul.f32 %v6379, %v6389
    %v6400 = vmul.f32 %v6240, %v6395
    %v6401 = vmul.f32 %v6241, %v6396
    %v6402 = vmul.f32 %v6242, %v6397
    %v6403 = vmul.f32 %v6243, %v6398
    %v6404 = vmul.f32 %v6244, %v6399
    %v6405 = vrcp.pop %v6400
    %v6406 = vmul.f32 1.0, %v6405
    %v6407 = vrcp.pop %v6401
    %v6408 = vmul.f32 1.0, %v6407
    %v6409 = vrcp.pop %v6402
    %v6410 = vmul.f32 1.0, %v6409
    %v6411 = vrcp.pop %v6403
    %v6412 = vmul.f32 1.0, %v6411
    %v6413 = vrcp.pop %v6404
    %v6414 = vmul.f32 1.0, %v6413
    %v6415 = vadd.f32 %v6406, %v6408
    %v6416 = vadd.f32 %v6415, %v6410
    %v6417 = vadd.f32 %v6416, %v6412
    %v6418 = vadd.f32 %v6417, %v6414
    %v6419 = vsub.f32 %v6418, %v566
    %v6420 = vmul.f32 %v112, %v6419
    %v6421 = vxor.u32 %v6420, 2147483648
    %v6422 = vmul.f32 %v6421, 1.442695
    %v6423 = vpow.pop %v6422
    %v6424 = vadd.f32 %v6423, 1.0
    %v6425 = vrcp.pop %v6424
    %v6426 = vmul.f32 1.0, %v6425
    %v6427 = vtanh.pop %v6420
    %v6428 = vmul.f32 %v6426, %v5999
    %6430 = vrot.lane.b32.xlu0 %v6427, 96
    %v6431 = vpop.permute.xlu0 %6430
    %v6433 = vmul.f32 %v6426, %v6431
    %6435 = vrot.lane.b32.xlu0 %v6433, 96
    %v6436 = vpop.permute.xlu0 %6435
    %v6438 = vadd.f32 %v6428, %v6436
    %v6439 = vtanh.pop %v6438
    %6441 = vrot.lane.b32.xlu0 %v6439, 96
    %v6442 = vpop.permute.xlu0 %6441
    %v6444 = vmul.f32 %v6426, %v6442
    %v6445 = vlaneseq
    %v6446 = vshrl.u32 %v6445, 7
    %v6447 = vsub.s32 0, %v6446
    %v6448 = vrot.slane %v6444, %v6447
    %v6449 = vmul.f32 %v596, %v6448
    %v6450 = vadd.f32 %v6449, 0.0
    %v6451 = vlaneseq
    %v6452 = vshrl.u32 %v6451, 7
    %v6453 = vsub.s32 0, %v6452
    %v6454 = vrot.slane %v6438, %v6453
    %v6455 = vmul.f32 %v596, %v6454
    %v6456 = vadd.f32 %v6455, 0.0
    %s6457 = scalar_lea.vmem %s0, 120
    %v6458 = vld [vmem:[%s6457] sm:$0xff]
    %6460 = vset.pattern.permute.xlu0 0
    %6461 = vperm.xlu0 %6460, %v6458
    %v6462 = vpop.permute.xlu0 %6461
    %v6464 = vmul.f32 %v6462, %v62
    %v6465 = vmul.f32 %v6462, %v63
    %v6466 = vmul.f32 %v6462, %v64
    %v6467 = vmul.f32 %v6462, %v65
    %v6468 = vmul.f32 %v6462, %v66
    %v6469 = vsub.f32 %v6464, %v67
    %v6470 = vsub.f32 %v6465, %v68
    %v6471 = vsub.f32 %v6466, %v69
    %v6472 = vsub.f32 %v6467, %v70
    %v6473 = vsub.f32 %v6468, %v71
    %6474 = vset.pattern.permute.xlu0 1
    %6475 = vperm.xlu0 %6474, %v6070
    %v6476 = vpop.permute.xlu0 %6475
    %6478 = vset.pattern.permute.xlu0 1
    %6479 = vperm.xlu0 %6478, %v6075
    %v6480 = vpop.permute.xlu0 %6479
    %6482 = vset.pattern.permute.xlu0 1
    %6483 = vperm.xlu0 %6482, %v6080
    %v6484 = vpop.permute.xlu0 %6483
    %6486 = vset.pattern.permute.xlu0 1
    %6487 = vperm.xlu0 %6486, %v6085
    %v6488 = vpop.permute.xlu0 %6487
    %v6490 = vmul.f32 %v6476, %v72
    %v6491 = vmul.f32 %v6480, %v73
    %v6492 = vmul.f32 %v6484, %v74
    %v6493 = vmul.f32 %v6488, %v75
    %v6494 = vmul.f32 %v6476, %v76
    %v6495 = vmul.f32 %v6480, %v77
    %v6496 = vmul.f32 %v6484, %v78
    %v6497 = vmul.f32 %v6488, %v79
    %v6498 = vmul.f32 %v6476, %v80
    %v6499 = vmul.f32 %v6480, %v81
    %v6500 = vmul.f32 %v6484, %v82
    %v6501 = vmul.f32 %v6488, %v83
    %v6502 = vmul.f32 %v6476, %v84
    %v6503 = vmul.f32 %v6480, %v85
    %v6504 = vmul.f32 %v6484, %v86
    %v6505 = vmul.f32 %v6488, %v87
    %v6506 = vmul.f32 %v6476, %v88
    %v6507 = vmul.f32 %v6480, %v89
    %v6508 = vmul.f32 %v6484, %v90
    %v6509 = vmul.f32 %v6488, %v91
    %v6510 = vsub.f32 %v6490, %v92
    %v6511 = vsub.f32 %v6491, %v93
    %v6512 = vsub.f32 %v6492, %v94
    %v6513 = vsub.f32 %v6493, %v95
    %v6514 = vsub.f32 %v6494, %v96
    %v6515 = vsub.f32 %v6495, %v97
    %v6516 = vsub.f32 %v6496, %v98
    %v6517 = vsub.f32 %v6497, %v99
    %v6518 = vsub.f32 %v6498, %v100
    %v6519 = vsub.f32 %v6499, %v101
    %v6520 = vsub.f32 %v6500, %v102
    %v6521 = vsub.f32 %v6501, %v103
    %v6522 = vsub.f32 %v6502, %v104
    %v6523 = vsub.f32 %v6503, %v105
    %v6524 = vsub.f32 %v6504, %v106
    %v6525 = vsub.f32 %v6505, %v107
    %v6526 = vsub.f32 %v6506, %v108
    %v6527 = vsub.f32 %v6507, %v109
    %v6528 = vsub.f32 %v6508, %v110
    %v6529 = vsub.f32 %v6509, %v111
    %v6530 = vsub.f32 0.0, %v6469
    %v6531 = vsub.f32 0.0, %v6470
    %v6532 = vsub.f32 0.0, %v6471
    %v6533 = vsub.f32 0.0, %v6472
    %v6534 = vsub.f32 0.0, %v6473
    %v6535 = vmul.f32 %v6530, 1.442695
    %v6536 = vpow.pop %v6535
    %v6537 = vmul.f32 %v6531, 1.442695
    %v6538 = vpow.pop %v6537
    %v6539 = vmul.f32 %v6532, 1.442695
    %v6540 = vpow.pop %v6539
    %v6541 = vmul.f32 %v6533, 1.442695
    %v6542 = vpow.pop %v6541
    %v6543 = vmul.f32 %v6534, 1.442695
    %v6544 = vpow.pop %v6543
    %v6545 = vadd.f32 %v6536, 1.0
    %v6546 = vadd.f32 %v6538, 1.0
    %v6547 = vadd.f32 %v6540, 1.0
    %v6548 = vadd.f32 %v6542, 1.0
    %v6549 = vadd.f32 %v6544, 1.0
    %v6555 = vrot.slane %v6545, 4
    %v6556 = vrot.slane %v6546, 4
    %v6557 = vrot.slane %v6547, 4
    %v6558 = vrot.slane %v6548, 4
    %v6559 = vrot.slane %v6549, 4
    %v6565 = vmul.f32 %v6545, %v6555
    %v6566 = vmul.f32 %v6546, %v6556
    %v6567 = vmul.f32 %v6547, %v6557
    %v6568 = vmul.f32 %v6548, %v6558
    %v6569 = vmul.f32 %v6549, %v6559
    %v6575 = vrot.slane %v6565, 2
    %v6576 = vrot.slane %v6566, 2
    %v6577 = vrot.slane %v6567, 2
    %v6578 = vrot.slane %v6568, 2
    %v6579 = vrot.slane %v6569, 2
    %v6585 = vmul.f32 %v6565, %v6575
    %v6586 = vmul.f32 %v6566, %v6576
    %v6587 = vmul.f32 %v6567, %v6577
    %v6588 = vmul.f32 %v6568, %v6578
    %v6589 = vmul.f32 %v6569, %v6579
    %v6595 = vrot.slane %v6585, 1
    %v6596 = vrot.slane %v6586, 1
    %v6597 = vrot.slane %v6587, 1
    %v6598 = vrot.slane %v6588, 1
    %v6599 = vrot.slane %v6589, 1
    %v6605 = vmul.f32 %v6585, %v6595
    %v6606 = vmul.f32 %v6586, %v6596
    %v6607 = vmul.f32 %v6587, %v6597
    %v6608 = vmul.f32 %v6588, %v6598
    %v6609 = vmul.f32 %v6589, %v6599
    %v6610 = vsub.f32 0.0, %v6510
    %v6611 = vsub.f32 0.0, %v6511
    %v6612 = vsub.f32 0.0, %v6512
    %v6613 = vsub.f32 0.0, %v6513
    %v6614 = vsub.f32 0.0, %v6514
    %v6615 = vsub.f32 0.0, %v6515
    %v6616 = vsub.f32 0.0, %v6516
    %v6617 = vsub.f32 0.0, %v6517
    %v6618 = vsub.f32 0.0, %v6518
    %v6619 = vsub.f32 0.0, %v6519
    %v6620 = vsub.f32 0.0, %v6520
    %v6621 = vsub.f32 0.0, %v6521
    %v6622 = vsub.f32 0.0, %v6522
    %v6623 = vsub.f32 0.0, %v6523
    %v6624 = vsub.f32 0.0, %v6524
    %v6625 = vsub.f32 0.0, %v6525
    %v6626 = vsub.f32 0.0, %v6526
    %v6627 = vsub.f32 0.0, %v6527
    %v6628 = vsub.f32 0.0, %v6528
    %v6629 = vsub.f32 0.0, %v6529
    %v6630 = vmul.f32 %v6610, 1.442695
    %v6631 = vpow.pop %v6630
    %v6632 = vmul.f32 %v6611, 1.442695
    %v6633 = vpow.pop %v6632
    %v6634 = vmul.f32 %v6612, 1.442695
    %v6635 = vpow.pop %v6634
    %v6636 = vmul.f32 %v6613, 1.442695
    %v6637 = vpow.pop %v6636
    %v6638 = vmul.f32 %v6614, 1.442695
    %v6639 = vpow.pop %v6638
    %v6640 = vmul.f32 %v6615, 1.442695
    %v6641 = vpow.pop %v6640
    %v6642 = vmul.f32 %v6616, 1.442695
    %v6643 = vpow.pop %v6642
    %v6644 = vmul.f32 %v6617, 1.442695
    %v6645 = vpow.pop %v6644
    %v6646 = vmul.f32 %v6618, 1.442695
    %v6647 = vpow.pop %v6646
    %v6648 = vmul.f32 %v6619, 1.442695
    %v6649 = vpow.pop %v6648
    %v6650 = vmul.f32 %v6620, 1.442695
    %v6651 = vpow.pop %v6650
    %v6652 = vmul.f32 %v6621, 1.442695
    %v6653 = vpow.pop %v6652
    %v6654 = vmul.f32 %v6622, 1.442695
    %v6655 = vpow.pop %v6654
    %v6656 = vmul.f32 %v6623, 1.442695
    %v6657 = vpow.pop %v6656
    %v6658 = vmul.f32 %v6624, 1.442695
    %v6659 = vpow.pop %v6658
    %v6660 = vmul.f32 %v6625, 1.442695
    %v6661 = vpow.pop %v6660
    %v6662 = vmul.f32 %v6626, 1.442695
    %v6663 = vpow.pop %v6662
    %v6664 = vmul.f32 %v6627, 1.442695
    %v6665 = vpow.pop %v6664
    %v6666 = vmul.f32 %v6628, 1.442695
    %v6667 = vpow.pop %v6666
    %v6668 = vmul.f32 %v6629, 1.442695
    %v6669 = vpow.pop %v6668
    %v6670 = vadd.f32 %v6631, 1.0
    %v6671 = vadd.f32 %v6633, 1.0
    %v6672 = vadd.f32 %v6635, 1.0
    %v6673 = vadd.f32 %v6637, 1.0
    %v6674 = vadd.f32 %v6639, 1.0
    %v6675 = vadd.f32 %v6641, 1.0
    %v6676 = vadd.f32 %v6643, 1.0
    %v6677 = vadd.f32 %v6645, 1.0
    %v6678 = vadd.f32 %v6647, 1.0
    %v6679 = vadd.f32 %v6649, 1.0
    %v6680 = vadd.f32 %v6651, 1.0
    %v6681 = vadd.f32 %v6653, 1.0
    %v6682 = vadd.f32 %v6655, 1.0
    %v6683 = vadd.f32 %v6657, 1.0
    %v6684 = vadd.f32 %v6659, 1.0
    %v6685 = vadd.f32 %v6661, 1.0
    %v6686 = vadd.f32 %v6663, 1.0
    %v6687 = vadd.f32 %v6665, 1.0
    %v6688 = vadd.f32 %v6667, 1.0
    %v6689 = vadd.f32 %v6669, 1.0
    %v6690 = vmul.f32 %v6670, %v6672
    %v6691 = vmul.f32 %v6671, %v6673
    %v6692 = vmul.f32 %v6674, %v6676
    %v6693 = vmul.f32 %v6675, %v6677
    %v6694 = vmul.f32 %v6678, %v6680
    %v6695 = vmul.f32 %v6679, %v6681
    %v6696 = vmul.f32 %v6682, %v6684
    %v6697 = vmul.f32 %v6683, %v6685
    %v6698 = vmul.f32 %v6686, %v6688
    %v6699 = vmul.f32 %v6687, %v6689
    %v6700 = vmul.f32 %v6690, %v6691
    %v6701 = vmul.f32 %v6692, %v6693
    %v6702 = vmul.f32 %v6694, %v6695
    %v6703 = vmul.f32 %v6696, %v6697
    %v6704 = vmul.f32 %v6698, %v6699
    %v6710 = vrot.slane %v6700, 4
    %v6711 = vrot.slane %v6701, 4
    %v6712 = vrot.slane %v6702, 4
    %v6713 = vrot.slane %v6703, 4
    %v6714 = vrot.slane %v6704, 4
    %v6720 = vmul.f32 %v6700, %v6710
    %v6721 = vmul.f32 %v6701, %v6711
    %v6722 = vmul.f32 %v6702, %v6712
    %v6723 = vmul.f32 %v6703, %v6713
    %v6724 = vmul.f32 %v6704, %v6714
    %v6730 = vrot.slane %v6720, 2
    %v6731 = vrot.slane %v6721, 2
    %v6732 = vrot.slane %v6722, 2
    %v6733 = vrot.slane %v6723, 2
    %v6734 = vrot.slane %v6724, 2
    %v6740 = vmul.f32 %v6720, %v6730
    %v6741 = vmul.f32 %v6721, %v6731
    %v6742 = vmul.f32 %v6722, %v6732
    %v6743 = vmul.f32 %v6723, %v6733
    %v6744 = vmul.f32 %v6724, %v6734
    %v6750 = vrot.slane %v6740, 1
    %v6751 = vrot.slane %v6741, 1
    %v6752 = vrot.slane %v6742, 1
    %v6753 = vrot.slane %v6743, 1
    %v6754 = vrot.slane %v6744, 1
    %v6760 = vmul.f32 %v6740, %v6750
    %v6761 = vmul.f32 %v6741, %v6751
    %v6762 = vmul.f32 %v6742, %v6752
    %v6763 = vmul.f32 %v6743, %v6753
    %v6764 = vmul.f32 %v6744, %v6754
    %v6765 = vmul.f32 %v6605, %v6760
    %v6766 = vmul.f32 %v6606, %v6761
    %v6767 = vmul.f32 %v6607, %v6762
    %v6768 = vmul.f32 %v6608, %v6763
    %v6769 = vmul.f32 %v6609, %v6764
    %v6770 = vrcp.pop %v6765
    %v6771 = vmul.f32 1.0, %v6770
    %v6772 = vrcp.pop %v6766
    %v6773 = vmul.f32 1.0, %v6772
    %v6774 = vrcp.pop %v6767
    %v6775 = vmul.f32 1.0, %v6774
    %v6776 = vrcp.pop %v6768
    %v6777 = vmul.f32 1.0, %v6776
    %v6778 = vrcp.pop %v6769
    %v6779 = vmul.f32 1.0, %v6778
    %v6780 = vadd.f32 %v6771, %v6773
    %v6781 = vadd.f32 %v6780, %v6775
    %v6782 = vadd.f32 %v6781, %v6777
    %v6783 = vadd.f32 %v6782, %v6779
    %v6784 = vsub.f32 %v6783, %v566
    %v6785 = vmul.f32 %v112, %v6784
    %v6786 = vxor.u32 %v6785, 2147483648
    %v6787 = vmul.f32 %v6786, 1.442695
    %v6788 = vpow.pop %v6787
    %v6789 = vadd.f32 %v6788, 1.0
    %v6790 = vrcp.pop %v6789
    %v6791 = vmul.f32 1.0, %v6790
    %v6792 = vtanh.pop %v6785
    %v6794 = vrot.slane %v5999, 1
    %v6796 = vmul.f32 %v6791, %v6794
    %6798 = vrot.lane.b32.xlu0 %v6792, 96
    %v6799 = vpop.permute.xlu0 %6798
    %v6801 = vmul.f32 %v6791, %v6799
    %6803 = vrot.lane.b32.xlu0 %v6801, 96
    %v6804 = vpop.permute.xlu0 %6803
    %v6806 = vadd.f32 %v6796, %v6804
    %v6807 = vtanh.pop %v6806
    %6809 = vrot.lane.b32.xlu0 %v6807, 96
    %v6810 = vpop.permute.xlu0 %6809
    %v6812 = vmul.f32 %v6791, %v6810
    %v6813 = vlaneseq
    %v6814 = vshrl.u32 %v6813, 7
    %v6815 = vsub.s32 0, %v6814
    %v6816 = vrot.slane %v6812, %v6815
    %v6817 = vmul.f32 %v967, %v6816
    %v6818 = vadd.f32 %v6450, %v6817
    %v6819 = vlaneseq
    %v6820 = vshrl.u32 %v6819, 7
    %v6821 = vsub.s32 0, %v6820
    %v6822 = vrot.slane %v6806, %v6821
    %v6823 = vmul.f32 %v967, %v6822
    %v6824 = vadd.f32 %v6456, %v6823
    %6826 = vrot.lane.b32.xlu0 %v6818, 32
    %v6827 = vpop.permute.xlu0 %6826
    %6829 = vst.msk [vmem:[#allocation2] sm:$0x3] %vm984, %v6827
    %6830 = vst.msk [vmem:[#allocation9] sm:$0x3] %vm984, %v6824
    %s6831 = scalar_lea.vmem [#allocation8], 14
    %6832 = vst.msk [vmem:[%s6831] sm:$0x3] %vm984, %v6827
    // Predicated region
    $region38: #{tpu_custom_call.1} parent=1 // pred_check
      _
    $region39: #{tpu_custom_call.1} parent=1 // pred_check_branch
      %6834 = sbr.rel (0) target = $region41
    $region40: #{tpu_custom_call.1} parent=1 // pred_region
      %s6836 = ssub.s32 256, 256
      %6837 = vsyncadd [#allocation5], %s6836
      %s6838 = sshll.u32 [#allocation8], 4
      %s6839 = int_to_ptr.vmem [resolvable:$true] %s6838
      %6844 = dma.vmem_to_hbm [thread:$0]  %s6839, 256, %s6, [#allocation5], 32, 32, 2
    $region41: #{tpu_custom_call.1} parent=1 // pred_fallthru
      _
    // Predicated region
    $region42: #{tpu_custom_call.1} parent=1 // pred_check
      _
    $region43: #{tpu_custom_call.1} parent=1 // pred_check_branch
      %6846 = sbr.rel (0) target = $region45
    $region44: #{tpu_custom_call.1} parent=1 // pred_region
      %s6848 = ssub.s32 32, 32
      %6849 = vsyncadd [#allocation10], %s6848
      %s6851 = sshll.u32 [#allocation9], 4
      %s6852 = int_to_ptr.vmem [resolvable:$true] %s6851
      %6854 = dma.vmem_to_hbm [thread:$0]  %s6852, 32, %s7, [#allocation10]
    $region45: #{tpu_custom_call.1} parent=1 // pred_fallthru
      _
    // Predicated region
    $region46: #{tpu_custom_call.1} parent=1 // pred_check
      _
    $region47: #{tpu_custom_call.1} parent=1 // pred_check_branch
      %6856 = sbr.rel (0) target = $region49
    $region48: #{tpu_custom_call.1} parent=1 // pred_region
      %6857 = dma.done [#allocation5], 256
    $region49: #{tpu_custom_call.1} parent=1 // pred_fallthru
      _
    // Predicated region
    $region50: #{tpu_custom_call.1} parent=1 // pred_check
      _
    $region51: #{tpu_custom_call.1} parent=1 // pred_check_branch
      %6859 = sbr.rel (0) target = $region53
    $region52: #{tpu_custom_call.1} parent=1 // pred_region
      %6860 = dma.done [#allocation10], 32
    $region53: #{tpu_custom_call.1} parent=1 // pred_fallthru
      _
    %6861 = vsyncpa [#allocation4], 1
    %6862 = vsyncpa [#allocation7], 1
    %6863 = vsyncpa [#allocation5], 1
    %6864 = vsyncpa [#allocation10], 1

</llo_original>
